<compile_context>
chip_gen: v7x
topology: tpu7x:2x2x1
jax: 0.10.0
libtpu: 0.0.40
codegen_flags: <defaults>
</compile_context>

<pallas_src>
import jax
import jax.numpy as jnp
from jax.experimental import pallas as pl
from jax.experimental.pallas import tpu as pltpu


# ---------------------------------------------------------------------------
# Fused Pallas kernel: B_tile images per grid step, intermediates in VMEM.
# ---------------------------------------------------------------------------
def _bottleneck_kernel(x_ref, w1_ref, b1_ref, w2_ref, b2_ref, w3_ref, b3_ref,
                       o_ref, hp_ref):
    # x_ref : (B, H, W, Cin_p)       input tile (f32)
    # w1    : (Cin_p, Cmid)  bf16    1x1 conv, BN1 scale folded in
    # w2    : (9, Cmid, Cmid) bf16   3x3 conv taps (ky*3+kx), BN2 folded in
    # w3    : (Cmid, Cout_p) bf16    1x1 conv, BN3 scale folded in
    # b*    : (1, C) f32             folded BN biases
    # o_ref : (B, H, W, Cout_p) f32
    # hp_ref: (B, H+2, W+2, Cmid) f32  VMEM scratch holding zero-padded h1
    B, H, W, cin = x_ref.shape
    cmid = w1_ref.shape[1]
    cout = o_ref.shape[-1]
    M = B * H * W

    x2d = x_ref[...].reshape(M, cin)               # f32; reused for residual

    # ---- stage 1: 1x1 conv (bf16 MXU, f32 accum) + bias + ReLU -------------
    h1 = jnp.dot(x2d.astype(jnp.bfloat16), w1_ref[...],
                 preferred_element_type=jnp.float32)
    h1 = jnp.maximum(h1 + b1_ref[...], 0.0)

    # ---- in-kernel halo: zero only the 1-px border, overwrite interior -----
    zrow = jnp.zeros((B, 1, W + 2, cmid), jnp.float32)
    zcol = jnp.zeros((B, H, 1, cmid), jnp.float32)
    hp_ref[:, 0:1, :, :] = zrow
    hp_ref[:, H + 1:H + 2, :, :] = zrow
    hp_ref[:, 1:H + 1, 0:1, :] = zcol
    hp_ref[:, 1:H + 1, W + 1:W + 2, :] = zcol
    hp_ref[:, 1:H + 1, 1:W + 1, :] = h1.reshape(B, H, W, cmid)

    # ---- stage 2: 3x3 conv (pad=1, stride=1) as 9 shifted MXU matmuls ------
    acc = None
    for ky in range(3):
        for kx in range(3):
            patch = hp_ref[:, ky:ky + H, kx:kx + W, :].reshape(M, cmid)
            d = jnp.dot(patch.astype(jnp.bfloat16), w2_ref[ky * 3 + kx],
                        preferred_element_type=jnp.float32)
            acc = d if acc is None else acc + d
    h2 = jnp.maximum(acc + b2_ref[...], 0.0)

    # ---- stage 3: 1x1 conv + bias + identity residual + ReLU ---------------
    y = jnp.dot(h2.astype(jnp.bfloat16), w3_ref[...],
                preferred_element_type=jnp.float32)
    y = jnp.maximum(y + b3_ref[...] + x2d, 0.0)
    o_ref[...] = y.reshape(B, H, W, cout).astype(o_ref.dtype)


# ---------------------------------------------------------------------------
# Runtime tiling / VMEM-budget helpers.
# ---------------------------------------------------------------------------
def _round_up(n, m=128):
    return (n + m - 1) // m * m


def _vmem_limit_bytes():
    """~80% of physical VMEM, capped at 100 MiB (v7x: 64 MiB, v5e/v6e: 128)."""
    try:
        info = pltpu.get_tpu_info()
        cap = getattr(info, "vmem_capacity_bytes", 64 * 1024 * 1024)
    except Exception:                       # pragma: no cover - CPU fallback
        cap = 64 * 1024 * 1024
    return min(int(cap * 4 // 5), 100 * 1024 * 1024)


def _choose_batch_tile(n, h, w, cin_p, cmid, cout_p, vmem_limit):
    """Largest divisor of n whose per-step VMEM estimate fits the budget."""
    per_img = (2 * h * w * cin_p * 4                  # input block, 2 buffers
               + 2 * h * w * cout_p * 4               # output block, 2 buffers
               + (h + 2) * (w + 2) * cmid * 4         # halo scratch (f32)
               + h * w * (3 * cmid + cout_p) * 4)     # h1/acc/h2/y temporaries
    weights = 2 * 2 * (cin_p * cmid + 9 * cmid * cmid + cmid * cout_p)  # bf16
    budget = int(vmem_limit * 0.7) - weights
    bt = 1
    for cand in range(1, n + 1):
        if n % cand == 0 and cand * per_img <= budget:
            bt = cand
    return bt


# ---------------------------------------------------------------------------
# Kernel-native entry point: NHWC, channels already padded to Cin_p == Cout_p.
# In a full network, keep activations in this layout between blocks so no
# per-block transpose/pad/slice HBM passes are needed.
# ---------------------------------------------------------------------------
def bottleneck_forward_nhwc(x, p):
    N, H, W, cin_p = x.shape
    assert cin_p == p["w1"].shape[0]
    cmid = p["w1"].shape[1]
    cout_p = p["w3"].shape[1]
    assert cout_p == cin_p, "identity residual needs inplanes == planes*4"

    vmem_limit = _vmem_limit_bytes()
    bt = _choose_batch_tile(N, H, W, cin_p, cmid, cout_p, vmem_limit)

    return pl.pallas_call(
        _bottleneck_kernel,
        out_shape=jax.ShapeDtypeStruct((N, H, W, cout_p), jnp.float32),
        grid_spec=pltpu.PrefetchScalarGridSpec(
            num_scalar_prefetch=0,
            grid=(N // bt,),
            in_specs=[
                pl.BlockSpec((bt, H, W, cin_p), lambda n: (n, 0, 0, 0)),
                pl.BlockSpec((cin_p, cmid), lambda n: (0, 0)),
                pl.BlockSpec((1, cmid), lambda n: (0, 0)),
                pl.BlockSpec((9, cmid, cmid), lambda n: (0, 0, 0)),
                pl.BlockSpec((1, cmid), lambda n: (0, 0)),
                pl.BlockSpec((cmid, cout_p), lambda n: (0, 0)),
                pl.BlockSpec((1, cout_p), lambda n: (0, 0)),
            ],
            out_specs=pl.BlockSpec((bt, H, W, cout_p),
                                   lambda n: (n, 0, 0, 0)),
            scratch_shapes=[
                pltpu.VMEM((bt, H + 2, W + 2, cmid), jnp.float32)],
        ),
        compiler_params=pltpu.CompilerParams(
            dimension_semantics=("parallel",),   # spread batch tiles over TCs
            vmem_limit_bytes=vmem_limit,
        ),
    )(x, p["w1"], p["b1"], p["w2"], p["b2"], p["w3"], p["b3"])


# ---------------------------------------------------------------------------
# PyTorch-interface adapter (NCHW in / NCHW out).  These transpose/pad/slice
# passes exist only at the network boundary; intermediate blocks should call
# bottleneck_forward_nhwc directly.
# ---------------------------------------------------------------------------
def bottleneck_forward(x_nchw, p):
    cin_p = p["w1"].shape[0]
    x = jnp.transpose(x_nchw, (0, 2, 3, 1)).astype(jnp.float32)   # NCHW->NHWC
    cin = x.shape[-1]
    if cin_p != cin:
        x = jnp.pad(x, ((0, 0), (0, 0), (0, 0), (0, cin_p - cin)))
    out = bottleneck_forward_nhwc(x, p)
    out = out[..., :cin]                          # strip channel padding
    return jnp.transpose(out, (0, 3, 1, 2))       # NHWC -> NCHW


# ---------------------------------------------------------------------------
# Parameter construction (PyTorch-layout) + one-time fold/pad preprocessing.
# ---------------------------------------------------------------------------
def make_params(key, inplanes, planes):
    expansion = 4
    ks = jax.random.split(key, 6)
    nrm = lambda k, s: jax.random.normal(k, s, jnp.float32)

    def bn_params(k, c):
        kg, kb, km, kv = jax.random.split(k, 4)
        return (1.0 + 0.1 * nrm(kg, (c,)), 0.1 * nrm(kb, (c,)),
                0.1 * nrm(km, (c,)), jnp.abs(nrm(kv, (c,))) + 0.5)

    raw = {
        "conv1_w": 0.1 * nrm(ks[0], (planes, inplanes, 1, 1)),
        "conv2_w": 0.1 * nrm(ks[1], (planes, planes, 3, 3)),
        "conv3_w": 0.1 * nrm(ks[2], (planes * expansion, planes, 1, 1)),
    }
    for i, (name, c) in enumerate([("bn1", planes), ("bn2", planes),
                                   ("bn3", planes * expansion)]):
        g, b, m, v = bn_params(ks[3 + i], c)
        raw[name + "_g"], raw[name + "_b"] = g, b
        raw[name + "_m"], raw[name + "_v"] = m, v
    return raw


def fold_and_pad_params(raw, eps=1e-5, lane=128):
    """One-time: fold eval-mode BN into conv weights (bf16), pad Cin/Cout.

    Cmid is intentionally left unpadded (weight blocks are full-extent so no
    (8,128) constraint); blanket-padding e.g. 64->128 would 4x stage-2 FLOPs.
    Cin/Cout are padded to 128 for lane-dense residual/output stores -- a
    no-op for real ResNet widths (256/512/1024/2048).
    """
    def scale_bias(pre):
        s = raw[pre + "_g"] / jnp.sqrt(raw[pre + "_v"] + eps)
        return s, raw[pre + "_b"] - raw[pre + "_m"] * s

    s1, b1 = scale_bias("bn1")
    s2, b2 = scale_bias("bn2")
    s3, b3 = scale_bias("bn3")

    w1 = (raw["conv1_w"][:, :, 0, 0] * s1[:, None]).T            # (Cin, Cmid)
    w2 = jnp.transpose(raw["conv2_w"] * s2[:, None, None, None],
                       (2, 3, 1, 0))                              # (3,3,Ci,Co)
    w2 = w2.reshape(9, w2.shape[2], w2.shape[3])                  # tap=ky*3+kx
    w3 = (raw["conv3_w"][:, :, 0, 0] * s3[:, None]).T             # (Cmid,Cout)

    cin, cmid = w1.shape
    cout = w3.shape[1]
    cin_p, cout_p = _round_up(cin, lane), _round_up(cout, lane)

    pad2 = lambda a, r, c: jnp.pad(a, ((0, r - a.shape[0]),
                                       (0, c - a.shape[1])))
    padb = lambda a, c: jnp.pad(a, (0, c - a.shape[0])).reshape(1, c)

    return {
        "w1": pad2(w1, cin_p, cmid).astype(jnp.bfloat16),
        "b1": b1.reshape(1, cmid).astype(jnp.float32),
        "w2": w2.astype(jnp.bfloat16),
        "b2": b2.reshape(1, cmid).astype(jnp.float32),
        "w3": pad2(w3, cmid, cout_p).astype(jnp.bfloat16),
        "b3": padb(b3, cout_p).astype(jnp.float32),
    }


# ---------------------------------------------------------------------------
# Plain-JAX reference (unfolded f32 params, same math as the PyTorch module).
# ---------------------------------------------------------------------------
def reference_forward(x_nchw, raw, eps=1e-5):
    x = jnp.transpose(x_nchw, (0, 2, 3, 1)).astype(jnp.float32)
    N, H, W, _ = x.shape

    def bn(h, pre):
        g, b = raw[pre + "_g"], raw[pre + "_b"]
        m, v = raw[pre + "_m"], raw[pre + "_v"]
        return (h - m) * (g / jnp.sqrt(v + eps)) + b

    h = jnp.einsum("nhwc,oc->nhwo", x, raw["conv1_w"][:, :, 0, 0])
    h = jnp.maximum(bn(h, "bn1"), 0.0)

    hp = jnp.pad(h, ((0, 0), (1, 1), (1, 1), (0, 0)))
    acc = jnp.zeros_like(h)
    for ky in range(3):
        for kx in range(3):
            acc = acc + jnp.einsum("nhwc,oc->nhwo",
                                   hp[:, ky:ky + H, kx:kx + W, :],
                                   raw["conv2_w"][:, :, ky, kx])
    h2 = jnp.maximum(bn(acc, "bn2"), 0.0)

    h3 = jnp.einsum("nhwc,oc->nhwo", h2, raw["conv3_w"][:, :, 0, 0])
    h3 = jnp.maximum(bn(h3, "bn3") + x, 0.0)
    return jnp.transpose(h3, (0, 3, 1, 2))


if __name__ == "__main__":
    key = jax.random.PRNGKey(0)
    k_x, k_p = jax.random.split(key)

    # Bottleneck(inplanes=16, planes=4): inplanes == planes*4, so the identity
    # residual path (downsample=None, stride=1) is valid.
    N, inplanes, planes, H, W = 2, 16, 4, 16, 16
    x = jax.random.normal(k_x, (N, inplanes, H, W), jnp.float32)   # NCHW

    raw = make_params(k_p, inplanes, planes)
    params = fold_and_pad_params(raw)        # one-time weight preprocessing

    out = jax.block_until_ready(bottleneck_forward(x, params))
    ref = jax.block_until_ready(reference_forward(x, raw))

    assert out.shape == (N, planes * 4, H, W)
    # bf16 MXU operands (f32 accumulation) -> slightly looser tolerance.
    assert jnp.allclose(out, ref, rtol=2e-2, atol=2e-2), "mismatch vs reference"

    print("KERNEL_OK")
</pallas_src>

<mosaic_0001>
module attributes {stable_mosaic.version = 11 : i64} {
  func.func @_bottleneck_kernel(%arg0: i32, %arg1: memref<2x16x16x128xf32, #tpu.memory_space<vmem>>, %arg2: memref<128x4xbf16, #tpu.memory_space<vmem>>, %arg3: memref<1x4xf32, #tpu.memory_space<vmem>>, %arg4: memref<9x4x4xbf16, #tpu.memory_space<vmem>>, %arg5: memref<1x4xf32, #tpu.memory_space<vmem>>, %arg6: memref<4x128xbf16, #tpu.memory_space<vmem>>, %arg7: memref<1x128xf32, #tpu.memory_space<vmem>>, %arg8: memref<2x16x16x128xf32, #tpu.memory_space<vmem>>, %arg9: memref<2x18x18x4xf32, #tpu.memory_space<vmem>>) attributes {dimension_semantics = [#tpu.dimension_semantics<parallel>], iteration_bounds = array<i64: 1>, scalar_prefetch = 0 : i64, scratch_operands = 1 : i64, tpu.core_type = #tpu.core_type<tc>, window_params = [{transform_indices = @transform_0, window_bounds = array<i64: 2, 16, 16, 128>}, {pipeline_mode = #tpu.pipeline_mode<synchronous>, transform_indices = @transform_1, window_bounds = array<i64: 128, 4>}, {pipeline_mode = #tpu.pipeline_mode<synchronous>, transform_indices = @transform_2, window_bounds = array<i64: 1, 4>}, {pipeline_mode = #tpu.pipeline_mode<synchronous>, transform_indices = @transform_3, window_bounds = array<i64: 9, 4, 4>}, {pipeline_mode = #tpu.pipeline_mode<synchronous>, transform_indices = @transform_4, window_bounds = array<i64: 1, 4>}, {pipeline_mode = #tpu.pipeline_mode<synchronous>, transform_indices = @transform_5, window_bounds = array<i64: 4, 128>}, {pipeline_mode = #tpu.pipeline_mode<synchronous>, transform_indices = @transform_6, window_bounds = array<i64: 1, 128>}, {transform_indices = @transform_7, window_bounds = array<i64: 2, 16, 16, 128>}]} {
    %c0 = arith.constant 0 : index
    %c0_0 = arith.constant 0 : index
    %c0_1 = arith.constant 0 : index
    %c0_2 = arith.constant 0 : index
    %0 = vector.load %arg1[%c0, %c0_0, %c0_1, %c0_2] : memref<2x16x16x128xf32, #tpu.memory_space<vmem>>, vector<2x16x16x128xf32>
    %1 = vector.shape_cast %0 : vector<2x16x16x128xf32> to vector<512x128xf32>
    %2 = arith.truncf %1 : vector<512x128xf32> to vector<512x128xbf16>
    %c0_3 = arith.constant 0 : index
    %c0_4 = arith.constant 0 : index
    %3 = vector.load %arg2[%c0_3, %c0_4] : memref<128x4xbf16, #tpu.memory_space<vmem>>, vector<128x4xbf16>
    %cst = arith.constant dense<0.000000e+00> : vector<512x4xf32>
    %4 = tpu.matmul %2, %3, %cst {dimension_numbers = #tpu.dot_dimension_numbers<[1], [0], [0], [1], [0, 0, 1, 1], [], []>} : vector<512x128xbf16>, vector<128x4xbf16>, vector<512x4xf32> -> vector<512x4xf32>
    %c0_5 = arith.constant 0 : index
    %c0_6 = arith.constant 0 : index
    %5 = vector.load %arg3[%c0_5, %c0_6] : memref<1x4xf32, #tpu.memory_space<vmem>>, vector<1x4xf32>
    %6 = vector.broadcast %5 : vector<1x4xf32> to vector<512x4xf32>
    %7 = arith.addf %4, %6 : vector<512x4xf32>
    %cst_7 = arith.constant 0.000000e+00 : f32
    %8 = vector.broadcast %cst_7 : f32 to vector<512x4xf32>
    %9 = arith.maximumf %7, %8 : vector<512x4xf32>
    %cst_8 = arith.constant 0.000000e+00 : f32
    %10 = vector.broadcast %cst_8 : f32 to vector<2x1x18x4xf32>
    %cst_9 = arith.constant 0.000000e+00 : f32
    %11 = vector.broadcast %cst_9 : f32 to vector<2x16x1x4xf32>
    %c0_10 = arith.constant 0 : index
    %c0_11 = arith.constant 0 : index
    %c0_12 = arith.constant 0 : index
    %c0_13 = arith.constant 0 : index
    %12 = vector.load %arg9[%c0_10, %c0_11, %c0_12, %c0_13] : memref<2x18x18x4xf32, #tpu.memory_space<vmem>>, vector<2x1x18x4xf32>
    tpu.vector_store %arg9[%c0_10, %c0_11, %c0_12, %c0_13], %10 {strides = array<i32>} : memref<2x18x18x4xf32, #tpu.memory_space<vmem>>, vector<2x1x18x4xf32>,
    %c0_14 = arith.constant 0 : index
    %c17 = arith.constant 17 : index
    %c0_15 = arith.constant 0 : index
    %c0_16 = arith.constant 0 : index
    %13 = vector.load %arg9[%c0_14, %c17, %c0_15, %c0_16] : memref<2x18x18x4xf32, #tpu.memory_space<vmem>>, vector<2x1x18x4xf32>
    tpu.vector_store %arg9[%c0_14, %c17, %c0_15, %c0_16], %10 {strides = array<i32>} : memref<2x18x18x4xf32, #tpu.memory_space<vmem>>, vector<2x1x18x4xf32>,
    %c0_17 = arith.constant 0 : index
    %c1 = arith.constant 1 : index
    %c0_18 = arith.constant 0 : index
    %c0_19 = arith.constant 0 : index
    %14 = vector.load %arg9[%c0_17, %c1, %c0_18, %c0_19] : memref<2x18x18x4xf32, #tpu.memory_space<vmem>>, vector<2x16x1x4xf32>
    tpu.vector_store %arg9[%c0_17, %c1, %c0_18, %c0_19], %11 {strides = array<i32>} : memref<2x18x18x4xf32, #tpu.memory_space<vmem>>, vector<2x16x1x4xf32>,
    %c0_20 = arith.constant 0 : index
    %c1_21 = arith.constant 1 : index
    %c17_22 = arith.constant 17 : index
    %c0_23 = arith.constant 0 : index
    %15 = vector.load %arg9[%c0_20, %c1_21, %c17_22, %c0_23] : memref<2x18x18x4xf32, #tpu.memory_space<vmem>>, vector<2x16x1x4xf32>
    tpu.vector_store %arg9[%c0_20, %c1_21, %c17_22, %c0_23], %11 {strides = array<i32>} : memref<2x18x18x4xf32, #tpu.memory_space<vmem>>, vector<2x16x1x4xf32>,
    %16 = vector.shape_cast %9 : vector<512x4xf32> to vector<2x16x16x4xf32>
    %c0_24 = arith.constant 0 : index
    %c1_25 = arith.constant 1 : index
    %c1_26 = arith.constant 1 : index
    %c0_27 = arith.constant 0 : index
    %17 = vector.load %arg9[%c0_24, %c1_25, %c1_26, %c0_27] : memref<2x18x18x4xf32, #tpu.memory_space<vmem>>, vector<2x16x16x4xf32>
    tpu.vector_store %arg9[%c0_24, %c1_25, %c1_26, %c0_27], %16 {strides = array<i32>} : memref<2x18x18x4xf32, #tpu.memory_space<vmem>>, vector<2x16x16x4xf32>,
    %c0_28 = arith.constant 0 : index
    %c0_29 = arith.constant 0 : index
    %c0_30 = arith.constant 0 : index
    %c0_31 = arith.constant 0 : index
    %18 = vector.load %arg9[%c0_28, %c0_29, %c0_30, %c0_31] : memref<2x18x18x4xf32, #tpu.memory_space<vmem>>, vector<2x16x16x4xf32>
    %19 = vector.shape_cast %18 : vector<2x16x16x4xf32> to vector<512x4xf32>
    %20 = arith.truncf %19 : vector<512x4xf32> to vector<512x4xbf16>
    %c0_32 = arith.constant 0 : index
    %c0_33 = arith.constant 0 : index
    %c0_34 = arith.constant 0 : index
    %21 = vector.load %arg4[%c0_32, %c0_33, %c0_34] : memref<9x4x4xbf16, #tpu.memory_space<vmem>>, vector<1x4x4xbf16>
    %22 = vector.shape_cast %21 : vector<1x4x4xbf16> to vector<4x4xbf16>
    %cst_35 = arith.constant dense<0.000000e+00> : vector<512x4xf32>
    %23 = tpu.matmul %20, %22, %cst_35 {dimension_numbers = #tpu.dot_dimension_numbers<[1], [0], [0], [1], [0, 0, 1, 1], [], []>} : vector<512x4xbf16>, vector<4x4xbf16>, vector<512x4xf32> -> vector<512x4xf32>
    %c0_36 = arith.constant 0 : index
    %c0_37 = arith.constant 0 : index
    %c1_38 = arith.constant 1 : index
    %c0_39 = arith.constant 0 : index
    %24 = vector.load %arg9[%c0_36, %c0_37, %c1_38, %c0_39] : memref<2x18x18x4xf32, #tpu.memory_space<vmem>>, vector<2x16x16x4xf32>
    %25 = vector.shape_cast %24 : vector<2x16x16x4xf32> to vector<512x4xf32>
    %26 = arith.truncf %25 : vector<512x4xf32> to vector<512x4xbf16>
    %c1_40 = arith.constant 1 : index
    %c0_41 = arith.constant 0 : index
    %c0_42 = arith.constant 0 : index
    %27 = vector.load %arg4[%c1_40, %c0_41, %c0_42] : memref<9x4x4xbf16, #tpu.memory_space<vmem>>, vector<1x4x4xbf16>
    %28 = vector.shape_cast %27 : vector<1x4x4xbf16> to vector<4x4xbf16>
    %cst_43 = arith.constant dense<0.000000e+00> : vector<512x4xf32>
    %29 = tpu.matmul %26, %28, %cst_43 {dimension_numbers = #tpu.dot_dimension_numbers<[1], [0], [0], [1], [0, 0, 1, 1], [], []>} : vector<512x4xbf16>, vector<4x4xbf16>, vector<512x4xf32> -> vector<512x4xf32>
    %30 = arith.addf %23, %29 : vector<512x4xf32>
    %c0_44 = arith.constant 0 : index
    %c0_45 = arith.constant 0 : index
    %c2 = arith.constant 2 : index
    %c0_46 = arith.constant 0 : index
    %31 = vector.load %arg9[%c0_44, %c0_45, %c2, %c0_46] : memref<2x18x18x4xf32, #tpu.memory_space<vmem>>, vector<2x16x16x4xf32>
    %32 = vector.shape_cast %31 : vector<2x16x16x4xf32> to vector<512x4xf32>
    %33 = arith.truncf %32 : vector<512x4xf32> to vector<512x4xbf16>
    %c2_47 = arith.constant 2 : index
    %c0_48 = arith.constant 0 : index
    %c0_49 = arith.constant 0 : index
    %34 = vector.load %arg4[%c2_47, %c0_48, %c0_49] : memref<9x4x4xbf16, #tpu.memory_space<vmem>>, vector<1x4x4xbf16>
    %35 = vector.shape_cast %34 : vector<1x4x4xbf16> to vector<4x4xbf16>
    %cst_50 = arith.constant dense<0.000000e+00> : vector<512x4xf32>
    %36 = tpu.matmul %33, %35, %cst_50 {dimension_numbers = #tpu.dot_dimension_numbers<[1], [0], [0], [1], [0, 0, 1, 1], [], []>} : vector<512x4xbf16>, vector<4x4xbf16>, vector<512x4xf32> -> vector<512x4xf32>
    %37 = arith.addf %30, %36 : vector<512x4xf32>
    %c0_51 = arith.constant 0 : index
    %c1_52 = arith.constant 1 : index
    %c0_53 = arith.constant 0 : index
    %c0_54 = arith.constant 0 : index
    %38 = vector.load %arg9[%c0_51, %c1_52, %c0_53, %c0_54] : memref<2x18x18x4xf32, #tpu.memory_space<vmem>>, vector<2x16x16x4xf32>
    %39 = vector.shape_cast %38 : vector<2x16x16x4xf32> to vector<512x4xf32>
    %40 = arith.truncf %39 : vector<512x4xf32> to vector<512x4xbf16>
    %c3 = arith.constant 3 : index
    %c0_55 = arith.constant 0 : index
    %c0_56 = arith.constant 0 : index
    %41 = vector.load %arg4[%c3, %c0_55, %c0_56] : memref<9x4x4xbf16, #tpu.memory_space<vmem>>, vector<1x4x4xbf16>
    %42 = vector.shape_cast %41 : vector<1x4x4xbf16> to vector<4x4xbf16>
    %cst_57 = arith.constant dense<0.000000e+00> : vector<512x4xf32>
    %43 = tpu.matmul %40, %42, %cst_57 {dimension_numbers = #tpu.dot_dimension_numbers<[1], [0], [0], [1], [0, 0, 1, 1], [], []>} : vector<512x4xbf16>, vector<4x4xbf16>, vector<512x4xf32> -> vector<512x4xf32>
    %44 = arith.addf %37, %43 : vector<512x4xf32>
    %c0_58 = arith.constant 0 : index
    %c1_59 = arith.constant 1 : index
    %c1_60 = arith.constant 1 : index
    %c0_61 = arith.constant 0 : index
    %45 = vector.load %arg9[%c0_58, %c1_59, %c1_60, %c0_61] : memref<2x18x18x4xf32, #tpu.memory_space<vmem>>, vector<2x16x16x4xf32>
    %46 = vector.shape_cast %45 : vector<2x16x16x4xf32> to vector<512x4xf32>
    %47 = arith.truncf %46 : vector<512x4xf32> to vector<512x4xbf16>
    %c4 = arith.constant 4 : index
    %c0_62 = arith.constant 0 : index
    %c0_63 = arith.constant 0 : index
    %48 = vector.load %arg4[%c4, %c0_62, %c0_63] : memref<9x4x4xbf16, #tpu.memory_space<vmem>>, vector<1x4x4xbf16>
    %49 = vector.shape_cast %48 : vector<1x4x4xbf16> to vector<4x4xbf16>
    %cst_64 = arith.constant dense<0.000000e+00> : vector<512x4xf32>
    %50 = tpu.matmul %47, %49, %cst_64 {dimension_numbers = #tpu.dot_dimension_numbers<[1], [0], [0], [1], [0, 0, 1, 1], [], []>} : vector<512x4xbf16>, vector<4x4xbf16>, vector<512x4xf32> -> vector<512x4xf32>
    %51 = arith.addf %44, %50 : vector<512x4xf32>
    %c0_65 = arith.constant 0 : index
    %c1_66 = arith.constant 1 : index
    %c2_67 = arith.constant 2 : index
    %c0_68 = arith.constant 0 : index
    %52 = vector.load %arg9[%c0_65, %c1_66, %c2_67, %c0_68] : memref<2x18x18x4xf32, #tpu.memory_space<vmem>>, vector<2x16x16x4xf32>
    %53 = vector.shape_cast %52 : vector<2x16x16x4xf32> to vector<512x4xf32>
    %54 = arith.truncf %53 : vector<512x4xf32> to vector<512x4xbf16>
    %c5 = arith.constant 5 : index
    %c0_69 = arith.constant 0 : index
    %c0_70 = arith.constant 0 : index
    %55 = vector.load %arg4[%c5, %c0_69, %c0_70] : memref<9x4x4xbf16, #tpu.memory_space<vmem>>, vector<1x4x4xbf16>
    %56 = vector.shape_cast %55 : vector<1x4x4xbf16> to vector<4x4xbf16>
    %cst_71 = arith.constant dense<0.000000e+00> : vector<512x4xf32>
    %57 = tpu.matmul %54, %56, %cst_71 {dimension_numbers = #tpu.dot_dimension_numbers<[1], [0], [0], [1], [0, 0, 1, 1], [], []>} : vector<512x4xbf16>, vector<4x4xbf16>, vector<512x4xf32> -> vector<512x4xf32>
    %58 = arith.addf %51, %57 : vector<512x4xf32>
    %c0_72 = arith.constant 0 : index
    %c2_73 = arith.constant 2 : index
    %c0_74 = arith.constant 0 : index
    %c0_75 = arith.constant 0 : index
    %59 = vector.load %arg9[%c0_72, %c2_73, %c0_74, %c0_75] : memref<2x18x18x4xf32, #tpu.memory_space<vmem>>, vector<2x16x16x4xf32>
    %60 = vector.shape_cast %59 : vector<2x16x16x4xf32> to vector<512x4xf32>
    %61 = arith.truncf %60 : vector<512x4xf32> to vector<512x4xbf16>
    %c6 = arith.constant 6 : index
    %c0_76 = arith.constant 0 : index
    %c0_77 = arith.constant 0 : index
    %62 = vector.load %arg4[%c6, %c0_76, %c0_77] : memref<9x4x4xbf16, #tpu.memory_space<vmem>>, vector<1x4x4xbf16>
    %63 = vector.shape_cast %62 : vector<1x4x4xbf16> to vector<4x4xbf16>
    %cst_78 = arith.constant dense<0.000000e+00> : vector<512x4xf32>
    %64 = tpu.matmul %61, %63, %cst_78 {dimension_numbers = #tpu.dot_dimension_numbers<[1], [0], [0], [1], [0, 0, 1, 1], [], []>} : vector<512x4xbf16>, vector<4x4xbf16>, vector<512x4xf32> -> vector<512x4xf32>
    %65 = arith.addf %58, %64 : vector<512x4xf32>
    %c0_79 = arith.constant 0 : index
    %c2_80 = arith.constant 2 : index
    %c1_81 = arith.constant 1 : index
    %c0_82 = arith.constant 0 : index
    %66 = vector.load %arg9[%c0_79, %c2_80, %c1_81, %c0_82] : memref<2x18x18x4xf32, #tpu.memory_space<vmem>>, vector<2x16x16x4xf32>
    %67 = vector.shape_cast %66 : vector<2x16x16x4xf32> to vector<512x4xf32>
    %68 = arith.truncf %67 : vector<512x4xf32> to vector<512x4xbf16>
    %c7 = arith.constant 7 : index
    %c0_83 = arith.constant 0 : index
    %c0_84 = arith.constant 0 : index
    %69 = vector.load %arg4[%c7, %c0_83, %c0_84] : memref<9x4x4xbf16, #tpu.memory_space<vmem>>, vector<1x4x4xbf16>
    %70 = vector.shape_cast %69 : vector<1x4x4xbf16> to vector<4x4xbf16>
    %cst_85 = arith.constant dense<0.000000e+00> : vector<512x4xf32>
    %71 = tpu.matmul %68, %70, %cst_85 {dimension_numbers = #tpu.dot_dimension_numbers<[1], [0], [0], [1], [0, 0, 1, 1], [], []>} : vector<512x4xbf16>, vector<4x4xbf16>, vector<512x4xf32> -> vector<512x4xf32>
    %72 = arith.addf %65, %71 : vector<512x4xf32>
    %c0_86 = arith.constant 0 : index
    %c2_87 = arith.constant 2 : index
    %c2_88 = arith.constant 2 : index
    %c0_89 = arith.constant 0 : index
    %73 = vector.load %arg9[%c0_86, %c2_87, %c2_88, %c0_89] : memref<2x18x18x4xf32, #tpu.memory_space<vmem>>, vector<2x16x16x4xf32>
    %74 = vector.shape_cast %73 : vector<2x16x16x4xf32> to vector<512x4xf32>
    %75 = arith.truncf %74 : vector<512x4xf32> to vector<512x4xbf16>
    %c8 = arith.constant 8 : index
    %c0_90 = arith.constant 0 : index
    %c0_91 = arith.constant 0 : index
    %76 = vector.load %arg4[%c8, %c0_90, %c0_91] : memref<9x4x4xbf16, #tpu.memory_space<vmem>>, vector<1x4x4xbf16>
    %77 = vector.shape_cast %76 : vector<1x4x4xbf16> to vector<4x4xbf16>
    %cst_92 = arith.constant dense<0.000000e+00> : vector<512x4xf32>
    %78 = tpu.matmul %75, %77, %cst_92 {dimension_numbers = #tpu.dot_dimension_numbers<[1], [0], [0], [1], [0, 0, 1, 1], [], []>} : vector<512x4xbf16>, vector<4x4xbf16>, vector<512x4xf32> -> vector<512x4xf32>
    %79 = arith.addf %72, %78 : vector<512x4xf32>
    %c0_93 = arith.constant 0 : index
    %c0_94 = arith.constant 0 : index
    %80 = vector.load %arg5[%c0_93, %c0_94] : memref<1x4xf32, #tpu.memory_space<vmem>>, vector<1x4xf32>
    %81 = vector.broadcast %80 : vector<1x4xf32> to vector<512x4xf32>
    %82 = arith.addf %79, %81 : vector<512x4xf32>
    %cst_95 = arith.constant 0.000000e+00 : f32
    %83 = vector.broadcast %cst_95 : f32 to vector<512x4xf32>
    %84 = arith.maximumf %82, %83 : vector<512x4xf32>
    %85 = arith.truncf %84 : vector<512x4xf32> to vector<512x4xbf16>
    %c0_96 = arith.constant 0 : index
    %c0_97 = arith.constant 0 : index
    %86 = vector.load %arg6[%c0_96, %c0_97] : memref<4x128xbf16, #tpu.memory_space<vmem>>, vector<4x128xbf16>
    %cst_98 = arith.constant dense<0.000000e+00> : vector<512x128xf32>
    %87 = tpu.matmul %85, %86, %cst_98 {dimension_numbers = #tpu.dot_dimension_numbers<[1], [0], [0], [1], [0, 0, 1, 1], [], []>} : vector<512x4xbf16>, vector<4x128xbf16>, vector<512x128xf32> -> vector<512x128xf32>
    %c0_99 = arith.constant 0 : index
    %c0_100 = arith.constant 0 : index
    %88 = vector.load %arg7[%c0_99, %c0_100] : memref<1x128xf32, #tpu.memory_space<vmem>>, vector<1x128xf32>
    %89 = vector.broadcast %88 : vector<1x128xf32> to vector<512x128xf32>
    %90 = arith.addf %87, %89 : vector<512x128xf32>
    %91 = arith.addf %90, %1 : vector<512x128xf32>
    %cst_101 = arith.constant 0.000000e+00 : f32
    %92 = vector.broadcast %cst_101 : f32 to vector<512x128xf32>
    %93 = arith.maximumf %91, %92 : vector<512x128xf32>
    %94 = vector.shape_cast %93 : vector<512x128xf32> to vector<2x16x16x128xf32>
    %c0_102 = arith.constant 0 : index
    %c0_103 = arith.constant 0 : index
    %c0_104 = arith.constant 0 : index
    %c0_105 = arith.constant 0 : index
    %95 = vector.load %arg8[%c0_102, %c0_103, %c0_104, %c0_105] : memref<2x16x16x128xf32, #tpu.memory_space<vmem>>, vector<2x16x16x128xf32>
    tpu.vector_store %arg8[%c0_102, %c0_103, %c0_104, %c0_105], %94 {strides = array<i32>} : memref<2x16x16x128xf32, #tpu.memory_space<vmem>>, vector<2x16x16x128xf32>,
    return
  }
  func.func @transform_0(%arg0: i32) -> (i32, i32, i32, i32) {
    %c0_i32 = arith.constant 0 : i32
    %c0_i32_0 = arith.constant 0 : i32
    %c0_i32_1 = arith.constant 0 : i32
    %c0_i32_2 = arith.constant 0 : i32
    return %arg0, %c0_i32, %c0_i32_0, %c0_i32_1 : i32, i32, i32, i32
  }
  func.func @transform_1(%arg0: i32) -> (i32, i32) {
    %c0_i32 = arith.constant 0 : i32
    %c0_i32_0 = arith.constant 0 : i32
    %c0_i32_1 = arith.constant 0 : i32
    return %c0_i32, %c0_i32_0 : i32, i32
  }
  func.func @transform_2(%arg0: i32) -> (i32, i32) {
    %c0_i32 = arith.constant 0 : i32
    %c0_i32_0 = arith.constant 0 : i32
    %c0_i32_1 = arith.constant 0 : i32
    return %c0_i32, %c0_i32_0 : i32, i32
  }
  func.func @transform_3(%arg0: i32) -> (i32, i32, i32) {
    %c0_i32 = arith.constant 0 : i32
    %c0_i32_0 = arith.constant 0 : i32
    %c0_i32_1 = arith.constant 0 : i32
    %c0_i32_2 = arith.constant 0 : i32
    return %c0_i32, %c0_i32_0, %c0_i32_1 : i32, i32, i32
  }
  func.func @transform_4(%arg0: i32) -> (i32, i32) {
    %c0_i32 = arith.constant 0 : i32
    %c0_i32_0 = arith.constant 0 : i32
    %c0_i32_1 = arith.constant 0 : i32
    return %c0_i32, %c0_i32_0 : i32, i32
  }
  func.func @transform_5(%arg0: i32) -> (i32, i32) {
    %c0_i32 = arith.constant 0 : i32
    %c0_i32_0 = arith.constant 0 : i32
    %c0_i32_1 = arith.constant 0 : i32
    return %c0_i32, %c0_i32_0 : i32, i32
  }
  func.func @transform_6(%arg0: i32) -> (i32, i32) {
    %c0_i32 = arith.constant 0 : i32
    %c0_i32_0 = arith.constant 0 : i32
    %c0_i32_1 = arith.constant 0 : i32
    return %c0_i32, %c0_i32_0 : i32, i32
  }
  func.func @transform_7(%arg0: i32) -> (i32, i32, i32, i32) {
    %c0_i32 = arith.constant 0 : i32
    %c0_i32_0 = arith.constant 0 : i32
    %c0_i32_1 = arith.constant 0 : i32
    %c0_i32_2 = arith.constant 0 : i32
    return %arg0, %c0_i32, %c0_i32_0, %c0_i32_1 : i32, i32, i32, i32
  }
}

</mosaic_0001>

<llo_original>
// kernel: tpu_custom_call.1
$region0: #{tpu_custom_call.1}
  #allocation0 [shape = 'u32[]', space=smem, size = 0x4, offset = 0x4, fixed_abs, tag = 'smem constant byte address 0x4 - core index']
  #allocation1 [shape = 'u32[144,128]{1,0:T(1,128)}', space=vmem, size = 0x12000, scoped, tag = 'internal scratch']
  #allocation2 [shape = 'f32[2,18,18,4]{3,2,1,0:T(8,128)}', space=vmem, size = 0x6c000, scoped, tag = 'scratch operand']
  %s0 = inlined_call_operand.hbm [shape: f32[2,16,16,128], index: 0, kind: input, shape index: {}]
  %s1 = inlined_call_operand.vmem [shape: bf16[128,4], index: 1, kind: input, shape index: {}]
  %s2 = inlined_call_operand.vmem [shape: f32[1,4], index: 2, kind: input, shape index: {}]
  %s3 = inlined_call_operand.vmem [shape: bf16[9,4,4], index: 3, kind: input, shape index: {}]
  %s4 = inlined_call_operand.vmem [shape: f32[1,4], index: 4, kind: input, shape index: {}]
  %s5 = inlined_call_operand.vmem [shape: bf16[4,128], index: 5, kind: input, shape index: {}]
  %s6 = inlined_call_operand.vmem [shape: f32[1,128], index: 6, kind: input, shape index: {}]
  %s7 = inlined_call_operand.hbm [shape: f32[2,16,16,128], index: 7, kind: output, shape index: {}]
  %s8 = sld [smem:[#allocation0]]
  $region42: #{tpu_custom_call.1} parent=0
    _
  %s10 = ssub.s32 1, %s8
  %s11 = scalar_select 0, %s10, %s8
  $region1: #{tpu_custom_call.1} parent=0
    #allocation3 [shape = 'u8[262144]{0}', space=vmem, size = 0x40000, scoped, tag = 'input window, operand 0, single buffered']
    #allocation4 [shape = 's32[1]{0}', space=sflag, size = 0x4, scoped, tag = 'scoped memory for tpu_custom_call.1']
    #allocation5 [shape = 's32[1]{0}', space=sflag, size = 0x4, scoped, tag = 'scoped memory for tpu_custom_call.1']
    #allocation6 [shape = 'u8[262144]{0}', space=vmem, size = 0x40000, scoped, tag = 'output window, operand 0, single buffered']
    %12 = vsyncpa [#allocation4], 0
    %13 = vsyncpa [#allocation5], 0
    // Predicated region
    $region2: #{tpu_custom_call.1} parent=1 // pred_check
      _
    $region3: #{tpu_custom_call.1} parent=1 // pred_check_branch
      %15 = sbr.rel (0) target = $region5
    $region4: #{tpu_custom_call.1} parent=1 // pred_region
      %s17 = ssub.s32 8192, 8192
      %18 = vsyncadd [#allocation4], %s17
      %s19 = sshll.u32 [#allocation3], 4
      %s20 = int_to_ptr.vmem [resolvable:$true] %s19
      %25 = dma.hbm_to_vmem [thread:$0]  %s0, 8192, %s20, [#allocation4], 128, 128, 8
    $region5: #{tpu_custom_call.1} parent=1 // pred_fallthru
      _
    // Predicated region
    $region6: #{tpu_custom_call.1} parent=1 // pred_check
      _
    $region7: #{tpu_custom_call.1} parent=1 // pred_check_branch
      %27 = sbr.rel (0) target = $region9
    $region8: #{tpu_custom_call.1} parent=1 // pred_region
      _
    $region9: #{tpu_custom_call.1} parent=1 // pred_fallthru
      _
    // Predicated region
    $region10: #{tpu_custom_call.1} parent=1 // pred_check
      _
    $region11: #{tpu_custom_call.1} parent=1 // pred_check_branch
      %29 = sbr.rel (0) target = $region13
    $region12: #{tpu_custom_call.1} parent=1 // pred_region
      _
    $region13: #{tpu_custom_call.1} parent=1 // pred_fallthru
      _
    // Predicated region
    $region14: #{tpu_custom_call.1} parent=1 // pred_check
      _
    $region15: #{tpu_custom_call.1} parent=1 // pred_check_branch
      %31 = sbr.rel (0) target = $region17
    $region16: #{tpu_custom_call.1} parent=1 // pred_region
      _
    $region17: #{tpu_custom_call.1} parent=1 // pred_fallthru
      _
    // Predicated region
    $region18: #{tpu_custom_call.1} parent=1 // pred_check
      _
    $region19: #{tpu_custom_call.1} parent=1 // pred_check_branch
      %33 = sbr.rel (0) target = $region21
    $region20: #{tpu_custom_call.1} parent=1 // pred_region
      _
    $region21: #{tpu_custom_call.1} parent=1 // pred_fallthru
      _
    // Predicated region
    $region22: #{tpu_custom_call.1} parent=1 // pred_check
      _
    $region23: #{tpu_custom_call.1} parent=1 // pred_check_branch
      %35 = sbr.rel (0) target = $region25
    $region24: #{tpu_custom_call.1} parent=1 // pred_region
      _
    $region25: #{tpu_custom_call.1} parent=1 // pred_fallthru
      _
    // Predicated region
    $region26: #{tpu_custom_call.1} parent=1 // pred_check
      _
    $region27: #{tpu_custom_call.1} parent=1 // pred_check_branch
      %37 = sbr.rel (0) target = $region29
    $region28: #{tpu_custom_call.1} parent=1 // pred_region
      _
    $region29: #{tpu_custom_call.1} parent=1 // pred_fallthru
      _
    // Predicated region
    $region30: #{tpu_custom_call.1} parent=1 // pred_check
      _
    $region31: #{tpu_custom_call.1} parent=1 // pred_check_branch
      %39 = sbr.rel (0) target = $region33
    $region32: #{tpu_custom_call.1} parent=1 // pred_region
      %40 = dma.done [#allocation4], 8192
    $region33: #{tpu_custom_call.1} parent=1 // pred_fallthru
      _
    %v42 = vld [vmem:[#allocation3] sm:$0xff]
    %v43 = vld [vmem:[#allocation3 + $0x8] sm:$0xff]
    %v44 = vld [vmem:[#allocation3 + $0x10] sm:$0xff]
    %v45 = vld [vmem:[#allocation3 + $0x18] sm:$0xff]
    %v46 = vld [vmem:[#allocation3 + $0x20] sm:$0xff]
    %v47 = vld [vmem:[#allocation3 + $0x28] sm:$0xff]
    %v48 = vld [vmem:[#allocation3 + $0x30] sm:$0xff]
    %v49 = vld [vmem:[#allocation3 + $0x38] sm:$0xff]
    %v50 = vld [vmem:[#allocation3 + $0x40] sm:$0xff]
    %v51 = vld [vmem:[#allocation3 + $0x48] sm:$0xff]
    %v52 = vld [vmem:[#allocation3 + $0x50] sm:$0xff]
    %v53 = vld [vmem:[#allocation3 + $0x58] sm:$0xff]
    %v54 = vld [vmem:[#allocation3 + $0x60] sm:$0xff]
    %v55 = vld [vmem:[#allocation3 + $0x68] sm:$0xff]
    %v56 = vld [vmem:[#allocation3 + $0x70] sm:$0xff]
    %v57 = vld [vmem:[#allocation3 + $0x78] sm:$0xff]
    %v58 = vld [vmem:[#allocation3 + $0x80] sm:$0xff]
    %v59 = vld [vmem:[#allocation3 + $0x88] sm:$0xff]
    %v60 = vld [vmem:[#allocation3 + $0x90] sm:$0xff]
    %v61 = vld [vmem:[#allocation3 + $0x98] sm:$0xff]
    %v62 = vld [vmem:[#allocation3 + $0xa0] sm:$0xff]
    %v63 = vld [vmem:[#allocation3 + $0xa8] sm:$0xff]
    %v64 = vld [vmem:[#allocation3 + $0xb0] sm:$0xff]
    %v65 = vld [vmem:[#allocation3 + $0xb8] sm:$0xff]
    %v66 = vld [vmem:[#allocation3 + $0xc0] sm:$0xff]
    %v67 = vld [vmem:[#allocation3 + $0xc8] sm:$0xff]
    %v68 = vld [vmem:[#allocation3 + $0xd0] sm:$0xff]
    %v69 = vld [vmem:[#allocation3 + $0xd8] sm:$0xff]
    %v70 = vld [vmem:[#allocation3 + $0xe0] sm:$0xff]
    %v71 = vld [vmem:[#allocation3 + $0xe8] sm:$0xff]
    %v72 = vld [vmem:[#allocation3 + $0xf0] sm:$0xff]
    %v73 = vld [vmem:[#allocation3 + $0xf8] sm:$0xff]
    %v74 = vld [vmem:[#allocation3 + $0x100] sm:$0xff]
    %v75 = vld [vmem:[#allocation3 + $0x108] sm:$0xff]
    %v76 = vld [vmem:[#allocation3 + $0x110] sm:$0xff]
    %v77 = vld [vmem:[#allocation3 + $0x118] sm:$0xff]
    %v78 = vld [vmem:[#allocation3 + $0x120] sm:$0xff]
    %v79 = vld [vmem:[#allocation3 + $0x128] sm:$0xff]
    %v80 = vld [vmem:[#allocation3 + $0x130] sm:$0xff]
    %v81 = vld [vmem:[#allocation3 + $0x138] sm:$0xff]
    %v82 = vld [vmem:[#allocation3 + $0x140] sm:$0xff]
    %v83 = vld [vmem:[#allocation3 + $0x148] sm:$0xff]
    %v84 = vld [vmem:[#allocation3 + $0x150] sm:$0xff]
    %v85 = vld [vmem:[#allocation3 + $0x158] sm:$0xff]
    %v86 = vld [vmem:[#allocation3 + $0x160] sm:$0xff]
    %v87 = vld [vmem:[#allocation3 + $0x168] sm:$0xff]
    %v88 = vld [vmem:[#allocation3 + $0x170] sm:$0xff]
    %v89 = vld [vmem:[#allocation3 + $0x178] sm:$0xff]
    %v90 = vld [vmem:[#allocation3 + $0x180] sm:$0xff]
    %v91 = vld [vmem:[#allocation3 + $0x188] sm:$0xff]
    %v92 = vld [vmem:[#allocation3 + $0x190] sm:$0xff]
    %v93 = vld [vmem:[#allocation3 + $0x198] sm:$0xff]
    %v94 = vld [vmem:[#allocation3 + $0x1a0] sm:$0xff]
    %v95 = vld [vmem:[#allocation3 + $0x1a8] sm:$0xff]
    %v96 = vld [vmem:[#allocation3 + $0x1b0] sm:$0xff]
    %v97 = vld [vmem:[#allocation3 + $0x1b8] sm:$0xff]
    %v98 = vld [vmem:[#allocation3 + $0x1c0] sm:$0xff]
    %v99 = vld [vmem:[#allocation3 + $0x1c8] sm:$0xff]
    %v100 = vld [vmem:[#allocation3 + $0x1d0] sm:$0xff]
    %v101 = vld [vmem:[#allocation3 + $0x1d8] sm:$0xff]
    %v102 = vld [vmem:[#allocation3 + $0x1e0] sm:$0xff]
    %v103 = vld [vmem:[#allocation3 + $0x1e8] sm:$0xff]
    %v104 = vld [vmem:[#allocation3 + $0x1f0] sm:$0xff]
    %v105 = vld [vmem:[#allocation3 + $0x1f8] sm:$0xff]
    %v106 = vpack.c.bf16 %v43, %v42
    %v107 = vpack.c.bf16 %v45, %v44
    %v108 = vpack.c.bf16 %v47, %v46
    %v109 = vpack.c.bf16 %v49, %v48
    %v110 = vpack.c.bf16 %v51, %v50
    %v111 = vpack.c.bf16 %v53, %v52
    %v112 = vpack.c.bf16 %v55, %v54
    %v113 = vpack.c.bf16 %v57, %v56
    %v114 = vpack.c.bf16 %v59, %v58
    %v115 = vpack.c.bf16 %v61, %v60
    %v116 = vpack.c.bf16 %v63, %v62
    %v117 = vpack.c.bf16 %v65, %v64
    %v118 = vpack.c.bf16 %v67, %v66
    %v119 = vpack.c.bf16 %v69, %v68
    %v120 = vpack.c.bf16 %v71, %v70
    %v121 = vpack.c.bf16 %v73, %v72
    %v122 = vpack.c.bf16 %v75, %v74
    %v123 = vpack.c.bf16 %v77, %v76
    %v124 = vpack.c.bf16 %v79, %v78
    %v125 = vpack.c.bf16 %v81, %v80
    %v126 = vpack.c.bf16 %v83, %v82
    %v127 = vpack.c.bf16 %v85, %v84
    %v128 = vpack.c.bf16 %v87, %v86
    %v129 = vpack.c.bf16 %v89, %v88
    %v130 = vpack.c.bf16 %v91, %v90
    %v131 = vpack.c.bf16 %v93, %v92
    %v132 = vpack.c.bf16 %v95, %v94
    %v133 = vpack.c.bf16 %v97, %v96
    %v134 = vpack.c.bf16 %v99, %v98
    %v135 = vpack.c.bf16 %v101, %v100
    %v136 = vpack.c.bf16 %v103, %v102
    %v137 = vpack.c.bf16 %v105, %v104
    %v138 = vld [vmem:[%s1] sm:$0xf]
    %v139 = vld [vmem:[%s1 + $0x4] sm:$0xf]
    %v140 = vld [vmem:[%s1 + $0x8] sm:$0xf]
    %v141 = vld [vmem:[%s1 + $0xc] sm:$0xf]
    %v142 = vld [vmem:[%s1 + $0x10] sm:$0xf]
    %v143 = vld [vmem:[%s1 + $0x14] sm:$0xf]
    %v144 = vld [vmem:[%s1 + $0x18] sm:$0xf]
    %v145 = vld [vmem:[%s1 + $0x1c] sm:$0xf]
    %v146 = vld [vmem:[%s1 + $0x20] sm:$0xf]
    %v147 = vld [vmem:[%s1 + $0x24] sm:$0xf]
    %v148 = vld [vmem:[%s1 + $0x28] sm:$0xf]
    %v149 = vld [vmem:[%s1 + $0x2c] sm:$0xf]
    %v150 = vld [vmem:[%s1 + $0x30] sm:$0xf]
    %v151 = vld [vmem:[%s1 + $0x34] sm:$0xf]
    %v152 = vld [vmem:[%s1 + $0x38] sm:$0xf]
    %v153 = vld [vmem:[%s1 + $0x3c] sm:$0xf]
    %v154 = vld [vmem:[%s2] sm:$0x1]
    %v156 = vlaneseq
    %v157 = vshrl.u32 %v156, 7
    %v158 = vsub.s32 0, %v157
    %v159 = vrot.slane %v154, %v158
    %v177 = vunpack.c.l.b16 %v138
    %v178 = vunpack.c.l.b16 %v139
    %v179 = vunpack.c.l.b16 %v140
    %v180 = vunpack.c.l.b16 %v141
    %v181 = vunpack.c.l.b16 %v142
    %v182 = vunpack.c.l.b16 %v143
    %v183 = vunpack.c.l.b16 %v144
    %v184 = vunpack.c.l.b16 %v145
    %v185 = vunpack.c.l.b16 %v146
    %v186 = vunpack.c.l.b16 %v147
    %v187 = vunpack.c.l.b16 %v148
    %v188 = vunpack.c.l.b16 %v149
    %v189 = vunpack.c.l.b16 %v150
    %v190 = vunpack.c.l.b16 %v151
    %v191 = vunpack.c.l.b16 %v152
    %v192 = vunpack.c.l.b16 %v153
    %v193 = vpack.c.b16 %v178, %v177
    %v194 = vpack.c.b16 %v180, %v179
    %v195 = vpack.c.b16 %v182, %v181
    %v196 = vpack.c.b16 %v184, %v183
    %v197 = vpack.c.b16 %v186, %v185
    %v198 = vpack.c.b16 %v188, %v187
    %v199 = vpack.c.b16 %v190, %v189
    %v200 = vpack.c.b16 %v192, %v191
    %209 = vmatprep.subr.bf16.mxu0 0
    %210 = vmatpush1.bf16.msra.mxu0 %v193
    %211 = vmatprep.subr.bf16.mxu0 0
    %212 = vmatpush1.bf16.msra.mxu0 %v194
    %213 = vmatprep.subr.bf16.mxu0 0
    %214 = vmatpush1.bf16.msra.mxu0 %v195
    %215 = vmatprep.subr.bf16.mxu0 0
    %216 = vmatpush1.bf16.msra.mxu0 %v196
    %217 = vmatprep.subr.bf16.mxu0 0
    %218 = vmatpush1.bf16.msra.mxu0 %v197
    %219 = vmatprep.subr.bf16.mxu0 0
    %220 = vmatpush1.bf16.msra.mxu0 %v198
    %221 = vmatprep.subr.bf16.mxu0 0
    %222 = vmatpush1.bf16.msra.mxu0 %v199
    %223 = vmatprep.subr.bf16.mxu0 0
    %224 = vmatpush1.bf16.msra.mxu0 %v200
    %225 = vmatprep.subr.bf16.mxu0 0
    %226 = vmatpush1.bf16.msra.mxu0 0
    %227 = vmatprep.subr.bf16.mxu0 0
    %228 = vmatpush1.bf16.msra.mxu0 0
    %229 = vmatprep.subr.bf16.mxu0 0
    %230 = vmatpush1.bf16.msra.mxu0 0
    %231 = vmatprep.subr.bf16.mxu0 0
    %232 = vmatpush1.bf16.msra.mxu0 0
    %233 = vmatprep.subr.bf16.mxu0 0
    %234 = vmatpush1.bf16.msra.mxu0 0
    %235 = vmatprep.subr.bf16.mxu0 0
    %236 = vmatpush1.bf16.msra.mxu0 0
    %237 = vmatprep.subr.bf16.mxu0 0
    %238 = vmatpush1.bf16.msra.mxu0 0
    %239 = vmatprep.subr.bf16.mxu0 0
    %240 = vmatpush1.bf16.msra.mxu0 0
    %241 = vmatprep.mubr.bf16.mxu0 0
    %242 = vmatmul.mubr.bf16.gmra.mrb[0].mxu0 %v106
    %v243 = vpop.f32.mrb[0].mxu0
    %v244 = vadd.f32 %v159, %v243
    %v245 = vpop.f32.mrb[0].mxu0
    %v246 = vpop.f32.mrb[0].mxu0
    %v247 = vadd.f32 %v159, %v246
    %v248 = vpop.f32.mrb[0].mxu0
    %249 = vmatprep.mubr.bf16.mxu0 0
    %250 = vmatmul.mubr.bf16.gmra.mrb[0].mxu0 %v107
    %v251 = vpop.f32.mrb[0].mxu0
    %v252 = vadd.f32 %v159, %v251
    %v253 = vpop.f32.mrb[0].mxu0
    %v254 = vpop.f32.mrb[0].mxu0
    %v255 = vadd.f32 %v159, %v254
    %v256 = vpop.f32.mrb[0].mxu0
    %257 = vmatprep.mubr.bf16.mxu0 0
    %258 = vmatmul.mubr.bf16.gmra.mrb[0].mxu0 %v108
    %v259 = vpop.f32.mrb[0].mxu0
    %v260 = vadd.f32 %v159, %v259
    %v261 = vpop.f32.mrb[0].mxu0
    %v262 = vpop.f32.mrb[0].mxu0
    %v263 = vadd.f32 %v159, %v262
    %v264 = vpop.f32.mrb[0].mxu0
    %265 = vmatprep.mubr.bf16.mxu0 0
    %266 = vmatmul.mubr.bf16.gmra.mrb[0].mxu0 %v109
    %v267 = vpop.f32.mrb[0].mxu0
    %v268 = vadd.f32 %v159, %v267
    %v269 = vpop.f32.mrb[0].mxu0
    %v270 = vpop.f32.mrb[0].mxu0
    %v271 = vadd.f32 %v159, %v270
    %v272 = vpop.f32.mrb[0].mxu0
    %273 = vmatprep.mubr.bf16.mxu0 0
    %274 = vmatmul.mubr.bf16.gmra.mrb[0].mxu0 %v110
    %v275 = vpop.f32.mrb[0].mxu0
    %v276 = vadd.f32 %v159, %v275
    %v277 = vpop.f32.mrb[0].mxu0
    %v278 = vpop.f32.mrb[0].mxu0
    %v279 = vadd.f32 %v159, %v278
    %v280 = vpop.f32.mrb[0].mxu0
    %281 = vmatprep.mubr.bf16.mxu0 0
    %282 = vmatmul.mubr.bf16.gmra.mrb[0].mxu0 %v111
    %v283 = vpop.f32.mrb[0].mxu0
    %v284 = vadd.f32 %v159, %v283
    %v285 = vpop.f32.mrb[0].mxu0
    %v286 = vpop.f32.mrb[0].mxu0
    %v287 = vadd.f32 %v159, %v286
    %v288 = vpop.f32.mrb[0].mxu0
    %289 = vmatprep.mubr.bf16.mxu0 0
    %290 = vmatmul.mubr.bf16.gmra.mrb[0].mxu0 %v112
    %v291 = vpop.f32.mrb[0].mxu0
    %v292 = vadd.f32 %v159, %v291
    %v293 = vpop.f32.mrb[0].mxu0
    %v294 = vpop.f32.mrb[0].mxu0
    %v295 = vadd.f32 %v159, %v294
    %v296 = vpop.f32.mrb[0].mxu0
    %297 = vmatprep.mubr.bf16.mxu0 0
    %298 = vmatmul.mubr.bf16.gmra.mrb[0].mxu0 %v113
    %v299 = vpop.f32.mrb[0].mxu0
    %v300 = vadd.f32 %v159, %v299
    %v301 = vpop.f32.mrb[0].mxu0
    %v302 = vpop.f32.mrb[0].mxu0
    %v303 = vadd.f32 %v159, %v302
    %v304 = vpop.f32.mrb[0].mxu0
    %305 = vmatprep.mubr.bf16.mxu0 0
    %306 = vmatmul.mubr.bf16.gmra.mrb[0].mxu0 %v114
    %v307 = vpop.f32.mrb[0].mxu0
    %v308 = vadd.f32 %v159, %v307
    %v309 = vpop.f32.mrb[0].mxu0
    %v310 = vpop.f32.mrb[0].mxu0
    %v311 = vadd.f32 %v159, %v310
    %v312 = vpop.f32.mrb[0].mxu0
    %313 = vmatprep.mubr.bf16.mxu0 0
    %314 = vmatmul.mubr.bf16.gmra.mrb[0].mxu0 %v115
    %v315 = vpop.f32.mrb[0].mxu0
    %v316 = vadd.f32 %v159, %v315
    %v317 = vpop.f32.mrb[0].mxu0
    %v318 = vpop.f32.mrb[0].mxu0
    %v319 = vadd.f32 %v159, %v318
    %v320 = vpop.f32.mrb[0].mxu0
    %321 = vmatprep.mubr.bf16.mxu0 0
    %322 = vmatmul.mubr.bf16.gmra.mrb[0].mxu0 %v116
    %v323 = vpop.f32.mrb[0].mxu0
    %v324 = vadd.f32 %v159, %v323
    %v325 = vpop.f32.mrb[0].mxu0
    %v326 = vpop.f32.mrb[0].mxu0
    %v327 = vadd.f32 %v159, %v326
    %v328 = vpop.f32.mrb[0].mxu0
    %329 = vmatprep.mubr.bf16.mxu0 0
    %330 = vmatmul.mubr.bf16.gmra.mrb[0].mxu0 %v117
    %v331 = vpop.f32.mrb[0].mxu0
    %v332 = vadd.f32 %v159, %v331
    %v333 = vpop.f32.mrb[0].mxu0
    %v334 = vpop.f32.mrb[0].mxu0
    %v335 = vadd.f32 %v159, %v334
    %v336 = vpop.f32.mrb[0].mxu0
    %337 = vmatprep.mubr.bf16.mxu0 0
    %338 = vmatmul.mubr.bf16.gmra.mrb[0].mxu0 %v118
    %v339 = vpop.f32.mrb[0].mxu0
    %v340 = vadd.f32 %v159, %v339
    %v341 = vpop.f32.mrb[0].mxu0
    %v342 = vpop.f32.mrb[0].mxu0
    %v343 = vadd.f32 %v159, %v342
    %v344 = vpop.f32.mrb[0].mxu0
    %345 = vmatprep.mubr.bf16.mxu0 0
    %346 = vmatmul.mubr.bf16.gmra.mrb[0].mxu0 %v119
    %v347 = vpop.f32.mrb[0].mxu0
    %v348 = vadd.f32 %v159, %v347
    %v349 = vpop.f32.mrb[0].mxu0
    %v350 = vpop.f32.mrb[0].mxu0
    %v351 = vadd.f32 %v159, %v350
    %v352 = vpop.f32.mrb[0].mxu0
    %353 = vmatprep.mubr.bf16.mxu0 0
    %354 = vmatmul.mubr.bf16.gmra.mrb[0].mxu0 %v120
    %v355 = vpop.f32.mrb[0].mxu0
    %v356 = vadd.f32 %v159, %v355
    %v357 = vpop.f32.mrb[0].mxu0
    %v358 = vpop.f32.mrb[0].mxu0
    %v359 = vadd.f32 %v159, %v358
    %v360 = vpop.f32.mrb[0].mxu0
    %361 = vmatprep.mubr.bf16.mxu0 0
    %362 = vmatmul.mubr.bf16.gmra.mrb[0].mxu0 %v121
    %v363 = vpop.f32.mrb[0].mxu0
    %v364 = vadd.f32 %v159, %v363
    %v365 = vpop.f32.mrb[0].mxu0
    %v366 = vpop.f32.mrb[0].mxu0
    %v367 = vadd.f32 %v159, %v366
    %v368 = vpop.f32.mrb[0].mxu0
    %369 = vmatprep.mubr.bf16.mxu0 0
    %370 = vmatmul.mubr.bf16.gmra.mrb[0].mxu0 %v122
    %v371 = vpop.f32.mrb[0].mxu0
    %v372 = vadd.f32 %v159, %v371
    %v373 = vpop.f32.mrb[0].mxu0
    %v374 = vpop.f32.mrb[0].mxu0
    %v375 = vadd.f32 %v159, %v374
    %v376 = vpop.f32.mrb[0].mxu0
    %377 = vmatprep.mubr.bf16.mxu0 0
    %378 = vmatmul.mubr.bf16.gmra.mrb[0].mxu0 %v123
    %v379 = vpop.f32.mrb[0].mxu0
    %v380 = vadd.f32 %v159, %v379
    %v381 = vpop.f32.mrb[0].mxu0
    %v382 = vpop.f32.mrb[0].mxu0
    %v383 = vadd.f32 %v159, %v382
    %v384 = vpop.f32.mrb[0].mxu0
    %385 = vmatprep.mubr.bf16.mxu0 0
    %386 = vmatmul.mubr.bf16.gmra.mrb[0].mxu0 %v124
    %v387 = vpop.f32.mrb[0].mxu0
    %v388 = vadd.f32 %v159, %v387
    %v389 = vpop.f32.mrb[0].mxu0
    %v390 = vpop.f32.mrb[0].mxu0
    %v391 = vadd.f32 %v159, %v390
    %v392 = vpop.f32.mrb[0].mxu0
    %393 = vmatprep.mubr.bf16.mxu0 0
    %394 = vmatmul.mubr.bf16.gmra.mrb[0].mxu0 %v125
    %v395 = vpop.f32.mrb[0].mxu0
    %v396 = vadd.f32 %v159, %v395
    %v397 = vpop.f32.mrb[0].mxu0
    %v398 = vpop.f32.mrb[0].mxu0
    %v399 = vadd.f32 %v159, %v398
    %v400 = vpop.f32.mrb[0].mxu0
    %401 = vmatprep.mubr.bf16.mxu0 0
    %402 = vmatmul.mubr.bf16.gmra.mrb[0].mxu0 %v126
    %v403 = vpop.f32.mrb[0].mxu0
    %v404 = vadd.f32 %v159, %v403
    %v405 = vpop.f32.mrb[0].mxu0
    %v406 = vpop.f32.mrb[0].mxu0
    %v407 = vadd.f32 %v159, %v406
    %v408 = vpop.f32.mrb[0].mxu0
    %409 = vmatprep.mubr.bf16.mxu0 0
    %410 = vmatmul.mubr.bf16.gmra.mrb[0].mxu0 %v127
    %v411 = vpop.f32.mrb[0].mxu0
    %v412 = vadd.f32 %v159, %v411
    %v413 = vpop.f32.mrb[0].mxu0
    %v414 = vpop.f32.mrb[0].mxu0
    %v415 = vadd.f32 %v159, %v414
    %v416 = vpop.f32.mrb[0].mxu0
    %417 = vmatprep.mubr.bf16.mxu0 0
    %418 = vmatmul.mubr.bf16.gmra.mrb[0].mxu0 %v128
    %v419 = vpop.f32.mrb[0].mxu0
    %v420 = vadd.f32 %v159, %v419
    %v421 = vpop.f32.mrb[0].mxu0
    %v422 = vpop.f32.mrb[0].mxu0
    %v423 = vadd.f32 %v159, %v422
    %v424 = vpop.f32.mrb[0].mxu0
    %425 = vmatprep.mubr.bf16.mxu0 0
    %426 = vmatmul.mubr.bf16.gmra.mrb[0].mxu0 %v129
    %v427 = vpop.f32.mrb[0].mxu0
    %v428 = vadd.f32 %v159, %v427
    %v429 = vpop.f32.mrb[0].mxu0
    %v430 = vpop.f32.mrb[0].mxu0
    %v431 = vadd.f32 %v159, %v430
    %v432 = vpop.f32.mrb[0].mxu0
    %433 = vmatprep.mubr.bf16.mxu0 0
    %434 = vmatmul.mubr.bf16.gmra.mrb[0].mxu0 %v130
    %v435 = vpop.f32.mrb[0].mxu0
    %v436 = vadd.f32 %v159, %v435
    %v437 = vpop.f32.mrb[0].mxu0
    %v438 = vpop.f32.mrb[0].mxu0
    %v439 = vadd.f32 %v159, %v438
    %v440 = vpop.f32.mrb[0].mxu0
    %441 = vmatprep.mubr.bf16.mxu0 0
    %442 = vmatmul.mubr.bf16.gmra.mrb[0].mxu0 %v131
    %v443 = vpop.f32.mrb[0].mxu0
    %v444 = vadd.f32 %v159, %v443
    %v445 = vpop.f32.mrb[0].mxu0
    %v446 = vpop.f32.mrb[0].mxu0
    %v447 = vadd.f32 %v159, %v446
    %v448 = vpop.f32.mrb[0].mxu0
    %449 = vmatprep.mubr.bf16.mxu0 0
    %450 = vmatmul.mubr.bf16.gmra.mrb[0].mxu0 %v132
    %v451 = vpop.f32.mrb[0].mxu0
    %v452 = vadd.f32 %v159, %v451
    %v453 = vpop.f32.mrb[0].mxu0
    %v454 = vpop.f32.mrb[0].mxu0
    %v455 = vadd.f32 %v159, %v454
    %v456 = vpop.f32.mrb[0].mxu0
    %457 = vmatprep.mubr.bf16.mxu0 0
    %458 = vmatmul.mubr.bf16.gmra.mrb[0].mxu0 %v133
    %v459 = vpop.f32.mrb[0].mxu0
    %v460 = vadd.f32 %v159, %v459
    %v461 = vpop.f32.mrb[0].mxu0
    %v462 = vpop.f32.mrb[0].mxu0
    %v463 = vadd.f32 %v159, %v462
    %v464 = vpop.f32.mrb[0].mxu0
    %465 = vmatprep.mubr.bf16.mxu0 0
    %466 = vmatmul.mubr.bf16.gmra.mrb[0].mxu0 %v134
    %v467 = vpop.f32.mrb[0].mxu0
    %v468 = vadd.f32 %v159, %v467
    %v469 = vpop.f32.mrb[0].mxu0
    %v470 = vpop.f32.mrb[0].mxu0
    %v471 = vadd.f32 %v159, %v470
    %v472 = vpop.f32.mrb[0].mxu0
    %473 = vmatprep.mubr.bf16.mxu0 0
    %474 = vmatmul.mubr.bf16.gmra.mrb[0].mxu0 %v135
    %v475 = vpop.f32.mrb[0].mxu0
    %v476 = vadd.f32 %v159, %v475
    %v477 = vpop.f32.mrb[0].mxu0
    %v478 = vpop.f32.mrb[0].mxu0
    %v479 = vadd.f32 %v159, %v478
    %v480 = vpop.f32.mrb[0].mxu0
    %481 = vmatprep.mubr.bf16.mxu0 0
    %482 = vmatmul.mubr.bf16.gmra.mrb[0].mxu0 %v136
    %v483 = vpop.f32.mrb[0].mxu0
    %v484 = vadd.f32 %v159, %v483
    %v485 = vpop.f32.mrb[0].mxu0
    %v486 = vpop.f32.mrb[0].mxu0
    %v487 = vadd.f32 %v159, %v486
    %v488 = vpop.f32.mrb[0].mxu0
    %489 = vmatprep.mubr.bf16.mxu0 0
    %490 = vmatmul.mubr.bf16.gmra.mrb[0].mxu0 %v137
    %v491 = vpop.f32.mrb[0].mxu0
    %v492 = vadd.f32 %v159, %v491
    %v493 = vpop.f32.mrb[0].mxu0
    %v494 = vpop.f32.mrb[0].mxu0
    %v495 = vadd.f32 %v159, %v494
    %v496 = vpop.f32.mrb[0].mxu0
    %497 = vdwg.mxu0
    %v498 = vmax.f32 %v244, 0.0
    %v499 = vmax.f32 %v247, 0.0
    %v500 = vmax.f32 %v252, 0.0
    %v501 = vmax.f32 %v255, 0.0
    %v502 = vmax.f32 %v260, 0.0
    %v503 = vmax.f32 %v263, 0.0
    %v504 = vmax.f32 %v268, 0.0
    %v505 = vmax.f32 %v271, 0.0
    %v506 = vmax.f32 %v276, 0.0
    %v507 = vmax.f32 %v279, 0.0
    %v508 = vmax.f32 %v284, 0.0
    %v509 = vmax.f32 %v287, 0.0
    %v510 = vmax.f32 %v292, 0.0
    %v511 = vmax.f32 %v295, 0.0
    %v512 = vmax.f32 %v300, 0.0
    %v513 = vmax.f32 %v303, 0.0
    %v514 = vmax.f32 %v308, 0.0
    %v515 = vmax.f32 %v311, 0.0
    %v516 = vmax.f32 %v316, 0.0
    %v517 = vmax.f32 %v319, 0.0
    %v518 = vmax.f32 %v324, 0.0
    %v519 = vmax.f32 %v327, 0.0
    %v520 = vmax.f32 %v332, 0.0
    %v521 = vmax.f32 %v335, 0.0
    %v522 = vmax.f32 %v340, 0.0
    %v523 = vmax.f32 %v343, 0.0
    %v524 = vmax.f32 %v348, 0.0
    %v525 = vmax.f32 %v351, 0.0
    %v526 = vmax.f32 %v356, 0.0
    %v527 = vmax.f32 %v359, 0.0
    %v528 = vmax.f32 %v364, 0.0
    %v529 = vmax.f32 %v367, 0.0
    %v530 = vmax.f32 %v372, 0.0
    %v531 = vmax.f32 %v375, 0.0
    %v532 = vmax.f32 %v380, 0.0
    %v533 = vmax.f32 %v383, 0.0
    %v534 = vmax.f32 %v388, 0.0
    %v535 = vmax.f32 %v391, 0.0
    %v536 = vmax.f32 %v396, 0.0
    %v537 = vmax.f32 %v399, 0.0
    %v538 = vmax.f32 %v404, 0.0
    %v539 = vmax.f32 %v407, 0.0
    %v540 = vmax.f32 %v412, 0.0
    %v541 = vmax.f32 %v415, 0.0
    %v542 = vmax.f32 %v420, 0.0
    %v543 = vmax.f32 %v423, 0.0
    %v544 = vmax.f32 %v428, 0.0
    %v545 = vmax.f32 %v431, 0.0
    %v546 = vmax.f32 %v436, 0.0
    %v547 = vmax.f32 %v439, 0.0
    %v548 = vmax.f32 %v444, 0.0
    %v549 = vmax.f32 %v447, 0.0
    %v550 = vmax.f32 %v452, 0.0
    %v551 = vmax.f32 %v455, 0.0
    %v552 = vmax.f32 %v460, 0.0
    %v553 = vmax.f32 %v463, 0.0
    %v554 = vmax.f32 %v468, 0.0
    %v555 = vmax.f32 %v471, 0.0
    %v556 = vmax.f32 %v476, 0.0
    %v557 = vmax.f32 %v479, 0.0
    %v558 = vmax.f32 %v484, 0.0
    %v559 = vmax.f32 %v487, 0.0
    %v560 = vmax.f32 %v492, 0.0
    %v561 = vmax.f32 %v495, 0.0
    %vm562 = vcmask 31744
    %563 = vst.msk [vmem:[#allocation2] sm:$0xff] %vm562, 0.0
    %564 = vst.msk [vmem:[#allocation2 + $0x8] sm:$0xff] %vm562, 0.0
    %vm565 = vcmask 25600
    %566 = vst.msk [vmem:[#allocation2 + $0x10] sm:$0x3] %vm565, 0.0
    %567 = vst.msk [vmem:[#allocation2 + $0x1b0] sm:$0xff] %vm562, 0.0
    %568 = vst.msk [vmem:[#allocation2 + $0x1b8] sm:$0xff] %vm562, 0.0
    %569 = vst.msk [vmem:[#allocation2 + $0x1c0] sm:$0x3] %vm565, 0.0
    %s570 = scalar_lea.vmem [#allocation2], 408
    %571 = vst.msk [vmem:[%s570] sm:$0xff] %vm562, 0.0
    %572 = vst.msk [vmem:[%s570 + $0x8] sm:$0xff] %vm562, 0.0
    %573 = vst.msk [vmem:[%s570 + $0x10] sm:$0x3] %vm565, 0.0
    %574 = vst.msk [vmem:[%s570 + $0x1b0] sm:$0xff] %vm562, 0.0
    %575 = vst.msk [vmem:[%s570 + $0x1b8] sm:$0xff] %vm562, 0.0
    %576 = vst.msk [vmem:[%s570 + $0x1c0] sm:$0x3] %vm565, 0.0
    %s577 = scalar_lea.vmem [#allocation2], 24
    %vm578 = vcmask 24576
    %579 = vst.msk [vmem:[%s577] sm:$0x1] %vm578, 0.0
    %580 = vst.msk [vmem:[%s577 + $0x18] sm:$0x1] %vm578, 0.0
    %581 = vst.msk [vmem:[%s577 + $0x30] sm:$0x1] %vm578, 0.0
    %582 = vst.msk [vmem:[%s577 + $0x48] sm:$0x1] %vm578, 0.0
    %583 = vst.msk [vmem:[%s577 + $0x60] sm:$0x1] %vm578, 0.0
    %584 = vst.msk [vmem:[%s577 + $0x78] sm:$0x1] %vm578, 0.0
    %585 = vst.msk [vmem:[%s577 + $0x90] sm:$0x1] %vm578, 0.0
    %586 = vst.msk [vmem:[%s577 + $0xa8] sm:$0x1] %vm578, 0.0
    %587 = vst.msk [vmem:[%s577 + $0xc0] sm:$0x1] %vm578, 0.0
    %588 = vst.msk [vmem:[%s577 + $0xd8] sm:$0x1] %vm578, 0.0
    %589 = vst.msk [vmem:[%s577 + $0xf0] sm:$0x1] %vm578, 0.0
    %590 = vst.msk [vmem:[%s577 + $0x108] sm:$0x1] %vm578, 0.0
    %591 = vst.msk [vmem:[%s577 + $0x120] sm:$0x1] %vm578, 0.0
    %592 = vst.msk [vmem:[%s577 + $0x138] sm:$0x1] %vm578, 0.0
    %593 = vst.msk [vmem:[%s577 + $0x150] sm:$0x1] %vm578, 0.0
    %594 = vst.msk [vmem:[%s577 + $0x168] sm:$0x1] %vm578, 0.0
    %595 = vst.msk [vmem:[%s577 + $0x1b0] sm:$0x1] %vm578, 0.0
    %596 = vst.msk [vmem:[%s577 + $0x1c8] sm:$0x1] %vm578, 0.0
    %597 = vst.msk [vmem:[%s577 + $0x1e0] sm:$0x1] %vm578, 0.0
    %598 = vst.msk [vmem:[%s577 + $0x1f8] sm:$0x1] %vm578, 0.0
    %599 = vst.msk [vmem:[%s577 + $0x210] sm:$0x1] %vm578, 0.0
    %600 = vst.msk [vmem:[%s577 + $0x228] sm:$0x1] %vm578, 0.0
    %601 = vst.msk [vmem:[%s577 + $0x240] sm:$0x1] %vm578, 0.0
    %602 = vst.msk [vmem:[%s577 + $0x258] sm:$0x1] %vm578, 0.0
    %603 = vst.msk [vmem:[%s577 + $0x270] sm:$0x1] %vm578, 0.0
    %604 = vst.msk [vmem:[%s577 + $0x288] sm:$0x1] %vm578, 0.0
    %605 = vst.msk [vmem:[%s577 + $0x2a0] sm:$0x1] %vm578, 0.0
    %606 = vst.msk [vmem:[%s577 + $0x2b8] sm:$0x1] %vm578, 0.0
    %607 = vst.msk [vmem:[%s577 + $0x2d0] sm:$0x1] %vm578, 0.0
    %608 = vst.msk [vmem:[%s577 + $0x2e8] sm:$0x1] %vm578, 0.0
    %609 = vst.msk [vmem:[%s577 + $0x300] sm:$0x1] %vm578, 0.0
    %610 = vst.msk [vmem:[%s577 + $0x318] sm:$0x1] %vm578, 0.0
    %611 = vst.msk [vmem:[%s577 + $0x11] sm:$0x1] %vm578, 0.0
    %612 = vst.msk [vmem:[%s577 + $0x29] sm:$0x1] %vm578, 0.0
    %613 = vst.msk [vmem:[%s577 + $0x41] sm:$0x1] %vm578, 0.0
    %614 = vst.msk [vmem:[%s577 + $0x59] sm:$0x1] %vm578, 0.0
    %615 = vst.msk [vmem:[%s577 + $0x71] sm:$0x1] %vm578, 0.0
    %616 = vst.msk [vmem:[%s577 + $0x89] sm:$0x1] %vm578, 0.0
    %617 = vst.msk [vmem:[%s577 + $0xa1] sm:$0x1] %vm578, 0.0
    %618 = vst.msk [vmem:[%s577 + $0xb9] sm:$0x1] %vm578, 0.0
    %619 = vst.msk [vmem:[%s577 + $0xd1] sm:$0x1] %vm578, 0.0
    %620 = vst.msk [vmem:[%s577 + $0xe9] sm:$0x1] %vm578, 0.0
    %621 = vst.msk [vmem:[%s577 + $0x101] sm:$0x1] %vm578, 0.0
    %622 = vst.msk [vmem:[%s577 + $0x119] sm:$0x1] %vm578, 0.0
    %623 = vst.msk [vmem:[%s577 + $0x131] sm:$0x1] %vm578, 0.0
    %624 = vst.msk [vmem:[%s577 + $0x149] sm:$0x1] %vm578, 0.0
    %625 = vst.msk [vmem:[%s577 + $0x161] sm:$0x1] %vm578, 0.0
    %626 = vst.msk [vmem:[%s577 + $0x179] sm:$0x1] %vm578, 0.0
    %627 = vst.msk [vmem:[%s577 + $0x1c1] sm:$0x1] %vm578, 0.0
    %628 = vst.msk [vmem:[%s577 + $0x1d9] sm:$0x1] %vm578, 0.0
    %629 = vst.msk [vmem:[%s577 + $0x1f1] sm:$0x1] %vm578, 0.0
    %630 = vst.msk [vmem:[%s577 + $0x209] sm:$0x1] %vm578, 0.0
    %631 = vst.msk [vmem:[%s577 + $0x221] sm:$0x1] %vm578, 0.0
    %632 = vst.msk [vmem:[%s577 + $0x239] sm:$0x1] %vm578, 0.0
    %633 = vst.msk [vmem:[%s577 + $0x251] sm:$0x1] %vm578, 0.0
    %634 = vst.msk [vmem:[%s577 + $0x269] sm:$0x1] %vm578, 0.0
    %635 = vst.msk [vmem:[%s577 + $0x281] sm:$0x1] %vm578, 0.0
    %636 = vst.msk [vmem:[%s577 + $0x299] sm:$0x1] %vm578, 0.0
    %637 = vst.msk [vmem:[%s577 + $0x2b1] sm:$0x1] %vm578, 0.0
    %638 = vst.msk [vmem:[%s577 + $0x2c9] sm:$0x1] %vm578, 0.0
    %639 = vst.msk [vmem:[%s577 + $0x2e1] sm:$0x1] %vm578, 0.0
    %640 = vst.msk [vmem:[%s577 + $0x2f9] sm:$0x1] %vm578, 0.0
    %641 = vst.msk [vmem:[%s577 + $0x311] sm:$0x1] %vm578, 0.0
    %642 = vst.msk [vmem:[%s577 + $0x329] sm:$0x1] %vm578, 0.0
    %643 = vst.msk [vmem:[%s577 + $0x1] sm:$0xff] %vm562, %v498
    %644 = vst.msk [vmem:[%s577 + $0x9] sm:$0xff] %vm562, %v499
    %645 = vst.msk [vmem:[%s577 + $0x19] sm:$0xff] %vm562, %v500
    %646 = vst.msk [vmem:[%s577 + $0x21] sm:$0xff] %vm562, %v501
    %647 = vst.msk [vmem:[%s577 + $0x31] sm:$0xff] %vm562, %v502
    %648 = vst.msk [vmem:[%s577 + $0x39] sm:$0xff] %vm562, %v503
    %649 = vst.msk [vmem:[%s577 + $0x49] sm:$0xff] %vm562, %v504
    %650 = vst.msk [vmem:[%s577 + $0x51] sm:$0xff] %vm562, %v505
    %651 = vst.msk [vmem:[%s577 + $0x61] sm:$0xff] %vm562, %v506
    %652 = vst.msk [vmem:[%s577 + $0x69] sm:$0xff] %vm562, %v507
    %653 = vst.msk [vmem:[%s577 + $0x79] sm:$0xff] %vm562, %v508
    %654 = vst.msk [vmem:[%s577 + $0x81] sm:$0xff] %vm562, %v509
    %655 = vst.msk [vmem:[%s577 + $0x91] sm:$0xff] %vm562, %v510
    %656 = vst.msk [vmem:[%s577 + $0x99] sm:$0xff] %vm562, %v511
    %657 = vst.msk [vmem:[%s577 + $0xa9] sm:$0xff] %vm562, %v512
    %658 = vst.msk [vmem:[%s577 + $0xb1] sm:$0xff] %vm562, %v513
    %659 = vst.msk [vmem:[%s577 + $0xc1] sm:$0xff] %vm562, %v514
    %660 = vst.msk [vmem:[%s577 + $0xc9] sm:$0xff] %vm562, %v515
    %661 = vst.msk [vmem:[%s577 + $0xd9] sm:$0xff] %vm562, %v516
    %662 = vst.msk [vmem:[%s577 + $0xe1] sm:$0xff] %vm562, %v517
    %663 = vst.msk [vmem:[%s577 + $0xf1] sm:$0xff] %vm562, %v518
    %664 = vst.msk [vmem:[%s577 + $0xf9] sm:$0xff] %vm562, %v519
    %665 = vst.msk [vmem:[%s577 + $0x109] sm:$0xff] %vm562, %v520
    %666 = vst.msk [vmem:[%s577 + $0x111] sm:$0xff] %vm562, %v521
    %667 = vst.msk [vmem:[%s577 + $0x121] sm:$0xff] %vm562, %v522
    %668 = vst.msk [vmem:[%s577 + $0x129] sm:$0xff] %vm562, %v523
    %669 = vst.msk [vmem:[%s577 + $0x139] sm:$0xff] %vm562, %v524
    %670 = vst.msk [vmem:[%s577 + $0x141] sm:$0xff] %vm562, %v525
    %671 = vst.msk [vmem:[%s577 + $0x151] sm:$0xff] %vm562, %v526
    %672 = vst.msk [vmem:[%s577 + $0x159] sm:$0xff] %vm562, %v527
    %673 = vst.msk [vmem:[%s577 + $0x169] sm:$0xff] %vm562, %v528
    %674 = vst.msk [vmem:[%s577 + $0x171] sm:$0xff] %vm562, %v529
    %675 = vst.msk [vmem:[%s577 + $0x1b1] sm:$0xff] %vm562, %v530
    %676 = vst.msk [vmem:[%s577 + $0x1b9] sm:$0xff] %vm562, %v531
    %677 = vst.msk [vmem:[%s577 + $0x1c9] sm:$0xff] %vm562, %v532
    %678 = vst.msk [vmem:[%s577 + $0x1d1] sm:$0xff] %vm562, %v533
    %679 = vst.msk [vmem:[%s577 + $0x1e1] sm:$0xff] %vm562, %v534
    %680 = vst.msk [vmem:[%s577 + $0x1e9] sm:$0xff] %vm562, %v535
    %681 = vst.msk [vmem:[%s577 + $0x1f9] sm:$0xff] %vm562, %v536
    %682 = vst.msk [vmem:[%s577 + $0x201] sm:$0xff] %vm562, %v537
    %683 = vst.msk [vmem:[%s577 + $0x211] sm:$0xff] %vm562, %v538
    %684 = vst.msk [vmem:[%s577 + $0x219] sm:$0xff] %vm562, %v539
    %685 = vst.msk [vmem:[%s577 + $0x229] sm:$0xff] %vm562, %v540
    %686 = vst.msk [vmem:[%s577 + $0x231] sm:$0xff] %vm562, %v541
    %687 = vst.msk [vmem:[%s577 + $0x241] sm:$0xff] %vm562, %v542
    %688 = vst.msk [vmem:[%s577 + $0x249] sm:$0xff] %vm562, %v543
    %689 = vst.msk [vmem:[%s577 + $0x259] sm:$0xff] %vm562, %v544
    %690 = vst.msk [vmem:[%s577 + $0x261] sm:$0xff] %vm562, %v545
    %691 = vst.msk [vmem:[%s577 + $0x271] sm:$0xff] %vm562, %v546
    %692 = vst.msk [vmem:[%s577 + $0x279] sm:$0xff] %vm562, %v547
    %693 = vst.msk [vmem:[%s577 + $0x289] sm:$0xff] %vm562, %v548
    %694 = vst.msk [vmem:[%s577 + $0x291] sm:$0xff] %vm562, %v549
    %695 = vst.msk [vmem:[%s577 + $0x2a1] sm:$0xff] %vm562, %v550
    %696 = vst.msk [vmem:[%s577 + $0x2a9] sm:$0xff] %vm562, %v551
    %697 = vst.msk [vmem:[%s577 + $0x2b9] sm:$0xff] %vm562, %v552
    %698 = vst.msk [vmem:[%s577 + $0x2c1] sm:$0xff] %vm562, %v553
    %699 = vst.msk [vmem:[%s577 + $0x2d1] sm:$0xff] %vm562, %v554
    %700 = vst.msk [vmem:[%s577 + $0x2d9] sm:$0xff] %vm562, %v555
    %701 = vst.msk [vmem:[%s577 + $0x2e9] sm:$0xff] %vm562, %v556
    %702 = vst.msk [vmem:[%s577 + $0x2f1] sm:$0xff] %vm562, %v557
    %703 = vst.msk [vmem:[%s577 + $0x301] sm:$0xff] %vm562, %v558
    %704 = vst.msk [vmem:[%s577 + $0x309] sm:$0xff] %vm562, %v559
    %705 = vst.msk [vmem:[%s577 + $0x319] sm:$0xff] %vm562, %v560
    %706 = vst.msk [vmem:[%s577 + $0x321] sm:$0xff] %vm562, %v561
    %v707 = vld [vmem:[#allocation2] sm:$0xff]
    %v708 = vld [vmem:[#allocation2 + $0x8] sm:$0xff]
    %v709 = vld [vmem:[#allocation2 + $0x18] sm:$0xff]
    %v710 = vld [vmem:[#allocation2 + $0x20] sm:$0xff]
    %v711 = vld [vmem:[#allocation2 + $0x30] sm:$0xff]
    %v712 = vld [vmem:[#allocation2 + $0x38] sm:$0xff]
    %v713 = vld [vmem:[#allocation2 + $0x48] sm:$0xff]
    %v714 = vld [vmem:[#allocation2 + $0x50] sm:$0xff]
    %v715 = vld [vmem:[#allocation2 + $0x60] sm:$0xff]
    %v716 = vld [vmem:[#allocation2 + $0x68] sm:$0xff]
    %v717 = vld [vmem:[#allocation2 + $0x78] sm:$0xff]
    %v718 = vld [vmem:[#allocation2 + $0x80] sm:$0xff]
    %v719 = vld [vmem:[#allocation2 + $0x90] sm:$0xff]
    %v720 = vld [vmem:[#allocation2 + $0x98] sm:$0xff]
    %v721 = vld [vmem:[#allocation2 + $0xa8] sm:$0xff]
    %v722 = vld [vmem:[#allocation2 + $0xb0] sm:$0xff]
    %v723 = vld [vmem:[#allocation2 + $0xc0] sm:$0xff]
    %v724 = vld [vmem:[#allocation2 + $0xc8] sm:$0xff]
    %v725 = vld [vmem:[#allocation2 + $0xd8] sm:$0xff]
    %v726 = vld [vmem:[#allocation2 + $0xe0] sm:$0xff]
    %v727 = vld [vmem:[#allocation2 + $0xf0] sm:$0xff]
    %v728 = vld [vmem:[#allocation2 + $0xf8] sm:$0xff]
    %v729 = vld [vmem:[#allocation2 + $0x108] sm:$0xff]
    %v730 = vld [vmem:[#allocation2 + $0x110] sm:$0xff]
    %v731 = vld [vmem:[#allocation2 + $0x120] sm:$0xff]
    %v732 = vld [vmem:[#allocation2 + $0x128] sm:$0xff]
    %v733 = vld [vmem:[#allocation2 + $0x138] sm:$0xff]
    %v734 = vld [vmem:[#allocation2 + $0x140] sm:$0xff]
    %v735 = vld [vmem:[#allocation2 + $0x150] sm:$0xff]
    %v736 = vld [vmem:[#allocation2 + $0x158] sm:$0xff]
    %v737 = vld [vmem:[#allocation2 + $0x168] sm:$0xff]
    %v738 = vld [vmem:[#allocation2 + $0x170] sm:$0xff]
    %v739 = vld [vmem:[#allocation2 + $0x1b0] sm:$0xff]
    %v740 = vld [vmem:[#allocation2 + $0x1b8] sm:$0xff]
    %v741 = vld [vmem:[#allocation2 + $0x1c8] sm:$0xff]
    %v742 = vld [vmem:[#allocation2 + $0x1d0] sm:$0xff]
    %v743 = vld [vmem:[#allocation2 + $0x1e0] sm:$0xff]
    %v744 = vld [vmem:[#allocation2 + $0x1e8] sm:$0xff]
    %v745 = vld [vmem:[#allocation2 + $0x1f8] sm:$0xff]
    %v746 = vld [vmem:[#allocation2 + $0x200] sm:$0xff]
    %v747 = vld [vmem:[#allocation2 + $0x210] sm:$0xff]
    %v748 = vld [vmem:[#allocation2 + $0x218] sm:$0xff]
    %v749 = vld [vmem:[#allocation2 + $0x228] sm:$0xff]
    %v750 = vld [vmem:[#allocation2 + $0x230] sm:$0xff]
    %v751 = vld [vmem:[#allocation2 + $0x240] sm:$0xff]
    %v752 = vld [vmem:[#allocation2 + $0x248] sm:$0xff]
    %v753 = vld [vmem:[#allocation2 + $0x258] sm:$0xff]
    %v754 = vld [vmem:[#allocation2 + $0x260] sm:$0xff]
    %v755 = vld [vmem:[#allocation2 + $0x270] sm:$0xff]
    %v756 = vld [vmem:[#allocation2 + $0x278] sm:$0xff]
    %v757 = vld [vmem:[#allocation2 + $0x288] sm:$0xff]
    %v758 = vld [vmem:[#allocation2 + $0x290] sm:$0xff]
    %v759 = vld [vmem:[#allocation2 + $0x2a0] sm:$0xff]
    %v760 = vld [vmem:[#allocation2 + $0x2a8] sm:$0xff]
    %v761 = vld [vmem:[#allocation2 + $0x2b8] sm:$0xff]
    %v762 = vld [vmem:[#allocation2 + $0x2c0] sm:$0xff]
    %v763 = vld [vmem:[#allocation2 + $0x2d0] sm:$0xff]
    %v764 = vld [vmem:[#allocation2 + $0x2d8] sm:$0xff]
    %v765 = vld [vmem:[#allocation2 + $0x2e8] sm:$0xff]
    %v766 = vld [vmem:[#allocation2 + $0x2f0] sm:$0xff]
    %v767 = vld [vmem:[#allocation2 + $0x300] sm:$0xff]
    %v768 = vld [vmem:[#allocation2 + $0x308] sm:$0xff]
    %v769 = vld [vmem:[#allocation2 + $0x318] sm:$0xff]
    %v770 = vld [vmem:[#allocation2 + $0x320] sm:$0xff]
    %v771 = vpack.c.bf16 %v708, %v707
    %v772 = vpack.c.bf16 %v710, %v709
    %v773 = vpack.c.bf16 %v712, %v711
    %v774 = vpack.c.bf16 %v714, %v713
    %v775 = vpack.c.bf16 %v716, %v715
    %v776 = vpack.c.bf16 %v718, %v717
    %v777 = vpack.c.bf16 %v720, %v719
    %v778 = vpack.c.bf16 %v722, %v721
    %v779 = vpack.c.bf16 %v724, %v723
    %v780 = vpack.c.bf16 %v726, %v725
    %v781 = vpack.c.bf16 %v728, %v727
    %v782 = vpack.c.bf16 %v730, %v729
    %v783 = vpack.c.bf16 %v732, %v731
    %v784 = vpack.c.bf16 %v734, %v733
    %v785 = vpack.c.bf16 %v736, %v735
    %v786 = vpack.c.bf16 %v738, %v737
    %v787 = vpack.c.bf16 %v740, %v739
    %v788 = vpack.c.bf16 %v742, %v741
    %v789 = vpack.c.bf16 %v744, %v743
    %v790 = vpack.c.bf16 %v746, %v745
    %v791 = vpack.c.bf16 %v748, %v747
    %v792 = vpack.c.bf16 %v750, %v749
    %v793 = vpack.c.bf16 %v752, %v751
    %v794 = vpack.c.bf16 %v754, %v753
    %v795 = vpack.c.bf16 %v756, %v755
    %v796 = vpack.c.bf16 %v758, %v757
    %v797 = vpack.c.bf16 %v760, %v759
    %v798 = vpack.c.bf16 %v762, %v761
    %v799 = vpack.c.bf16 %v764, %v763
    %v800 = vpack.c.bf16 %v766, %v765
    %v801 = vpack.c.bf16 %v768, %v767
    %v802 = vpack.c.bf16 %v770, %v769
    %v803 = vld [vmem:[%s3] sm:$0x3]
    %v804 = vld [vmem:[#allocation2 + $0x1] sm:$0xff]
    %v805 = vld [vmem:[#allocation2 + $0x9] sm:$0xff]
    %v806 = vld [vmem:[#allocation2 + $0x19] sm:$0xff]
    %v807 = vld [vmem:[#allocation2 + $0x21] sm:$0xff]
    %v808 = vld [vmem:[#allocation2 + $0x31] sm:$0xff]
    %v809 = vld [vmem:[#allocation2 + $0x39] sm:$0xff]
    %v810 = vld [vmem:[#allocation2 + $0x49] sm:$0xff]
    %v811 = vld [vmem:[#allocation2 + $0x51] sm:$0xff]
    %v812 = vld [vmem:[#allocation2 + $0x61] sm:$0xff]
    %v813 = vld [vmem:[#allocation2 + $0x69] sm:$0xff]
    %v814 = vld [vmem:[#allocation2 + $0x79] sm:$0xff]
    %v815 = vld [vmem:[#allocation2 + $0x81] sm:$0xff]
    %v816 = vld [vmem:[#allocation2 + $0x91] sm:$0xff]
    %v817 = vld [vmem:[#allocation2 + $0x99] sm:$0xff]
    %v818 = vld [vmem:[#allocation2 + $0xa9] sm:$0xff]
    %v819 = vld [vmem:[#allocation2 + $0xb1] sm:$0xff]
    %v820 = vld [vmem:[#allocation2 + $0xc1] sm:$0xff]
    %v821 = vld [vmem:[#allocation2 + $0xc9] sm:$0xff]
    %v822 = vld [vmem:[#allocation2 + $0xd9] sm:$0xff]
    %v823 = vld [vmem:[#allocation2 + $0xe1] sm:$0xff]
    %v824 = vld [vmem:[#allocation2 + $0xf1] sm:$0xff]
    %v825 = vld [vmem:[#allocation2 + $0xf9] sm:$0xff]
    %v826 = vld [vmem:[#allocation2 + $0x109] sm:$0xff]
    %v827 = vld [vmem:[#allocation2 + $0x111] sm:$0xff]
    %v828 = vld [vmem:[#allocation2 + $0x121] sm:$0xff]
    %v829 = vld [vmem:[#allocation2 + $0x129] sm:$0xff]
    %v830 = vld [vmem:[#allocation2 + $0x139] sm:$0xff]
    %v831 = vld [vmem:[#allocation2 + $0x141] sm:$0xff]
    %v832 = vld [vmem:[#allocation2 + $0x151] sm:$0xff]
    %v833 = vld [vmem:[#allocation2 + $0x159] sm:$0xff]
    %v834 = vld [vmem:[#allocation2 + $0x169] sm:$0xff]
    %v835 = vld [vmem:[#allocation2 + $0x171] sm:$0xff]
    %v836 = vld [vmem:[#allocation2 + $0x1b1] sm:$0xff]
    %v837 = vld [vmem:[#allocation2 + $0x1b9] sm:$0xff]
    %v838 = vld [vmem:[#allocation2 + $0x1c9] sm:$0xff]
    %v839 = vld [vmem:[#allocation2 + $0x1d1] sm:$0xff]
    %v840 = vld [vmem:[#allocation2 + $0x1e1] sm:$0xff]
    %v841 = vld [vmem:[#allocation2 + $0x1e9] sm:$0xff]
    %v842 = vld [vmem:[#allocation2 + $0x1f9] sm:$0xff]
    %v843 = vld [vmem:[#allocation2 + $0x201] sm:$0xff]
    %v844 = vld [vmem:[#allocation2 + $0x211] sm:$0xff]
    %v845 = vld [vmem:[#allocation2 + $0x219] sm:$0xff]
    %v846 = vld [vmem:[#allocation2 + $0x229] sm:$0xff]
    %v847 = vld [vmem:[#allocation2 + $0x231] sm:$0xff]
    %v848 = vld [vmem:[#allocation2 + $0x241] sm:$0xff]
    %v849 = vld [vmem:[#allocation2 + $0x249] sm:$0xff]
    %v850 = vld [vmem:[#allocation2 + $0x259] sm:$0xff]
    %v851 = vld [vmem:[#allocation2 + $0x261] sm:$0xff]
    %v852 = vld [vmem:[#allocation2 + $0x271] sm:$0xff]
    %v853 = vld [vmem:[#allocation2 + $0x279] sm:$0xff]
    %v854 = vld [vmem:[#allocation2 + $0x289] sm:$0xff]
    %v855 = vld [vmem:[#allocation2 + $0x291] sm:$0xff]
    %v856 = vld [vmem:[#allocation2 + $0x2a1] sm:$0xff]
    %v857 = vld [vmem:[#allocation2 + $0x2a9] sm:$0xff]
    %v858 = vld [vmem:[#allocation2 + $0x2b9] sm:$0xff]
    %v859 = vld [vmem:[#allocation2 + $0x2c1] sm:$0xff]
    %v860 = vld [vmem:[#allocation2 + $0x2d1] sm:$0xff]
    %v861 = vld [vmem:[#allocation2 + $0x2d9] sm:$0xff]
    %v862 = vld [vmem:[#allocation2 + $0x2e9] sm:$0xff]
    %v863 = vld [vmem:[#allocation2 + $0x2f1] sm:$0xff]
    %v864 = vld [vmem:[#allocation2 + $0x301] sm:$0xff]
    %v865 = vld [vmem:[#allocation2 + $0x309] sm:$0xff]
    %v866 = vld [vmem:[#allocation2 + $0x319] sm:$0xff]
    %v867 = vld [vmem:[#allocation2 + $0x321] sm:$0xff]
    %v868 = vpack.c.bf16 %v805, %v804
    %v869 = vpack.c.bf16 %v807, %v806
    %v870 = vpack.c.bf16 %v809, %v808
    %v871 = vpack.c.bf16 %v811, %v810
    %v872 = vpack.c.bf16 %v813, %v812
    %v873 = vpack.c.bf16 %v815, %v814
    %v874 = vpack.c.bf16 %v817, %v816
    %v875 = vpack.c.bf16 %v819, %v818
    %v876 = vpack.c.bf16 %v821, %v820
    %v877 = vpack.c.bf16 %v823, %v822
    %v878 = vpack.c.bf16 %v825, %v824
    %v879 = vpack.c.bf16 %v827, %v826
    %v880 = vpack.c.bf16 %v829, %v828
    %v881 = vpack.c.bf16 %v831, %v830
    %v882 = vpack.c.bf16 %v833, %v832
    %v883 = vpack.c.bf16 %v835, %v834
    %v884 = vpack.c.bf16 %v837, %v836
    %v885 = vpack.c.bf16 %v839, %v838
    %v886 = vpack.c.bf16 %v841, %v840
    %v887 = vpack.c.bf16 %v843, %v842
    %v888 = vpack.c.bf16 %v845, %v844
    %v889 = vpack.c.bf16 %v847, %v846
    %v890 = vpack.c.bf16 %v849, %v848
    %v891 = vpack.c.bf16 %v851, %v850
    %v892 = vpack.c.bf16 %v853, %v852
    %v893 = vpack.c.bf16 %v855, %v854
    %v894 = vpack.c.bf16 %v857, %v856
    %v895 = vpack.c.bf16 %v859, %v858
    %v896 = vpack.c.bf16 %v861, %v860
    %v897 = vpack.c.bf16 %v863, %v862
    %v898 = vpack.c.bf16 %v865, %v864
    %v899 = vpack.c.bf16 %v867, %v866
    %s900 = scalar_lea.vmem %s3, 2
    %v901 = vld [vmem:[%s900] sm:$0x3]
    %v903 = vsel %vm562, %v868, 0
    %v906 = vsel %vm562, %v869, 0
    %v909 = vsel %vm562, %v870, 0
    %v912 = vsel %vm562, %v871, 0
    %v915 = vsel %vm562, %v872, 0
    %v918 = vsel %vm562, %v873, 0
    %v921 = vsel %vm562, %v874, 0
    %v924 = vsel %vm562, %v875, 0
    %v927 = vsel %vm562, %v876, 0
    %v930 = vsel %vm562, %v877, 0
    %v933 = vsel %vm562, %v878, 0
    %v936 = vsel %vm562, %v879, 0
    %v939 = vsel %vm562, %v880, 0
    %v942 = vsel %vm562, %v881, 0
    %v945 = vsel %vm562, %v882, 0
    %v948 = vsel %vm562, %v883, 0
    %v951 = vsel %vm562, %v884, 0
    %v954 = vsel %vm562, %v885, 0
    %v957 = vsel %vm562, %v886, 0
    %v960 = vsel %vm562, %v887, 0
    %v963 = vsel %vm562, %v888, 0
    %v966 = vsel %vm562, %v889, 0
    %v969 = vsel %vm562, %v890, 0
    %v972 = vsel %vm562, %v891, 0
    %v975 = vsel %vm562, %v892, 0
    %v978 = vsel %vm562, %v893, 0
    %v981 = vsel %vm562, %v894, 0
    %v984 = vsel %vm562, %v895, 0
    %v987 = vsel %vm562, %v896, 0
    %v990 = vsel %vm562, %v897, 0
    %v993 = vsel %vm562, %v898, 0
    %v996 = vsel %vm562, %v899, 0
    %vm998 = vcmask 1041408
    %v1000 = vsel %vm998, %v901, 0
    %1002 = vmatprep.subr.bf16.mxu0 0
    %1003 = vmatpush1.bf16.msra.mxu0 %v1000
    %1004 = vmatprep.subr.bf16.mxu0 0
    %1005 = vmatpush1.bf16.msra.mxu0 0
    %1006 = vmatprep.subr.bf16.mxu0 0
    %1007 = vmatpush1.bf16.msra.mxu0 0
    %1008 = vmatprep.subr.bf16.mxu0 0
    %1009 = vmatpush1.bf16.msra.mxu0 0
    %1010 = vmatprep.subr.bf16.mxu0 0
    %1011 = vmatpush1.bf16.msra.mxu0 0
    %1012 = vmatprep.subr.bf16.mxu0 0
    %1013 = vmatpush1.bf16.msra.mxu0 0
    %1014 = vmatprep.subr.bf16.mxu0 0
    %1015 = vmatpush1.bf16.msra.mxu0 0
    %1016 = vmatprep.subr.bf16.mxu0 0
    %1017 = vmatpush1.bf16.msra.mxu0 0
    %1018 = vmatprep.subr.bf16.mxu0 0
    %1019 = vmatpush1.bf16.msra.mxu0 0
    %1020 = vmatprep.subr.bf16.mxu0 0
    %1021 = vmatpush1.bf16.msra.mxu0 0
    %1022 = vmatprep.subr.bf16.mxu0 0
    %1023 = vmatpush1.bf16.msra.mxu0 0
    %1024 = vmatprep.subr.bf16.mxu0 0
    %1025 = vmatpush1.bf16.msra.mxu0 0
    %1026 = vmatprep.subr.bf16.mxu0 0
    %1027 = vmatpush1.bf16.msra.mxu0 0
    %1028 = vmatprep.subr.bf16.mxu0 0
    %1029 = vmatpush1.bf16.msra.mxu0 0
    %1030 = vmatprep.subr.bf16.mxu0 0
    %1031 = vmatpush1.bf16.msra.mxu0 0
    %1032 = vmatprep.subr.bf16.mxu0 0
    %1033 = vmatpush1.bf16.msra.mxu0 0
    %1034 = vmatprep.mubr.bf16.mxu0 0
    %1035 = vmatmul.mubr.bf16.gmra.mrb[0].mxu0 %v903
    %v1036 = vpop.f32.mrb[0].mxu0
    %v1037 = vadd.f32 0.0, %v1036
    %v1038 = vpop.f32.mrb[0].mxu0
    %v1039 = vpop.f32.mrb[0].mxu0
    %v1040 = vadd.f32 0.0, %v1039
    %v1041 = vpop.f32.mrb[0].mxu0
    %1042 = vmatprep.mubr.bf16.mxu0 0
    %1043 = vmatmul.mubr.bf16.gmra.mrb[0].mxu0 %v906
    %v1044 = vpop.f32.mrb[0].mxu0
    %v1045 = vadd.f32 0.0, %v1044
    %v1046 = vpop.f32.mrb[0].mxu0
    %v1047 = vpop.f32.mrb[0].mxu0
    %v1048 = vadd.f32 0.0, %v1047
    %v1049 = vpop.f32.mrb[0].mxu0
    %1050 = vmatprep.mubr.bf16.mxu0 0
    %1051 = vmatmul.mubr.bf16.gmra.mrb[0].mxu0 %v909
    %v1052 = vpop.f32.mrb[0].mxu0
    %v1053 = vadd.f32 0.0, %v1052
    %v1054 = vpop.f32.mrb[0].mxu0
    %v1055 = vpop.f32.mrb[0].mxu0
    %v1056 = vadd.f32 0.0, %v1055
    %v1057 = vpop.f32.mrb[0].mxu0
    %1058 = vmatprep.mubr.bf16.mxu0 0
    %1059 = vmatmul.mubr.bf16.gmra.mrb[0].mxu0 %v912
    %v1060 = vpop.f32.mrb[0].mxu0
    %v1061 = vadd.f32 0.0, %v1060
    %v1062 = vpop.f32.mrb[0].mxu0
    %v1063 = vpop.f32.mrb[0].mxu0
    %v1064 = vadd.f32 0.0, %v1063
    %v1065 = vpop.f32.mrb[0].mxu0
    %1066 = vmatprep.mubr.bf16.mxu0 0
    %1067 = vmatmul.mubr.bf16.gmra.mrb[0].mxu0 %v915
    %v1068 = vpop.f32.mrb[0].mxu0
    %v1069 = vadd.f32 0.0, %v1068
    %v1070 = vpop.f32.mrb[0].mxu0
    %v1071 = vpop.f32.mrb[0].mxu0
    %v1072 = vadd.f32 0.0, %v1071
    %v1073 = vpop.f32.mrb[0].mxu0
    %1074 = vmatprep.mubr.bf16.mxu0 0
    %1075 = vmatmul.mubr.bf16.gmra.mrb[0].mxu0 %v918
    %v1076 = vpop.f32.mrb[0].mxu0
    %v1077 = vadd.f32 0.0, %v1076
    %v1078 = vpop.f32.mrb[0].mxu0
    %v1079 = vpop.f32.mrb[0].mxu0
    %v1080 = vadd.f32 0.0, %v1079
    %v1081 = vpop.f32.mrb[0].mxu0
    %1082 = vmatprep.mubr.bf16.mxu0 0
    %1083 = vmatmul.mubr.bf16.gmra.mrb[0].mxu0 %v921
    %v1084 = vpop.f32.mrb[0].mxu0
    %v1085 = vadd.f32 0.0, %v1084
    %v1086 = vpop.f32.mrb[0].mxu0
    %v1087 = vpop.f32.mrb[0].mxu0
    %v1088 = vadd.f32 0.0, %v1087
    %v1089 = vpop.f32.mrb[0].mxu0
    %1090 = vmatprep.mubr.bf16.mxu0 0
    %1091 = vmatmul.mubr.bf16.gmra.mrb[0].mxu0 %v924
    %v1092 = vpop.f32.mrb[0].mxu0
    %v1093 = vadd.f32 0.0, %v1092
    %v1094 = vpop.f32.mrb[0].mxu0
    %v1095 = vpop.f32.mrb[0].mxu0
    %v1096 = vadd.f32 0.0, %v1095
    %v1097 = vpop.f32.mrb[0].mxu0
    %1098 = vmatprep.mubr.bf16.mxu0 0
    %1099 = vmatmul.mubr.bf16.gmra.mrb[0].mxu0 %v927
    %v1100 = vpop.f32.mrb[0].mxu0
    %v1101 = vadd.f32 0.0, %v1100
    %v1102 = vpop.f32.mrb[0].mxu0
    %v1103 = vpop.f32.mrb[0].mxu0
    %v1104 = vadd.f32 0.0, %v1103
    %v1105 = vpop.f32.mrb[0].mxu0
    %1106 = vmatprep.mubr.bf16.mxu0 0
    %1107 = vmatmul.mubr.bf16.gmra.mrb[0].mxu0 %v930
    %v1108 = vpop.f32.mrb[0].mxu0
    %v1109 = vadd.f32 0.0, %v1108
    %v1110 = vpop.f32.mrb[0].mxu0
    %v1111 = vpop.f32.mrb[0].mxu0
    %v1112 = vadd.f32 0.0, %v1111
    %v1113 = vpop.f32.mrb[0].mxu0
    %1114 = vmatprep.mubr.bf16.mxu0 0
    %1115 = vmatmul.mubr.bf16.gmra.mrb[0].mxu0 %v933
    %v1116 = vpop.f32.mrb[0].mxu0
    %v1117 = vadd.f32 0.0, %v1116
    %v1118 = vpop.f32.mrb[0].mxu0
    %v1119 = vpop.f32.mrb[0].mxu0
    %v1120 = vadd.f32 0.0, %v1119
    %v1121 = vpop.f32.mrb[0].mxu0
    %1122 = vmatprep.mubr.bf16.mxu0 0
    %1123 = vmatmul.mubr.bf16.gmra.mrb[0].mxu0 %v936
    %v1124 = vpop.f32.mrb[0].mxu0
    %v1125 = vadd.f32 0.0, %v1124
    %v1126 = vpop.f32.mrb[0].mxu0
    %v1127 = vpop.f32.mrb[0].mxu0
    %v1128 = vadd.f32 0.0, %v1127
    %v1129 = vpop.f32.mrb[0].mxu0
    %1130 = vmatprep.mubr.bf16.mxu0 0
    %1131 = vmatmul.mubr.bf16.gmra.mrb[0].mxu0 %v939
    %v1132 = vpop.f32.mrb[0].mxu0
    %v1133 = vadd.f32 0.0, %v1132
    %v1134 = vpop.f32.mrb[0].mxu0
    %v1135 = vpop.f32.mrb[0].mxu0
    %v1136 = vadd.f32 0.0, %v1135
    %v1137 = vpop.f32.mrb[0].mxu0
    %1138 = vmatprep.mubr.bf16.mxu0 0
    %1139 = vmatmul.mubr.bf16.gmra.mrb[0].mxu0 %v942
    %v1140 = vpop.f32.mrb[0].mxu0
    %v1141 = vadd.f32 0.0, %v1140
    %v1142 = vpop.f32.mrb[0].mxu0
    %v1143 = vpop.f32.mrb[0].mxu0
    %v1144 = vadd.f32 0.0, %v1143
    %v1145 = vpop.f32.mrb[0].mxu0
    %1146 = vmatprep.mubr.bf16.mxu0 0
    %1147 = vmatmul.mubr.bf16.gmra.mrb[0].mxu0 %v945
    %v1148 = vpop.f32.mrb[0].mxu0
    %v1149 = vadd.f32 0.0, %v1148
    %v1150 = vpop.f32.mrb[0].mxu0
    %v1151 = vpop.f32.mrb[0].mxu0
    %v1152 = vadd.f32 0.0, %v1151
    %v1153 = vpop.f32.mrb[0].mxu0
    %1154 = vmatprep.mubr.bf16.mxu0 0
    %1155 = vmatmul.mubr.bf16.gmra.mrb[0].mxu0 %v948
    %v1156 = vpop.f32.mrb[0].mxu0
    %v1157 = vadd.f32 0.0, %v1156
    %v1158 = vpop.f32.mrb[0].mxu0
    %v1159 = vpop.f32.mrb[0].mxu0
    %v1160 = vadd.f32 0.0, %v1159
    %v1161 = vpop.f32.mrb[0].mxu0
    %1162 = vmatprep.mubr.bf16.mxu0 0
    %1163 = vmatmul.mubr.bf16.gmra.mrb[0].mxu0 %v951
    %v1164 = vpop.f32.mrb[0].mxu0
    %v1165 = vadd.f32 0.0, %v1164
    %v1166 = vpop.f32.mrb[0].mxu0
    %v1167 = vpop.f32.mrb[0].mxu0
    %v1168 = vadd.f32 0.0, %v1167
    %v1169 = vpop.f32.mrb[0].mxu0
    %1170 = vmatprep.mubr.bf16.mxu0 0
    %1171 = vmatmul.mubr.bf16.gmra.mrb[0].mxu0 %v954
    %v1172 = vpop.f32.mrb[0].mxu0
    %v1173 = vadd.f32 0.0, %v1172
    %v1174 = vpop.f32.mrb[0].mxu0
    %v1175 = vpop.f32.mrb[0].mxu0
    %v1176 = vadd.f32 0.0, %v1175
    %v1177 = vpop.f32.mrb[0].mxu0
    %1178 = vmatprep.mubr.bf16.mxu0 0
    %1179 = vmatmul.mubr.bf16.gmra.mrb[0].mxu0 %v957
    %v1180 = vpop.f32.mrb[0].mxu0
    %v1181 = vadd.f32 0.0, %v1180
    %v1182 = vpop.f32.mrb[0].mxu0
    %v1183 = vpop.f32.mrb[0].mxu0
    %v1184 = vadd.f32 0.0, %v1183
    %v1185 = vpop.f32.mrb[0].mxu0
    %1186 = vmatprep.mubr.bf16.mxu0 0
    %1187 = vmatmul.mubr.bf16.gmra.mrb[0].mxu0 %v960
    %v1188 = vpop.f32.mrb[0].mxu0
    %v1189 = vadd.f32 0.0, %v1188
    %v1190 = vpop.f32.mrb[0].mxu0
    %v1191 = vpop.f32.mrb[0].mxu0
    %v1192 = vadd.f32 0.0, %v1191
    %v1193 = vpop.f32.mrb[0].mxu0
    %1194 = vmatprep.mubr.bf16.mxu0 0
    %1195 = vmatmul.mubr.bf16.gmra.mrb[0].mxu0 %v963
    %v1196 = vpop.f32.mrb[0].mxu0
    %v1197 = vadd.f32 0.0, %v1196
    %v1198 = vpop.f32.mrb[0].mxu0
    %v1199 = vpop.f32.mrb[0].mxu0
    %v1200 = vadd.f32 0.0, %v1199
    %v1201 = vpop.f32.mrb[0].mxu0
    %1202 = vmatprep.mubr.bf16.mxu0 0
    %1203 = vmatmul.mubr.bf16.gmra.mrb[0].mxu0 %v966
    %v1204 = vpop.f32.mrb[0].mxu0
    %v1205 = vadd.f32 0.0, %v1204
    %v1206 = vpop.f32.mrb[0].mxu0
    %v1207 = vpop.f32.mrb[0].mxu0
    %v1208 = vadd.f32 0.0, %v1207
    %v1209 = vpop.f32.mrb[0].mxu0
    %1210 = vmatprep.mubr.bf16.mxu0 0
    %1211 = vmatmul.mubr.bf16.gmra.mrb[0].mxu0 %v969
    %v1212 = vpop.f32.mrb[0].mxu0
    %v1213 = vadd.f32 0.0, %v1212
    %v1214 = vpop.f32.mrb[0].mxu0
    %v1215 = vpop.f32.mrb[0].mxu0
    %v1216 = vadd.f32 0.0, %v1215
    %v1217 = vpop.f32.mrb[0].mxu0
    %1218 = vmatprep.mubr.bf16.mxu0 0
    %1219 = vmatmul.mubr.bf16.gmra.mrb[0].mxu0 %v972
    %v1220 = vpop.f32.mrb[0].mxu0
    %v1221 = vadd.f32 0.0, %v1220
    %v1222 = vpop.f32.mrb[0].mxu0
    %v1223 = vpop.f32.mrb[0].mxu0
    %v1224 = vadd.f32 0.0, %v1223
    %v1225 = vpop.f32.mrb[0].mxu0
    %1226 = vmatprep.mubr.bf16.mxu0 0
    %1227 = vmatmul.mubr.bf16.gmra.mrb[0].mxu0 %v975
    %v1228 = vpop.f32.mrb[0].mxu0
    %v1229 = vadd.f32 0.0, %v1228
    %v1230 = vpop.f32.mrb[0].mxu0
    %v1231 = vpop.f32.mrb[0].mxu0
    %v1232 = vadd.f32 0.0, %v1231
    %v1233 = vpop.f32.mrb[0].mxu0
    %1234 = vmatprep.mubr.bf16.mxu0 0
    %1235 = vmatmul.mubr.bf16.gmra.mrb[0].mxu0 %v978
    %v1236 = vpop.f32.mrb[0].mxu0
    %v1237 = vadd.f32 0.0, %v1236
    %v1238 = vpop.f32.mrb[0].mxu0
    %v1239 = vpop.f32.mrb[0].mxu0
    %v1240 = vadd.f32 0.0, %v1239
    %v1241 = vpop.f32.mrb[0].mxu0
    %1242 = vmatprep.mubr.bf16.mxu0 0
    %1243 = vmatmul.mubr.bf16.gmra.mrb[0].mxu0 %v981
    %v1244 = vpop.f32.mrb[0].mxu0
    %v1245 = vadd.f32 0.0, %v1244
    %v1246 = vpop.f32.mrb[0].mxu0
    %v1247 = vpop.f32.mrb[0].mxu0
    %v1248 = vadd.f32 0.0, %v1247
    %v1249 = vpop.f32.mrb[0].mxu0
    %1250 = vmatprep.mubr.bf16.mxu0 0
    %1251 = vmatmul.mubr.bf16.gmra.mrb[0].mxu0 %v984
    %v1252 = vpop.f32.mrb[0].mxu0
    %v1253 = vadd.f32 0.0, %v1252
    %v1254 = vpop.f32.mrb[0].mxu0
    %v1255 = vpop.f32.mrb[0].mxu0
    %v1256 = vadd.f32 0.0, %v1255
    %v1257 = vpop.f32.mrb[0].mxu0
    %1258 = vmatprep.mubr.bf16.mxu0 0
    %1259 = vmatmul.mubr.bf16.gmra.mrb[0].mxu0 %v987
    %v1260 = vpop.f32.mrb[0].mxu0
    %v1261 = vadd.f32 0.0, %v1260
    %v1262 = vpop.f32.mrb[0].mxu0
    %v1263 = vpop.f32.mrb[0].mxu0
    %v1264 = vadd.f32 0.0, %v1263
    %v1265 = vpop.f32.mrb[0].mxu0
    %1266 = vmatprep.mubr.bf16.mxu0 0
    %1267 = vmatmul.mubr.bf16.gmra.mrb[0].mxu0 %v990
    %v1268 = vpop.f32.mrb[0].mxu0
    %v1269 = vadd.f32 0.0, %v1268
    %v1270 = vpop.f32.mrb[0].mxu0
    %v1271 = vpop.f32.mrb[0].mxu0
    %v1272 = vadd.f32 0.0, %v1271
    %v1273 = vpop.f32.mrb[0].mxu0
    %1274 = vmatprep.mubr.bf16.mxu0 0
    %1275 = vmatmul.mubr.bf16.gmra.mrb[0].mxu0 %v993
    %v1276 = vpop.f32.mrb[0].mxu0
    %v1277 = vadd.f32 0.0, %v1276
    %v1278 = vpop.f32.mrb[0].mxu0
    %v1279 = vpop.f32.mrb[0].mxu0
    %v1280 = vadd.f32 0.0, %v1279
    %v1281 = vpop.f32.mrb[0].mxu0
    %1282 = vmatprep.mubr.bf16.mxu0 0
    %1283 = vmatmul.mubr.bf16.gmra.mrb[0].mxu0 %v996
    %v1284 = vpop.f32.mrb[0].mxu0
    %v1285 = vadd.f32 0.0, %v1284
    %v1286 = vpop.f32.mrb[0].mxu0
    %v1287 = vpop.f32.mrb[0].mxu0
    %v1288 = vadd.f32 0.0, %v1287
    %v1289 = vpop.f32.mrb[0].mxu0
    %1290 = vdwg.mxu0
    %v1292 = vsel %vm562, %v771, 0
    %v1295 = vsel %vm562, %v772, 0
    %v1298 = vsel %vm562, %v773, 0
    %v1301 = vsel %vm562, %v774, 0
    %v1304 = vsel %vm562, %v775, 0
    %v1307 = vsel %vm562, %v776, 0
    %v1310 = vsel %vm562, %v777, 0
    %v1313 = vsel %vm562, %v778, 0
    %v1316 = vsel %vm562, %v779, 0
    %v1319 = vsel %vm562, %v780, 0
    %v1322 = vsel %vm562, %v781, 0
    %v1325 = vsel %vm562, %v782, 0
    %v1328 = vsel %vm562, %v783, 0
    %v1331 = vsel %vm562, %v784, 0
    %v1334 = vsel %vm562, %v785, 0
    %v1337 = vsel %vm562, %v786, 0
    %v1340 = vsel %vm562, %v787, 0
    %v1343 = vsel %vm562, %v788, 0
    %v1346 = vsel %vm562, %v789, 0
    %v1349 = vsel %vm562, %v790, 0
    %v1352 = vsel %vm562, %v791, 0
    %v1355 = vsel %vm562, %v792, 0
    %v1358 = vsel %vm562, %v793, 0
    %v1361 = vsel %vm562, %v794, 0
    %v1364 = vsel %vm562, %v795, 0
    %v1367 = vsel %vm562, %v796, 0
    %v1370 = vsel %vm562, %v797, 0
    %v1373 = vsel %vm562, %v798, 0
    %v1376 = vsel %vm562, %v799, 0
    %v1379 = vsel %vm562, %v800, 0
    %v1382 = vsel %vm562, %v801, 0
    %v1385 = vsel %vm562, %v802, 0
    %v1388 = vsel %vm998, %v803, 0
    %1390 = vmatprep.subr.bf16.mxu0 0
    %1391 = vmatpush1.bf16.msra.mxu0 %v1388
    %1392 = vmatprep.subr.bf16.mxu0 0
    %1393 = vmatpush1.bf16.msra.mxu0 0
    %1394 = vmatprep.subr.bf16.mxu0 0
    %1395 = vmatpush1.bf16.msra.mxu0 0
    %1396 = vmatprep.subr.bf16.mxu0 0
    %1397 = vmatpush1.bf16.msra.mxu0 0
    %1398 = vmatprep.subr.bf16.mxu0 0
    %1399 = vmatpush1.bf16.msra.mxu0 0
    %1400 = vmatprep.subr.bf16.mxu0 0
    %1401 = vmatpush1.bf16.msra.mxu0 0
    %1402 = vmatprep.subr.bf16.mxu0 0
    %1403 = vmatpush1.bf16.msra.mxu0 0
    %1404 = vmatprep.subr.bf16.mxu0 0
    %1405 = vmatpush1.bf16.msra.mxu0 0
    %1406 = vmatprep.subr.bf16.mxu0 0
    %1407 = vmatpush1.bf16.msra.mxu0 0
    %1408 = vmatprep.subr.bf16.mxu0 0
    %1409 = vmatpush1.bf16.msra.mxu0 0
    %1410 = vmatprep.subr.bf16.mxu0 0
    %1411 = vmatpush1.bf16.msra.mxu0 0
    %1412 = vmatprep.subr.bf16.mxu0 0
    %1413 = vmatpush1.bf16.msra.mxu0 0
    %1414 = vmatprep.subr.bf16.mxu0 0
    %1415 = vmatpush1.bf16.msra.mxu0 0
    %1416 = vmatprep.subr.bf16.mxu0 0
    %1417 = vmatpush1.bf16.msra.mxu0 0
    %1418 = vmatprep.subr.bf16.mxu0 0
    %1419 = vmatpush1.bf16.msra.mxu0 0
    %1420 = vmatprep.subr.bf16.mxu0 0
    %1421 = vmatpush1.bf16.msra.mxu0 0
    %1422 = vmatprep.mubr.bf16.mxu0 0
    %1423 = vmatmul.mubr.bf16.gmra.mrb[0].mxu0 %v1292
    %v1424 = vpop.f32.mrb[0].mxu0
    %v1425 = vadd.f32 %v1037, %v1424
    %v1426 = vpop.f32.mrb[0].mxu0
    %v1427 = vpop.f32.mrb[0].mxu0
    %v1428 = vadd.f32 %v1040, %v1427
    %v1429 = vpop.f32.mrb[0].mxu0
    %1430 = vmatprep.mubr.bf16.mxu0 0
    %1431 = vmatmul.mubr.bf16.gmra.mrb[0].mxu0 %v1295
    %v1432 = vpop.f32.mrb[0].mxu0
    %v1433 = vadd.f32 %v1045, %v1432
    %v1434 = vpop.f32.mrb[0].mxu0
    %v1435 = vpop.f32.mrb[0].mxu0
    %v1436 = vadd.f32 %v1048, %v1435
    %v1437 = vpop.f32.mrb[0].mxu0
    %1438 = vmatprep.mubr.bf16.mxu0 0
    %1439 = vmatmul.mubr.bf16.gmra.mrb[0].mxu0 %v1298
    %v1440 = vpop.f32.mrb[0].mxu0
    %v1441 = vadd.f32 %v1053, %v1440
    %v1442 = vpop.f32.mrb[0].mxu0
    %v1443 = vpop.f32.mrb[0].mxu0
    %v1444 = vadd.f32 %v1056, %v1443
    %v1445 = vpop.f32.mrb[0].mxu0
    %1446 = vmatprep.mubr.bf16.mxu0 0
    %1447 = vmatmul.mubr.bf16.gmra.mrb[0].mxu0 %v1301
    %v1448 = vpop.f32.mrb[0].mxu0
    %v1449 = vadd.f32 %v1061, %v1448
    %v1450 = vpop.f32.mrb[0].mxu0
    %v1451 = vpop.f32.mrb[0].mxu0
    %v1452 = vadd.f32 %v1064, %v1451
    %v1453 = vpop.f32.mrb[0].mxu0
    %1454 = vmatprep.mubr.bf16.mxu0 0
    %1455 = vmatmul.mubr.bf16.gmra.mrb[0].mxu0 %v1304
    %v1456 = vpop.f32.mrb[0].mxu0
    %v1457 = vadd.f32 %v1069, %v1456
    %v1458 = vpop.f32.mrb[0].mxu0
    %v1459 = vpop.f32.mrb[0].mxu0
    %v1460 = vadd.f32 %v1072, %v1459
    %v1461 = vpop.f32.mrb[0].mxu0
    %1462 = vmatprep.mubr.bf16.mxu0 0
    %1463 = vmatmul.mubr.bf16.gmra.mrb[0].mxu0 %v1307
    %v1464 = vpop.f32.mrb[0].mxu0
    %v1465 = vadd.f32 %v1077, %v1464
    %v1466 = vpop.f32.mrb[0].mxu0
    %v1467 = vpop.f32.mrb[0].mxu0
    %v1468 = vadd.f32 %v1080, %v1467
    %v1469 = vpop.f32.mrb[0].mxu0
    %1470 = vmatprep.mubr.bf16.mxu0 0
    %1471 = vmatmul.mubr.bf16.gmra.mrb[0].mxu0 %v1310
    %v1472 = vpop.f32.mrb[0].mxu0
    %v1473 = vadd.f32 %v1085, %v1472
    %v1474 = vpop.f32.mrb[0].mxu0
    %v1475 = vpop.f32.mrb[0].mxu0
    %v1476 = vadd.f32 %v1088, %v1475
    %v1477 = vpop.f32.mrb[0].mxu0
    %1478 = vmatprep.mubr.bf16.mxu0 0
    %1479 = vmatmul.mubr.bf16.gmra.mrb[0].mxu0 %v1313
    %v1480 = vpop.f32.mrb[0].mxu0
    %v1481 = vadd.f32 %v1093, %v1480
    %v1482 = vpop.f32.mrb[0].mxu0
    %v1483 = vpop.f32.mrb[0].mxu0
    %v1484 = vadd.f32 %v1096, %v1483
    %v1485 = vpop.f32.mrb[0].mxu0
    %1486 = vmatprep.mubr.bf16.mxu0 0
    %1487 = vmatmul.mubr.bf16.gmra.mrb[0].mxu0 %v1316
    %v1488 = vpop.f32.mrb[0].mxu0
    %v1489 = vadd.f32 %v1101, %v1488
    %v1490 = vpop.f32.mrb[0].mxu0
    %v1491 = vpop.f32.mrb[0].mxu0
    %v1492 = vadd.f32 %v1104, %v1491
    %v1493 = vpop.f32.mrb[0].mxu0
    %1494 = vmatprep.mubr.bf16.mxu0 0
    %1495 = vmatmul.mubr.bf16.gmra.mrb[0].mxu0 %v1319
    %v1496 = vpop.f32.mrb[0].mxu0
    %v1497 = vadd.f32 %v1109, %v1496
    %v1498 = vpop.f32.mrb[0].mxu0
    %v1499 = vpop.f32.mrb[0].mxu0
    %v1500 = vadd.f32 %v1112, %v1499
    %v1501 = vpop.f32.mrb[0].mxu0
    %1502 = vmatprep.mubr.bf16.mxu0 0
    %1503 = vmatmul.mubr.bf16.gmra.mrb[0].mxu0 %v1322
    %v1504 = vpop.f32.mrb[0].mxu0
    %v1505 = vadd.f32 %v1117, %v1504
    %v1506 = vpop.f32.mrb[0].mxu0
    %v1507 = vpop.f32.mrb[0].mxu0
    %v1508 = vadd.f32 %v1120, %v1507
    %v1509 = vpop.f32.mrb[0].mxu0
    %1510 = vmatprep.mubr.bf16.mxu0 0
    %1511 = vmatmul.mubr.bf16.gmra.mrb[0].mxu0 %v1325
    %v1512 = vpop.f32.mrb[0].mxu0
    %v1513 = vadd.f32 %v1125, %v1512
    %v1514 = vpop.f32.mrb[0].mxu0
    %v1515 = vpop.f32.mrb[0].mxu0
    %v1516 = vadd.f32 %v1128, %v1515
    %v1517 = vpop.f32.mrb[0].mxu0
    %1518 = vmatprep.mubr.bf16.mxu0 0
    %1519 = vmatmul.mubr.bf16.gmra.mrb[0].mxu0 %v1328
    %v1520 = vpop.f32.mrb[0].mxu0
    %v1521 = vadd.f32 %v1133, %v1520
    %v1522 = vpop.f32.mrb[0].mxu0
    %v1523 = vpop.f32.mrb[0].mxu0
    %v1524 = vadd.f32 %v1136, %v1523
    %v1525 = vpop.f32.mrb[0].mxu0
    %1526 = vmatprep.mubr.bf16.mxu0 0
    %1527 = vmatmul.mubr.bf16.gmra.mrb[0].mxu0 %v1331
    %v1528 = vpop.f32.mrb[0].mxu0
    %v1529 = vadd.f32 %v1141, %v1528
    %v1530 = vpop.f32.mrb[0].mxu0
    %v1531 = vpop.f32.mrb[0].mxu0
    %v1532 = vadd.f32 %v1144, %v1531
    %v1533 = vpop.f32.mrb[0].mxu0
    %1534 = vmatprep.mubr.bf16.mxu0 0
    %1535 = vmatmul.mubr.bf16.gmra.mrb[0].mxu0 %v1334
    %v1536 = vpop.f32.mrb[0].mxu0
    %v1537 = vadd.f32 %v1149, %v1536
    %v1538 = vpop.f32.mrb[0].mxu0
    %v1539 = vpop.f32.mrb[0].mxu0
    %v1540 = vadd.f32 %v1152, %v1539
    %v1541 = vpop.f32.mrb[0].mxu0
    %1542 = vmatprep.mubr.bf16.mxu0 0
    %1543 = vmatmul.mubr.bf16.gmra.mrb[0].mxu0 %v1337
    %v1544 = vpop.f32.mrb[0].mxu0
    %v1545 = vadd.f32 %v1157, %v1544
    %v1546 = vpop.f32.mrb[0].mxu0
    %v1547 = vpop.f32.mrb[0].mxu0
    %v1548 = vadd.f32 %v1160, %v1547
    %v1549 = vpop.f32.mrb[0].mxu0
    %1550 = vmatprep.mubr.bf16.mxu0 0
    %1551 = vmatmul.mubr.bf16.gmra.mrb[0].mxu0 %v1340
    %v1552 = vpop.f32.mrb[0].mxu0
    %v1553 = vadd.f32 %v1165, %v1552
    %v1554 = vpop.f32.mrb[0].mxu0
    %v1555 = vpop.f32.mrb[0].mxu0
    %v1556 = vadd.f32 %v1168, %v1555
    %v1557 = vpop.f32.mrb[0].mxu0
    %1558 = vmatprep.mubr.bf16.mxu0 0
    %1559 = vmatmul.mubr.bf16.gmra.mrb[0].mxu0 %v1343
    %v1560 = vpop.f32.mrb[0].mxu0
    %v1561 = vadd.f32 %v1173, %v1560
    %v1562 = vpop.f32.mrb[0].mxu0
    %v1563 = vpop.f32.mrb[0].mxu0
    %v1564 = vadd.f32 %v1176, %v1563
    %v1565 = vpop.f32.mrb[0].mxu0
    %1566 = vmatprep.mubr.bf16.mxu0 0
    %1567 = vmatmul.mubr.bf16.gmra.mrb[0].mxu0 %v1346
    %v1568 = vpop.f32.mrb[0].mxu0
    %v1569 = vadd.f32 %v1181, %v1568
    %v1570 = vpop.f32.mrb[0].mxu0
    %v1571 = vpop.f32.mrb[0].mxu0
    %v1572 = vadd.f32 %v1184, %v1571
    %v1573 = vpop.f32.mrb[0].mxu0
    %1574 = vmatprep.mubr.bf16.mxu0 0
    %1575 = vmatmul.mubr.bf16.gmra.mrb[0].mxu0 %v1349
    %v1576 = vpop.f32.mrb[0].mxu0
    %v1577 = vadd.f32 %v1189, %v1576
    %v1578 = vpop.f32.mrb[0].mxu0
    %v1579 = vpop.f32.mrb[0].mxu0
    %v1580 = vadd.f32 %v1192, %v1579
    %v1581 = vpop.f32.mrb[0].mxu0
    %1582 = vmatprep.mubr.bf16.mxu0 0
    %1583 = vmatmul.mubr.bf16.gmra.mrb[0].mxu0 %v1352
    %v1584 = vpop.f32.mrb[0].mxu0
    %v1585 = vadd.f32 %v1197, %v1584
    %v1586 = vpop.f32.mrb[0].mxu0
    %v1587 = vpop.f32.mrb[0].mxu0
    %v1588 = vadd.f32 %v1200, %v1587
    %v1589 = vpop.f32.mrb[0].mxu0
    %1590 = vmatprep.mubr.bf16.mxu0 0
    %1591 = vmatmul.mubr.bf16.gmra.mrb[0].mxu0 %v1355
    %v1592 = vpop.f32.mrb[0].mxu0
    %v1593 = vadd.f32 %v1205, %v1592
    %v1594 = vpop.f32.mrb[0].mxu0
    %v1595 = vpop.f32.mrb[0].mxu0
    %v1596 = vadd.f32 %v1208, %v1595
    %v1597 = vpop.f32.mrb[0].mxu0
    %1598 = vmatprep.mubr.bf16.mxu0 0
    %1599 = vmatmul.mubr.bf16.gmra.mrb[0].mxu0 %v1358
    %v1600 = vpop.f32.mrb[0].mxu0
    %v1601 = vadd.f32 %v1213, %v1600
    %v1602 = vpop.f32.mrb[0].mxu0
    %v1603 = vpop.f32.mrb[0].mxu0
    %v1604 = vadd.f32 %v1216, %v1603
    %v1605 = vpop.f32.mrb[0].mxu0
    %1606 = vmatprep.mubr.bf16.mxu0 0
    %1607 = vmatmul.mubr.bf16.gmra.mrb[0].mxu0 %v1361
    %v1608 = vpop.f32.mrb[0].mxu0
    %v1609 = vadd.f32 %v1221, %v1608
    %v1610 = vpop.f32.mrb[0].mxu0
    %v1611 = vpop.f32.mrb[0].mxu0
    %v1612 = vadd.f32 %v1224, %v1611
    %v1613 = vpop.f32.mrb[0].mxu0
    %1614 = vmatprep.mubr.bf16.mxu0 0
    %1615 = vmatmul.mubr.bf16.gmra.mrb[0].mxu0 %v1364
    %v1616 = vpop.f32.mrb[0].mxu0
    %v1617 = vadd.f32 %v1229, %v1616
    %v1618 = vpop.f32.mrb[0].mxu0
    %v1619 = vpop.f32.mrb[0].mxu0
    %v1620 = vadd.f32 %v1232, %v1619
    %v1621 = vpop.f32.mrb[0].mxu0
    %1622 = vmatprep.mubr.bf16.mxu0 0
    %1623 = vmatmul.mubr.bf16.gmra.mrb[0].mxu0 %v1367
    %v1624 = vpop.f32.mrb[0].mxu0
    %v1625 = vadd.f32 %v1237, %v1624
    %v1626 = vpop.f32.mrb[0].mxu0
    %v1627 = vpop.f32.mrb[0].mxu0
    %v1628 = vadd.f32 %v1240, %v1627
    %v1629 = vpop.f32.mrb[0].mxu0
    %1630 = vmatprep.mubr.bf16.mxu0 0
    %1631 = vmatmul.mubr.bf16.gmra.mrb[0].mxu0 %v1370
    %v1632 = vpop.f32.mrb[0].mxu0
    %v1633 = vadd.f32 %v1245, %v1632
    %v1634 = vpop.f32.mrb[0].mxu0
    %v1635 = vpop.f32.mrb[0].mxu0
    %v1636 = vadd.f32 %v1248, %v1635
    %v1637 = vpop.f32.mrb[0].mxu0
    %1638 = vmatprep.mubr.bf16.mxu0 0
    %1639 = vmatmul.mubr.bf16.gmra.mrb[0].mxu0 %v1373
    %v1640 = vpop.f32.mrb[0].mxu0
    %v1641 = vadd.f32 %v1253, %v1640
    %v1642 = vpop.f32.mrb[0].mxu0
    %v1643 = vpop.f32.mrb[0].mxu0
    %v1644 = vadd.f32 %v1256, %v1643
    %v1645 = vpop.f32.mrb[0].mxu0
    %1646 = vmatprep.mubr.bf16.mxu0 0
    %1647 = vmatmul.mubr.bf16.gmra.mrb[0].mxu0 %v1376
    %v1648 = vpop.f32.mrb[0].mxu0
    %v1649 = vadd.f32 %v1261, %v1648
    %v1650 = vpop.f32.mrb[0].mxu0
    %v1651 = vpop.f32.mrb[0].mxu0
    %v1652 = vadd.f32 %v1264, %v1651
    %v1653 = vpop.f32.mrb[0].mxu0
    %1654 = vmatprep.mubr.bf16.mxu0 0
    %1655 = vmatmul.mubr.bf16.gmra.mrb[0].mxu0 %v1379
    %v1656 = vpop.f32.mrb[0].mxu0
    %v1657 = vadd.f32 %v1269, %v1656
    %v1658 = vpop.f32.mrb[0].mxu0
    %v1659 = vpop.f32.mrb[0].mxu0
    %v1660 = vadd.f32 %v1272, %v1659
    %v1661 = vpop.f32.mrb[0].mxu0
    %1662 = vmatprep.mubr.bf16.mxu0 0
    %1663 = vmatmul.mubr.bf16.gmra.mrb[0].mxu0 %v1382
    %v1664 = vpop.f32.mrb[0].mxu0
    %v1665 = vadd.f32 %v1277, %v1664
    %v1666 = vpop.f32.mrb[0].mxu0
    %v1667 = vpop.f32.mrb[0].mxu0
    %v1668 = vadd.f32 %v1280, %v1667
    %v1669 = vpop.f32.mrb[0].mxu0
    %1670 = vmatprep.mubr.bf16.mxu0 0
    %1671 = vmatmul.mubr.bf16.gmra.mrb[0].mxu0 %v1385
    %v1672 = vpop.f32.mrb[0].mxu0
    %v1673 = vadd.f32 %v1285, %v1672
    %v1674 = vpop.f32.mrb[0].mxu0
    %v1675 = vpop.f32.mrb[0].mxu0
    %v1676 = vadd.f32 %v1288, %v1675
    %v1677 = vpop.f32.mrb[0].mxu0
    %1678 = vdwg.mxu0
    %v1679 = vld [vmem:[#allocation2 + $0x2] sm:$0xff]
    %v1680 = vld [vmem:[#allocation2 + $0xa] sm:$0xff]
    %v1681 = vld [vmem:[#allocation2 + $0x1a] sm:$0xff]
    %v1682 = vld [vmem:[#allocation2 + $0x22] sm:$0xff]
    %v1683 = vld [vmem:[#allocation2 + $0x32] sm:$0xff]
    %v1684 = vld [vmem:[#allocation2 + $0x3a] sm:$0xff]
    %v1685 = vld [vmem:[#allocation2 + $0x4a] sm:$0xff]
    %v1686 = vld [vmem:[#allocation2 + $0x52] sm:$0xff]
    %v1687 = vld [vmem:[#allocation2 + $0x62] sm:$0xff]
    %v1688 = vld [vmem:[#allocation2 + $0x6a] sm:$0xff]
    %v1689 = vld [vmem:[#allocation2 + $0x7a] sm:$0xff]
    %v1690 = vld [vmem:[#allocation2 + $0x82] sm:$0xff]
    %v1691 = vld [vmem:[#allocation2 + $0x92] sm:$0xff]
    %v1692 = vld [vmem:[#allocation2 + $0x9a] sm:$0xff]
    %v1693 = vld [vmem:[#allocation2 + $0xaa] sm:$0xff]
    %v1694 = vld [vmem:[#allocation2 + $0xb2] sm:$0xff]
    %v1695 = vld [vmem:[#allocation2 + $0xc2] sm:$0xff]
    %v1696 = vld [vmem:[#allocation2 + $0xca] sm:$0xff]
    %v1697 = vld [vmem:[#allocation2 + $0xda] sm:$0xff]
    %v1698 = vld [vmem:[#allocation2 + $0xe2] sm:$0xff]
    %v1699 = vld [vmem:[#allocation2 + $0xf2] sm:$0xff]
    %v1700 = vld [vmem:[#allocation2 + $0xfa] sm:$0xff]
    %v1701 = vld [vmem:[#allocation2 + $0x10a] sm:$0xff]
    %v1702 = vld [vmem:[#allocation2 + $0x112] sm:$0xff]
    %v1703 = vld [vmem:[#allocation2 + $0x122] sm:$0xff]
    %v1704 = vld [vmem:[#allocation2 + $0x12a] sm:$0xff]
    %v1705 = vld [vmem:[#allocation2 + $0x13a] sm:$0xff]
    %v1706 = vld [vmem:[#allocation2 + $0x142] sm:$0xff]
    %v1707 = vld [vmem:[#allocation2 + $0x152] sm:$0xff]
    %v1708 = vld [vmem:[#allocation2 + $0x15a] sm:$0xff]
    %v1709 = vld [vmem:[#allocation2 + $0x16a] sm:$0xff]
    %v1710 = vld [vmem:[#allocation2 + $0x172] sm:$0xff]
    %v1711 = vld [vmem:[#allocation2 + $0x1b2] sm:$0xff]
    %v1712 = vld [vmem:[#allocation2 + $0x1ba] sm:$0xff]
    %v1713 = vld [vmem:[#allocation2 + $0x1ca] sm:$0xff]
    %v1714 = vld [vmem:[#allocation2 + $0x1d2] sm:$0xff]
    %v1715 = vld [vmem:[#allocation2 + $0x1e2] sm:$0xff]
    %v1716 = vld [vmem:[#allocation2 + $0x1ea] sm:$0xff]
    %v1717 = vld [vmem:[#allocation2 + $0x1fa] sm:$0xff]
    %v1718 = vld [vmem:[#allocation2 + $0x202] sm:$0xff]
    %v1719 = vld [vmem:[#allocation2 + $0x212] sm:$0xff]
    %v1720 = vld [vmem:[#allocation2 + $0x21a] sm:$0xff]
    %v1721 = vld [vmem:[#allocation2 + $0x22a] sm:$0xff]
    %v1722 = vld [vmem:[#allocation2 + $0x232] sm:$0xff]
    %v1723 = vld [vmem:[#allocation2 + $0x242] sm:$0xff]
    %v1724 = vld [vmem:[#allocation2 + $0x24a] sm:$0xff]
    %v1725 = vld [vmem:[#allocation2 + $0x25a] sm:$0xff]
    %v1726 = vld [vmem:[#allocation2 + $0x262] sm:$0xff]
    %v1727 = vld [vmem:[#allocation2 + $0x272] sm:$0xff]
    %v1728 = vld [vmem:[#allocation2 + $0x27a] sm:$0xff]
    %v1729 = vld [vmem:[#allocation2 + $0x28a] sm:$0xff]
    %v1730 = vld [vmem:[#allocation2 + $0x292] sm:$0xff]
    %v1731 = vld [vmem:[#allocation2 + $0x2a2] sm:$0xff]
    %v1732 = vld [vmem:[#allocation2 + $0x2aa] sm:$0xff]
    %v1733 = vld [vmem:[#allocation2 + $0x2ba] sm:$0xff]
    %v1734 = vld [vmem:[#allocation2 + $0x2c2] sm:$0xff]
    %v1735 = vld [vmem:[#allocation2 + $0x2d2] sm:$0xff]
    %v1736 = vld [vmem:[#allocation2 + $0x2da] sm:$0xff]
    %v1737 = vld [vmem:[#allocation2 + $0x2ea] sm:$0xff]
    %v1738 = vld [vmem:[#allocation2 + $0x2f2] sm:$0xff]
    %v1739 = vld [vmem:[#allocation2 + $0x302] sm:$0xff]
    %v1740 = vld [vmem:[#allocation2 + $0x30a] sm:$0xff]
    %v1741 = vld [vmem:[#allocation2 + $0x31a] sm:$0xff]
    %v1742 = vld [vmem:[#allocation2 + $0x322] sm:$0xff]
    %v1743 = vpack.c.bf16 %v1680, %v1679
    %v1744 = vpack.c.bf16 %v1682, %v1681
    %v1745 = vpack.c.bf16 %v1684, %v1683
    %v1746 = vpack.c.bf16 %v1686, %v1685
    %v1747 = vpack.c.bf16 %v1688, %v1687
    %v1748 = vpack.c.bf16 %v1690, %v1689
    %v1749 = vpack.c.bf16 %v1692, %v1691
    %v1750 = vpack.c.bf16 %v1694, %v1693
    %v1751 = vpack.c.bf16 %v1696, %v1695
    %v1752 = vpack.c.bf16 %v1698, %v1697
    %v1753 = vpack.c.bf16 %v1700, %v1699
    %v1754 = vpack.c.bf16 %v1702, %v1701
    %v1755 = vpack.c.bf16 %v1704, %v1703
    %v1756 = vpack.c.bf16 %v1706, %v1705
    %v1757 = vpack.c.bf16 %v1708, %v1707
    %v1758 = vpack.c.bf16 %v1710, %v1709
    %v1759 = vpack.c.bf16 %v1712, %v1711
    %v1760 = vpack.c.bf16 %v1714, %v1713
    %v1761 = vpack.c.bf16 %v1716, %v1715
    %v1762 = vpack.c.bf16 %v1718, %v1717
    %v1763 = vpack.c.bf16 %v1720, %v1719
    %v1764 = vpack.c.bf16 %v1722, %v1721
    %v1765 = vpack.c.bf16 %v1724, %v1723
    %v1766 = vpack.c.bf16 %v1726, %v1725
    %v1767 = vpack.c.bf16 %v1728, %v1727
    %v1768 = vpack.c.bf16 %v1730, %v1729
    %v1769 = vpack.c.bf16 %v1732, %v1731
    %v1770 = vpack.c.bf16 %v1734, %v1733
    %v1771 = vpack.c.bf16 %v1736, %v1735
    %v1772 = vpack.c.bf16 %v1738, %v1737
    %v1773 = vpack.c.bf16 %v1740, %v1739
    %v1774 = vpack.c.bf16 %v1742, %v1741
    %s1775 = scalar_lea.vmem %s3, 4
    %v1776 = vld [vmem:[%s1775] sm:$0x3]
    %v1778 = vsel %vm562, %v1743, 0
    %v1781 = vsel %vm562, %v1744, 0
    %v1784 = vsel %vm562, %v1745, 0
    %v1787 = vsel %vm562, %v1746, 0
    %v1790 = vsel %vm562, %v1747, 0
    %v1793 = vsel %vm562, %v1748, 0
    %v1796 = vsel %vm562, %v1749, 0
    %v1799 = vsel %vm562, %v1750, 0
    %v1802 = vsel %vm562, %v1751, 0
    %v1805 = vsel %vm562, %v1752, 0
    %v1808 = vsel %vm562, %v1753, 0
    %v1811 = vsel %vm562, %v1754, 0
    %v1814 = vsel %vm562, %v1755, 0
    %v1817 = vsel %vm562, %v1756, 0
    %v1820 = vsel %vm562, %v1757, 0
    %v1823 = vsel %vm562, %v1758, 0
    %v1826 = vsel %vm562, %v1759, 0
    %v1829 = vsel %vm562, %v1760, 0
    %v1832 = vsel %vm562, %v1761, 0
    %v1835 = vsel %vm562, %v1762, 0
    %v1838 = vsel %vm562, %v1763, 0
    %v1841 = vsel %vm562, %v1764, 0
    %v1844 = vsel %vm562, %v1765, 0
    %v1847 = vsel %vm562, %v1766, 0
    %v1850 = vsel %vm562, %v1767, 0
    %v1853 = vsel %vm562, %v1768, 0
    %v1856 = vsel %vm562, %v1769, 0
    %v1859 = vsel %vm562, %v1770, 0
    %v1862 = vsel %vm562, %v1771, 0
    %v1865 = vsel %vm562, %v1772, 0
    %v1868 = vsel %vm562, %v1773, 0
    %v1871 = vsel %vm562, %v1774, 0
    %v1874 = vsel %vm998, %v1776, 0
    %1876 = vmatprep.subr.bf16.mxu0 0
    %1877 = vmatpush1.bf16.msra.mxu0 %v1874
    %1878 = vmatprep.subr.bf16.mxu0 0
    %1879 = vmatpush1.bf16.msra.mxu0 0
    %1880 = vmatprep.subr.bf16.mxu0 0
    %1881 = vmatpush1.bf16.msra.mxu0 0
    %1882 = vmatprep.subr.bf16.mxu0 0
    %1883 = vmatpush1.bf16.msra.mxu0 0
    %1884 = vmatprep.subr.bf16.mxu0 0
    %1885 = vmatpush1.bf16.msra.mxu0 0
    %1886 = vmatprep.subr.bf16.mxu0 0
    %1887 = vmatpush1.bf16.msra.mxu0 0
    %1888 = vmatprep.subr.bf16.mxu0 0
    %1889 = vmatpush1.bf16.msra.mxu0 0
    %1890 = vmatprep.subr.bf16.mxu0 0
    %1891 = vmatpush1.bf16.msra.mxu0 0
    %1892 = vmatprep.subr.bf16.mxu0 0
    %1893 = vmatpush1.bf16.msra.mxu0 0
    %1894 = vmatprep.subr.bf16.mxu0 0
    %1895 = vmatpush1.bf16.msra.mxu0 0
    %1896 = vmatprep.subr.bf16.mxu0 0
    %1897 = vmatpush1.bf16.msra.mxu0 0
    %1898 = vmatprep.subr.bf16.mxu0 0
    %1899 = vmatpush1.bf16.msra.mxu0 0
    %1900 = vmatprep.subr.bf16.mxu0 0
    %1901 = vmatpush1.bf16.msra.mxu0 0
    %1902 = vmatprep.subr.bf16.mxu0 0
    %1903 = vmatpush1.bf16.msra.mxu0 0
    %1904 = vmatprep.subr.bf16.mxu0 0
    %1905 = vmatpush1.bf16.msra.mxu0 0
    %1906 = vmatprep.subr.bf16.mxu0 0
    %1907 = vmatpush1.bf16.msra.mxu0 0
    %1908 = vmatprep.mubr.bf16.mxu0 0
    %1909 = vmatmul.mubr.bf16.gmra.mrb[0].mxu0 %v1778
    %v1910 = vpop.f32.mrb[0].mxu0
    %v1911 = vadd.f32 0.0, %v1910
    %v1912 = vpop.f32.mrb[0].mxu0
    %v1913 = vpop.f32.mrb[0].mxu0
    %v1914 = vadd.f32 0.0, %v1913
    %v1915 = vpop.f32.mrb[0].mxu0
    %1916 = vmatprep.mubr.bf16.mxu0 0
    %1917 = vmatmul.mubr.bf16.gmra.mrb[0].mxu0 %v1781
    %v1918 = vpop.f32.mrb[0].mxu0
    %v1919 = vadd.f32 0.0, %v1918
    %v1920 = vpop.f32.mrb[0].mxu0
    %v1921 = vpop.f32.mrb[0].mxu0
    %v1922 = vadd.f32 0.0, %v1921
    %v1923 = vpop.f32.mrb[0].mxu0
    %1924 = vmatprep.mubr.bf16.mxu0 0
    %1925 = vmatmul.mubr.bf16.gmra.mrb[0].mxu0 %v1784
    %v1926 = vpop.f32.mrb[0].mxu0
    %v1927 = vadd.f32 0.0, %v1926
    %v1928 = vpop.f32.mrb[0].mxu0
    %v1929 = vpop.f32.mrb[0].mxu0
    %v1930 = vadd.f32 0.0, %v1929
    %v1931 = vpop.f32.mrb[0].mxu0
    %1932 = vmatprep.mubr.bf16.mxu0 0
    %1933 = vmatmul.mubr.bf16.gmra.mrb[0].mxu0 %v1787
    %v1934 = vpop.f32.mrb[0].mxu0
    %v1935 = vadd.f32 0.0, %v1934
    %v1936 = vpop.f32.mrb[0].mxu0
    %v1937 = vpop.f32.mrb[0].mxu0
    %v1938 = vadd.f32 0.0, %v1937
    %v1939 = vpop.f32.mrb[0].mxu0
    %1940 = vmatprep.mubr.bf16.mxu0 0
    %1941 = vmatmul.mubr.bf16.gmra.mrb[0].mxu0 %v1790
    %v1942 = vpop.f32.mrb[0].mxu0
    %v1943 = vadd.f32 0.0, %v1942
    %v1944 = vpop.f32.mrb[0].mxu0
    %v1945 = vpop.f32.mrb[0].mxu0
    %v1946 = vadd.f32 0.0, %v1945
    %v1947 = vpop.f32.mrb[0].mxu0
    %1948 = vmatprep.mubr.bf16.mxu0 0
    %1949 = vmatmul.mubr.bf16.gmra.mrb[0].mxu0 %v1793
    %v1950 = vpop.f32.mrb[0].mxu0
    %v1951 = vadd.f32 0.0, %v1950
    %v1952 = vpop.f32.mrb[0].mxu0
    %v1953 = vpop.f32.mrb[0].mxu0
    %v1954 = vadd.f32 0.0, %v1953
    %v1955 = vpop.f32.mrb[0].mxu0
    %1956 = vmatprep.mubr.bf16.mxu0 0
    %1957 = vmatmul.mubr.bf16.gmra.mrb[0].mxu0 %v1796
    %v1958 = vpop.f32.mrb[0].mxu0
    %v1959 = vadd.f32 0.0, %v1958
    %v1960 = vpop.f32.mrb[0].mxu0
    %v1961 = vpop.f32.mrb[0].mxu0
    %v1962 = vadd.f32 0.0, %v1961
    %v1963 = vpop.f32.mrb[0].mxu0
    %1964 = vmatprep.mubr.bf16.mxu0 0
    %1965 = vmatmul.mubr.bf16.gmra.mrb[0].mxu0 %v1799
    %v1966 = vpop.f32.mrb[0].mxu0
    %v1967 = vadd.f32 0.0, %v1966
    %v1968 = vpop.f32.mrb[0].mxu0
    %v1969 = vpop.f32.mrb[0].mxu0
    %v1970 = vadd.f32 0.0, %v1969
    %v1971 = vpop.f32.mrb[0].mxu0
    %1972 = vmatprep.mubr.bf16.mxu0 0
    %1973 = vmatmul.mubr.bf16.gmra.mrb[0].mxu0 %v1802
    %v1974 = vpop.f32.mrb[0].mxu0
    %v1975 = vadd.f32 0.0, %v1974
    %v1976 = vpop.f32.mrb[0].mxu0
    %v1977 = vpop.f32.mrb[0].mxu0
    %v1978 = vadd.f32 0.0, %v1977
    %v1979 = vpop.f32.mrb[0].mxu0
    %1980 = vmatprep.mubr.bf16.mxu0 0
    %1981 = vmatmul.mubr.bf16.gmra.mrb[0].mxu0 %v1805
    %v1982 = vpop.f32.mrb[0].mxu0
    %v1983 = vadd.f32 0.0, %v1982
    %v1984 = vpop.f32.mrb[0].mxu0
    %v1985 = vpop.f32.mrb[0].mxu0
    %v1986 = vadd.f32 0.0, %v1985
    %v1987 = vpop.f32.mrb[0].mxu0
    %1988 = vmatprep.mubr.bf16.mxu0 0
    %1989 = vmatmul.mubr.bf16.gmra.mrb[0].mxu0 %v1808
    %v1990 = vpop.f32.mrb[0].mxu0
    %v1991 = vadd.f32 0.0, %v1990
    %v1992 = vpop.f32.mrb[0].mxu0
    %v1993 = vpop.f32.mrb[0].mxu0
    %v1994 = vadd.f32 0.0, %v1993
    %v1995 = vpop.f32.mrb[0].mxu0
    %1996 = vmatprep.mubr.bf16.mxu0 0
    %1997 = vmatmul.mubr.bf16.gmra.mrb[0].mxu0 %v1811
    %v1998 = vpop.f32.mrb[0].mxu0
    %v1999 = vadd.f32 0.0, %v1998
    %v2000 = vpop.f32.mrb[0].mxu0
    %v2001 = vpop.f32.mrb[0].mxu0
    %v2002 = vadd.f32 0.0, %v2001
    %v2003 = vpop.f32.mrb[0].mxu0
    %2004 = vmatprep.mubr.bf16.mxu0 0
    %2005 = vmatmul.mubr.bf16.gmra.mrb[0].mxu0 %v1814
    %v2006 = vpop.f32.mrb[0].mxu0
    %v2007 = vadd.f32 0.0, %v2006
    %v2008 = vpop.f32.mrb[0].mxu0
    %v2009 = vpop.f32.mrb[0].mxu0
    %v2010 = vadd.f32 0.0, %v2009
    %v2011 = vpop.f32.mrb[0].mxu0
    %2012 = vmatprep.mubr.bf16.mxu0 0
    %2013 = vmatmul.mubr.bf16.gmra.mrb[0].mxu0 %v1817
    %v2014 = vpop.f32.mrb[0].mxu0
    %v2015 = vadd.f32 0.0, %v2014
    %v2016 = vpop.f32.mrb[0].mxu0
    %v2017 = vpop.f32.mrb[0].mxu0
    %v2018 = vadd.f32 0.0, %v2017
    %v2019 = vpop.f32.mrb[0].mxu0
    %2020 = vmatprep.mubr.bf16.mxu0 0
    %2021 = vmatmul.mubr.bf16.gmra.mrb[0].mxu0 %v1820
    %v2022 = vpop.f32.mrb[0].mxu0
    %v2023 = vadd.f32 0.0, %v2022
    %v2024 = vpop.f32.mrb[0].mxu0
    %v2025 = vpop.f32.mrb[0].mxu0
    %v2026 = vadd.f32 0.0, %v2025
    %v2027 = vpop.f32.mrb[0].mxu0
    %2028 = vmatprep.mubr.bf16.mxu0 0
    %2029 = vmatmul.mubr.bf16.gmra.mrb[0].mxu0 %v1823
    %v2030 = vpop.f32.mrb[0].mxu0
    %v2031 = vadd.f32 0.0, %v2030
    %v2032 = vpop.f32.mrb[0].mxu0
    %v2033 = vpop.f32.mrb[0].mxu0
    %v2034 = vadd.f32 0.0, %v2033
    %v2035 = vpop.f32.mrb[0].mxu0
    %2036 = vmatprep.mubr.bf16.mxu0 0
    %2037 = vmatmul.mubr.bf16.gmra.mrb[0].mxu0 %v1826
    %v2038 = vpop.f32.mrb[0].mxu0
    %v2039 = vadd.f32 0.0, %v2038
    %v2040 = vpop.f32.mrb[0].mxu0
    %v2041 = vpop.f32.mrb[0].mxu0
    %v2042 = vadd.f32 0.0, %v2041
    %v2043 = vpop.f32.mrb[0].mxu0
    %2044 = vmatprep.mubr.bf16.mxu0 0
    %2045 = vmatmul.mubr.bf16.gmra.mrb[0].mxu0 %v1829
    %v2046 = vpop.f32.mrb[0].mxu0
    %v2047 = vadd.f32 0.0, %v2046
    %v2048 = vpop.f32.mrb[0].mxu0
    %v2049 = vpop.f32.mrb[0].mxu0
    %v2050 = vadd.f32 0.0, %v2049
    %v2051 = vpop.f32.mrb[0].mxu0
    %2052 = vmatprep.mubr.bf16.mxu0 0
    %2053 = vmatmul.mubr.bf16.gmra.mrb[0].mxu0 %v1832
    %v2054 = vpop.f32.mrb[0].mxu0
    %v2055 = vadd.f32 0.0, %v2054
    %v2056 = vpop.f32.mrb[0].mxu0
    %v2057 = vpop.f32.mrb[0].mxu0
    %v2058 = vadd.f32 0.0, %v2057
    %v2059 = vpop.f32.mrb[0].mxu0
    %2060 = vmatprep.mubr.bf16.mxu0 0
    %2061 = vmatmul.mubr.bf16.gmra.mrb[0].mxu0 %v1835
    %v2062 = vpop.f32.mrb[0].mxu0
    %v2063 = vadd.f32 0.0, %v2062
    %v2064 = vpop.f32.mrb[0].mxu0
    %v2065 = vpop.f32.mrb[0].mxu0
    %v2066 = vadd.f32 0.0, %v2065
    %v2067 = vpop.f32.mrb[0].mxu0
    %2068 = vmatprep.mubr.bf16.mxu0 0
    %2069 = vmatmul.mubr.bf16.gmra.mrb[0].mxu0 %v1838
    %v2070 = vpop.f32.mrb[0].mxu0
    %v2071 = vadd.f32 0.0, %v2070
    %v2072 = vpop.f32.mrb[0].mxu0
    %v2073 = vpop.f32.mrb[0].mxu0
    %v2074 = vadd.f32 0.0, %v2073
    %v2075 = vpop.f32.mrb[0].mxu0
    %2076 = vmatprep.mubr.bf16.mxu0 0
    %2077 = vmatmul.mubr.bf16.gmra.mrb[0].mxu0 %v1841
    %v2078 = vpop.f32.mrb[0].mxu0
    %v2079 = vadd.f32 0.0, %v2078
    %v2080 = vpop.f32.mrb[0].mxu0
    %v2081 = vpop.f32.mrb[0].mxu0
    %v2082 = vadd.f32 0.0, %v2081
    %v2083 = vpop.f32.mrb[0].mxu0
    %2084 = vmatprep.mubr.bf16.mxu0 0
    %2085 = vmatmul.mubr.bf16.gmra.mrb[0].mxu0 %v1844
    %v2086 = vpop.f32.mrb[0].mxu0
    %v2087 = vadd.f32 0.0, %v2086
    %v2088 = vpop.f32.mrb[0].mxu0
    %v2089 = vpop.f32.mrb[0].mxu0
    %v2090 = vadd.f32 0.0, %v2089
    %v2091 = vpop.f32.mrb[0].mxu0
    %2092 = vmatprep.mubr.bf16.mxu0 0
    %2093 = vmatmul.mubr.bf16.gmra.mrb[0].mxu0 %v1847
    %v2094 = vpop.f32.mrb[0].mxu0
    %v2095 = vadd.f32 0.0, %v2094
    %v2096 = vpop.f32.mrb[0].mxu0
    %v2097 = vpop.f32.mrb[0].mxu0
    %v2098 = vadd.f32 0.0, %v2097
    %v2099 = vpop.f32.mrb[0].mxu0
    %2100 = vmatprep.mubr.bf16.mxu0 0
    %2101 = vmatmul.mubr.bf16.gmra.mrb[0].mxu0 %v1850
    %v2102 = vpop.f32.mrb[0].mxu0
    %v2103 = vadd.f32 0.0, %v2102
    %v2104 = vpop.f32.mrb[0].mxu0
    %v2105 = vpop.f32.mrb[0].mxu0
    %v2106 = vadd.f32 0.0, %v2105
    %v2107 = vpop.f32.mrb[0].mxu0
    %2108 = vmatprep.mubr.bf16.mxu0 0
    %2109 = vmatmul.mubr.bf16.gmra.mrb[0].mxu0 %v1853
    %v2110 = vpop.f32.mrb[0].mxu0
    %v2111 = vadd.f32 0.0, %v2110
    %v2112 = vpop.f32.mrb[0].mxu0
    %v2113 = vpop.f32.mrb[0].mxu0
    %v2114 = vadd.f32 0.0, %v2113
    %v2115 = vpop.f32.mrb[0].mxu0
    %2116 = vmatprep.mubr.bf16.mxu0 0
    %2117 = vmatmul.mubr.bf16.gmra.mrb[0].mxu0 %v1856
    %v2118 = vpop.f32.mrb[0].mxu0
    %v2119 = vadd.f32 0.0, %v2118
    %v2120 = vpop.f32.mrb[0].mxu0
    %v2121 = vpop.f32.mrb[0].mxu0
    %v2122 = vadd.f32 0.0, %v2121
    %v2123 = vpop.f32.mrb[0].mxu0
    %2124 = vmatprep.mubr.bf16.mxu0 0
    %2125 = vmatmul.mubr.bf16.gmra.mrb[0].mxu0 %v1859
    %v2126 = vpop.f32.mrb[0].mxu0
    %v2127 = vadd.f32 0.0, %v2126
    %v2128 = vpop.f32.mrb[0].mxu0
    %v2129 = vpop.f32.mrb[0].mxu0
    %v2130 = vadd.f32 0.0, %v2129
    %v2131 = vpop.f32.mrb[0].mxu0
    %2132 = vmatprep.mubr.bf16.mxu0 0
    %2133 = vmatmul.mubr.bf16.gmra.mrb[0].mxu0 %v1862
    %v2134 = vpop.f32.mrb[0].mxu0
    %v2135 = vadd.f32 0.0, %v2134
    %v2136 = vpop.f32.mrb[0].mxu0
    %v2137 = vpop.f32.mrb[0].mxu0
    %v2138 = vadd.f32 0.0, %v2137
    %v2139 = vpop.f32.mrb[0].mxu0
    %2140 = vmatprep.mubr.bf16.mxu0 0
    %2141 = vmatmul.mubr.bf16.gmra.mrb[0].mxu0 %v1865
    %v2142 = vpop.f32.mrb[0].mxu0
    %v2143 = vadd.f32 0.0, %v2142
    %v2144 = vpop.f32.mrb[0].mxu0
    %v2145 = vpop.f32.mrb[0].mxu0
    %v2146 = vadd.f32 0.0, %v2145
    %v2147 = vpop.f32.mrb[0].mxu0
    %2148 = vmatprep.mubr.bf16.mxu0 0
    %2149 = vmatmul.mubr.bf16.gmra.mrb[0].mxu0 %v1868
    %v2150 = vpop.f32.mrb[0].mxu0
    %v2151 = vadd.f32 0.0, %v2150
    %v2152 = vpop.f32.mrb[0].mxu0
    %v2153 = vpop.f32.mrb[0].mxu0
    %v2154 = vadd.f32 0.0, %v2153
    %v2155 = vpop.f32.mrb[0].mxu0
    %2156 = vmatprep.mubr.bf16.mxu0 0
    %2157 = vmatmul.mubr.bf16.gmra.mrb[0].mxu0 %v1871
    %v2158 = vpop.f32.mrb[0].mxu0
    %v2159 = vadd.f32 0.0, %v2158
    %v2160 = vpop.f32.mrb[0].mxu0
    %v2161 = vpop.f32.mrb[0].mxu0
    %v2162 = vadd.f32 0.0, %v2161
    %v2163 = vpop.f32.mrb[0].mxu0
    %2164 = vdwg.mxu0
    %v2165 = vadd.f32 %v1425, %v1911
    %v2166 = vadd.f32 %v1428, %v1914
    %v2167 = vadd.f32 %v1433, %v1919
    %v2168 = vadd.f32 %v1436, %v1922
    %v2169 = vadd.f32 %v1441, %v1927
    %v2170 = vadd.f32 %v1444, %v1930
    %v2171 = vadd.f32 %v1449, %v1935
    %v2172 = vadd.f32 %v1452, %v1938
    %v2173 = vadd.f32 %v1457, %v1943
    %v2174 = vadd.f32 %v1460, %v1946
    %v2175 = vadd.f32 %v1465, %v1951
    %v2176 = vadd.f32 %v1468, %v1954
    %v2177 = vadd.f32 %v1473, %v1959
    %v2178 = vadd.f32 %v1476, %v1962
    %v2179 = vadd.f32 %v1481, %v1967
    %v2180 = vadd.f32 %v1484, %v1970
    %v2181 = vadd.f32 %v1489, %v1975
    %v2182 = vadd.f32 %v1492, %v1978
    %v2183 = vadd.f32 %v1497, %v1983
    %v2184 = vadd.f32 %v1500, %v1986
    %v2185 = vadd.f32 %v1505, %v1991
    %v2186 = vadd.f32 %v1508, %v1994
    %v2187 = vadd.f32 %v1513, %v1999
    %v2188 = vadd.f32 %v1516, %v2002
    %v2189 = vadd.f32 %v1521, %v2007
    %v2190 = vadd.f32 %v1524, %v2010
    %v2191 = vadd.f32 %v1529, %v2015
    %v2192 = vadd.f32 %v1532, %v2018
    %v2193 = vadd.f32 %v1537, %v2023
    %v2194 = vadd.f32 %v1540, %v2026
    %v2195 = vadd.f32 %v1545, %v2031
    %v2196 = vadd.f32 %v1548, %v2034
    %v2197 = vadd.f32 %v1553, %v2039
    %v2198 = vadd.f32 %v1556, %v2042
    %v2199 = vadd.f32 %v1561, %v2047
    %v2200 = vadd.f32 %v1564, %v2050
    %v2201 = vadd.f32 %v1569, %v2055
    %v2202 = vadd.f32 %v1572, %v2058
    %v2203 = vadd.f32 %v1577, %v2063
    %v2204 = vadd.f32 %v1580, %v2066
    %v2205 = vadd.f32 %v1585, %v2071
    %v2206 = vadd.f32 %v1588, %v2074
    %v2207 = vadd.f32 %v1593, %v2079
    %v2208 = vadd.f32 %v1596, %v2082
    %v2209 = vadd.f32 %v1601, %v2087
    %v2210 = vadd.f32 %v1604, %v2090
    %v2211 = vadd.f32 %v1609, %v2095
    %v2212 = vadd.f32 %v1612, %v2098
    %v2213 = vadd.f32 %v1617, %v2103
    %v2214 = vadd.f32 %v1620, %v2106
    %v2215 = vadd.f32 %v1625, %v2111
    %v2216 = vadd.f32 %v1628, %v2114
    %v2217 = vadd.f32 %v1633, %v2119
    %v2218 = vadd.f32 %v1636, %v2122
    %v2219 = vadd.f32 %v1641, %v2127
    %v2220 = vadd.f32 %v1644, %v2130
    %v2221 = vadd.f32 %v1649, %v2135
    %v2222 = vadd.f32 %v1652, %v2138
    %v2223 = vadd.f32 %v1657, %v2143
    %v2224 = vadd.f32 %v1660, %v2146
    %v2225 = vadd.f32 %v1665, %v2151
    %v2226 = vadd.f32 %v1668, %v2154
    %v2227 = vadd.f32 %v1673, %v2159
    %v2228 = vadd.f32 %v1676, %v2162
    %v2229 = vld [vmem:[%s577] sm:$0xff]
    %v2230 = vld [vmem:[%s577 + $0x8] sm:$0xff]
    %v2231 = vld [vmem:[%s577 + $0x18] sm:$0xff]
    %v2232 = vld [vmem:[%s577 + $0x20] sm:$0xff]
    %v2233 = vld [vmem:[%s577 + $0x30] sm:$0xff]
    %v2234 = vld [vmem:[%s577 + $0x38] sm:$0xff]
    %v2235 = vld [vmem:[%s577 + $0x48] sm:$0xff]
    %v2236 = vld [vmem:[%s577 + $0x50] sm:$0xff]
    %v2237 = vld [vmem:[%s577 + $0x60] sm:$0xff]
    %v2238 = vld [vmem:[%s577 + $0x68] sm:$0xff]
    %v2239 = vld [vmem:[%s577 + $0x78] sm:$0xff]
    %v2240 = vld [vmem:[%s577 + $0x80] sm:$0xff]
    %v2241 = vld [vmem:[%s577 + $0x90] sm:$0xff]
    %v2242 = vld [vmem:[%s577 + $0x98] sm:$0xff]
    %v2243 = vld [vmem:[%s577 + $0xa8] sm:$0xff]
    %v2244 = vld [vmem:[%s577 + $0xb0] sm:$0xff]
    %v2245 = vld [vmem:[%s577 + $0xc0] sm:$0xff]
    %v2246 = vld [vmem:[%s577 + $0xc8] sm:$0xff]
    %v2247 = vld [vmem:[%s577 + $0xd8] sm:$0xff]
    %v2248 = vld [vmem:[%s577 + $0xe0] sm:$0xff]
    %v2249 = vld [vmem:[%s577 + $0xf0] sm:$0xff]
    %v2250 = vld [vmem:[%s577 + $0xf8] sm:$0xff]
    %v2251 = vld [vmem:[%s577 + $0x108] sm:$0xff]
    %v2252 = vld [vmem:[%s577 + $0x110] sm:$0xff]
    %v2253 = vld [vmem:[%s577 + $0x120] sm:$0xff]
    %v2254 = vld [vmem:[%s577 + $0x128] sm:$0xff]
    %v2255 = vld [vmem:[%s577 + $0x138] sm:$0xff]
    %v2256 = vld [vmem:[%s577 + $0x140] sm:$0xff]
    %v2257 = vld [vmem:[%s577 + $0x150] sm:$0xff]
    %v2258 = vld [vmem:[%s577 + $0x158] sm:$0xff]
    %v2259 = vld [vmem:[%s577 + $0x168] sm:$0xff]
    %v2260 = vld [vmem:[%s577 + $0x170] sm:$0xff]
    %v2261 = vld [vmem:[%s577 + $0x1b0] sm:$0xff]
    %v2262 = vld [vmem:[%s577 + $0x1b8] sm:$0xff]
    %v2263 = vld [vmem:[%s577 + $0x1c8] sm:$0xff]
    %v2264 = vld [vmem:[%s577 + $0x1d0] sm:$0xff]
    %v2265 = vld [vmem:[%s577 + $0x1e0] sm:$0xff]
    %v2266 = vld [vmem:[%s577 + $0x1e8] sm:$0xff]
    %v2267 = vld [vmem:[%s577 + $0x1f8] sm:$0xff]
    %v2268 = vld [vmem:[%s577 + $0x200] sm:$0xff]
    %v2269 = vld [vmem:[%s577 + $0x210] sm:$0xff]
    %v2270 = vld [vmem:[%s577 + $0x218] sm:$0xff]
    %v2271 = vld [vmem:[%s577 + $0x228] sm:$0xff]
    %v2272 = vld [vmem:[%s577 + $0x230] sm:$0xff]
    %v2273 = vld [vmem:[%s577 + $0x240] sm:$0xff]
    %v2274 = vld [vmem:[%s577 + $0x248] sm:$0xff]
    %v2275 = vld [vmem:[%s577 + $0x258] sm:$0xff]
    %v2276 = vld [vmem:[%s577 + $0x260] sm:$0xff]
    %v2277 = vld [vmem:[%s577 + $0x270] sm:$0xff]
    %v2278 = vld [vmem:[%s577 + $0x278] sm:$0xff]
    %v2279 = vld [vmem:[%s577 + $0x288] sm:$0xff]
    %v2280 = vld [vmem:[%s577 + $0x290] sm:$0xff]
    %v2281 = vld [vmem:[%s577 + $0x2a0] sm:$0xff]
    %v2282 = vld [vmem:[%s577 + $0x2a8] sm:$0xff]
    %v2283 = vld [vmem:[%s577 + $0x2b8] sm:$0xff]
    %v2284 = vld [vmem:[%s577 + $0x2c0] sm:$0xff]
    %v2285 = vld [vmem:[%s577 + $0x2d0] sm:$0xff]
    %v2286 = vld [vmem:[%s577 + $0x2d8] sm:$0xff]
    %v2287 = vld [vmem:[%s577 + $0x2e8] sm:$0xff]
    %v2288 = vld [vmem:[%s577 + $0x2f0] sm:$0xff]
    %v2289 = vld [vmem:[%s577 + $0x300] sm:$0xff]
    %v2290 = vld [vmem:[%s577 + $0x308] sm:$0xff]
    %v2291 = vld [vmem:[%s577 + $0x318] sm:$0xff]
    %v2292 = vld [vmem:[%s577 + $0x320] sm:$0xff]
    %v2293 = vpack.c.bf16 %v2230, %v2229
    %v2294 = vpack.c.bf16 %v2232, %v2231
    %v2295 = vpack.c.bf16 %v2234, %v2233
    %v2296 = vpack.c.bf16 %v2236, %v2235
    %v2297 = vpack.c.bf16 %v2238, %v2237
    %v2298 = vpack.c.bf16 %v2240, %v2239
    %v2299 = vpack.c.bf16 %v2242, %v2241
    %v2300 = vpack.c.bf16 %v2244, %v2243
    %v2301 = vpack.c.bf16 %v2246, %v2245
    %v2302 = vpack.c.bf16 %v2248, %v2247
    %v2303 = vpack.c.bf16 %v2250, %v2249
    %v2304 = vpack.c.bf16 %v2252, %v2251
    %v2305 = vpack.c.bf16 %v2254, %v2253
    %v2306 = vpack.c.bf16 %v2256, %v2255
    %v2307 = vpack.c.bf16 %v2258, %v2257
    %v2308 = vpack.c.bf16 %v2260, %v2259
    %v2309 = vpack.c.bf16 %v2262, %v2261
    %v2310 = vpack.c.bf16 %v2264, %v2263
    %v2311 = vpack.c.bf16 %v2266, %v2265
    %v2312 = vpack.c.bf16 %v2268, %v2267
    %v2313 = vpack.c.bf16 %v2270, %v2269
    %v2314 = vpack.c.bf16 %v2272, %v2271
    %v2315 = vpack.c.bf16 %v2274, %v2273
    %v2316 = vpack.c.bf16 %v2276, %v2275
    %v2317 = vpack.c.bf16 %v2278, %v2277
    %v2318 = vpack.c.bf16 %v2280, %v2279
    %v2319 = vpack.c.bf16 %v2282, %v2281
    %v2320 = vpack.c.bf16 %v2284, %v2283
    %v2321 = vpack.c.bf16 %v2286, %v2285
    %v2322 = vpack.c.bf16 %v2288, %v2287
    %v2323 = vpack.c.bf16 %v2290, %v2289
    %v2324 = vpack.c.bf16 %v2292, %v2291
    %s2325 = scalar_lea.vmem %s3, 6
    %v2326 = vld [vmem:[%s2325] sm:$0x3]
    %v2328 = vsel %vm562, %v2293, 0
    %v2331 = vsel %vm562, %v2294, 0
    %v2334 = vsel %vm562, %v2295, 0
    %v2337 = vsel %vm562, %v2296, 0
    %v2340 = vsel %vm562, %v2297, 0
    %v2343 = vsel %vm562, %v2298, 0
    %v2346 = vsel %vm562, %v2299, 0
    %v2349 = vsel %vm562, %v2300, 0
    %v2352 = vsel %vm562, %v2301, 0
    %v2355 = vsel %vm562, %v2302, 0
    %v2358 = vsel %vm562, %v2303, 0
    %v2361 = vsel %vm562, %v2304, 0
    %v2364 = vsel %vm562, %v2305, 0
    %v2367 = vsel %vm562, %v2306, 0
    %v2370 = vsel %vm562, %v2307, 0
    %v2373 = vsel %vm562, %v2308, 0
    %v2376 = vsel %vm562, %v2309, 0
    %v2379 = vsel %vm562, %v2310, 0
    %v2382 = vsel %vm562, %v2311, 0
    %v2385 = vsel %vm562, %v2312, 0
    %v2388 = vsel %vm562, %v2313, 0
    %v2391 = vsel %vm562, %v2314, 0
    %v2394 = vsel %vm562, %v2315, 0
    %v2397 = vsel %vm562, %v2316, 0
    %v2400 = vsel %vm562, %v2317, 0
    %v2403 = vsel %vm562, %v2318, 0
    %v2406 = vsel %vm562, %v2319, 0
    %v2409 = vsel %vm562, %v2320, 0
    %v2412 = vsel %vm562, %v2321, 0
    %v2415 = vsel %vm562, %v2322, 0
    %v2418 = vsel %vm562, %v2323, 0
    %v2421 = vsel %vm562, %v2324, 0
    %v2424 = vsel %vm998, %v2326, 0
    %2426 = vmatprep.subr.bf16.mxu0 0
    %2427 = vmatpush1.bf16.msra.mxu0 %v2424
    %2428 = vmatprep.subr.bf16.mxu0 0
    %2429 = vmatpush1.bf16.msra.mxu0 0
    %2430 = vmatprep.subr.bf16.mxu0 0
    %2431 = vmatpush1.bf16.msra.mxu0 0
    %2432 = vmatprep.subr.bf16.mxu0 0
    %2433 = vmatpush1.bf16.msra.mxu0 0
    %2434 = vmatprep.subr.bf16.mxu0 0
    %2435 = vmatpush1.bf16.msra.mxu0 0
    %2436 = vmatprep.subr.bf16.mxu0 0
    %2437 = vmatpush1.bf16.msra.mxu0 0
    %2438 = vmatprep.subr.bf16.mxu0 0
    %2439 = vmatpush1.bf16.msra.mxu0 0
    %2440 = vmatprep.subr.bf16.mxu0 0
    %2441 = vmatpush1.bf16.msra.mxu0 0
    %2442 = vmatprep.subr.bf16.mxu0 0
    %2443 = vmatpush1.bf16.msra.mxu0 0
    %2444 = vmatprep.subr.bf16.mxu0 0
    %2445 = vmatpush1.bf16.msra.mxu0 0
    %2446 = vmatprep.subr.bf16.mxu0 0
    %2447 = vmatpush1.bf16.msra.mxu0 0
    %2448 = vmatprep.subr.bf16.mxu0 0
    %2449 = vmatpush1.bf16.msra.mxu0 0
    %2450 = vmatprep.subr.bf16.mxu0 0
    %2451 = vmatpush1.bf16.msra.mxu0 0
    %2452 = vmatprep.subr.bf16.mxu0 0
    %2453 = vmatpush1.bf16.msra.mxu0 0
    %2454 = vmatprep.subr.bf16.mxu0 0
    %2455 = vmatpush1.bf16.msra.mxu0 0
    %2456 = vmatprep.subr.bf16.mxu0 0
    %2457 = vmatpush1.bf16.msra.mxu0 0
    %2458 = vmatprep.mubr.bf16.mxu0 0
    %2459 = vmatmul.mubr.bf16.gmra.mrb[0].mxu0 %v2328
    %v2460 = vpop.f32.mrb[0].mxu0
    %v2461 = vadd.f32 0.0, %v2460
    %v2462 = vpop.f32.mrb[0].mxu0
    %v2463 = vpop.f32.mrb[0].mxu0
    %v2464 = vadd.f32 0.0, %v2463
    %v2465 = vpop.f32.mrb[0].mxu0
    %2466 = vmatprep.mubr.bf16.mxu0 0
    %2467 = vmatmul.mubr.bf16.gmra.mrb[0].mxu0 %v2331
    %v2468 = vpop.f32.mrb[0].mxu0
    %v2469 = vadd.f32 0.0, %v2468
    %v2470 = vpop.f32.mrb[0].mxu0
    %v2471 = vpop.f32.mrb[0].mxu0
    %v2472 = vadd.f32 0.0, %v2471
    %v2473 = vpop.f32.mrb[0].mxu0
    %2474 = vmatprep.mubr.bf16.mxu0 0
    %2475 = vmatmul.mubr.bf16.gmra.mrb[0].mxu0 %v2334
    %v2476 = vpop.f32.mrb[0].mxu0
    %v2477 = vadd.f32 0.0, %v2476
    %v2478 = vpop.f32.mrb[0].mxu0
    %v2479 = vpop.f32.mrb[0].mxu0
    %v2480 = vadd.f32 0.0, %v2479
    %v2481 = vpop.f32.mrb[0].mxu0
    %2482 = vmatprep.mubr.bf16.mxu0 0
    %2483 = vmatmul.mubr.bf16.gmra.mrb[0].mxu0 %v2337
    %v2484 = vpop.f32.mrb[0].mxu0
    %v2485 = vadd.f32 0.0, %v2484
    %v2486 = vpop.f32.mrb[0].mxu0
    %v2487 = vpop.f32.mrb[0].mxu0
    %v2488 = vadd.f32 0.0, %v2487
    %v2489 = vpop.f32.mrb[0].mxu0
    %2490 = vmatprep.mubr.bf16.mxu0 0
    %2491 = vmatmul.mubr.bf16.gmra.mrb[0].mxu0 %v2340
    %v2492 = vpop.f32.mrb[0].mxu0
    %v2493 = vadd.f32 0.0, %v2492
    %v2494 = vpop.f32.mrb[0].mxu0
    %v2495 = vpop.f32.mrb[0].mxu0
    %v2496 = vadd.f32 0.0, %v2495
    %v2497 = vpop.f32.mrb[0].mxu0
    %2498 = vmatprep.mubr.bf16.mxu0 0
    %2499 = vmatmul.mubr.bf16.gmra.mrb[0].mxu0 %v2343
    %v2500 = vpop.f32.mrb[0].mxu0
    %v2501 = vadd.f32 0.0, %v2500
    %v2502 = vpop.f32.mrb[0].mxu0
    %v2503 = vpop.f32.mrb[0].mxu0
    %v2504 = vadd.f32 0.0, %v2503
    %v2505 = vpop.f32.mrb[0].mxu0
    %2506 = vmatprep.mubr.bf16.mxu0 0
    %2507 = vmatmul.mubr.bf16.gmra.mrb[0].mxu0 %v2346
    %v2508 = vpop.f32.mrb[0].mxu0
    %v2509 = vadd.f32 0.0, %v2508
    %v2510 = vpop.f32.mrb[0].mxu0
    %v2511 = vpop.f32.mrb[0].mxu0
    %v2512 = vadd.f32 0.0, %v2511
    %v2513 = vpop.f32.mrb[0].mxu0
    %2514 = vmatprep.mubr.bf16.mxu0 0
    %2515 = vmatmul.mubr.bf16.gmra.mrb[0].mxu0 %v2349
    %v2516 = vpop.f32.mrb[0].mxu0
    %v2517 = vadd.f32 0.0, %v2516
    %v2518 = vpop.f32.mrb[0].mxu0
    %v2519 = vpop.f32.mrb[0].mxu0
    %v2520 = vadd.f32 0.0, %v2519
    %v2521 = vpop.f32.mrb[0].mxu0
    %2522 = vmatprep.mubr.bf16.mxu0 0
    %2523 = vmatmul.mubr.bf16.gmra.mrb[0].mxu0 %v2352
    %v2524 = vpop.f32.mrb[0].mxu0
    %v2525 = vadd.f32 0.0, %v2524
    %v2526 = vpop.f32.mrb[0].mxu0
    %v2527 = vpop.f32.mrb[0].mxu0
    %v2528 = vadd.f32 0.0, %v2527
    %v2529 = vpop.f32.mrb[0].mxu0
    %2530 = vmatprep.mubr.bf16.mxu0 0
    %2531 = vmatmul.mubr.bf16.gmra.mrb[0].mxu0 %v2355
    %v2532 = vpop.f32.mrb[0].mxu0
    %v2533 = vadd.f32 0.0, %v2532
    %v2534 = vpop.f32.mrb[0].mxu0
    %v2535 = vpop.f32.mrb[0].mxu0
    %v2536 = vadd.f32 0.0, %v2535
    %v2537 = vpop.f32.mrb[0].mxu0
    %2538 = vmatprep.mubr.bf16.mxu0 0
    %2539 = vmatmul.mubr.bf16.gmra.mrb[0].mxu0 %v2358
    %v2540 = vpop.f32.mrb[0].mxu0
    %v2541 = vadd.f32 0.0, %v2540
    %v2542 = vpop.f32.mrb[0].mxu0
    %v2543 = vpop.f32.mrb[0].mxu0
    %v2544 = vadd.f32 0.0, %v2543
    %v2545 = vpop.f32.mrb[0].mxu0
    %2546 = vmatprep.mubr.bf16.mxu0 0
    %2547 = vmatmul.mubr.bf16.gmra.mrb[0].mxu0 %v2361
    %v2548 = vpop.f32.mrb[0].mxu0
    %v2549 = vadd.f32 0.0, %v2548
    %v2550 = vpop.f32.mrb[0].mxu0
    %v2551 = vpop.f32.mrb[0].mxu0
    %v2552 = vadd.f32 0.0, %v2551
    %v2553 = vpop.f32.mrb[0].mxu0
    %2554 = vmatprep.mubr.bf16.mxu0 0
    %2555 = vmatmul.mubr.bf16.gmra.mrb[0].mxu0 %v2364
    %v2556 = vpop.f32.mrb[0].mxu0
    %v2557 = vadd.f32 0.0, %v2556
    %v2558 = vpop.f32.mrb[0].mxu0
    %v2559 = vpop.f32.mrb[0].mxu0
    %v2560 = vadd.f32 0.0, %v2559
    %v2561 = vpop.f32.mrb[0].mxu0
    %2562 = vmatprep.mubr.bf16.mxu0 0
    %2563 = vmatmul.mubr.bf16.gmra.mrb[0].mxu0 %v2367
    %v2564 = vpop.f32.mrb[0].mxu0
    %v2565 = vadd.f32 0.0, %v2564
    %v2566 = vpop.f32.mrb[0].mxu0
    %v2567 = vpop.f32.mrb[0].mxu0
    %v2568 = vadd.f32 0.0, %v2567
    %v2569 = vpop.f32.mrb[0].mxu0
    %2570 = vmatprep.mubr.bf16.mxu0 0
    %2571 = vmatmul.mubr.bf16.gmra.mrb[0].mxu0 %v2370
    %v2572 = vpop.f32.mrb[0].mxu0
    %v2573 = vadd.f32 0.0, %v2572
    %v2574 = vpop.f32.mrb[0].mxu0
    %v2575 = vpop.f32.mrb[0].mxu0
    %v2576 = vadd.f32 0.0, %v2575
    %v2577 = vpop.f32.mrb[0].mxu0
    %2578 = vmatprep.mubr.bf16.mxu0 0
    %2579 = vmatmul.mubr.bf16.gmra.mrb[0].mxu0 %v2373
    %v2580 = vpop.f32.mrb[0].mxu0
    %v2581 = vadd.f32 0.0, %v2580
    %v2582 = vpop.f32.mrb[0].mxu0
    %v2583 = vpop.f32.mrb[0].mxu0
    %v2584 = vadd.f32 0.0, %v2583
    %v2585 = vpop.f32.mrb[0].mxu0
    %2586 = vmatprep.mubr.bf16.mxu0 0
    %2587 = vmatmul.mubr.bf16.gmra.mrb[0].mxu0 %v2376
    %v2588 = vpop.f32.mrb[0].mxu0
    %v2589 = vadd.f32 0.0, %v2588
    %v2590 = vpop.f32.mrb[0].mxu0
    %v2591 = vpop.f32.mrb[0].mxu0
    %v2592 = vadd.f32 0.0, %v2591
    %v2593 = vpop.f32.mrb[0].mxu0
    %2594 = vmatprep.mubr.bf16.mxu0 0
    %2595 = vmatmul.mubr.bf16.gmra.mrb[0].mxu0 %v2379
    %v2596 = vpop.f32.mrb[0].mxu0
    %v2597 = vadd.f32 0.0, %v2596
    %v2598 = vpop.f32.mrb[0].mxu0
    %v2599 = vpop.f32.mrb[0].mxu0
    %v2600 = vadd.f32 0.0, %v2599
    %v2601 = vpop.f32.mrb[0].mxu0
    %2602 = vmatprep.mubr.bf16.mxu0 0
    %2603 = vmatmul.mubr.bf16.gmra.mrb[0].mxu0 %v2382
    %v2604 = vpop.f32.mrb[0].mxu0
    %v2605 = vadd.f32 0.0, %v2604
    %v2606 = vpop.f32.mrb[0].mxu0
    %v2607 = vpop.f32.mrb[0].mxu0
    %v2608 = vadd.f32 0.0, %v2607
    %v2609 = vpop.f32.mrb[0].mxu0
    %2610 = vmatprep.mubr.bf16.mxu0 0
    %2611 = vmatmul.mubr.bf16.gmra.mrb[0].mxu0 %v2385
    %v2612 = vpop.f32.mrb[0].mxu0
    %v2613 = vadd.f32 0.0, %v2612
    %v2614 = vpop.f32.mrb[0].mxu0
    %v2615 = vpop.f32.mrb[0].mxu0
    %v2616 = vadd.f32 0.0, %v2615
    %v2617 = vpop.f32.mrb[0].mxu0
    %2618 = vmatprep.mubr.bf16.mxu0 0
    %2619 = vmatmul.mubr.bf16.gmra.mrb[0].mxu0 %v2388
    %v2620 = vpop.f32.mrb[0].mxu0
    %v2621 = vadd.f32 0.0, %v2620
    %v2622 = vpop.f32.mrb[0].mxu0
    %v2623 = vpop.f32.mrb[0].mxu0
    %v2624 = vadd.f32 0.0, %v2623
    %v2625 = vpop.f32.mrb[0].mxu0
    %2626 = vmatprep.mubr.bf16.mxu0 0
    %2627 = vmatmul.mubr.bf16.gmra.mrb[0].mxu0 %v2391
    %v2628 = vpop.f32.mrb[0].mxu0
    %v2629 = vadd.f32 0.0, %v2628
    %v2630 = vpop.f32.mrb[0].mxu0
    %v2631 = vpop.f32.mrb[0].mxu0
    %v2632 = vadd.f32 0.0, %v2631
    %v2633 = vpop.f32.mrb[0].mxu0
    %2634 = vmatprep.mubr.bf16.mxu0 0
    %2635 = vmatmul.mubr.bf16.gmra.mrb[0].mxu0 %v2394
    %v2636 = vpop.f32.mrb[0].mxu0
    %v2637 = vadd.f32 0.0, %v2636
    %v2638 = vpop.f32.mrb[0].mxu0
    %v2639 = vpop.f32.mrb[0].mxu0
    %v2640 = vadd.f32 0.0, %v2639
    %v2641 = vpop.f32.mrb[0].mxu0
    %2642 = vmatprep.mubr.bf16.mxu0 0
    %2643 = vmatmul.mubr.bf16.gmra.mrb[0].mxu0 %v2397
    %v2644 = vpop.f32.mrb[0].mxu0
    %v2645 = vadd.f32 0.0, %v2644
    %v2646 = vpop.f32.mrb[0].mxu0
    %v2647 = vpop.f32.mrb[0].mxu0
    %v2648 = vadd.f32 0.0, %v2647
    %v2649 = vpop.f32.mrb[0].mxu0
    %2650 = vmatprep.mubr.bf16.mxu0 0
    %2651 = vmatmul.mubr.bf16.gmra.mrb[0].mxu0 %v2400
    %v2652 = vpop.f32.mrb[0].mxu0
    %v2653 = vadd.f32 0.0, %v2652
    %v2654 = vpop.f32.mrb[0].mxu0
    %v2655 = vpop.f32.mrb[0].mxu0
    %v2656 = vadd.f32 0.0, %v2655
    %v2657 = vpop.f32.mrb[0].mxu0
    %2658 = vmatprep.mubr.bf16.mxu0 0
    %2659 = vmatmul.mubr.bf16.gmra.mrb[0].mxu0 %v2403
    %v2660 = vpop.f32.mrb[0].mxu0
    %v2661 = vadd.f32 0.0, %v2660
    %v2662 = vpop.f32.mrb[0].mxu0
    %v2663 = vpop.f32.mrb[0].mxu0
    %v2664 = vadd.f32 0.0, %v2663
    %v2665 = vpop.f32.mrb[0].mxu0
    %2666 = vmatprep.mubr.bf16.mxu0 0
    %2667 = vmatmul.mubr.bf16.gmra.mrb[0].mxu0 %v2406
    %v2668 = vpop.f32.mrb[0].mxu0
    %v2669 = vadd.f32 0.0, %v2668
    %v2670 = vpop.f32.mrb[0].mxu0
    %v2671 = vpop.f32.mrb[0].mxu0
    %v2672 = vadd.f32 0.0, %v2671
    %v2673 = vpop.f32.mrb[0].mxu0
    %2674 = vmatprep.mubr.bf16.mxu0 0
    %2675 = vmatmul.mubr.bf16.gmra.mrb[0].mxu0 %v2409
    %v2676 = vpop.f32.mrb[0].mxu0
    %v2677 = vadd.f32 0.0, %v2676
    %v2678 = vpop.f32.mrb[0].mxu0
    %v2679 = vpop.f32.mrb[0].mxu0
    %v2680 = vadd.f32 0.0, %v2679
    %v2681 = vpop.f32.mrb[0].mxu0
    %2682 = vmatprep.mubr.bf16.mxu0 0
    %2683 = vmatmul.mubr.bf16.gmra.mrb[0].mxu0 %v2412
    %v2684 = vpop.f32.mrb[0].mxu0
    %v2685 = vadd.f32 0.0, %v2684
    %v2686 = vpop.f32.mrb[0].mxu0
    %v2687 = vpop.f32.mrb[0].mxu0
    %v2688 = vadd.f32 0.0, %v2687
    %v2689 = vpop.f32.mrb[0].mxu0
    %2690 = vmatprep.mubr.bf16.mxu0 0
    %2691 = vmatmul.mubr.bf16.gmra.mrb[0].mxu0 %v2415
    %v2692 = vpop.f32.mrb[0].mxu0
    %v2693 = vadd.f32 0.0, %v2692
    %v2694 = vpop.f32.mrb[0].mxu0
    %v2695 = vpop.f32.mrb[0].mxu0
    %v2696 = vadd.f32 0.0, %v2695
    %v2697 = vpop.f32.mrb[0].mxu0
    %2698 = vmatprep.mubr.bf16.mxu0 0
    %2699 = vmatmul.mubr.bf16.gmra.mrb[0].mxu0 %v2418
    %v2700 = vpop.f32.mrb[0].mxu0
    %v2701 = vadd.f32 0.0, %v2700
    %v2702 = vpop.f32.mrb[0].mxu0
    %v2703 = vpop.f32.mrb[0].mxu0
    %v2704 = vadd.f32 0.0, %v2703
    %v2705 = vpop.f32.mrb[0].mxu0
    %2706 = vmatprep.mubr.bf16.mxu0 0
    %2707 = vmatmul.mubr.bf16.gmra.mrb[0].mxu0 %v2421
    %v2708 = vpop.f32.mrb[0].mxu0
    %v2709 = vadd.f32 0.0, %v2708
    %v2710 = vpop.f32.mrb[0].mxu0
    %v2711 = vpop.f32.mrb[0].mxu0
    %v2712 = vadd.f32 0.0, %v2711
    %v2713 = vpop.f32.mrb[0].mxu0
    %2714 = vdwg.mxu0
    %v2715 = vadd.f32 %v2165, %v2461
    %v2716 = vadd.f32 %v2166, %v2464
    %v2717 = vadd.f32 %v2167, %v2469
    %v2718 = vadd.f32 %v2168, %v2472
    %v2719 = vadd.f32 %v2169, %v2477
    %v2720 = vadd.f32 %v2170, %v2480
    %v2721 = vadd.f32 %v2171, %v2485
    %v2722 = vadd.f32 %v2172, %v2488
    %v2723 = vadd.f32 %v2173, %v2493
    %v2724 = vadd.f32 %v2174, %v2496
    %v2725 = vadd.f32 %v2175, %v2501
    %v2726 = vadd.f32 %v2176, %v2504
    %v2727 = vadd.f32 %v2177, %v2509
    %v2728 = vadd.f32 %v2178, %v2512
    %v2729 = vadd.f32 %v2179, %v2517
    %v2730 = vadd.f32 %v2180, %v2520
    %v2731 = vadd.f32 %v2181, %v2525
    %v2732 = vadd.f32 %v2182, %v2528
    %v2733 = vadd.f32 %v2183, %v2533
    %v2734 = vadd.f32 %v2184, %v2536
    %v2735 = vadd.f32 %v2185, %v2541
    %v2736 = vadd.f32 %v2186, %v2544
    %v2737 = vadd.f32 %v2187, %v2549
    %v2738 = vadd.f32 %v2188, %v2552
    %v2739 = vadd.f32 %v2189, %v2557
    %v2740 = vadd.f32 %v2190, %v2560
    %v2741 = vadd.f32 %v2191, %v2565
    %v2742 = vadd.f32 %v2192, %v2568
    %v2743 = vadd.f32 %v2193, %v2573
    %v2744 = vadd.f32 %v2194, %v2576
    %v2745 = vadd.f32 %v2195, %v2581
    %v2746 = vadd.f32 %v2196, %v2584
    %v2747 = vadd.f32 %v2197, %v2589
    %v2748 = vadd.f32 %v2198, %v2592
    %v2749 = vadd.f32 %v2199, %v2597
    %v2750 = vadd.f32 %v2200, %v2600
    %v2751 = vadd.f32 %v2201, %v2605
    %v2752 = vadd.f32 %v2202, %v2608
    %v2753 = vadd.f32 %v2203, %v2613
    %v2754 = vadd.f32 %v2204, %v2616
    %v2755 = vadd.f32 %v2205, %v2621
    %v2756 = vadd.f32 %v2206, %v2624
    %v2757 = vadd.f32 %v2207, %v2629
    %v2758 = vadd.f32 %v2208, %v2632
    %v2759 = vadd.f32 %v2209, %v2637
    %v2760 = vadd.f32 %v2210, %v2640
    %v2761 = vadd.f32 %v2211, %v2645
    %v2762 = vadd.f32 %v2212, %v2648
    %v2763 = vadd.f32 %v2213, %v2653
    %v2764 = vadd.f32 %v2214, %v2656
    %v2765 = vadd.f32 %v2215, %v2661
    %v2766 = vadd.f32 %v2216, %v2664
    %v2767 = vadd.f32 %v2217, %v2669
    %v2768 = vadd.f32 %v2218, %v2672
    %v2769 = vadd.f32 %v2219, %v2677
    %v2770 = vadd.f32 %v2220, %v2680
    %v2771 = vadd.f32 %v2221, %v2685
    %v2772 = vadd.f32 %v2222, %v2688
    %v2773 = vadd.f32 %v2223, %v2693
    %v2774 = vadd.f32 %v2224, %v2696
    %v2775 = vadd.f32 %v2225, %v2701
    %v2776 = vadd.f32 %v2226, %v2704
    %v2777 = vadd.f32 %v2227, %v2709
    %v2778 = vadd.f32 %v2228, %v2712
    %v2779 = vld [vmem:[%s577 + $0x1] sm:$0xff]
    %v2780 = vld [vmem:[%s577 + $0x9] sm:$0xff]
    %v2781 = vld [vmem:[%s577 + $0x19] sm:$0xff]
    %v2782 = vld [vmem:[%s577 + $0x21] sm:$0xff]
    %v2783 = vld [vmem:[%s577 + $0x31] sm:$0xff]
    %v2784 = vld [vmem:[%s577 + $0x39] sm:$0xff]
    %v2785 = vld [vmem:[%s577 + $0x49] sm:$0xff]
    %v2786 = vld [vmem:[%s577 + $0x51] sm:$0xff]
    %v2787 = vld [vmem:[%s577 + $0x61] sm:$0xff]
    %v2788 = vld [vmem:[%s577 + $0x69] sm:$0xff]
    %v2789 = vld [vmem:[%s577 + $0x79] sm:$0xff]
    %v2790 = vld [vmem:[%s577 + $0x81] sm:$0xff]
    %v2791 = vld [vmem:[%s577 + $0x91] sm:$0xff]
    %v2792 = vld [vmem:[%s577 + $0x99] sm:$0xff]
    %v2793 = vld [vmem:[%s577 + $0xa9] sm:$0xff]
    %v2794 = vld [vmem:[%s577 + $0xb1] sm:$0xff]
    %v2795 = vld [vmem:[%s577 + $0xc1] sm:$0xff]
    %v2796 = vld [vmem:[%s577 + $0xc9] sm:$0xff]
    %v2797 = vld [vmem:[%s577 + $0xd9] sm:$0xff]
    %v2798 = vld [vmem:[%s577 + $0xe1] sm:$0xff]
    %v2799 = vld [vmem:[%s577 + $0xf1] sm:$0xff]
    %v2800 = vld [vmem:[%s577 + $0xf9] sm:$0xff]
    %v2801 = vld [vmem:[%s577 + $0x109] sm:$0xff]
    %v2802 = vld [vmem:[%s577 + $0x111] sm:$0xff]
    %v2803 = vld [vmem:[%s577 + $0x121] sm:$0xff]
    %v2804 = vld [vmem:[%s577 + $0x129] sm:$0xff]
    %v2805 = vld [vmem:[%s577 + $0x139] sm:$0xff]
    %v2806 = vld [vmem:[%s577 + $0x141] sm:$0xff]
    %v2807 = vld [vmem:[%s577 + $0x151] sm:$0xff]
    %v2808 = vld [vmem:[%s577 + $0x159] sm:$0xff]
    %v2809 = vld [vmem:[%s577 + $0x169] sm:$0xff]
    %v2810 = vld [vmem:[%s577 + $0x171] sm:$0xff]
    %v2811 = vld [vmem:[%s577 + $0x1b1] sm:$0xff]
    %v2812 = vld [vmem:[%s577 + $0x1b9] sm:$0xff]
    %v2813 = vld [vmem:[%s577 + $0x1c9] sm:$0xff]
    %v2814 = vld [vmem:[%s577 + $0x1d1] sm:$0xff]
    %v2815 = vld [vmem:[%s577 + $0x1e1] sm:$0xff]
    %v2816 = vld [vmem:[%s577 + $0x1e9] sm:$0xff]
    %v2817 = vld [vmem:[%s577 + $0x1f9] sm:$0xff]
    %v2818 = vld [vmem:[%s577 + $0x201] sm:$0xff]
    %v2819 = vld [vmem:[%s577 + $0x211] sm:$0xff]
    %v2820 = vld [vmem:[%s577 + $0x219] sm:$0xff]
    %v2821 = vld [vmem:[%s577 + $0x229] sm:$0xff]
    %v2822 = vld [vmem:[%s577 + $0x231] sm:$0xff]
    %v2823 = vld [vmem:[%s577 + $0x241] sm:$0xff]
    %v2824 = vld [vmem:[%s577 + $0x249] sm:$0xff]
    %v2825 = vld [vmem:[%s577 + $0x259] sm:$0xff]
    %v2826 = vld [vmem:[%s577 + $0x261] sm:$0xff]
    %v2827 = vld [vmem:[%s577 + $0x271] sm:$0xff]
    %v2828 = vld [vmem:[%s577 + $0x279] sm:$0xff]
    %v2829 = vld [vmem:[%s577 + $0x289] sm:$0xff]
    %v2830 = vld [vmem:[%s577 + $0x291] sm:$0xff]
    %v2831 = vld [vmem:[%s577 + $0x2a1] sm:$0xff]
    %v2832 = vld [vmem:[%s577 + $0x2a9] sm:$0xff]
    %v2833 = vld [vmem:[%s577 + $0x2b9] sm:$0xff]
    %v2834 = vld [vmem:[%s577 + $0x2c1] sm:$0xff]
    %v2835 = vld [vmem:[%s577 + $0x2d1] sm:$0xff]
    %v2836 = vld [vmem:[%s577 + $0x2d9] sm:$0xff]
    %v2837 = vld [vmem:[%s577 + $0x2e9] sm:$0xff]
    %v2838 = vld [vmem:[%s577 + $0x2f1] sm:$0xff]
    %v2839 = vld [vmem:[%s577 + $0x301] sm:$0xff]
    %v2840 = vld [vmem:[%s577 + $0x309] sm:$0xff]
    %v2841 = vld [vmem:[%s577 + $0x319] sm:$0xff]
    %v2842 = vld [vmem:[%s577 + $0x321] sm:$0xff]
    %v2843 = vpack.c.bf16 %v2780, %v2779
    %v2844 = vpack.c.bf16 %v2782, %v2781
    %v2845 = vpack.c.bf16 %v2784, %v2783
    %v2846 = vpack.c.bf16 %v2786, %v2785
    %v2847 = vpack.c.bf16 %v2788, %v2787
    %v2848 = vpack.c.bf16 %v2790, %v2789
    %v2849 = vpack.c.bf16 %v2792, %v2791
    %v2850 = vpack.c.bf16 %v2794, %v2793
    %v2851 = vpack.c.bf16 %v2796, %v2795
    %v2852 = vpack.c.bf16 %v2798, %v2797
    %v2853 = vpack.c.bf16 %v2800, %v2799
    %v2854 = vpack.c.bf16 %v2802, %v2801
    %v2855 = vpack.c.bf16 %v2804, %v2803
    %v2856 = vpack.c.bf16 %v2806, %v2805
    %v2857 = vpack.c.bf16 %v2808, %v2807
    %v2858 = vpack.c.bf16 %v2810, %v2809
    %v2859 = vpack.c.bf16 %v2812, %v2811
    %v2860 = vpack.c.bf16 %v2814, %v2813
    %v2861 = vpack.c.bf16 %v2816, %v2815
    %v2862 = vpack.c.bf16 %v2818, %v2817
    %v2863 = vpack.c.bf16 %v2820, %v2819
    %v2864 = vpack.c.bf16 %v2822, %v2821
    %v2865 = vpack.c.bf16 %v2824, %v2823
    %v2866 = vpack.c.bf16 %v2826, %v2825
    %v2867 = vpack.c.bf16 %v2828, %v2827
    %v2868 = vpack.c.bf16 %v2830, %v2829
    %v2869 = vpack.c.bf16 %v2832, %v2831
    %v2870 = vpack.c.bf16 %v2834, %v2833
    %v2871 = vpack.c.bf16 %v2836, %v2835
    %v2872 = vpack.c.bf16 %v2838, %v2837
    %v2873 = vpack.c.bf16 %v2840, %v2839
    %v2874 = vpack.c.bf16 %v2842, %v2841
    %s2875 = scalar_lea.vmem %s3, 8
    %v2876 = vld [vmem:[%s2875] sm:$0x3]
    %v2878 = vsel %vm562, %v2843, 0
    %v2881 = vsel %vm562, %v2844, 0
    %v2884 = vsel %vm562, %v2845, 0
    %v2887 = vsel %vm562, %v2846, 0
    %v2890 = vsel %vm562, %v2847, 0
    %v2893 = vsel %vm562, %v2848, 0
    %v2896 = vsel %vm562, %v2849, 0
    %v2899 = vsel %vm562, %v2850, 0
    %v2902 = vsel %vm562, %v2851, 0
    %v2905 = vsel %vm562, %v2852, 0
    %v2908 = vsel %vm562, %v2853, 0
    %v2911 = vsel %vm562, %v2854, 0
    %v2914 = vsel %vm562, %v2855, 0
    %v2917 = vsel %vm562, %v2856, 0
    %v2920 = vsel %vm562, %v2857, 0
    %v2923 = vsel %vm562, %v2858, 0
    %v2926 = vsel %vm562, %v2859, 0
    %v2929 = vsel %vm562, %v2860, 0
    %v2932 = vsel %vm562, %v2861, 0
    %v2935 = vsel %vm562, %v2862, 0
    %v2938 = vsel %vm562, %v2863, 0
    %v2941 = vsel %vm562, %v2864, 0
    %v2944 = vsel %vm562, %v2865, 0
    %v2947 = vsel %vm562, %v2866, 0
    %v2950 = vsel %vm562, %v2867, 0
    %v2953 = vsel %vm562, %v2868, 0
    %v2956 = vsel %vm562, %v2869, 0
    %v2959 = vsel %vm562, %v2870, 0
    %v2962 = vsel %vm562, %v2871, 0
    %v2965 = vsel %vm562, %v2872, 0
    %v2968 = vsel %vm562, %v2873, 0
    %v2971 = vsel %vm562, %v2874, 0
    %v2974 = vsel %vm998, %v2876, 0
    %2976 = vmatprep.subr.bf16.mxu0 0
    %2977 = vmatpush1.bf16.msra.mxu0 %v2974
    %2978 = vmatprep.subr.bf16.mxu0 0
    %2979 = vmatpush1.bf16.msra.mxu0 0
    %2980 = vmatprep.subr.bf16.mxu0 0
    %2981 = vmatpush1.bf16.msra.mxu0 0
    %2982 = vmatprep.subr.bf16.mxu0 0
    %2983 = vmatpush1.bf16.msra.mxu0 0
    %2984 = vmatprep.subr.bf16.mxu0 0
    %2985 = vmatpush1.bf16.msra.mxu0 0
    %2986 = vmatprep.subr.bf16.mxu0 0
    %2987 = vmatpush1.bf16.msra.mxu0 0
    %2988 = vmatprep.subr.bf16.mxu0 0
    %2989 = vmatpush1.bf16.msra.mxu0 0
    %2990 = vmatprep.subr.bf16.mxu0 0
    %2991 = vmatpush1.bf16.msra.mxu0 0
    %2992 = vmatprep.subr.bf16.mxu0 0
    %2993 = vmatpush1.bf16.msra.mxu0 0
    %2994 = vmatprep.subr.bf16.mxu0 0
    %2995 = vmatpush1.bf16.msra.mxu0 0
    %2996 = vmatprep.subr.bf16.mxu0 0
    %2997 = vmatpush1.bf16.msra.mxu0 0
    %2998 = vmatprep.subr.bf16.mxu0 0
    %2999 = vmatpush1.bf16.msra.mxu0 0
    %3000 = vmatprep.subr.bf16.mxu0 0
    %3001 = vmatpush1.bf16.msra.mxu0 0
    %3002 = vmatprep.subr.bf16.mxu0 0
    %3003 = vmatpush1.bf16.msra.mxu0 0
    %3004 = vmatprep.subr.bf16.mxu0 0
    %3005 = vmatpush1.bf16.msra.mxu0 0
    %3006 = vmatprep.subr.bf16.mxu0 0
    %3007 = vmatpush1.bf16.msra.mxu0 0
    %3008 = vmatprep.mubr.bf16.mxu0 0
    %3009 = vmatmul.mubr.bf16.gmra.mrb[0].mxu0 %v2878
    %v3010 = vpop.f32.mrb[0].mxu0
    %v3011 = vadd.f32 0.0, %v3010
    %v3012 = vpop.f32.mrb[0].mxu0
    %v3013 = vpop.f32.mrb[0].mxu0
    %v3014 = vadd.f32 0.0, %v3013
    %v3015 = vpop.f32.mrb[0].mxu0
    %3016 = vmatprep.mubr.bf16.mxu0 0
    %3017 = vmatmul.mubr.bf16.gmra.mrb[0].mxu0 %v2881
    %v3018 = vpop.f32.mrb[0].mxu0
    %v3019 = vadd.f32 0.0, %v3018
    %v3020 = vpop.f32.mrb[0].mxu0
    %v3021 = vpop.f32.mrb[0].mxu0
    %v3022 = vadd.f32 0.0, %v3021
    %v3023 = vpop.f32.mrb[0].mxu0
    %3024 = vmatprep.mubr.bf16.mxu0 0
    %3025 = vmatmul.mubr.bf16.gmra.mrb[0].mxu0 %v2884
    %v3026 = vpop.f32.mrb[0].mxu0
    %v3027 = vadd.f32 0.0, %v3026
    %v3028 = vpop.f32.mrb[0].mxu0
    %v3029 = vpop.f32.mrb[0].mxu0
    %v3030 = vadd.f32 0.0, %v3029
    %v3031 = vpop.f32.mrb[0].mxu0
    %3032 = vmatprep.mubr.bf16.mxu0 0
    %3033 = vmatmul.mubr.bf16.gmra.mrb[0].mxu0 %v2887
    %v3034 = vpop.f32.mrb[0].mxu0
    %v3035 = vadd.f32 0.0, %v3034
    %v3036 = vpop.f32.mrb[0].mxu0
    %v3037 = vpop.f32.mrb[0].mxu0
    %v3038 = vadd.f32 0.0, %v3037
    %v3039 = vpop.f32.mrb[0].mxu0
    %3040 = vmatprep.mubr.bf16.mxu0 0
    %3041 = vmatmul.mubr.bf16.gmra.mrb[0].mxu0 %v2890
    %v3042 = vpop.f32.mrb[0].mxu0
    %v3043 = vadd.f32 0.0, %v3042
    %v3044 = vpop.f32.mrb[0].mxu0
    %v3045 = vpop.f32.mrb[0].mxu0
    %v3046 = vadd.f32 0.0, %v3045
    %v3047 = vpop.f32.mrb[0].mxu0
    %3048 = vmatprep.mubr.bf16.mxu0 0
    %3049 = vmatmul.mubr.bf16.gmra.mrb[0].mxu0 %v2893
    %v3050 = vpop.f32.mrb[0].mxu0
    %v3051 = vadd.f32 0.0, %v3050
    %v3052 = vpop.f32.mrb[0].mxu0
    %v3053 = vpop.f32.mrb[0].mxu0
    %v3054 = vadd.f32 0.0, %v3053
    %v3055 = vpop.f32.mrb[0].mxu0
    %3056 = vmatprep.mubr.bf16.mxu0 0
    %3057 = vmatmul.mubr.bf16.gmra.mrb[0].mxu0 %v2896
    %v3058 = vpop.f32.mrb[0].mxu0
    %v3059 = vadd.f32 0.0, %v3058
    %v3060 = vpop.f32.mrb[0].mxu0
    %v3061 = vpop.f32.mrb[0].mxu0
    %v3062 = vadd.f32 0.0, %v3061
    %v3063 = vpop.f32.mrb[0].mxu0
    %3064 = vmatprep.mubr.bf16.mxu0 0
    %3065 = vmatmul.mubr.bf16.gmra.mrb[0].mxu0 %v2899
    %v3066 = vpop.f32.mrb[0].mxu0
    %v3067 = vadd.f32 0.0, %v3066
    %v3068 = vpop.f32.mrb[0].mxu0
    %v3069 = vpop.f32.mrb[0].mxu0
    %v3070 = vadd.f32 0.0, %v3069
    %v3071 = vpop.f32.mrb[0].mxu0
    %3072 = vmatprep.mubr.bf16.mxu0 0
    %3073 = vmatmul.mubr.bf16.gmra.mrb[0].mxu0 %v2902
    %v3074 = vpop.f32.mrb[0].mxu0
    %v3075 = vadd.f32 0.0, %v3074
    %v3076 = vpop.f32.mrb[0].mxu0
    %v3077 = vpop.f32.mrb[0].mxu0
    %v3078 = vadd.f32 0.0, %v3077
    %v3079 = vpop.f32.mrb[0].mxu0
    %3080 = vmatprep.mubr.bf16.mxu0 0
    %3081 = vmatmul.mubr.bf16.gmra.mrb[0].mxu0 %v2905
    %v3082 = vpop.f32.mrb[0].mxu0
    %v3083 = vadd.f32 0.0, %v3082
    %v3084 = vpop.f32.mrb[0].mxu0
    %v3085 = vpop.f32.mrb[0].mxu0
    %v3086 = vadd.f32 0.0, %v3085
    %v3087 = vpop.f32.mrb[0].mxu0
    %3088 = vmatprep.mubr.bf16.mxu0 0
    %3089 = vmatmul.mubr.bf16.gmra.mrb[0].mxu0 %v2908
    %v3090 = vpop.f32.mrb[0].mxu0
    %v3091 = vadd.f32 0.0, %v3090
    %v3092 = vpop.f32.mrb[0].mxu0
    %v3093 = vpop.f32.mrb[0].mxu0
    %v3094 = vadd.f32 0.0, %v3093
    %v3095 = vpop.f32.mrb[0].mxu0
    %3096 = vmatprep.mubr.bf16.mxu0 0
    %3097 = vmatmul.mubr.bf16.gmra.mrb[0].mxu0 %v2911
    %v3098 = vpop.f32.mrb[0].mxu0
    %v3099 = vadd.f32 0.0, %v3098
    %v3100 = vpop.f32.mrb[0].mxu0
    %v3101 = vpop.f32.mrb[0].mxu0
    %v3102 = vadd.f32 0.0, %v3101
    %v3103 = vpop.f32.mrb[0].mxu0
    %3104 = vmatprep.mubr.bf16.mxu0 0
    %3105 = vmatmul.mubr.bf16.gmra.mrb[0].mxu0 %v2914
    %v3106 = vpop.f32.mrb[0].mxu0
    %v3107 = vadd.f32 0.0, %v3106
    %v3108 = vpop.f32.mrb[0].mxu0
    %v3109 = vpop.f32.mrb[0].mxu0
    %v3110 = vadd.f32 0.0, %v3109
    %v3111 = vpop.f32.mrb[0].mxu0
    %3112 = vmatprep.mubr.bf16.mxu0 0
    %3113 = vmatmul.mubr.bf16.gmra.mrb[0].mxu0 %v2917
    %v3114 = vpop.f32.mrb[0].mxu0
    %v3115 = vadd.f32 0.0, %v3114
    %v3116 = vpop.f32.mrb[0].mxu0
    %v3117 = vpop.f32.mrb[0].mxu0
    %v3118 = vadd.f32 0.0, %v3117
    %v3119 = vpop.f32.mrb[0].mxu0
    %3120 = vmatprep.mubr.bf16.mxu0 0
    %3121 = vmatmul.mubr.bf16.gmra.mrb[0].mxu0 %v2920
    %v3122 = vpop.f32.mrb[0].mxu0
    %v3123 = vadd.f32 0.0, %v3122
    %v3124 = vpop.f32.mrb[0].mxu0
    %v3125 = vpop.f32.mrb[0].mxu0
    %v3126 = vadd.f32 0.0, %v3125
    %v3127 = vpop.f32.mrb[0].mxu0
    %3128 = vmatprep.mubr.bf16.mxu0 0
    %3129 = vmatmul.mubr.bf16.gmra.mrb[0].mxu0 %v2923
    %v3130 = vpop.f32.mrb[0].mxu0
    %v3131 = vadd.f32 0.0, %v3130
    %v3132 = vpop.f32.mrb[0].mxu0
    %v3133 = vpop.f32.mrb[0].mxu0
    %v3134 = vadd.f32 0.0, %v3133
    %v3135 = vpop.f32.mrb[0].mxu0
    %3136 = vmatprep.mubr.bf16.mxu0 0
    %3137 = vmatmul.mubr.bf16.gmra.mrb[0].mxu0 %v2926
    %v3138 = vpop.f32.mrb[0].mxu0
    %v3139 = vadd.f32 0.0, %v3138
    %v3140 = vpop.f32.mrb[0].mxu0
    %v3141 = vpop.f32.mrb[0].mxu0
    %v3142 = vadd.f32 0.0, %v3141
    %v3143 = vpop.f32.mrb[0].mxu0
    %3144 = vmatprep.mubr.bf16.mxu0 0
    %3145 = vmatmul.mubr.bf16.gmra.mrb[0].mxu0 %v2929
    %v3146 = vpop.f32.mrb[0].mxu0
    %v3147 = vadd.f32 0.0, %v3146
    %v3148 = vpop.f32.mrb[0].mxu0
    %v3149 = vpop.f32.mrb[0].mxu0
    %v3150 = vadd.f32 0.0, %v3149
    %v3151 = vpop.f32.mrb[0].mxu0
    %3152 = vmatprep.mubr.bf16.mxu0 0
    %3153 = vmatmul.mubr.bf16.gmra.mrb[0].mxu0 %v2932
    %v3154 = vpop.f32.mrb[0].mxu0
    %v3155 = vadd.f32 0.0, %v3154
    %v3156 = vpop.f32.mrb[0].mxu0
    %v3157 = vpop.f32.mrb[0].mxu0
    %v3158 = vadd.f32 0.0, %v3157
    %v3159 = vpop.f32.mrb[0].mxu0
    %3160 = vmatprep.mubr.bf16.mxu0 0
    %3161 = vmatmul.mubr.bf16.gmra.mrb[0].mxu0 %v2935
    %v3162 = vpop.f32.mrb[0].mxu0
    %v3163 = vadd.f32 0.0, %v3162
    %v3164 = vpop.f32.mrb[0].mxu0
    %v3165 = vpop.f32.mrb[0].mxu0
    %v3166 = vadd.f32 0.0, %v3165
    %v3167 = vpop.f32.mrb[0].mxu0
    %3168 = vmatprep.mubr.bf16.mxu0 0
    %3169 = vmatmul.mubr.bf16.gmra.mrb[0].mxu0 %v2938
    %v3170 = vpop.f32.mrb[0].mxu0
    %v3171 = vadd.f32 0.0, %v3170
    %v3172 = vpop.f32.mrb[0].mxu0
    %v3173 = vpop.f32.mrb[0].mxu0
    %v3174 = vadd.f32 0.0, %v3173
    %v3175 = vpop.f32.mrb[0].mxu0
    %3176 = vmatprep.mubr.bf16.mxu0 0
    %3177 = vmatmul.mubr.bf16.gmra.mrb[0].mxu0 %v2941
    %v3178 = vpop.f32.mrb[0].mxu0
    %v3179 = vadd.f32 0.0, %v3178
    %v3180 = vpop.f32.mrb[0].mxu0
    %v3181 = vpop.f32.mrb[0].mxu0
    %v3182 = vadd.f32 0.0, %v3181
    %v3183 = vpop.f32.mrb[0].mxu0
    %3184 = vmatprep.mubr.bf16.mxu0 0
    %3185 = vmatmul.mubr.bf16.gmra.mrb[0].mxu0 %v2944
    %v3186 = vpop.f32.mrb[0].mxu0
    %v3187 = vadd.f32 0.0, %v3186
    %v3188 = vpop.f32.mrb[0].mxu0
    %v3189 = vpop.f32.mrb[0].mxu0
    %v3190 = vadd.f32 0.0, %v3189
    %v3191 = vpop.f32.mrb[0].mxu0
    %3192 = vmatprep.mubr.bf16.mxu0 0
    %3193 = vmatmul.mubr.bf16.gmra.mrb[0].mxu0 %v2947
    %v3194 = vpop.f32.mrb[0].mxu0
    %v3195 = vadd.f32 0.0, %v3194
    %v3196 = vpop.f32.mrb[0].mxu0
    %v3197 = vpop.f32.mrb[0].mxu0
    %v3198 = vadd.f32 0.0, %v3197
    %v3199 = vpop.f32.mrb[0].mxu0
    %3200 = vmatprep.mubr.bf16.mxu0 0
    %3201 = vmatmul.mubr.bf16.gmra.mrb[0].mxu0 %v2950
    %v3202 = vpop.f32.mrb[0].mxu0
    %v3203 = vadd.f32 0.0, %v3202
    %v3204 = vpop.f32.mrb[0].mxu0
    %v3205 = vpop.f32.mrb[0].mxu0
    %v3206 = vadd.f32 0.0, %v3205
    %v3207 = vpop.f32.mrb[0].mxu0
    %3208 = vmatprep.mubr.bf16.mxu0 0
    %3209 = vmatmul.mubr.bf16.gmra.mrb[0].mxu0 %v2953
    %v3210 = vpop.f32.mrb[0].mxu0
    %v3211 = vadd.f32 0.0, %v3210
    %v3212 = vpop.f32.mrb[0].mxu0
    %v3213 = vpop.f32.mrb[0].mxu0
    %v3214 = vadd.f32 0.0, %v3213
    %v3215 = vpop.f32.mrb[0].mxu0
    %3216 = vmatprep.mubr.bf16.mxu0 0
    %3217 = vmatmul.mubr.bf16.gmra.mrb[0].mxu0 %v2956
    %v3218 = vpop.f32.mrb[0].mxu0
    %v3219 = vadd.f32 0.0, %v3218
    %v3220 = vpop.f32.mrb[0].mxu0
    %v3221 = vpop.f32.mrb[0].mxu0
    %v3222 = vadd.f32 0.0, %v3221
    %v3223 = vpop.f32.mrb[0].mxu0
    %3224 = vmatprep.mubr.bf16.mxu0 0
    %3225 = vmatmul.mubr.bf16.gmra.mrb[0].mxu0 %v2959
    %v3226 = vpop.f32.mrb[0].mxu0
    %v3227 = vadd.f32 0.0, %v3226
    %v3228 = vpop.f32.mrb[0].mxu0
    %v3229 = vpop.f32.mrb[0].mxu0
    %v3230 = vadd.f32 0.0, %v3229
    %v3231 = vpop.f32.mrb[0].mxu0
    %3232 = vmatprep.mubr.bf16.mxu0 0
    %3233 = vmatmul.mubr.bf16.gmra.mrb[0].mxu0 %v2962
    %v3234 = vpop.f32.mrb[0].mxu0
    %v3235 = vadd.f32 0.0, %v3234
    %v3236 = vpop.f32.mrb[0].mxu0
    %v3237 = vpop.f32.mrb[0].mxu0
    %v3238 = vadd.f32 0.0, %v3237
    %v3239 = vpop.f32.mrb[0].mxu0
    %3240 = vmatprep.mubr.bf16.mxu0 0
    %3241 = vmatmul.mubr.bf16.gmra.mrb[0].mxu0 %v2965
    %v3242 = vpop.f32.mrb[0].mxu0
    %v3243 = vadd.f32 0.0, %v3242
    %v3244 = vpop.f32.mrb[0].mxu0
    %v3245 = vpop.f32.mrb[0].mxu0
    %v3246 = vadd.f32 0.0, %v3245
    %v3247 = vpop.f32.mrb[0].mxu0
    %3248 = vmatprep.mubr.bf16.mxu0 0
    %3249 = vmatmul.mubr.bf16.gmra.mrb[0].mxu0 %v2968
    %v3250 = vpop.f32.mrb[0].mxu0
    %v3251 = vadd.f32 0.0, %v3250
    %v3252 = vpop.f32.mrb[0].mxu0
    %v3253 = vpop.f32.mrb[0].mxu0
    %v3254 = vadd.f32 0.0, %v3253
    %v3255 = vpop.f32.mrb[0].mxu0
    %3256 = vmatprep.mubr.bf16.mxu0 0
    %3257 = vmatmul.mubr.bf16.gmra.mrb[0].mxu0 %v2971
    %v3258 = vpop.f32.mrb[0].mxu0
    %v3259 = vadd.f32 0.0, %v3258
    %v3260 = vpop.f32.mrb[0].mxu0
    %v3261 = vpop.f32.mrb[0].mxu0
    %v3262 = vadd.f32 0.0, %v3261
    %v3263 = vpop.f32.mrb[0].mxu0
    %3264 = vdwg.mxu0
    %v3265 = vadd.f32 %v2715, %v3011
    %v3266 = vadd.f32 %v2716, %v3014
    %v3267 = vadd.f32 %v2717, %v3019
    %v3268 = vadd.f32 %v2718, %v3022
    %v3269 = vadd.f32 %v2719, %v3027
    %v3270 = vadd.f32 %v2720, %v3030
    %v3271 = vadd.f32 %v2721, %v3035
    %v3272 = vadd.f32 %v2722, %v3038
    %v3273 = vadd.f32 %v2723, %v3043
    %v3274 = vadd.f32 %v2724, %v3046
    %v3275 = vadd.f32 %v2725, %v3051
    %v3276 = vadd.f32 %v2726, %v3054
    %v3277 = vadd.f32 %v2727, %v3059
    %v3278 = vadd.f32 %v2728, %v3062
    %v3279 = vadd.f32 %v2729, %v3067
    %v3280 = vadd.f32 %v2730, %v3070
    %v3281 = vadd.f32 %v2731, %v3075
    %v3282 = vadd.f32 %v2732, %v3078
    %v3283 = vadd.f32 %v2733, %v3083
    %v3284 = vadd.f32 %v2734, %v3086
    %v3285 = vadd.f32 %v2735, %v3091
    %v3286 = vadd.f32 %v2736, %v3094
    %v3287 = vadd.f32 %v2737, %v3099
    %v3288 = vadd.f32 %v2738, %v3102
    %v3289 = vadd.f32 %v2739, %v3107
    %v3290 = vadd.f32 %v2740, %v3110
    %v3291 = vadd.f32 %v2741, %v3115
    %v3292 = vadd.f32 %v2742, %v3118
    %v3293 = vadd.f32 %v2743, %v3123
    %v3294 = vadd.f32 %v2744, %v3126
    %v3295 = vadd.f32 %v2745, %v3131
    %v3296 = vadd.f32 %v2746, %v3134
    %v3297 = vadd.f32 %v2747, %v3139
    %v3298 = vadd.f32 %v2748, %v3142
    %v3299 = vadd.f32 %v2749, %v3147
    %v3300 = vadd.f32 %v2750, %v3150
    %v3301 = vadd.f32 %v2751, %v3155
    %v3302 = vadd.f32 %v2752, %v3158
    %v3303 = vadd.f32 %v2753, %v3163
    %v3304 = vadd.f32 %v2754, %v3166
    %v3305 = vadd.f32 %v2755, %v3171
    %v3306 = vadd.f32 %v2756, %v3174
    %v3307 = vadd.f32 %v2757, %v3179
    %v3308 = vadd.f32 %v2758, %v3182
    %v3309 = vadd.f32 %v2759, %v3187
    %v3310 = vadd.f32 %v2760, %v3190
    %v3311 = vadd.f32 %v2761, %v3195
    %v3312 = vadd.f32 %v2762, %v3198
    %v3313 = vadd.f32 %v2763, %v3203
    %v3314 = vadd.f32 %v2764, %v3206
    %v3315 = vadd.f32 %v2765, %v3211
    %v3316 = vadd.f32 %v2766, %v3214
    %v3317 = vadd.f32 %v2767, %v3219
    %v3318 = vadd.f32 %v2768, %v3222
    %v3319 = vadd.f32 %v2769, %v3227
    %v3320 = vadd.f32 %v2770, %v3230
    %v3321 = vadd.f32 %v2771, %v3235
    %v3322 = vadd.f32 %v2772, %v3238
    %v3323 = vadd.f32 %v2773, %v3243
    %v3324 = vadd.f32 %v2774, %v3246
    %v3325 = vadd.f32 %v2775, %v3251
    %v3326 = vadd.f32 %v2776, %v3254
    %v3327 = vadd.f32 %v2777, %v3259
    %v3328 = vadd.f32 %v2778, %v3262
    %v3329 = vld [vmem:[%s577 + $0x2] sm:$0xff]
    %v3330 = vld [vmem:[%s577 + $0xa] sm:$0xff]
    %v3331 = vld [vmem:[%s577 + $0x1a] sm:$0xff]
    %v3332 = vld [vmem:[%s577 + $0x22] sm:$0xff]
    %v3333 = vld [vmem:[%s577 + $0x32] sm:$0xff]
    %v3334 = vld [vmem:[%s577 + $0x3a] sm:$0xff]
    %v3335 = vld [vmem:[%s577 + $0x4a] sm:$0xff]
    %v3336 = vld [vmem:[%s577 + $0x52] sm:$0xff]
    %v3337 = vld [vmem:[%s577 + $0x62] sm:$0xff]
    %v3338 = vld [vmem:[%s577 + $0x6a] sm:$0xff]
    %v3339 = vld [vmem:[%s577 + $0x7a] sm:$0xff]
    %v3340 = vld [vmem:[%s577 + $0x82] sm:$0xff]
    %v3341 = vld [vmem:[%s577 + $0x92] sm:$0xff]
    %v3342 = vld [vmem:[%s577 + $0x9a] sm:$0xff]
    %v3343 = vld [vmem:[%s577 + $0xaa] sm:$0xff]
    %v3344 = vld [vmem:[%s577 + $0xb2] sm:$0xff]
    %v3345 = vld [vmem:[%s577 + $0xc2] sm:$0xff]
    %v3346 = vld [vmem:[%s577 + $0xca] sm:$0xff]
    %v3347 = vld [vmem:[%s577 + $0xda] sm:$0xff]
    %v3348 = vld [vmem:[%s577 + $0xe2] sm:$0xff]
    %v3349 = vld [vmem:[%s577 + $0xf2] sm:$0xff]
    %v3350 = vld [vmem:[%s577 + $0xfa] sm:$0xff]
    %v3351 = vld [vmem:[%s577 + $0x10a] sm:$0xff]
    %v3352 = vld [vmem:[%s577 + $0x112] sm:$0xff]
    %v3353 = vld [vmem:[%s577 + $0x122] sm:$0xff]
    %v3354 = vld [vmem:[%s577 + $0x12a] sm:$0xff]
    %v3355 = vld [vmem:[%s577 + $0x13a] sm:$0xff]
    %v3356 = vld [vmem:[%s577 + $0x142] sm:$0xff]
    %v3357 = vld [vmem:[%s577 + $0x152] sm:$0xff]
    %v3358 = vld [vmem:[%s577 + $0x15a] sm:$0xff]
    %v3359 = vld [vmem:[%s577 + $0x16a] sm:$0xff]
    %v3360 = vld [vmem:[%s577 + $0x172] sm:$0xff]
    %v3361 = vld [vmem:[%s577 + $0x1b2] sm:$0xff]
    %v3362 = vld [vmem:[%s577 + $0x1ba] sm:$0xff]
    %v3363 = vld [vmem:[%s577 + $0x1ca] sm:$0xff]
    %v3364 = vld [vmem:[%s577 + $0x1d2] sm:$0xff]
    %v3365 = vld [vmem:[%s577 + $0x1e2] sm:$0xff]
    %v3366 = vld [vmem:[%s577 + $0x1ea] sm:$0xff]
    %v3367 = vld [vmem:[%s577 + $0x1fa] sm:$0xff]
    %v3368 = vld [vmem:[%s577 + $0x202] sm:$0xff]
    %v3369 = vld [vmem:[%s577 + $0x212] sm:$0xff]
    %v3370 = vld [vmem:[%s577 + $0x21a] sm:$0xff]
    %v3371 = vld [vmem:[%s577 + $0x22a] sm:$0xff]
    %v3372 = vld [vmem:[%s577 + $0x232] sm:$0xff]
    %v3373 = vld [vmem:[%s577 + $0x242] sm:$0xff]
    %v3374 = vld [vmem:[%s577 + $0x24a] sm:$0xff]
    %v3375 = vld [vmem:[%s577 + $0x25a] sm:$0xff]
    %v3376 = vld [vmem:[%s577 + $0x262] sm:$0xff]
    %v3377 = vld [vmem:[%s577 + $0x272] sm:$0xff]
    %v3378 = vld [vmem:[%s577 + $0x27a] sm:$0xff]
    %v3379 = vld [vmem:[%s577 + $0x28a] sm:$0xff]
    %v3380 = vld [vmem:[%s577 + $0x292] sm:$0xff]
    %v3381 = vld [vmem:[%s577 + $0x2a2] sm:$0xff]
    %v3382 = vld [vmem:[%s577 + $0x2aa] sm:$0xff]
    %v3383 = vld [vmem:[%s577 + $0x2ba] sm:$0xff]
    %v3384 = vld [vmem:[%s577 + $0x2c2] sm:$0xff]
    %v3385 = vld [vmem:[%s577 + $0x2d2] sm:$0xff]
    %v3386 = vld [vmem:[%s577 + $0x2da] sm:$0xff]
    %v3387 = vld [vmem:[%s577 + $0x2ea] sm:$0xff]
    %v3388 = vld [vmem:[%s577 + $0x2f2] sm:$0xff]
    %v3389 = vld [vmem:[%s577 + $0x302] sm:$0xff]
    %v3390 = vld [vmem:[%s577 + $0x30a] sm:$0xff]
    %v3391 = vld [vmem:[%s577 + $0x31a] sm:$0xff]
    %v3392 = vld [vmem:[%s577 + $0x322] sm:$0xff]
    %v3393 = vpack.c.bf16 %v3330, %v3329
    %v3394 = vpack.c.bf16 %v3332, %v3331
    %v3395 = vpack.c.bf16 %v3334, %v3333
    %v3396 = vpack.c.bf16 %v3336, %v3335
    %v3397 = vpack.c.bf16 %v3338, %v3337
    %v3398 = vpack.c.bf16 %v3340, %v3339
    %v3399 = vpack.c.bf16 %v3342, %v3341
    %v3400 = vpack.c.bf16 %v3344, %v3343
    %v3401 = vpack.c.bf16 %v3346, %v3345
    %v3402 = vpack.c.bf16 %v3348, %v3347
    %v3403 = vpack.c.bf16 %v3350, %v3349
    %v3404 = vpack.c.bf16 %v3352, %v3351
    %v3405 = vpack.c.bf16 %v3354, %v3353
    %v3406 = vpack.c.bf16 %v3356, %v3355
    %v3407 = vpack.c.bf16 %v3358, %v3357
    %v3408 = vpack.c.bf16 %v3360, %v3359
    %v3409 = vpack.c.bf16 %v3362, %v3361
    %v3410 = vpack.c.bf16 %v3364, %v3363
    %v3411 = vpack.c.bf16 %v3366, %v3365
    %v3412 = vpack.c.bf16 %v3368, %v3367
    %v3413 = vpack.c.bf16 %v3370, %v3369
    %v3414 = vpack.c.bf16 %v3372, %v3371
    %v3415 = vpack.c.bf16 %v3374, %v3373
    %v3416 = vpack.c.bf16 %v3376, %v3375
    %v3417 = vpack.c.bf16 %v3378, %v3377
    %v3418 = vpack.c.bf16 %v3380, %v3379
    %v3419 = vpack.c.bf16 %v3382, %v3381
    %v3420 = vpack.c.bf16 %v3384, %v3383
    %v3421 = vpack.c.bf16 %v3386, %v3385
    %v3422 = vpack.c.bf16 %v3388, %v3387
    %v3423 = vpack.c.bf16 %v3390, %v3389
    %v3424 = vpack.c.bf16 %v3392, %v3391
    %s3425 = scalar_lea.vmem %s3, 10
    %v3426 = vld [vmem:[%s3425] sm:$0x3]
    %v3428 = vsel %vm562, %v3393, 0
    %v3431 = vsel %vm562, %v3394, 0
    %v3434 = vsel %vm562, %v3395, 0
    %v3437 = vsel %vm562, %v3396, 0
    %v3440 = vsel %vm562, %v3397, 0
    %v3443 = vsel %vm562, %v3398, 0
    %v3446 = vsel %vm562, %v3399, 0
    %v3449 = vsel %vm562, %v3400, 0
    %v3452 = vsel %vm562, %v3401, 0
    %v3455 = vsel %vm562, %v3402, 0
    %v3458 = vsel %vm562, %v3403, 0
    %v3461 = vsel %vm562, %v3404, 0
    %v3464 = vsel %vm562, %v3405, 0
    %v3467 = vsel %vm562, %v3406, 0
    %v3470 = vsel %vm562, %v3407, 0
    %v3473 = vsel %vm562, %v3408, 0
    %v3476 = vsel %vm562, %v3409, 0
    %v3479 = vsel %vm562, %v3410, 0
    %v3482 = vsel %vm562, %v3411, 0
    %v3485 = vsel %vm562, %v3412, 0
    %v3488 = vsel %vm562, %v3413, 0
    %v3491 = vsel %vm562, %v3414, 0
    %v3494 = vsel %vm562, %v3415, 0
    %v3497 = vsel %vm562, %v3416, 0
    %v3500 = vsel %vm562, %v3417, 0
    %v3503 = vsel %vm562, %v3418, 0
    %v3506 = vsel %vm562, %v3419, 0
    %v3509 = vsel %vm562, %v3420, 0
    %v3512 = vsel %vm562, %v3421, 0
    %v3515 = vsel %vm562, %v3422, 0
    %v3518 = vsel %vm562, %v3423, 0
    %v3521 = vsel %vm562, %v3424, 0
    %v3524 = vsel %vm998, %v3426, 0
    %3526 = vmatprep.subr.bf16.mxu0 0
    %3527 = vmatpush1.bf16.msra.mxu0 %v3524
    %3528 = vmatprep.subr.bf16.mxu0 0
    %3529 = vmatpush1.bf16.msra.mxu0 0
    %3530 = vmatprep.subr.bf16.mxu0 0
    %3531 = vmatpush1.bf16.msra.mxu0 0
    %3532 = vmatprep.subr.bf16.mxu0 0
    %3533 = vmatpush1.bf16.msra.mxu0 0
    %3534 = vmatprep.subr.bf16.mxu0 0
    %3535 = vmatpush1.bf16.msra.mxu0 0
    %3536 = vmatprep.subr.bf16.mxu0 0
    %3537 = vmatpush1.bf16.msra.mxu0 0
    %3538 = vmatprep.subr.bf16.mxu0 0
    %3539 = vmatpush1.bf16.msra.mxu0 0
    %3540 = vmatprep.subr.bf16.mxu0 0
    %3541 = vmatpush1.bf16.msra.mxu0 0
    %3542 = vmatprep.subr.bf16.mxu0 0
    %3543 = vmatpush1.bf16.msra.mxu0 0
    %3544 = vmatprep.subr.bf16.mxu0 0
    %3545 = vmatpush1.bf16.msra.mxu0 0
    %3546 = vmatprep.subr.bf16.mxu0 0
    %3547 = vmatpush1.bf16.msra.mxu0 0
    %3548 = vmatprep.subr.bf16.mxu0 0
    %3549 = vmatpush1.bf16.msra.mxu0 0
    %3550 = vmatprep.subr.bf16.mxu0 0
    %3551 = vmatpush1.bf16.msra.mxu0 0
    %3552 = vmatprep.subr.bf16.mxu0 0
    %3553 = vmatpush1.bf16.msra.mxu0 0
    %3554 = vmatprep.subr.bf16.mxu0 0
    %3555 = vmatpush1.bf16.msra.mxu0 0
    %3556 = vmatprep.subr.bf16.mxu0 0
    %3557 = vmatpush1.bf16.msra.mxu0 0
    %3558 = vmatprep.mubr.bf16.mxu0 0
    %3559 = vmatmul.mubr.bf16.gmra.mrb[0].mxu0 %v3428
    %v3560 = vpop.f32.mrb[0].mxu0
    %v3561 = vadd.f32 0.0, %v3560
    %v3562 = vpop.f32.mrb[0].mxu0
    %v3563 = vpop.f32.mrb[0].mxu0
    %v3564 = vadd.f32 0.0, %v3563
    %v3565 = vpop.f32.mrb[0].mxu0
    %3566 = vmatprep.mubr.bf16.mxu0 0
    %3567 = vmatmul.mubr.bf16.gmra.mrb[0].mxu0 %v3431
    %v3568 = vpop.f32.mrb[0].mxu0
    %v3569 = vadd.f32 0.0, %v3568
    %v3570 = vpop.f32.mrb[0].mxu0
    %v3571 = vpop.f32.mrb[0].mxu0
    %v3572 = vadd.f32 0.0, %v3571
    %v3573 = vpop.f32.mrb[0].mxu0
    %3574 = vmatprep.mubr.bf16.mxu0 0
    %3575 = vmatmul.mubr.bf16.gmra.mrb[0].mxu0 %v3434
    %v3576 = vpop.f32.mrb[0].mxu0
    %v3577 = vadd.f32 0.0, %v3576
    %v3578 = vpop.f32.mrb[0].mxu0
    %v3579 = vpop.f32.mrb[0].mxu0
    %v3580 = vadd.f32 0.0, %v3579
    %v3581 = vpop.f32.mrb[0].mxu0
    %3582 = vmatprep.mubr.bf16.mxu0 0
    %3583 = vmatmul.mubr.bf16.gmra.mrb[0].mxu0 %v3437
    %v3584 = vpop.f32.mrb[0].mxu0
    %v3585 = vadd.f32 0.0, %v3584
    %v3586 = vpop.f32.mrb[0].mxu0
    %v3587 = vpop.f32.mrb[0].mxu0
    %v3588 = vadd.f32 0.0, %v3587
    %v3589 = vpop.f32.mrb[0].mxu0
    %3590 = vmatprep.mubr.bf16.mxu0 0
    %3591 = vmatmul.mubr.bf16.gmra.mrb[0].mxu0 %v3440
    %v3592 = vpop.f32.mrb[0].mxu0
    %v3593 = vadd.f32 0.0, %v3592
    %v3594 = vpop.f32.mrb[0].mxu0
    %v3595 = vpop.f32.mrb[0].mxu0
    %v3596 = vadd.f32 0.0, %v3595
    %v3597 = vpop.f32.mrb[0].mxu0
    %3598 = vmatprep.mubr.bf16.mxu0 0
    %3599 = vmatmul.mubr.bf16.gmra.mrb[0].mxu0 %v3443
    %v3600 = vpop.f32.mrb[0].mxu0
    %v3601 = vadd.f32 0.0, %v3600
    %v3602 = vpop.f32.mrb[0].mxu0
    %v3603 = vpop.f32.mrb[0].mxu0
    %v3604 = vadd.f32 0.0, %v3603
    %v3605 = vpop.f32.mrb[0].mxu0
    %3606 = vmatprep.mubr.bf16.mxu0 0
    %3607 = vmatmul.mubr.bf16.gmra.mrb[0].mxu0 %v3446
    %v3608 = vpop.f32.mrb[0].mxu0
    %v3609 = vadd.f32 0.0, %v3608
    %v3610 = vpop.f32.mrb[0].mxu0
    %v3611 = vpop.f32.mrb[0].mxu0
    %v3612 = vadd.f32 0.0, %v3611
    %v3613 = vpop.f32.mrb[0].mxu0
    %3614 = vmatprep.mubr.bf16.mxu0 0
    %3615 = vmatmul.mubr.bf16.gmra.mrb[0].mxu0 %v3449
    %v3616 = vpop.f32.mrb[0].mxu0
    %v3617 = vadd.f32 0.0, %v3616
    %v3618 = vpop.f32.mrb[0].mxu0
    %v3619 = vpop.f32.mrb[0].mxu0
    %v3620 = vadd.f32 0.0, %v3619
    %v3621 = vpop.f32.mrb[0].mxu0
    %3622 = vmatprep.mubr.bf16.mxu0 0
    %3623 = vmatmul.mubr.bf16.gmra.mrb[0].mxu0 %v3452
    %v3624 = vpop.f32.mrb[0].mxu0
    %v3625 = vadd.f32 0.0, %v3624
    %v3626 = vpop.f32.mrb[0].mxu0
    %v3627 = vpop.f32.mrb[0].mxu0
    %v3628 = vadd.f32 0.0, %v3627
    %v3629 = vpop.f32.mrb[0].mxu0
    %3630 = vmatprep.mubr.bf16.mxu0 0
    %3631 = vmatmul.mubr.bf16.gmra.mrb[0].mxu0 %v3455
    %v3632 = vpop.f32.mrb[0].mxu0
    %v3633 = vadd.f32 0.0, %v3632
    %v3634 = vpop.f32.mrb[0].mxu0
    %v3635 = vpop.f32.mrb[0].mxu0
    %v3636 = vadd.f32 0.0, %v3635
    %v3637 = vpop.f32.mrb[0].mxu0
    %3638 = vmatprep.mubr.bf16.mxu0 0
    %3639 = vmatmul.mubr.bf16.gmra.mrb[0].mxu0 %v3458
    %v3640 = vpop.f32.mrb[0].mxu0
    %v3641 = vadd.f32 0.0, %v3640
    %v3642 = vpop.f32.mrb[0].mxu0
    %v3643 = vpop.f32.mrb[0].mxu0
    %v3644 = vadd.f32 0.0, %v3643
    %v3645 = vpop.f32.mrb[0].mxu0
    %3646 = vmatprep.mubr.bf16.mxu0 0
    %3647 = vmatmul.mubr.bf16.gmra.mrb[0].mxu0 %v3461
    %v3648 = vpop.f32.mrb[0].mxu0
    %v3649 = vadd.f32 0.0, %v3648
    %v3650 = vpop.f32.mrb[0].mxu0
    %v3651 = vpop.f32.mrb[0].mxu0
    %v3652 = vadd.f32 0.0, %v3651
    %v3653 = vpop.f32.mrb[0].mxu0
    %3654 = vmatprep.mubr.bf16.mxu0 0
    %3655 = vmatmul.mubr.bf16.gmra.mrb[0].mxu0 %v3464
    %v3656 = vpop.f32.mrb[0].mxu0
    %v3657 = vadd.f32 0.0, %v3656
    %v3658 = vpop.f32.mrb[0].mxu0
    %v3659 = vpop.f32.mrb[0].mxu0
    %v3660 = vadd.f32 0.0, %v3659
    %v3661 = vpop.f32.mrb[0].mxu0
    %3662 = vmatprep.mubr.bf16.mxu0 0
    %3663 = vmatmul.mubr.bf16.gmra.mrb[0].mxu0 %v3467
    %v3664 = vpop.f32.mrb[0].mxu0
    %v3665 = vadd.f32 0.0, %v3664
    %v3666 = vpop.f32.mrb[0].mxu0
    %v3667 = vpop.f32.mrb[0].mxu0
    %v3668 = vadd.f32 0.0, %v3667
    %v3669 = vpop.f32.mrb[0].mxu0
    %3670 = vmatprep.mubr.bf16.mxu0 0
    %3671 = vmatmul.mubr.bf16.gmra.mrb[0].mxu0 %v3470
    %v3672 = vpop.f32.mrb[0].mxu0
    %v3673 = vadd.f32 0.0, %v3672
    %v3674 = vpop.f32.mrb[0].mxu0
    %v3675 = vpop.f32.mrb[0].mxu0
    %v3676 = vadd.f32 0.0, %v3675
    %v3677 = vpop.f32.mrb[0].mxu0
    %3678 = vmatprep.mubr.bf16.mxu0 0
    %3679 = vmatmul.mubr.bf16.gmra.mrb[0].mxu0 %v3473
    %v3680 = vpop.f32.mrb[0].mxu0
    %v3681 = vadd.f32 0.0, %v3680
    %v3682 = vpop.f32.mrb[0].mxu0
    %v3683 = vpop.f32.mrb[0].mxu0
    %v3684 = vadd.f32 0.0, %v3683
    %v3685 = vpop.f32.mrb[0].mxu0
    %3686 = vmatprep.mubr.bf16.mxu0 0
    %3687 = vmatmul.mubr.bf16.gmra.mrb[0].mxu0 %v3476
    %v3688 = vpop.f32.mrb[0].mxu0
    %v3689 = vadd.f32 0.0, %v3688
    %v3690 = vpop.f32.mrb[0].mxu0
    %v3691 = vpop.f32.mrb[0].mxu0
    %v3692 = vadd.f32 0.0, %v3691
    %v3693 = vpop.f32.mrb[0].mxu0
    %3694 = vmatprep.mubr.bf16.mxu0 0
    %3695 = vmatmul.mubr.bf16.gmra.mrb[0].mxu0 %v3479
    %v3696 = vpop.f32.mrb[0].mxu0
    %v3697 = vadd.f32 0.0, %v3696
    %v3698 = vpop.f32.mrb[0].mxu0
    %v3699 = vpop.f32.mrb[0].mxu0
    %v3700 = vadd.f32 0.0, %v3699
    %v3701 = vpop.f32.mrb[0].mxu0
    %3702 = vmatprep.mubr.bf16.mxu0 0
    %3703 = vmatmul.mubr.bf16.gmra.mrb[0].mxu0 %v3482
    %v3704 = vpop.f32.mrb[0].mxu0
    %v3705 = vadd.f32 0.0, %v3704
    %v3706 = vpop.f32.mrb[0].mxu0
    %v3707 = vpop.f32.mrb[0].mxu0
    %v3708 = vadd.f32 0.0, %v3707
    %v3709 = vpop.f32.mrb[0].mxu0
    %3710 = vmatprep.mubr.bf16.mxu0 0
    %3711 = vmatmul.mubr.bf16.gmra.mrb[0].mxu0 %v3485
    %v3712 = vpop.f32.mrb[0].mxu0
    %v3713 = vadd.f32 0.0, %v3712
    %v3714 = vpop.f32.mrb[0].mxu0
    %v3715 = vpop.f32.mrb[0].mxu0
    %v3716 = vadd.f32 0.0, %v3715
    %v3717 = vpop.f32.mrb[0].mxu0
    %3718 = vmatprep.mubr.bf16.mxu0 0
    %3719 = vmatmul.mubr.bf16.gmra.mrb[0].mxu0 %v3488
    %v3720 = vpop.f32.mrb[0].mxu0
    %v3721 = vadd.f32 0.0, %v3720
    %v3722 = vpop.f32.mrb[0].mxu0
    %v3723 = vpop.f32.mrb[0].mxu0
    %v3724 = vadd.f32 0.0, %v3723
    %v3725 = vpop.f32.mrb[0].mxu0
    %3726 = vmatprep.mubr.bf16.mxu0 0
    %3727 = vmatmul.mubr.bf16.gmra.mrb[0].mxu0 %v3491
    %v3728 = vpop.f32.mrb[0].mxu0
    %v3729 = vadd.f32 0.0, %v3728
    %v3730 = vpop.f32.mrb[0].mxu0
    %v3731 = vpop.f32.mrb[0].mxu0
    %v3732 = vadd.f32 0.0, %v3731
    %v3733 = vpop.f32.mrb[0].mxu0
    %3734 = vmatprep.mubr.bf16.mxu0 0
    %3735 = vmatmul.mubr.bf16.gmra.mrb[0].mxu0 %v3494
    %v3736 = vpop.f32.mrb[0].mxu0
    %v3737 = vadd.f32 0.0, %v3736
    %v3738 = vpop.f32.mrb[0].mxu0
    %v3739 = vpop.f32.mrb[0].mxu0
    %v3740 = vadd.f32 0.0, %v3739
    %v3741 = vpop.f32.mrb[0].mxu0
    %3742 = vmatprep.mubr.bf16.mxu0 0
    %3743 = vmatmul.mubr.bf16.gmra.mrb[0].mxu0 %v3497
    %v3744 = vpop.f32.mrb[0].mxu0
    %v3745 = vadd.f32 0.0, %v3744
    %v3746 = vpop.f32.mrb[0].mxu0
    %v3747 = vpop.f32.mrb[0].mxu0
    %v3748 = vadd.f32 0.0, %v3747
    %v3749 = vpop.f32.mrb[0].mxu0
    %3750 = vmatprep.mubr.bf16.mxu0 0
    %3751 = vmatmul.mubr.bf16.gmra.mrb[0].mxu0 %v3500
    %v3752 = vpop.f32.mrb[0].mxu0
    %v3753 = vadd.f32 0.0, %v3752
    %v3754 = vpop.f32.mrb[0].mxu0
    %v3755 = vpop.f32.mrb[0].mxu0
    %v3756 = vadd.f32 0.0, %v3755
    %v3757 = vpop.f32.mrb[0].mxu0
    %3758 = vmatprep.mubr.bf16.mxu0 0
    %3759 = vmatmul.mubr.bf16.gmra.mrb[0].mxu0 %v3503
    %v3760 = vpop.f32.mrb[0].mxu0
    %v3761 = vadd.f32 0.0, %v3760
    %v3762 = vpop.f32.mrb[0].mxu0
    %v3763 = vpop.f32.mrb[0].mxu0
    %v3764 = vadd.f32 0.0, %v3763
    %v3765 = vpop.f32.mrb[0].mxu0
    %3766 = vmatprep.mubr.bf16.mxu0 0
    %3767 = vmatmul.mubr.bf16.gmra.mrb[0].mxu0 %v3506
    %v3768 = vpop.f32.mrb[0].mxu0
    %v3769 = vadd.f32 0.0, %v3768
    %v3770 = vpop.f32.mrb[0].mxu0
    %v3771 = vpop.f32.mrb[0].mxu0
    %v3772 = vadd.f32 0.0, %v3771
    %v3773 = vpop.f32.mrb[0].mxu0
    %3774 = vmatprep.mubr.bf16.mxu0 0
    %3775 = vmatmul.mubr.bf16.gmra.mrb[0].mxu0 %v3509
    %v3776 = vpop.f32.mrb[0].mxu0
    %v3777 = vadd.f32 0.0, %v3776
    %v3778 = vpop.f32.mrb[0].mxu0
    %v3779 = vpop.f32.mrb[0].mxu0
    %v3780 = vadd.f32 0.0, %v3779
    %v3781 = vpop.f32.mrb[0].mxu0
    %3782 = vmatprep.mubr.bf16.mxu0 0
    %3783 = vmatmul.mubr.bf16.gmra.mrb[0].mxu0 %v3512
    %v3784 = vpop.f32.mrb[0].mxu0
    %v3785 = vadd.f32 0.0, %v3784
    %v3786 = vpop.f32.mrb[0].mxu0
    %v3787 = vpop.f32.mrb[0].mxu0
    %v3788 = vadd.f32 0.0, %v3787
    %v3789 = vpop.f32.mrb[0].mxu0
    %3790 = vmatprep.mubr.bf16.mxu0 0
    %3791 = vmatmul.mubr.bf16.gmra.mrb[0].mxu0 %v3515
    %v3792 = vpop.f32.mrb[0].mxu0
    %v3793 = vadd.f32 0.0, %v3792
    %v3794 = vpop.f32.mrb[0].mxu0
    %v3795 = vpop.f32.mrb[0].mxu0
    %v3796 = vadd.f32 0.0, %v3795
    %v3797 = vpop.f32.mrb[0].mxu0
    %3798 = vmatprep.mubr.bf16.mxu0 0
    %3799 = vmatmul.mubr.bf16.gmra.mrb[0].mxu0 %v3518
    %v3800 = vpop.f32.mrb[0].mxu0
    %v3801 = vadd.f32 0.0, %v3800
    %v3802 = vpop.f32.mrb[0].mxu0
    %v3803 = vpop.f32.mrb[0].mxu0
    %v3804 = vadd.f32 0.0, %v3803
    %v3805 = vpop.f32.mrb[0].mxu0
    %3806 = vmatprep.mubr.bf16.mxu0 0
    %3807 = vmatmul.mubr.bf16.gmra.mrb[0].mxu0 %v3521
    %v3808 = vpop.f32.mrb[0].mxu0
    %v3809 = vadd.f32 0.0, %v3808
    %v3810 = vpop.f32.mrb[0].mxu0
    %v3811 = vpop.f32.mrb[0].mxu0
    %v3812 = vadd.f32 0.0, %v3811
    %v3813 = vpop.f32.mrb[0].mxu0
    %3814 = vdwg.mxu0
    %v3815 = vadd.f32 %v3265, %v3561
    %v3816 = vadd.f32 %v3266, %v3564
    %v3817 = vadd.f32 %v3267, %v3569
    %v3818 = vadd.f32 %v3268, %v3572
    %v3819 = vadd.f32 %v3269, %v3577
    %v3820 = vadd.f32 %v3270, %v3580
    %v3821 = vadd.f32 %v3271, %v3585
    %v3822 = vadd.f32 %v3272, %v3588
    %v3823 = vadd.f32 %v3273, %v3593
    %v3824 = vadd.f32 %v3274, %v3596
    %v3825 = vadd.f32 %v3275, %v3601
    %v3826 = vadd.f32 %v3276, %v3604
    %v3827 = vadd.f32 %v3277, %v3609
    %v3828 = vadd.f32 %v3278, %v3612
    %v3829 = vadd.f32 %v3279, %v3617
    %v3830 = vadd.f32 %v3280, %v3620
    %v3831 = vadd.f32 %v3281, %v3625
    %v3832 = vadd.f32 %v3282, %v3628
    %v3833 = vadd.f32 %v3283, %v3633
    %v3834 = vadd.f32 %v3284, %v3636
    %v3835 = vadd.f32 %v3285, %v3641
    %v3836 = vadd.f32 %v3286, %v3644
    %v3837 = vadd.f32 %v3287, %v3649
    %v3838 = vadd.f32 %v3288, %v3652
    %v3839 = vadd.f32 %v3289, %v3657
    %v3840 = vadd.f32 %v3290, %v3660
    %v3841 = vadd.f32 %v3291, %v3665
    %v3842 = vadd.f32 %v3292, %v3668
    %v3843 = vadd.f32 %v3293, %v3673
    %v3844 = vadd.f32 %v3294, %v3676
    %v3845 = vadd.f32 %v3295, %v3681
    %v3846 = vadd.f32 %v3296, %v3684
    %v3847 = vadd.f32 %v3297, %v3689
    %v3848 = vadd.f32 %v3298, %v3692
    %v3849 = vadd.f32 %v3299, %v3697
    %v3850 = vadd.f32 %v3300, %v3700
    %v3851 = vadd.f32 %v3301, %v3705
    %v3852 = vadd.f32 %v3302, %v3708
    %v3853 = vadd.f32 %v3303, %v3713
    %v3854 = vadd.f32 %v3304, %v3716
    %v3855 = vadd.f32 %v3305, %v3721
    %v3856 = vadd.f32 %v3306, %v3724
    %v3857 = vadd.f32 %v3307, %v3729
    %v3858 = vadd.f32 %v3308, %v3732
    %v3859 = vadd.f32 %v3309, %v3737
    %v3860 = vadd.f32 %v3310, %v3740
    %v3861 = vadd.f32 %v3311, %v3745
    %v3862 = vadd.f32 %v3312, %v3748
    %v3863 = vadd.f32 %v3313, %v3753
    %v3864 = vadd.f32 %v3314, %v3756
    %v3865 = vadd.f32 %v3315, %v3761
    %v3866 = vadd.f32 %v3316, %v3764
    %v3867 = vadd.f32 %v3317, %v3769
    %v3868 = vadd.f32 %v3318, %v3772
    %v3869 = vadd.f32 %v3319, %v3777
    %v3870 = vadd.f32 %v3320, %v3780
    %v3871 = vadd.f32 %v3321, %v3785
    %v3872 = vadd.f32 %v3322, %v3788
    %v3873 = vadd.f32 %v3323, %v3793
    %v3874 = vadd.f32 %v3324, %v3796
    %v3875 = vadd.f32 %v3325, %v3801
    %v3876 = vadd.f32 %v3326, %v3804
    %v3877 = vadd.f32 %v3327, %v3809
    %v3878 = vadd.f32 %v3328, %v3812
    %s3879 = scalar_lea.vmem [#allocation2], 48
    %v3880 = vld [vmem:[%s3879] sm:$0xff]
    %v3881 = vld [vmem:[%s3879 + $0x8] sm:$0xff]
    %v3882 = vld [vmem:[%s3879 + $0x18] sm:$0xff]
    %v3883 = vld [vmem:[%s3879 + $0x20] sm:$0xff]
    %v3884 = vld [vmem:[%s3879 + $0x30] sm:$0xff]
    %v3885 = vld [vmem:[%s3879 + $0x38] sm:$0xff]
    %v3886 = vld [vmem:[%s3879 + $0x48] sm:$0xff]
    %v3887 = vld [vmem:[%s3879 + $0x50] sm:$0xff]
    %v3888 = vld [vmem:[%s3879 + $0x60] sm:$0xff]
    %v3889 = vld [vmem:[%s3879 + $0x68] sm:$0xff]
    %v3890 = vld [vmem:[%s3879 + $0x78] sm:$0xff]
    %v3891 = vld [vmem:[%s3879 + $0x80] sm:$0xff]
    %v3892 = vld [vmem:[%s3879 + $0x90] sm:$0xff]
    %v3893 = vld [vmem:[%s3879 + $0x98] sm:$0xff]
    %v3894 = vld [vmem:[%s3879 + $0xa8] sm:$0xff]
    %v3895 = vld [vmem:[%s3879 + $0xb0] sm:$0xff]
    %v3896 = vld [vmem:[%s3879 + $0xc0] sm:$0xff]
    %v3897 = vld [vmem:[%s3879 + $0xc8] sm:$0xff]
    %v3898 = vld [vmem:[%s3879 + $0xd8] sm:$0xff]
    %v3899 = vld [vmem:[%s3879 + $0xe0] sm:$0xff]
    %v3900 = vld [vmem:[%s3879 + $0xf0] sm:$0xff]
    %v3901 = vld [vmem:[%s3879 + $0xf8] sm:$0xff]
    %v3902 = vld [vmem:[%s3879 + $0x108] sm:$0xff]
    %v3903 = vld [vmem:[%s3879 + $0x110] sm:$0xff]
    %v3904 = vld [vmem:[%s3879 + $0x120] sm:$0xff]
    %v3905 = vld [vmem:[%s3879 + $0x128] sm:$0xff]
    %v3906 = vld [vmem:[%s3879 + $0x138] sm:$0xff]
    %v3907 = vld [vmem:[%s3879 + $0x140] sm:$0xff]
    %v3908 = vld [vmem:[%s3879 + $0x150] sm:$0xff]
    %v3909 = vld [vmem:[%s3879 + $0x158] sm:$0xff]
    %v3910 = vld [vmem:[%s3879 + $0x168] sm:$0xff]
    %v3911 = vld [vmem:[%s3879 + $0x170] sm:$0xff]
    %v3912 = vld [vmem:[%s3879 + $0x1b0] sm:$0xff]
    %v3913 = vld [vmem:[%s3879 + $0x1b8] sm:$0xff]
    %v3914 = vld [vmem:[%s3879 + $0x1c8] sm:$0xff]
    %v3915 = vld [vmem:[%s3879 + $0x1d0] sm:$0xff]
    %v3916 = vld [vmem:[%s3879 + $0x1e0] sm:$0xff]
    %v3917 = vld [vmem:[%s3879 + $0x1e8] sm:$0xff]
    %v3918 = vld [vmem:[%s3879 + $0x1f8] sm:$0xff]
    %v3919 = vld [vmem:[%s3879 + $0x200] sm:$0xff]
    %v3920 = vld [vmem:[%s3879 + $0x210] sm:$0xff]
    %v3921 = vld [vmem:[%s3879 + $0x218] sm:$0xff]
    %v3922 = vld [vmem:[%s3879 + $0x228] sm:$0xff]
    %v3923 = vld [vmem:[%s3879 + $0x230] sm:$0xff]
    %v3924 = vld [vmem:[%s3879 + $0x240] sm:$0xff]
    %v3925 = vld [vmem:[%s3879 + $0x248] sm:$0xff]
    %v3926 = vld [vmem:[%s3879 + $0x258] sm:$0xff]
    %v3927 = vld [vmem:[%s3879 + $0x260] sm:$0xff]
    %v3928 = vld [vmem:[%s3879 + $0x270] sm:$0xff]
    %v3929 = vld [vmem:[%s3879 + $0x278] sm:$0xff]
    %v3930 = vld [vmem:[%s3879 + $0x288] sm:$0xff]
    %v3931 = vld [vmem:[%s3879 + $0x290] sm:$0xff]
    %v3932 = vld [vmem:[%s3879 + $0x2a0] sm:$0xff]
    %v3933 = vld [vmem:[%s3879 + $0x2a8] sm:$0xff]
    %v3934 = vld [vmem:[%s3879 + $0x2b8] sm:$0xff]
    %v3935 = vld [vmem:[%s3879 + $0x2c0] sm:$0xff]
    %v3936 = vld [vmem:[%s3879 + $0x2d0] sm:$0xff]
    %v3937 = vld [vmem:[%s3879 + $0x2d8] sm:$0xff]
    %v3938 = vld [vmem:[%s3879 + $0x2e8] sm:$0xff]
    %v3939 = vld [vmem:[%s3879 + $0x2f0] sm:$0xff]
    %v3940 = vld [vmem:[%s3879 + $0x300] sm:$0xff]
    %v3941 = vld [vmem:[%s3879 + $0x308] sm:$0xff]
    %v3942 = vld [vmem:[%s3879 + $0x318] sm:$0xff]
    %v3943 = vld [vmem:[%s3879 + $0x320] sm:$0xff]
    %v3944 = vpack.c.bf16 %v3881, %v3880
    %v3945 = vpack.c.bf16 %v3883, %v3882
    %v3946 = vpack.c.bf16 %v3885, %v3884
    %v3947 = vpack.c.bf16 %v3887, %v3886
    %v3948 = vpack.c.bf16 %v3889, %v3888
    %v3949 = vpack.c.bf16 %v3891, %v3890
    %v3950 = vpack.c.bf16 %v3893, %v3892
    %v3951 = vpack.c.bf16 %v3895, %v3894
    %v3952 = vpack.c.bf16 %v3897, %v3896
    %v3953 = vpack.c.bf16 %v3899, %v3898
    %v3954 = vpack.c.bf16 %v3901, %v3900
    %v3955 = vpack.c.bf16 %v3903, %v3902
    %v3956 = vpack.c.bf16 %v3905, %v3904
    %v3957 = vpack.c.bf16 %v3907, %v3906
    %v3958 = vpack.c.bf16 %v3909, %v3908
    %v3959 = vpack.c.bf16 %v3911, %v3910
    %v3960 = vpack.c.bf16 %v3913, %v3912
    %v3961 = vpack.c.bf16 %v3915, %v3914
    %v3962 = vpack.c.bf16 %v3917, %v3916
    %v3963 = vpack.c.bf16 %v3919, %v3918
    %v3964 = vpack.c.bf16 %v3921, %v3920
    %v3965 = vpack.c.bf16 %v3923, %v3922
    %v3966 = vpack.c.bf16 %v3925, %v3924
    %v3967 = vpack.c.bf16 %v3927, %v3926
    %v3968 = vpack.c.bf16 %v3929, %v3928
    %v3969 = vpack.c.bf16 %v3931, %v3930
    %v3970 = vpack.c.bf16 %v3933, %v3932
    %v3971 = vpack.c.bf16 %v3935, %v3934
    %v3972 = vpack.c.bf16 %v3937, %v3936
    %v3973 = vpack.c.bf16 %v3939, %v3938
    %v3974 = vpack.c.bf16 %v3941, %v3940
    %v3975 = vpack.c.bf16 %v3943, %v3942
    %s3976 = scalar_lea.vmem %s3, 12
    %v3977 = vld [vmem:[%s3976] sm:$0x3]
    %v3979 = vsel %vm562, %v3944, 0
    %v3982 = vsel %vm562, %v3945, 0
    %v3985 = vsel %vm562, %v3946, 0
    %v3988 = vsel %vm562, %v3947, 0
    %v3991 = vsel %vm562, %v3948, 0
    %v3994 = vsel %vm562, %v3949, 0
    %v3997 = vsel %vm562, %v3950, 0
    %v4000 = vsel %vm562, %v3951, 0
    %v4003 = vsel %vm562, %v3952, 0
    %v4006 = vsel %vm562, %v3953, 0
    %v4009 = vsel %vm562, %v3954, 0
    %v4012 = vsel %vm562, %v3955, 0
    %v4015 = vsel %vm562, %v3956, 0
    %v4018 = vsel %vm562, %v3957, 0
    %v4021 = vsel %vm562, %v3958, 0
    %v4024 = vsel %vm562, %v3959, 0
    %v4027 = vsel %vm562, %v3960, 0
    %v4030 = vsel %vm562, %v3961, 0
    %v4033 = vsel %vm562, %v3962, 0
    %v4036 = vsel %vm562, %v3963, 0
    %v4039 = vsel %vm562, %v3964, 0
    %v4042 = vsel %vm562, %v3965, 0
    %v4045 = vsel %vm562, %v3966, 0
    %v4048 = vsel %vm562, %v3967, 0
    %v4051 = vsel %vm562, %v3968, 0
    %v4054 = vsel %vm562, %v3969, 0
    %v4057 = vsel %vm562, %v3970, 0
    %v4060 = vsel %vm562, %v3971, 0
    %v4063 = vsel %vm562, %v3972, 0
    %v4066 = vsel %vm562, %v3973, 0
    %v4069 = vsel %vm562, %v3974, 0
    %v4072 = vsel %vm562, %v3975, 0
    %v4075 = vsel %vm998, %v3977, 0
    %4077 = vmatprep.subr.bf16.mxu0 0
    %4078 = vmatpush1.bf16.msra.mxu0 %v4075
    %4079 = vmatprep.subr.bf16.mxu0 0
    %4080 = vmatpush1.bf16.msra.mxu0 0
    %4081 = vmatprep.subr.bf16.mxu0 0
    %4082 = vmatpush1.bf16.msra.mxu0 0
    %4083 = vmatprep.subr.bf16.mxu0 0
    %4084 = vmatpush1.bf16.msra.mxu0 0
    %4085 = vmatprep.subr.bf16.mxu0 0
    %4086 = vmatpush1.bf16.msra.mxu0 0
    %4087 = vmatprep.subr.bf16.mxu0 0
    %4088 = vmatpush1.bf16.msra.mxu0 0
    %4089 = vmatprep.subr.bf16.mxu0 0
    %4090 = vmatpush1.bf16.msra.mxu0 0
    %4091 = vmatprep.subr.bf16.mxu0 0
    %4092 = vmatpush1.bf16.msra.mxu0 0
    %4093 = vmatprep.subr.bf16.mxu0 0
    %4094 = vmatpush1.bf16.msra.mxu0 0
    %4095 = vmatprep.subr.bf16.mxu0 0
    %4096 = vmatpush1.bf16.msra.mxu0 0
    %4097 = vmatprep.subr.bf16.mxu0 0
    %4098 = vmatpush1.bf16.msra.mxu0 0
    %4099 = vmatprep.subr.bf16.mxu0 0
    %4100 = vmatpush1.bf16.msra.mxu0 0
    %4101 = vmatprep.subr.bf16.mxu0 0
    %4102 = vmatpush1.bf16.msra.mxu0 0
    %4103 = vmatprep.subr.bf16.mxu0 0
    %4104 = vmatpush1.bf16.msra.mxu0 0
    %4105 = vmatprep.subr.bf16.mxu0 0
    %4106 = vmatpush1.bf16.msra.mxu0 0
    %4107 = vmatprep.subr.bf16.mxu0 0
    %4108 = vmatpush1.bf16.msra.mxu0 0
    %4109 = vmatprep.mubr.bf16.mxu0 0
    %4110 = vmatmul.mubr.bf16.gmra.mrb[0].mxu0 %v3979
    %v4111 = vpop.f32.mrb[0].mxu0
    %v4112 = vadd.f32 0.0, %v4111
    %v4113 = vpop.f32.mrb[0].mxu0
    %v4114 = vpop.f32.mrb[0].mxu0
    %v4115 = vadd.f32 0.0, %v4114
    %v4116 = vpop.f32.mrb[0].mxu0
    %4117 = vmatprep.mubr.bf16.mxu0 0
    %4118 = vmatmul.mubr.bf16.gmra.mrb[0].mxu0 %v3982
    %v4119 = vpop.f32.mrb[0].mxu0
    %v4120 = vadd.f32 0.0, %v4119
    %v4121 = vpop.f32.mrb[0].mxu0
    %v4122 = vpop.f32.mrb[0].mxu0
    %v4123 = vadd.f32 0.0, %v4122
    %v4124 = vpop.f32.mrb[0].mxu0
    %4125 = vmatprep.mubr.bf16.mxu0 0
    %4126 = vmatmul.mubr.bf16.gmra.mrb[0].mxu0 %v3985
    %v4127 = vpop.f32.mrb[0].mxu0
    %v4128 = vadd.f32 0.0, %v4127
    %v4129 = vpop.f32.mrb[0].mxu0
    %v4130 = vpop.f32.mrb[0].mxu0
    %v4131 = vadd.f32 0.0, %v4130
    %v4132 = vpop.f32.mrb[0].mxu0
    %4133 = vmatprep.mubr.bf16.mxu0 0
    %4134 = vmatmul.mubr.bf16.gmra.mrb[0].mxu0 %v3988
    %v4135 = vpop.f32.mrb[0].mxu0
    %v4136 = vadd.f32 0.0, %v4135
    %v4137 = vpop.f32.mrb[0].mxu0
    %v4138 = vpop.f32.mrb[0].mxu0
    %v4139 = vadd.f32 0.0, %v4138
    %v4140 = vpop.f32.mrb[0].mxu0
    %4141 = vmatprep.mubr.bf16.mxu0 0
    %4142 = vmatmul.mubr.bf16.gmra.mrb[0].mxu0 %v3991
    %v4143 = vpop.f32.mrb[0].mxu0
    %v4144 = vadd.f32 0.0, %v4143
    %v4145 = vpop.f32.mrb[0].mxu0
    %v4146 = vpop.f32.mrb[0].mxu0
    %v4147 = vadd.f32 0.0, %v4146
    %v4148 = vpop.f32.mrb[0].mxu0
    %4149 = vmatprep.mubr.bf16.mxu0 0
    %4150 = vmatmul.mubr.bf16.gmra.mrb[0].mxu0 %v3994
    %v4151 = vpop.f32.mrb[0].mxu0
    %v4152 = vadd.f32 0.0, %v4151
    %v4153 = vpop.f32.mrb[0].mxu0
    %v4154 = vpop.f32.mrb[0].mxu0
    %v4155 = vadd.f32 0.0, %v4154
    %v4156 = vpop.f32.mrb[0].mxu0
    %4157 = vmatprep.mubr.bf16.mxu0 0
    %4158 = vmatmul.mubr.bf16.gmra.mrb[0].mxu0 %v3997
    %v4159 = vpop.f32.mrb[0].mxu0
    %v4160 = vadd.f32 0.0, %v4159
    %v4161 = vpop.f32.mrb[0].mxu0
    %v4162 = vpop.f32.mrb[0].mxu0
    %v4163 = vadd.f32 0.0, %v4162
    %v4164 = vpop.f32.mrb[0].mxu0
    %4165 = vmatprep.mubr.bf16.mxu0 0
    %4166 = vmatmul.mubr.bf16.gmra.mrb[0].mxu0 %v4000
    %v4167 = vpop.f32.mrb[0].mxu0
    %v4168 = vadd.f32 0.0, %v4167
    %v4169 = vpop.f32.mrb[0].mxu0
    %v4170 = vpop.f32.mrb[0].mxu0
    %v4171 = vadd.f32 0.0, %v4170
    %v4172 = vpop.f32.mrb[0].mxu0
    %4173 = vmatprep.mubr.bf16.mxu0 0
    %4174 = vmatmul.mubr.bf16.gmra.mrb[0].mxu0 %v4003
    %v4175 = vpop.f32.mrb[0].mxu0
    %v4176 = vadd.f32 0.0, %v4175
    %v4177 = vpop.f32.mrb[0].mxu0
    %v4178 = vpop.f32.mrb[0].mxu0
    %v4179 = vadd.f32 0.0, %v4178
    %v4180 = vpop.f32.mrb[0].mxu0
    %4181 = vmatprep.mubr.bf16.mxu0 0
    %4182 = vmatmul.mubr.bf16.gmra.mrb[0].mxu0 %v4006
    %v4183 = vpop.f32.mrb[0].mxu0
    %v4184 = vadd.f32 0.0, %v4183
    %v4185 = vpop.f32.mrb[0].mxu0
    %v4186 = vpop.f32.mrb[0].mxu0
    %v4187 = vadd.f32 0.0, %v4186
    %v4188 = vpop.f32.mrb[0].mxu0
    %4189 = vmatprep.mubr.bf16.mxu0 0
    %4190 = vmatmul.mubr.bf16.gmra.mrb[0].mxu0 %v4009
    %v4191 = vpop.f32.mrb[0].mxu0
    %v4192 = vadd.f32 0.0, %v4191
    %v4193 = vpop.f32.mrb[0].mxu0
    %v4194 = vpop.f32.mrb[0].mxu0
    %v4195 = vadd.f32 0.0, %v4194
    %v4196 = vpop.f32.mrb[0].mxu0
    %4197 = vmatprep.mubr.bf16.mxu0 0
    %4198 = vmatmul.mubr.bf16.gmra.mrb[0].mxu0 %v4012
    %v4199 = vpop.f32.mrb[0].mxu0
    %v4200 = vadd.f32 0.0, %v4199
    %v4201 = vpop.f32.mrb[0].mxu0
    %v4202 = vpop.f32.mrb[0].mxu0
    %v4203 = vadd.f32 0.0, %v4202
    %v4204 = vpop.f32.mrb[0].mxu0
    %4205 = vmatprep.mubr.bf16.mxu0 0
    %4206 = vmatmul.mubr.bf16.gmra.mrb[0].mxu0 %v4015
    %v4207 = vpop.f32.mrb[0].mxu0
    %v4208 = vadd.f32 0.0, %v4207
    %v4209 = vpop.f32.mrb[0].mxu0
    %v4210 = vpop.f32.mrb[0].mxu0
    %v4211 = vadd.f32 0.0, %v4210
    %v4212 = vpop.f32.mrb[0].mxu0
    %4213 = vmatprep.mubr.bf16.mxu0 0
    %4214 = vmatmul.mubr.bf16.gmra.mrb[0].mxu0 %v4018
    %v4215 = vpop.f32.mrb[0].mxu0
    %v4216 = vadd.f32 0.0, %v4215
    %v4217 = vpop.f32.mrb[0].mxu0
    %v4218 = vpop.f32.mrb[0].mxu0
    %v4219 = vadd.f32 0.0, %v4218
    %v4220 = vpop.f32.mrb[0].mxu0
    %4221 = vmatprep.mubr.bf16.mxu0 0
    %4222 = vmatmul.mubr.bf16.gmra.mrb[0].mxu0 %v4021
    %v4223 = vpop.f32.mrb[0].mxu0
    %v4224 = vadd.f32 0.0, %v4223
    %v4225 = vpop.f32.mrb[0].mxu0
    %v4226 = vpop.f32.mrb[0].mxu0
    %v4227 = vadd.f32 0.0, %v4226
    %v4228 = vpop.f32.mrb[0].mxu0
    %4229 = vmatprep.mubr.bf16.mxu0 0
    %4230 = vmatmul.mubr.bf16.gmra.mrb[0].mxu0 %v4024
    %v4231 = vpop.f32.mrb[0].mxu0
    %v4232 = vadd.f32 0.0, %v4231
    %v4233 = vpop.f32.mrb[0].mxu0
    %v4234 = vpop.f32.mrb[0].mxu0
    %v4235 = vadd.f32 0.0, %v4234
    %v4236 = vpop.f32.mrb[0].mxu0
    %4237 = vmatprep.mubr.bf16.mxu0 0
    %4238 = vmatmul.mubr.bf16.gmra.mrb[0].mxu0 %v4027
    %v4239 = vpop.f32.mrb[0].mxu0
    %v4240 = vadd.f32 0.0, %v4239
    %v4241 = vpop.f32.mrb[0].mxu0
    %v4242 = vpop.f32.mrb[0].mxu0
    %v4243 = vadd.f32 0.0, %v4242
    %v4244 = vpop.f32.mrb[0].mxu0
    %4245 = vmatprep.mubr.bf16.mxu0 0
    %4246 = vmatmul.mubr.bf16.gmra.mrb[0].mxu0 %v4030
    %v4247 = vpop.f32.mrb[0].mxu0
    %v4248 = vadd.f32 0.0, %v4247
    %v4249 = vpop.f32.mrb[0].mxu0
    %v4250 = vpop.f32.mrb[0].mxu0
    %v4251 = vadd.f32 0.0, %v4250
    %v4252 = vpop.f32.mrb[0].mxu0
    %4253 = vmatprep.mubr.bf16.mxu0 0
    %4254 = vmatmul.mubr.bf16.gmra.mrb[0].mxu0 %v4033
    %v4255 = vpop.f32.mrb[0].mxu0
    %v4256 = vadd.f32 0.0, %v4255
    %v4257 = vpop.f32.mrb[0].mxu0
    %v4258 = vpop.f32.mrb[0].mxu0
    %v4259 = vadd.f32 0.0, %v4258
    %v4260 = vpop.f32.mrb[0].mxu0
    %4261 = vmatprep.mubr.bf16.mxu0 0
    %4262 = vmatmul.mubr.bf16.gmra.mrb[0].mxu0 %v4036
    %v4263 = vpop.f32.mrb[0].mxu0
    %v4264 = vadd.f32 0.0, %v4263
    %v4265 = vpop.f32.mrb[0].mxu0
    %v4266 = vpop.f32.mrb[0].mxu0
    %v4267 = vadd.f32 0.0, %v4266
    %v4268 = vpop.f32.mrb[0].mxu0
    %4269 = vmatprep.mubr.bf16.mxu0 0
    %4270 = vmatmul.mubr.bf16.gmra.mrb[0].mxu0 %v4039
    %v4271 = vpop.f32.mrb[0].mxu0
    %v4272 = vadd.f32 0.0, %v4271
    %v4273 = vpop.f32.mrb[0].mxu0
    %v4274 = vpop.f32.mrb[0].mxu0
    %v4275 = vadd.f32 0.0, %v4274
    %v4276 = vpop.f32.mrb[0].mxu0
    %4277 = vmatprep.mubr.bf16.mxu0 0
    %4278 = vmatmul.mubr.bf16.gmra.mrb[0].mxu0 %v4042
    %v4279 = vpop.f32.mrb[0].mxu0
    %v4280 = vadd.f32 0.0, %v4279
    %v4281 = vpop.f32.mrb[0].mxu0
    %v4282 = vpop.f32.mrb[0].mxu0
    %v4283 = vadd.f32 0.0, %v4282
    %v4284 = vpop.f32.mrb[0].mxu0
    %4285 = vmatprep.mubr.bf16.mxu0 0
    %4286 = vmatmul.mubr.bf16.gmra.mrb[0].mxu0 %v4045
    %v4287 = vpop.f32.mrb[0].mxu0
    %v4288 = vadd.f32 0.0, %v4287
    %v4289 = vpop.f32.mrb[0].mxu0
    %v4290 = vpop.f32.mrb[0].mxu0
    %v4291 = vadd.f32 0.0, %v4290
    %v4292 = vpop.f32.mrb[0].mxu0
    %4293 = vmatprep.mubr.bf16.mxu0 0
    %4294 = vmatmul.mubr.bf16.gmra.mrb[0].mxu0 %v4048
    %v4295 = vpop.f32.mrb[0].mxu0
    %v4296 = vadd.f32 0.0, %v4295
    %v4297 = vpop.f32.mrb[0].mxu0
    %v4298 = vpop.f32.mrb[0].mxu0
    %v4299 = vadd.f32 0.0, %v4298
    %v4300 = vpop.f32.mrb[0].mxu0
    %4301 = vmatprep.mubr.bf16.mxu0 0
    %4302 = vmatmul.mubr.bf16.gmra.mrb[0].mxu0 %v4051
    %v4303 = vpop.f32.mrb[0].mxu0
    %v4304 = vadd.f32 0.0, %v4303
    %v4305 = vpop.f32.mrb[0].mxu0
    %v4306 = vpop.f32.mrb[0].mxu0
    %v4307 = vadd.f32 0.0, %v4306
    %v4308 = vpop.f32.mrb[0].mxu0
    %4309 = vmatprep.mubr.bf16.mxu0 0
    %4310 = vmatmul.mubr.bf16.gmra.mrb[0].mxu0 %v4054
    %v4311 = vpop.f32.mrb[0].mxu0
    %v4312 = vadd.f32 0.0, %v4311
    %v4313 = vpop.f32.mrb[0].mxu0
    %v4314 = vpop.f32.mrb[0].mxu0
    %v4315 = vadd.f32 0.0, %v4314
    %v4316 = vpop.f32.mrb[0].mxu0
    %4317 = vmatprep.mubr.bf16.mxu0 0
    %4318 = vmatmul.mubr.bf16.gmra.mrb[0].mxu0 %v4057
    %v4319 = vpop.f32.mrb[0].mxu0
    %v4320 = vadd.f32 0.0, %v4319
    %v4321 = vpop.f32.mrb[0].mxu0
    %v4322 = vpop.f32.mrb[0].mxu0
    %v4323 = vadd.f32 0.0, %v4322
    %v4324 = vpop.f32.mrb[0].mxu0
    %4325 = vmatprep.mubr.bf16.mxu0 0
    %4326 = vmatmul.mubr.bf16.gmra.mrb[0].mxu0 %v4060
    %v4327 = vpop.f32.mrb[0].mxu0
    %v4328 = vadd.f32 0.0, %v4327
    %v4329 = vpop.f32.mrb[0].mxu0
    %v4330 = vpop.f32.mrb[0].mxu0
    %v4331 = vadd.f32 0.0, %v4330
    %v4332 = vpop.f32.mrb[0].mxu0
    %4333 = vmatprep.mubr.bf16.mxu0 0
    %4334 = vmatmul.mubr.bf16.gmra.mrb[0].mxu0 %v4063
    %v4335 = vpop.f32.mrb[0].mxu0
    %v4336 = vadd.f32 0.0, %v4335
    %v4337 = vpop.f32.mrb[0].mxu0
    %v4338 = vpop.f32.mrb[0].mxu0
    %v4339 = vadd.f32 0.0, %v4338
    %v4340 = vpop.f32.mrb[0].mxu0
    %4341 = vmatprep.mubr.bf16.mxu0 0
    %4342 = vmatmul.mubr.bf16.gmra.mrb[0].mxu0 %v4066
    %v4343 = vpop.f32.mrb[0].mxu0
    %v4344 = vadd.f32 0.0, %v4343
    %v4345 = vpop.f32.mrb[0].mxu0
    %v4346 = vpop.f32.mrb[0].mxu0
    %v4347 = vadd.f32 0.0, %v4346
    %v4348 = vpop.f32.mrb[0].mxu0
    %4349 = vmatprep.mubr.bf16.mxu0 0
    %4350 = vmatmul.mubr.bf16.gmra.mrb[0].mxu0 %v4069
    %v4351 = vpop.f32.mrb[0].mxu0
    %v4352 = vadd.f32 0.0, %v4351
    %v4353 = vpop.f32.mrb[0].mxu0
    %v4354 = vpop.f32.mrb[0].mxu0
    %v4355 = vadd.f32 0.0, %v4354
    %v4356 = vpop.f32.mrb[0].mxu0
    %4357 = vmatprep.mubr.bf16.mxu0 0
    %4358 = vmatmul.mubr.bf16.gmra.mrb[0].mxu0 %v4072
    %v4359 = vpop.f32.mrb[0].mxu0
    %v4360 = vadd.f32 0.0, %v4359
    %v4361 = vpop.f32.mrb[0].mxu0
    %v4362 = vpop.f32.mrb[0].mxu0
    %v4363 = vadd.f32 0.0, %v4362
    %v4364 = vpop.f32.mrb[0].mxu0
    %4365 = vdwg.mxu0
    %v4366 = vadd.f32 %v3815, %v4112
    %v4367 = vadd.f32 %v3816, %v4115
    %v4368 = vadd.f32 %v3817, %v4120
    %v4369 = vadd.f32 %v3818, %v4123
    %v4370 = vadd.f32 %v3819, %v4128
    %v4371 = vadd.f32 %v3820, %v4131
    %v4372 = vadd.f32 %v3821, %v4136
    %v4373 = vadd.f32 %v3822, %v4139
    %v4374 = vadd.f32 %v3823, %v4144
    %v4375 = vadd.f32 %v3824, %v4147
    %v4376 = vadd.f32 %v3825, %v4152
    %v4377 = vadd.f32 %v3826, %v4155
    %v4378 = vadd.f32 %v3827, %v4160
    %v4379 = vadd.f32 %v3828, %v4163
    %v4380 = vadd.f32 %v3829, %v4168
    %v4381 = vadd.f32 %v3830, %v4171
    %v4382 = vadd.f32 %v3831, %v4176
    %v4383 = vadd.f32 %v3832, %v4179
    %v4384 = vadd.f32 %v3833, %v4184
    %v4385 = vadd.f32 %v3834, %v4187
    %v4386 = vadd.f32 %v3835, %v4192
    %v4387 = vadd.f32 %v3836, %v4195
    %v4388 = vadd.f32 %v3837, %v4200
    %v4389 = vadd.f32 %v3838, %v4203
    %v4390 = vadd.f32 %v3839, %v4208
    %v4391 = vadd.f32 %v3840, %v4211
    %v4392 = vadd.f32 %v3841, %v4216
    %v4393 = vadd.f32 %v3842, %v4219
    %v4394 = vadd.f32 %v3843, %v4224
    %v4395 = vadd.f32 %v3844, %v4227
    %v4396 = vadd.f32 %v3845, %v4232
    %v4397 = vadd.f32 %v3846, %v4235
    %v4398 = vadd.f32 %v3847, %v4240
    %v4399 = vadd.f32 %v3848, %v4243
    %v4400 = vadd.f32 %v3849, %v4248
    %v4401 = vadd.f32 %v3850, %v4251
    %v4402 = vadd.f32 %v3851, %v4256
    %v4403 = vadd.f32 %v3852, %v4259
    %v4404 = vadd.f32 %v3853, %v4264
    %v4405 = vadd.f32 %v3854, %v4267
    %v4406 = vadd.f32 %v3855, %v4272
    %v4407 = vadd.f32 %v3856, %v4275
    %v4408 = vadd.f32 %v3857, %v4280
    %v4409 = vadd.f32 %v3858, %v4283
    %v4410 = vadd.f32 %v3859, %v4288
    %v4411 = vadd.f32 %v3860, %v4291
    %v4412 = vadd.f32 %v3861, %v4296
    %v4413 = vadd.f32 %v3862, %v4299
    %v4414 = vadd.f32 %v3863, %v4304
    %v4415 = vadd.f32 %v3864, %v4307
    %v4416 = vadd.f32 %v3865, %v4312
    %v4417 = vadd.f32 %v3866, %v4315
    %v4418 = vadd.f32 %v3867, %v4320
    %v4419 = vadd.f32 %v3868, %v4323
    %v4420 = vadd.f32 %v3869, %v4328
    %v4421 = vadd.f32 %v3870, %v4331
    %v4422 = vadd.f32 %v3871, %v4336
    %v4423 = vadd.f32 %v3872, %v4339
    %v4424 = vadd.f32 %v3873, %v4344
    %v4425 = vadd.f32 %v3874, %v4347
    %v4426 = vadd.f32 %v3875, %v4352
    %v4427 = vadd.f32 %v3876, %v4355
    %v4428 = vadd.f32 %v3877, %v4360
    %v4429 = vadd.f32 %v3878, %v4363
    %v4430 = vld [vmem:[%s3879 + $0x1] sm:$0xff]
    %v4431 = vld [vmem:[%s3879 + $0x9] sm:$0xff]
    %v4432 = vld [vmem:[%s3879 + $0x19] sm:$0xff]
    %v4433 = vld [vmem:[%s3879 + $0x21] sm:$0xff]
    %v4434 = vld [vmem:[%s3879 + $0x31] sm:$0xff]
    %v4435 = vld [vmem:[%s3879 + $0x39] sm:$0xff]
    %v4436 = vld [vmem:[%s3879 + $0x49] sm:$0xff]
    %v4437 = vld [vmem:[%s3879 + $0x51] sm:$0xff]
    %v4438 = vld [vmem:[%s3879 + $0x61] sm:$0xff]
    %v4439 = vld [vmem:[%s3879 + $0x69] sm:$0xff]
    %v4440 = vld [vmem:[%s3879 + $0x79] sm:$0xff]
    %v4441 = vld [vmem:[%s3879 + $0x81] sm:$0xff]
    %v4442 = vld [vmem:[%s3879 + $0x91] sm:$0xff]
    %v4443 = vld [vmem:[%s3879 + $0x99] sm:$0xff]
    %v4444 = vld [vmem:[%s3879 + $0xa9] sm:$0xff]
    %v4445 = vld [vmem:[%s3879 + $0xb1] sm:$0xff]
    %v4446 = vld [vmem:[%s3879 + $0xc1] sm:$0xff]
    %v4447 = vld [vmem:[%s3879 + $0xc9] sm:$0xff]
    %v4448 = vld [vmem:[%s3879 + $0xd9] sm:$0xff]
    %v4449 = vld [vmem:[%s3879 + $0xe1] sm:$0xff]
    %v4450 = vld [vmem:[%s3879 + $0xf1] sm:$0xff]
    %v4451 = vld [vmem:[%s3879 + $0xf9] sm:$0xff]
    %v4452 = vld [vmem:[%s3879 + $0x109] sm:$0xff]
    %v4453 = vld [vmem:[%s3879 + $0x111] sm:$0xff]
    %v4454 = vld [vmem:[%s3879 + $0x121] sm:$0xff]
    %v4455 = vld [vmem:[%s3879 + $0x129] sm:$0xff]
    %v4456 = vld [vmem:[%s3879 + $0x139] sm:$0xff]
    %v4457 = vld [vmem:[%s3879 + $0x141] sm:$0xff]
    %v4458 = vld [vmem:[%s3879 + $0x151] sm:$0xff]
    %v4459 = vld [vmem:[%s3879 + $0x159] sm:$0xff]
    %v4460 = vld [vmem:[%s3879 + $0x169] sm:$0xff]
    %v4461 = vld [vmem:[%s3879 + $0x171] sm:$0xff]
    %v4462 = vld [vmem:[%s3879 + $0x1b1] sm:$0xff]
    %v4463 = vld [vmem:[%s3879 + $0x1b9] sm:$0xff]
    %v4464 = vld [vmem:[%s3879 + $0x1c9] sm:$0xff]
    %v4465 = vld [vmem:[%s3879 + $0x1d1] sm:$0xff]
    %v4466 = vld [vmem:[%s3879 + $0x1e1] sm:$0xff]
    %v4467 = vld [vmem:[%s3879 + $0x1e9] sm:$0xff]
    %v4468 = vld [vmem:[%s3879 + $0x1f9] sm:$0xff]
    %v4469 = vld [vmem:[%s3879 + $0x201] sm:$0xff]
    %v4470 = vld [vmem:[%s3879 + $0x211] sm:$0xff]
    %v4471 = vld [vmem:[%s3879 + $0x219] sm:$0xff]
    %v4472 = vld [vmem:[%s3879 + $0x229] sm:$0xff]
    %v4473 = vld [vmem:[%s3879 + $0x231] sm:$0xff]
    %v4474 = vld [vmem:[%s3879 + $0x241] sm:$0xff]
    %v4475 = vld [vmem:[%s3879 + $0x249] sm:$0xff]
    %v4476 = vld [vmem:[%s3879 + $0x259] sm:$0xff]
    %v4477 = vld [vmem:[%s3879 + $0x261] sm:$0xff]
    %v4478 = vld [vmem:[%s3879 + $0x271] sm:$0xff]
    %v4479 = vld [vmem:[%s3879 + $0x279] sm:$0xff]
    %v4480 = vld [vmem:[%s3879 + $0x289] sm:$0xff]
    %v4481 = vld [vmem:[%s3879 + $0x291] sm:$0xff]
    %v4482 = vld [vmem:[%s3879 + $0x2a1] sm:$0xff]
    %v4483 = vld [vmem:[%s3879 + $0x2a9] sm:$0xff]
    %v4484 = vld [vmem:[%s3879 + $0x2b9] sm:$0xff]
    %v4485 = vld [vmem:[%s3879 + $0x2c1] sm:$0xff]
    %v4486 = vld [vmem:[%s3879 + $0x2d1] sm:$0xff]
    %v4487 = vld [vmem:[%s3879 + $0x2d9] sm:$0xff]
    %v4488 = vld [vmem:[%s3879 + $0x2e9] sm:$0xff]
    %v4489 = vld [vmem:[%s3879 + $0x2f1] sm:$0xff]
    %v4490 = vld [vmem:[%s3879 + $0x301] sm:$0xff]
    %v4491 = vld [vmem:[%s3879 + $0x309] sm:$0xff]
    %v4492 = vld [vmem:[%s3879 + $0x319] sm:$0xff]
    %v4493 = vld [vmem:[%s3879 + $0x321] sm:$0xff]
    %v4494 = vpack.c.bf16 %v4431, %v4430
    %v4495 = vpack.c.bf16 %v4433, %v4432
    %v4496 = vpack.c.bf16 %v4435, %v4434
    %v4497 = vpack.c.bf16 %v4437, %v4436
    %v4498 = vpack.c.bf16 %v4439, %v4438
    %v4499 = vpack.c.bf16 %v4441, %v4440
    %v4500 = vpack.c.bf16 %v4443, %v4442
    %v4501 = vpack.c.bf16 %v4445, %v4444
    %v4502 = vpack.c.bf16 %v4447, %v4446
    %v4503 = vpack.c.bf16 %v4449, %v4448
    %v4504 = vpack.c.bf16 %v4451, %v4450
    %v4505 = vpack.c.bf16 %v4453, %v4452
    %v4506 = vpack.c.bf16 %v4455, %v4454
    %v4507 = vpack.c.bf16 %v4457, %v4456
    %v4508 = vpack.c.bf16 %v4459, %v4458
    %v4509 = vpack.c.bf16 %v4461, %v4460
    %v4510 = vpack.c.bf16 %v4463, %v4462
    %v4511 = vpack.c.bf16 %v4465, %v4464
    %v4512 = vpack.c.bf16 %v4467, %v4466
    %v4513 = vpack.c.bf16 %v4469, %v4468
    %v4514 = vpack.c.bf16 %v4471, %v4470
    %v4515 = vpack.c.bf16 %v4473, %v4472
    %v4516 = vpack.c.bf16 %v4475, %v4474
    %v4517 = vpack.c.bf16 %v4477, %v4476
    %v4518 = vpack.c.bf16 %v4479, %v4478
    %v4519 = vpack.c.bf16 %v4481, %v4480
    %v4520 = vpack.c.bf16 %v4483, %v4482
    %v4521 = vpack.c.bf16 %v4485, %v4484
    %v4522 = vpack.c.bf16 %v4487, %v4486
    %v4523 = vpack.c.bf16 %v4489, %v4488
    %v4524 = vpack.c.bf16 %v4491, %v4490
    %v4525 = vpack.c.bf16 %v4493, %v4492
    %s4526 = scalar_lea.vmem %s3, 14
    %v4527 = vld [vmem:[%s4526] sm:$0x3]
    %v4529 = vsel %vm562, %v4494, 0
    %v4532 = vsel %vm562, %v4495, 0
    %v4535 = vsel %vm562, %v4496, 0
    %v4538 = vsel %vm562, %v4497, 0
    %v4541 = vsel %vm562, %v4498, 0
    %v4544 = vsel %vm562, %v4499, 0
    %v4547 = vsel %vm562, %v4500, 0
    %v4550 = vsel %vm562, %v4501, 0
    %v4553 = vsel %vm562, %v4502, 0
    %v4556 = vsel %vm562, %v4503, 0
    %v4559 = vsel %vm562, %v4504, 0
    %v4562 = vsel %vm562, %v4505, 0
    %v4565 = vsel %vm562, %v4506, 0
    %v4568 = vsel %vm562, %v4507, 0
    %v4571 = vsel %vm562, %v4508, 0
    %v4574 = vsel %vm562, %v4509, 0
    %v4577 = vsel %vm562, %v4510, 0
    %v4580 = vsel %vm562, %v4511, 0
    %v4583 = vsel %vm562, %v4512, 0
    %v4586 = vsel %vm562, %v4513, 0
    %v4589 = vsel %vm562, %v4514, 0
    %v4592 = vsel %vm562, %v4515, 0
    %v4595 = vsel %vm562, %v4516, 0
    %v4598 = vsel %vm562, %v4517, 0
    %v4601 = vsel %vm562, %v4518, 0
    %v4604 = vsel %vm562, %v4519, 0
    %v4607 = vsel %vm562, %v4520, 0
    %v4610 = vsel %vm562, %v4521, 0
    %v4613 = vsel %vm562, %v4522, 0
    %v4616 = vsel %vm562, %v4523, 0
    %v4619 = vsel %vm562, %v4524, 0
    %v4622 = vsel %vm562, %v4525, 0
    %v4625 = vsel %vm998, %v4527, 0
    %4627 = vmatprep.subr.bf16.mxu0 0
    %4628 = vmatpush1.bf16.msra.mxu0 %v4625
    %4629 = vmatprep.subr.bf16.mxu0 0
    %4630 = vmatpush1.bf16.msra.mxu0 0
    %4631 = vmatprep.subr.bf16.mxu0 0
    %4632 = vmatpush1.bf16.msra.mxu0 0
    %4633 = vmatprep.subr.bf16.mxu0 0
    %4634 = vmatpush1.bf16.msra.mxu0 0
    %4635 = vmatprep.subr.bf16.mxu0 0
    %4636 = vmatpush1.bf16.msra.mxu0 0
    %4637 = vmatprep.subr.bf16.mxu0 0
    %4638 = vmatpush1.bf16.msra.mxu0 0
    %4639 = vmatprep.subr.bf16.mxu0 0
    %4640 = vmatpush1.bf16.msra.mxu0 0
    %4641 = vmatprep.subr.bf16.mxu0 0
    %4642 = vmatpush1.bf16.msra.mxu0 0
    %4643 = vmatprep.subr.bf16.mxu0 0
    %4644 = vmatpush1.bf16.msra.mxu0 0
    %4645 = vmatprep.subr.bf16.mxu0 0
    %4646 = vmatpush1.bf16.msra.mxu0 0
    %4647 = vmatprep.subr.bf16.mxu0 0
    %4648 = vmatpush1.bf16.msra.mxu0 0
    %4649 = vmatprep.subr.bf16.mxu0 0
    %4650 = vmatpush1.bf16.msra.mxu0 0
    %4651 = vmatprep.subr.bf16.mxu0 0
    %4652 = vmatpush1.bf16.msra.mxu0 0
    %4653 = vmatprep.subr.bf16.mxu0 0
    %4654 = vmatpush1.bf16.msra.mxu0 0
    %4655 = vmatprep.subr.bf16.mxu0 0
    %4656 = vmatpush1.bf16.msra.mxu0 0
    %4657 = vmatprep.subr.bf16.mxu0 0
    %4658 = vmatpush1.bf16.msra.mxu0 0
    %4659 = vmatprep.mubr.bf16.mxu0 0
    %4660 = vmatmul.mubr.bf16.gmra.mrb[0].mxu0 %v4529
    %v4661 = vpop.f32.mrb[0].mxu0
    %v4662 = vadd.f32 0.0, %v4661
    %v4663 = vpop.f32.mrb[0].mxu0
    %v4664 = vpop.f32.mrb[0].mxu0
    %v4665 = vadd.f32 0.0, %v4664
    %v4666 = vpop.f32.mrb[0].mxu0
    %4667 = vmatprep.mubr.bf16.mxu0 0
    %4668 = vmatmul.mubr.bf16.gmra.mrb[0].mxu0 %v4532
    %v4669 = vpop.f32.mrb[0].mxu0
    %v4670 = vadd.f32 0.0, %v4669
    %v4671 = vpop.f32.mrb[0].mxu0
    %v4672 = vpop.f32.mrb[0].mxu0
    %v4673 = vadd.f32 0.0, %v4672
    %v4674 = vpop.f32.mrb[0].mxu0
    %4675 = vmatprep.mubr.bf16.mxu0 0
    %4676 = vmatmul.mubr.bf16.gmra.mrb[0].mxu0 %v4535
    %v4677 = vpop.f32.mrb[0].mxu0
    %v4678 = vadd.f32 0.0, %v4677
    %v4679 = vpop.f32.mrb[0].mxu0
    %v4680 = vpop.f32.mrb[0].mxu0
    %v4681 = vadd.f32 0.0, %v4680
    %v4682 = vpop.f32.mrb[0].mxu0
    %4683 = vmatprep.mubr.bf16.mxu0 0
    %4684 = vmatmul.mubr.bf16.gmra.mrb[0].mxu0 %v4538
    %v4685 = vpop.f32.mrb[0].mxu0
    %v4686 = vadd.f32 0.0, %v4685
    %v4687 = vpop.f32.mrb[0].mxu0
    %v4688 = vpop.f32.mrb[0].mxu0
    %v4689 = vadd.f32 0.0, %v4688
    %v4690 = vpop.f32.mrb[0].mxu0
    %4691 = vmatprep.mubr.bf16.mxu0 0
    %4692 = vmatmul.mubr.bf16.gmra.mrb[0].mxu0 %v4541
    %v4693 = vpop.f32.mrb[0].mxu0
    %v4694 = vadd.f32 0.0, %v4693
    %v4695 = vpop.f32.mrb[0].mxu0
    %v4696 = vpop.f32.mrb[0].mxu0
    %v4697 = vadd.f32 0.0, %v4696
    %v4698 = vpop.f32.mrb[0].mxu0
    %4699 = vmatprep.mubr.bf16.mxu0 0
    %4700 = vmatmul.mubr.bf16.gmra.mrb[0].mxu0 %v4544
    %v4701 = vpop.f32.mrb[0].mxu0
    %v4702 = vadd.f32 0.0, %v4701
    %v4703 = vpop.f32.mrb[0].mxu0
    %v4704 = vpop.f32.mrb[0].mxu0
    %v4705 = vadd.f32 0.0, %v4704
    %v4706 = vpop.f32.mrb[0].mxu0
    %4707 = vmatprep.mubr.bf16.mxu0 0
    %4708 = vmatmul.mubr.bf16.gmra.mrb[0].mxu0 %v4547
    %v4709 = vpop.f32.mrb[0].mxu0
    %v4710 = vadd.f32 0.0, %v4709
    %v4711 = vpop.f32.mrb[0].mxu0
    %v4712 = vpop.f32.mrb[0].mxu0
    %v4713 = vadd.f32 0.0, %v4712
    %v4714 = vpop.f32.mrb[0].mxu0
    %4715 = vmatprep.mubr.bf16.mxu0 0
    %4716 = vmatmul.mubr.bf16.gmra.mrb[0].mxu0 %v4550
    %v4717 = vpop.f32.mrb[0].mxu0
    %v4718 = vadd.f32 0.0, %v4717
    %v4719 = vpop.f32.mrb[0].mxu0
    %v4720 = vpop.f32.mrb[0].mxu0
    %v4721 = vadd.f32 0.0, %v4720
    %v4722 = vpop.f32.mrb[0].mxu0
    %4723 = vmatprep.mubr.bf16.mxu0 0
    %4724 = vmatmul.mubr.bf16.gmra.mrb[0].mxu0 %v4553
    %v4725 = vpop.f32.mrb[0].mxu0
    %v4726 = vadd.f32 0.0, %v4725
    %v4727 = vpop.f32.mrb[0].mxu0
    %v4728 = vpop.f32.mrb[0].mxu0
    %v4729 = vadd.f32 0.0, %v4728
    %v4730 = vpop.f32.mrb[0].mxu0
    %4731 = vmatprep.mubr.bf16.mxu0 0
    %4732 = vmatmul.mubr.bf16.gmra.mrb[0].mxu0 %v4556
    %v4733 = vpop.f32.mrb[0].mxu0
    %v4734 = vadd.f32 0.0, %v4733
    %v4735 = vpop.f32.mrb[0].mxu0
    %v4736 = vpop.f32.mrb[0].mxu0
    %v4737 = vadd.f32 0.0, %v4736
    %v4738 = vpop.f32.mrb[0].mxu0
    %4739 = vmatprep.mubr.bf16.mxu0 0
    %4740 = vmatmul.mubr.bf16.gmra.mrb[0].mxu0 %v4559
    %v4741 = vpop.f32.mrb[0].mxu0
    %v4742 = vadd.f32 0.0, %v4741
    %v4743 = vpop.f32.mrb[0].mxu0
    %v4744 = vpop.f32.mrb[0].mxu0
    %v4745 = vadd.f32 0.0, %v4744
    %v4746 = vpop.f32.mrb[0].mxu0
    %4747 = vmatprep.mubr.bf16.mxu0 0
    %4748 = vmatmul.mubr.bf16.gmra.mrb[0].mxu0 %v4562
    %v4749 = vpop.f32.mrb[0].mxu0
    %v4750 = vadd.f32 0.0, %v4749
    %v4751 = vpop.f32.mrb[0].mxu0
    %v4752 = vpop.f32.mrb[0].mxu0
    %v4753 = vadd.f32 0.0, %v4752
    %v4754 = vpop.f32.mrb[0].mxu0
    %4755 = vmatprep.mubr.bf16.mxu0 0
    %4756 = vmatmul.mubr.bf16.gmra.mrb[0].mxu0 %v4565
    %v4757 = vpop.f32.mrb[0].mxu0
    %v4758 = vadd.f32 0.0, %v4757
    %v4759 = vpop.f32.mrb[0].mxu0
    %v4760 = vpop.f32.mrb[0].mxu0
    %v4761 = vadd.f32 0.0, %v4760
    %v4762 = vpop.f32.mrb[0].mxu0
    %4763 = vmatprep.mubr.bf16.mxu0 0
    %4764 = vmatmul.mubr.bf16.gmra.mrb[0].mxu0 %v4568
    %v4765 = vpop.f32.mrb[0].mxu0
    %v4766 = vadd.f32 0.0, %v4765
    %v4767 = vpop.f32.mrb[0].mxu0
    %v4768 = vpop.f32.mrb[0].mxu0
    %v4769 = vadd.f32 0.0, %v4768
    %v4770 = vpop.f32.mrb[0].mxu0
    %4771 = vmatprep.mubr.bf16.mxu0 0
    %4772 = vmatmul.mubr.bf16.gmra.mrb[0].mxu0 %v4571
    %v4773 = vpop.f32.mrb[0].mxu0
    %v4774 = vadd.f32 0.0, %v4773
    %v4775 = vpop.f32.mrb[0].mxu0
    %v4776 = vpop.f32.mrb[0].mxu0
    %v4777 = vadd.f32 0.0, %v4776
    %v4778 = vpop.f32.mrb[0].mxu0
    %4779 = vmatprep.mubr.bf16.mxu0 0
    %4780 = vmatmul.mubr.bf16.gmra.mrb[0].mxu0 %v4574
    %v4781 = vpop.f32.mrb[0].mxu0
    %v4782 = vadd.f32 0.0, %v4781
    %v4783 = vpop.f32.mrb[0].mxu0
    %v4784 = vpop.f32.mrb[0].mxu0
    %v4785 = vadd.f32 0.0, %v4784
    %v4786 = vpop.f32.mrb[0].mxu0
    %4787 = vmatprep.mubr.bf16.mxu0 0
    %4788 = vmatmul.mubr.bf16.gmra.mrb[0].mxu0 %v4577
    %v4789 = vpop.f32.mrb[0].mxu0
    %v4790 = vadd.f32 0.0, %v4789
    %v4791 = vpop.f32.mrb[0].mxu0
    %v4792 = vpop.f32.mrb[0].mxu0
    %v4793 = vadd.f32 0.0, %v4792
    %v4794 = vpop.f32.mrb[0].mxu0
    %4795 = vmatprep.mubr.bf16.mxu0 0
    %4796 = vmatmul.mubr.bf16.gmra.mrb[0].mxu0 %v4580
    %v4797 = vpop.f32.mrb[0].mxu0
    %v4798 = vadd.f32 0.0, %v4797
    %v4799 = vpop.f32.mrb[0].mxu0
    %v4800 = vpop.f32.mrb[0].mxu0
    %v4801 = vadd.f32 0.0, %v4800
    %v4802 = vpop.f32.mrb[0].mxu0
    %4803 = vmatprep.mubr.bf16.mxu0 0
    %4804 = vmatmul.mubr.bf16.gmra.mrb[0].mxu0 %v4583
    %v4805 = vpop.f32.mrb[0].mxu0
    %v4806 = vadd.f32 0.0, %v4805
    %v4807 = vpop.f32.mrb[0].mxu0
    %v4808 = vpop.f32.mrb[0].mxu0
    %v4809 = vadd.f32 0.0, %v4808
    %v4810 = vpop.f32.mrb[0].mxu0
    %4811 = vmatprep.mubr.bf16.mxu0 0
    %4812 = vmatmul.mubr.bf16.gmra.mrb[0].mxu0 %v4586
    %v4813 = vpop.f32.mrb[0].mxu0
    %v4814 = vadd.f32 0.0, %v4813
    %v4815 = vpop.f32.mrb[0].mxu0
    %v4816 = vpop.f32.mrb[0].mxu0
    %v4817 = vadd.f32 0.0, %v4816
    %v4818 = vpop.f32.mrb[0].mxu0
    %4819 = vmatprep.mubr.bf16.mxu0 0
    %4820 = vmatmul.mubr.bf16.gmra.mrb[0].mxu0 %v4589
    %v4821 = vpop.f32.mrb[0].mxu0
    %v4822 = vadd.f32 0.0, %v4821
    %v4823 = vpop.f32.mrb[0].mxu0
    %v4824 = vpop.f32.mrb[0].mxu0
    %v4825 = vadd.f32 0.0, %v4824
    %v4826 = vpop.f32.mrb[0].mxu0
    %4827 = vmatprep.mubr.bf16.mxu0 0
    %4828 = vmatmul.mubr.bf16.gmra.mrb[0].mxu0 %v4592
    %v4829 = vpop.f32.mrb[0].mxu0
    %v4830 = vadd.f32 0.0, %v4829
    %v4831 = vpop.f32.mrb[0].mxu0
    %v4832 = vpop.f32.mrb[0].mxu0
    %v4833 = vadd.f32 0.0, %v4832
    %v4834 = vpop.f32.mrb[0].mxu0
    %4835 = vmatprep.mubr.bf16.mxu0 0
    %4836 = vmatmul.mubr.bf16.gmra.mrb[0].mxu0 %v4595
    %v4837 = vpop.f32.mrb[0].mxu0
    %v4838 = vadd.f32 0.0, %v4837
    %v4839 = vpop.f32.mrb[0].mxu0
    %v4840 = vpop.f32.mrb[0].mxu0
    %v4841 = vadd.f32 0.0, %v4840
    %v4842 = vpop.f32.mrb[0].mxu0
    %4843 = vmatprep.mubr.bf16.mxu0 0
    %4844 = vmatmul.mubr.bf16.gmra.mrb[0].mxu0 %v4598
    %v4845 = vpop.f32.mrb[0].mxu0
    %v4846 = vadd.f32 0.0, %v4845
    %v4847 = vpop.f32.mrb[0].mxu0
    %v4848 = vpop.f32.mrb[0].mxu0
    %v4849 = vadd.f32 0.0, %v4848
    %v4850 = vpop.f32.mrb[0].mxu0
    %4851 = vmatprep.mubr.bf16.mxu0 0
    %4852 = vmatmul.mubr.bf16.gmra.mrb[0].mxu0 %v4601
    %v4853 = vpop.f32.mrb[0].mxu0
    %v4854 = vadd.f32 0.0, %v4853
    %v4855 = vpop.f32.mrb[0].mxu0
    %v4856 = vpop.f32.mrb[0].mxu0
    %v4857 = vadd.f32 0.0, %v4856
    %v4858 = vpop.f32.mrb[0].mxu0
    %4859 = vmatprep.mubr.bf16.mxu0 0
    %4860 = vmatmul.mubr.bf16.gmra.mrb[0].mxu0 %v4604
    %v4861 = vpop.f32.mrb[0].mxu0
    %v4862 = vadd.f32 0.0, %v4861
    %v4863 = vpop.f32.mrb[0].mxu0
    %v4864 = vpop.f32.mrb[0].mxu0
    %v4865 = vadd.f32 0.0, %v4864
    %v4866 = vpop.f32.mrb[0].mxu0
    %4867 = vmatprep.mubr.bf16.mxu0 0
    %4868 = vmatmul.mubr.bf16.gmra.mrb[0].mxu0 %v4607
    %v4869 = vpop.f32.mrb[0].mxu0
    %v4870 = vadd.f32 0.0, %v4869
    %v4871 = vpop.f32.mrb[0].mxu0
    %v4872 = vpop.f32.mrb[0].mxu0
    %v4873 = vadd.f32 0.0, %v4872
    %v4874 = vpop.f32.mrb[0].mxu0
    %4875 = vmatprep.mubr.bf16.mxu0 0
    %4876 = vmatmul.mubr.bf16.gmra.mrb[0].mxu0 %v4610
    %v4877 = vpop.f32.mrb[0].mxu0
    %v4878 = vadd.f32 0.0, %v4877
    %v4879 = vpop.f32.mrb[0].mxu0
    %v4880 = vpop.f32.mrb[0].mxu0
    %v4881 = vadd.f32 0.0, %v4880
    %v4882 = vpop.f32.mrb[0].mxu0
    %4883 = vmatprep.mubr.bf16.mxu0 0
    %4884 = vmatmul.mubr.bf16.gmra.mrb[0].mxu0 %v4613
    %v4885 = vpop.f32.mrb[0].mxu0
    %v4886 = vadd.f32 0.0, %v4885
    %v4887 = vpop.f32.mrb[0].mxu0
    %v4888 = vpop.f32.mrb[0].mxu0
    %v4889 = vadd.f32 0.0, %v4888
    %v4890 = vpop.f32.mrb[0].mxu0
    %4891 = vmatprep.mubr.bf16.mxu0 0
    %4892 = vmatmul.mubr.bf16.gmra.mrb[0].mxu0 %v4616
    %v4893 = vpop.f32.mrb[0].mxu0
    %v4894 = vadd.f32 0.0, %v4893
    %v4895 = vpop.f32.mrb[0].mxu0
    %v4896 = vpop.f32.mrb[0].mxu0
    %v4897 = vadd.f32 0.0, %v4896
    %v4898 = vpop.f32.mrb[0].mxu0
    %4899 = vmatprep.mubr.bf16.mxu0 0
    %4900 = vmatmul.mubr.bf16.gmra.mrb[0].mxu0 %v4619
    %v4901 = vpop.f32.mrb[0].mxu0
    %v4902 = vadd.f32 0.0, %v4901
    %v4903 = vpop.f32.mrb[0].mxu0
    %v4904 = vpop.f32.mrb[0].mxu0
    %v4905 = vadd.f32 0.0, %v4904
    %v4906 = vpop.f32.mrb[0].mxu0
    %4907 = vmatprep.mubr.bf16.mxu0 0
    %4908 = vmatmul.mubr.bf16.gmra.mrb[0].mxu0 %v4622
    %v4909 = vpop.f32.mrb[0].mxu0
    %v4910 = vadd.f32 0.0, %v4909
    %v4911 = vpop.f32.mrb[0].mxu0
    %v4912 = vpop.f32.mrb[0].mxu0
    %v4913 = vadd.f32 0.0, %v4912
    %v4914 = vpop.f32.mrb[0].mxu0
    %4915 = vdwg.mxu0
    %v4916 = vadd.f32 %v4366, %v4662
    %v4917 = vadd.f32 %v4367, %v4665
    %v4918 = vadd.f32 %v4368, %v4670
    %v4919 = vadd.f32 %v4369, %v4673
    %v4920 = vadd.f32 %v4370, %v4678
    %v4921 = vadd.f32 %v4371, %v4681
    %v4922 = vadd.f32 %v4372, %v4686
    %v4923 = vadd.f32 %v4373, %v4689
    %v4924 = vadd.f32 %v4374, %v4694
    %v4925 = vadd.f32 %v4375, %v4697
    %v4926 = vadd.f32 %v4376, %v4702
    %v4927 = vadd.f32 %v4377, %v4705
    %v4928 = vadd.f32 %v4378, %v4710
    %v4929 = vadd.f32 %v4379, %v4713
    %v4930 = vadd.f32 %v4380, %v4718
    %v4931 = vadd.f32 %v4381, %v4721
    %v4932 = vadd.f32 %v4382, %v4726
    %v4933 = vadd.f32 %v4383, %v4729
    %v4934 = vadd.f32 %v4384, %v4734
    %v4935 = vadd.f32 %v4385, %v4737
    %v4936 = vadd.f32 %v4386, %v4742
    %v4937 = vadd.f32 %v4387, %v4745
    %v4938 = vadd.f32 %v4388, %v4750
    %v4939 = vadd.f32 %v4389, %v4753
    %v4940 = vadd.f32 %v4390, %v4758
    %v4941 = vadd.f32 %v4391, %v4761
    %v4942 = vadd.f32 %v4392, %v4766
    %v4943 = vadd.f32 %v4393, %v4769
    %v4944 = vadd.f32 %v4394, %v4774
    %v4945 = vadd.f32 %v4395, %v4777
    %v4946 = vadd.f32 %v4396, %v4782
    %v4947 = vadd.f32 %v4397, %v4785
    %v4948 = vadd.f32 %v4398, %v4790
    %v4949 = vadd.f32 %v4399, %v4793
    %v4950 = vadd.f32 %v4400, %v4798
    %v4951 = vadd.f32 %v4401, %v4801
    %v4952 = vadd.f32 %v4402, %v4806
    %v4953 = vadd.f32 %v4403, %v4809
    %v4954 = vadd.f32 %v4404, %v4814
    %v4955 = vadd.f32 %v4405, %v4817
    %v4956 = vadd.f32 %v4406, %v4822
    %v4957 = vadd.f32 %v4407, %v4825
    %v4958 = vadd.f32 %v4408, %v4830
    %v4959 = vadd.f32 %v4409, %v4833
    %v4960 = vadd.f32 %v4410, %v4838
    %v4961 = vadd.f32 %v4411, %v4841
    %v4962 = vadd.f32 %v4412, %v4846
    %v4963 = vadd.f32 %v4413, %v4849
    %v4964 = vadd.f32 %v4414, %v4854
    %v4965 = vadd.f32 %v4415, %v4857
    %v4966 = vadd.f32 %v4416, %v4862
    %v4967 = vadd.f32 %v4417, %v4865
    %v4968 = vadd.f32 %v4418, %v4870
    %v4969 = vadd.f32 %v4419, %v4873
    %v4970 = vadd.f32 %v4420, %v4878
    %v4971 = vadd.f32 %v4421, %v4881
    %v4972 = vadd.f32 %v4422, %v4886
    %v4973 = vadd.f32 %v4423, %v4889
    %v4974 = vadd.f32 %v4424, %v4894
    %v4975 = vadd.f32 %v4425, %v4897
    %v4976 = vadd.f32 %v4426, %v4902
    %v4977 = vadd.f32 %v4427, %v4905
    %v4978 = vadd.f32 %v4428, %v4910
    %v4979 = vadd.f32 %v4429, %v4913
    %v4980 = vld [vmem:[%s3879 + $0x2] sm:$0xff]
    %v4981 = vld [vmem:[%s3879 + $0xa] sm:$0xff]
    %v4982 = vld [vmem:[%s3879 + $0x1a] sm:$0xff]
    %v4983 = vld [vmem:[%s3879 + $0x22] sm:$0xff]
    %v4984 = vld [vmem:[%s3879 + $0x32] sm:$0xff]
    %v4985 = vld [vmem:[%s3879 + $0x3a] sm:$0xff]
    %v4986 = vld [vmem:[%s3879 + $0x4a] sm:$0xff]
    %v4987 = vld [vmem:[%s3879 + $0x52] sm:$0xff]
    %v4988 = vld [vmem:[%s3879 + $0x62] sm:$0xff]
    %v4989 = vld [vmem:[%s3879 + $0x6a] sm:$0xff]
    %v4990 = vld [vmem:[%s3879 + $0x7a] sm:$0xff]
    %v4991 = vld [vmem:[%s3879 + $0x82] sm:$0xff]
    %v4992 = vld [vmem:[%s3879 + $0x92] sm:$0xff]
    %v4993 = vld [vmem:[%s3879 + $0x9a] sm:$0xff]
    %v4994 = vld [vmem:[%s3879 + $0xaa] sm:$0xff]
    %v4995 = vld [vmem:[%s3879 + $0xb2] sm:$0xff]
    %v4996 = vld [vmem:[%s3879 + $0xc2] sm:$0xff]
    %v4997 = vld [vmem:[%s3879 + $0xca] sm:$0xff]
    %v4998 = vld [vmem:[%s3879 + $0xda] sm:$0xff]
    %v4999 = vld [vmem:[%s3879 + $0xe2] sm:$0xff]
    %v5000 = vld [vmem:[%s3879 + $0xf2] sm:$0xff]
    %v5001 = vld [vmem:[%s3879 + $0xfa] sm:$0xff]
    %v5002 = vld [vmem:[%s3879 + $0x10a] sm:$0xff]
    %v5003 = vld [vmem:[%s3879 + $0x112] sm:$0xff]
    %v5004 = vld [vmem:[%s3879 + $0x122] sm:$0xff]
    %v5005 = vld [vmem:[%s3879 + $0x12a] sm:$0xff]
    %v5006 = vld [vmem:[%s3879 + $0x13a] sm:$0xff]
    %v5007 = vld [vmem:[%s3879 + $0x142] sm:$0xff]
    %v5008 = vld [vmem:[%s3879 + $0x152] sm:$0xff]
    %v5009 = vld [vmem:[%s3879 + $0x15a] sm:$0xff]
    %v5010 = vld [vmem:[%s3879 + $0x16a] sm:$0xff]
    %v5011 = vld [vmem:[%s3879 + $0x172] sm:$0xff]
    %v5012 = vld [vmem:[%s3879 + $0x1b2] sm:$0xff]
    %v5013 = vld [vmem:[%s3879 + $0x1ba] sm:$0xff]
    %v5014 = vld [vmem:[%s3879 + $0x1ca] sm:$0xff]
    %v5015 = vld [vmem:[%s3879 + $0x1d2] sm:$0xff]
    %v5016 = vld [vmem:[%s3879 + $0x1e2] sm:$0xff]
    %v5017 = vld [vmem:[%s3879 + $0x1ea] sm:$0xff]
    %v5018 = vld [vmem:[%s3879 + $0x1fa] sm:$0xff]
    %v5019 = vld [vmem:[%s3879 + $0x202] sm:$0xff]
    %v5020 = vld [vmem:[%s3879 + $0x212] sm:$0xff]
    %v5021 = vld [vmem:[%s3879 + $0x21a] sm:$0xff]
    %v5022 = vld [vmem:[%s3879 + $0x22a] sm:$0xff]
    %v5023 = vld [vmem:[%s3879 + $0x232] sm:$0xff]
    %v5024 = vld [vmem:[%s3879 + $0x242] sm:$0xff]
    %v5025 = vld [vmem:[%s3879 + $0x24a] sm:$0xff]
    %v5026 = vld [vmem:[%s3879 + $0x25a] sm:$0xff]
    %v5027 = vld [vmem:[%s3879 + $0x262] sm:$0xff]
    %v5028 = vld [vmem:[%s3879 + $0x272] sm:$0xff]
    %v5029 = vld [vmem:[%s3879 + $0x27a] sm:$0xff]
    %v5030 = vld [vmem:[%s3879 + $0x28a] sm:$0xff]
    %v5031 = vld [vmem:[%s3879 + $0x292] sm:$0xff]
    %v5032 = vld [vmem:[%s3879 + $0x2a2] sm:$0xff]
    %v5033 = vld [vmem:[%s3879 + $0x2aa] sm:$0xff]
    %v5034 = vld [vmem:[%s3879 + $0x2ba] sm:$0xff]
    %v5035 = vld [vmem:[%s3879 + $0x2c2] sm:$0xff]
    %v5036 = vld [vmem:[%s3879 + $0x2d2] sm:$0xff]
    %v5037 = vld [vmem:[%s3879 + $0x2da] sm:$0xff]
    %v5038 = vld [vmem:[%s3879 + $0x2ea] sm:$0xff]
    %v5039 = vld [vmem:[%s3879 + $0x2f2] sm:$0xff]
    %v5040 = vld [vmem:[%s3879 + $0x302] sm:$0xff]
    %v5041 = vld [vmem:[%s3879 + $0x30a] sm:$0xff]
    %v5042 = vld [vmem:[%s3879 + $0x31a] sm:$0xff]
    %v5043 = vld [vmem:[%s3879 + $0x322] sm:$0xff]
    %v5044 = vpack.c.bf16 %v4981, %v4980
    %v5045 = vpack.c.bf16 %v4983, %v4982
    %v5046 = vpack.c.bf16 %v4985, %v4984
    %v5047 = vpack.c.bf16 %v4987, %v4986
    %v5048 = vpack.c.bf16 %v4989, %v4988
    %v5049 = vpack.c.bf16 %v4991, %v4990
    %v5050 = vpack.c.bf16 %v4993, %v4992
    %v5051 = vpack.c.bf16 %v4995, %v4994
    %v5052 = vpack.c.bf16 %v4997, %v4996
    %v5053 = vpack.c.bf16 %v4999, %v4998
    %v5054 = vpack.c.bf16 %v5001, %v5000
    %v5055 = vpack.c.bf16 %v5003, %v5002
    %v5056 = vpack.c.bf16 %v5005, %v5004
    %v5057 = vpack.c.bf16 %v5007, %v5006
    %v5058 = vpack.c.bf16 %v5009, %v5008
    %v5059 = vpack.c.bf16 %v5011, %v5010
    %v5060 = vpack.c.bf16 %v5013, %v5012
    %v5061 = vpack.c.bf16 %v5015, %v5014
    %v5062 = vpack.c.bf16 %v5017, %v5016
    %v5063 = vpack.c.bf16 %v5019, %v5018
    %v5064 = vpack.c.bf16 %v5021, %v5020
    %v5065 = vpack.c.bf16 %v5023, %v5022
    %v5066 = vpack.c.bf16 %v5025, %v5024
    %v5067 = vpack.c.bf16 %v5027, %v5026
    %v5068 = vpack.c.bf16 %v5029, %v5028
    %v5069 = vpack.c.bf16 %v5031, %v5030
    %v5070 = vpack.c.bf16 %v5033, %v5032
    %v5071 = vpack.c.bf16 %v5035, %v5034
    %v5072 = vpack.c.bf16 %v5037, %v5036
    %v5073 = vpack.c.bf16 %v5039, %v5038
    %v5074 = vpack.c.bf16 %v5041, %v5040
    %v5075 = vpack.c.bf16 %v5043, %v5042
    %s5076 = scalar_lea.vmem %s3, 16
    %v5077 = vld [vmem:[%s5076] sm:$0x3]
    %v5079 = vsel %vm562, %v5044, 0
    %v5082 = vsel %vm562, %v5045, 0
    %v5085 = vsel %vm562, %v5046, 0
    %v5088 = vsel %vm562, %v5047, 0
    %v5091 = vsel %vm562, %v5048, 0
    %v5094 = vsel %vm562, %v5049, 0
    %v5097 = vsel %vm562, %v5050, 0
    %v5100 = vsel %vm562, %v5051, 0
    %v5103 = vsel %vm562, %v5052, 0
    %v5106 = vsel %vm562, %v5053, 0
    %v5109 = vsel %vm562, %v5054, 0
    %v5112 = vsel %vm562, %v5055, 0
    %v5115 = vsel %vm562, %v5056, 0
    %v5118 = vsel %vm562, %v5057, 0
    %v5121 = vsel %vm562, %v5058, 0
    %v5124 = vsel %vm562, %v5059, 0
    %v5127 = vsel %vm562, %v5060, 0
    %v5130 = vsel %vm562, %v5061, 0
    %v5133 = vsel %vm562, %v5062, 0
    %v5136 = vsel %vm562, %v5063, 0
    %v5139 = vsel %vm562, %v5064, 0
    %v5142 = vsel %vm562, %v5065, 0
    %v5145 = vsel %vm562, %v5066, 0
    %v5148 = vsel %vm562, %v5067, 0
    %v5151 = vsel %vm562, %v5068, 0
    %v5154 = vsel %vm562, %v5069, 0
    %v5157 = vsel %vm562, %v5070, 0
    %v5160 = vsel %vm562, %v5071, 0
    %v5163 = vsel %vm562, %v5072, 0
    %v5166 = vsel %vm562, %v5073, 0
    %v5169 = vsel %vm562, %v5074, 0
    %v5172 = vsel %vm562, %v5075, 0
    %v5175 = vsel %vm998, %v5077, 0
    %5177 = vmatprep.subr.bf16.mxu0 0
    %5178 = vmatpush1.bf16.msra.mxu0 %v5175
    %5179 = vmatprep.subr.bf16.mxu0 0
    %5180 = vmatpush1.bf16.msra.mxu0 0
    %5181 = vmatprep.subr.bf16.mxu0 0
    %5182 = vmatpush1.bf16.msra.mxu0 0
    %5183 = vmatprep.subr.bf16.mxu0 0
    %5184 = vmatpush1.bf16.msra.mxu0 0
    %5185 = vmatprep.subr.bf16.mxu0 0
    %5186 = vmatpush1.bf16.msra.mxu0 0
    %5187 = vmatprep.subr.bf16.mxu0 0
    %5188 = vmatpush1.bf16.msra.mxu0 0
    %5189 = vmatprep.subr.bf16.mxu0 0
    %5190 = vmatpush1.bf16.msra.mxu0 0
    %5191 = vmatprep.subr.bf16.mxu0 0
    %5192 = vmatpush1.bf16.msra.mxu0 0
    %5193 = vmatprep.subr.bf16.mxu0 0
    %5194 = vmatpush1.bf16.msra.mxu0 0
    %5195 = vmatprep.subr.bf16.mxu0 0
    %5196 = vmatpush1.bf16.msra.mxu0 0
    %5197 = vmatprep.subr.bf16.mxu0 0
    %5198 = vmatpush1.bf16.msra.mxu0 0
    %5199 = vmatprep.subr.bf16.mxu0 0
    %5200 = vmatpush1.bf16.msra.mxu0 0
    %5201 = vmatprep.subr.bf16.mxu0 0
    %5202 = vmatpush1.bf16.msra.mxu0 0
    %5203 = vmatprep.subr.bf16.mxu0 0
    %5204 = vmatpush1.bf16.msra.mxu0 0
    %5205 = vmatprep.subr.bf16.mxu0 0
    %5206 = vmatpush1.bf16.msra.mxu0 0
    %5207 = vmatprep.subr.bf16.mxu0 0
    %5208 = vmatpush1.bf16.msra.mxu0 0
    %5209 = vmatprep.mubr.bf16.mxu0 0
    %5210 = vmatmul.mubr.bf16.gmra.mrb[0].mxu0 %v5079
    %v5211 = vpop.f32.mrb[0].mxu0
    %v5212 = vadd.f32 0.0, %v5211
    %v5213 = vpop.f32.mrb[0].mxu0
    %v5214 = vpop.f32.mrb[0].mxu0
    %v5215 = vadd.f32 0.0, %v5214
    %v5216 = vpop.f32.mrb[0].mxu0
    %5217 = vmatprep.mubr.bf16.mxu0 0
    %5218 = vmatmul.mubr.bf16.gmra.mrb[0].mxu0 %v5082
    %v5219 = vpop.f32.mrb[0].mxu0
    %v5220 = vadd.f32 0.0, %v5219
    %v5221 = vpop.f32.mrb[0].mxu0
    %v5222 = vpop.f32.mrb[0].mxu0
    %v5223 = vadd.f32 0.0, %v5222
    %v5224 = vpop.f32.mrb[0].mxu0
    %5225 = vmatprep.mubr.bf16.mxu0 0
    %5226 = vmatmul.mubr.bf16.gmra.mrb[0].mxu0 %v5085
    %v5227 = vpop.f32.mrb[0].mxu0
    %v5228 = vadd.f32 0.0, %v5227
    %v5229 = vpop.f32.mrb[0].mxu0
    %v5230 = vpop.f32.mrb[0].mxu0
    %v5231 = vadd.f32 0.0, %v5230
    %v5232 = vpop.f32.mrb[0].mxu0
    %5233 = vmatprep.mubr.bf16.mxu0 0
    %5234 = vmatmul.mubr.bf16.gmra.mrb[0].mxu0 %v5088
    %v5235 = vpop.f32.mrb[0].mxu0
    %v5236 = vadd.f32 0.0, %v5235
    %v5237 = vpop.f32.mrb[0].mxu0
    %v5238 = vpop.f32.mrb[0].mxu0
    %v5239 = vadd.f32 0.0, %v5238
    %v5240 = vpop.f32.mrb[0].mxu0
    %5241 = vmatprep.mubr.bf16.mxu0 0
    %5242 = vmatmul.mubr.bf16.gmra.mrb[0].mxu0 %v5091
    %v5243 = vpop.f32.mrb[0].mxu0
    %v5244 = vadd.f32 0.0, %v5243
    %v5245 = vpop.f32.mrb[0].mxu0
    %v5246 = vpop.f32.mrb[0].mxu0
    %v5247 = vadd.f32 0.0, %v5246
    %v5248 = vpop.f32.mrb[0].mxu0
    %5249 = vmatprep.mubr.bf16.mxu0 0
    %5250 = vmatmul.mubr.bf16.gmra.mrb[0].mxu0 %v5094
    %v5251 = vpop.f32.mrb[0].mxu0
    %v5252 = vadd.f32 0.0, %v5251
    %v5253 = vpop.f32.mrb[0].mxu0
    %v5254 = vpop.f32.mrb[0].mxu0
    %v5255 = vadd.f32 0.0, %v5254
    %v5256 = vpop.f32.mrb[0].mxu0
    %5257 = vmatprep.mubr.bf16.mxu0 0
    %5258 = vmatmul.mubr.bf16.gmra.mrb[0].mxu0 %v5097
    %v5259 = vpop.f32.mrb[0].mxu0
    %v5260 = vadd.f32 0.0, %v5259
    %v5261 = vpop.f32.mrb[0].mxu0
    %v5262 = vpop.f32.mrb[0].mxu0
    %v5263 = vadd.f32 0.0, %v5262
    %v5264 = vpop.f32.mrb[0].mxu0
    %5265 = vmatprep.mubr.bf16.mxu0 0
    %5266 = vmatmul.mubr.bf16.gmra.mrb[0].mxu0 %v5100
    %v5267 = vpop.f32.mrb[0].mxu0
    %v5268 = vadd.f32 0.0, %v5267
    %v5269 = vpop.f32.mrb[0].mxu0
    %v5270 = vpop.f32.mrb[0].mxu0
    %v5271 = vadd.f32 0.0, %v5270
    %v5272 = vpop.f32.mrb[0].mxu0
    %5273 = vmatprep.mubr.bf16.mxu0 0
    %5274 = vmatmul.mubr.bf16.gmra.mrb[0].mxu0 %v5103
    %v5275 = vpop.f32.mrb[0].mxu0
    %v5276 = vadd.f32 0.0, %v5275
    %v5277 = vpop.f32.mrb[0].mxu0
    %v5278 = vpop.f32.mrb[0].mxu0
    %v5279 = vadd.f32 0.0, %v5278
    %v5280 = vpop.f32.mrb[0].mxu0
    %5281 = vmatprep.mubr.bf16.mxu0 0
    %5282 = vmatmul.mubr.bf16.gmra.mrb[0].mxu0 %v5106
    %v5283 = vpop.f32.mrb[0].mxu0
    %v5284 = vadd.f32 0.0, %v5283
    %v5285 = vpop.f32.mrb[0].mxu0
    %v5286 = vpop.f32.mrb[0].mxu0
    %v5287 = vadd.f32 0.0, %v5286
    %v5288 = vpop.f32.mrb[0].mxu0
    %5289 = vmatprep.mubr.bf16.mxu0 0
    %5290 = vmatmul.mubr.bf16.gmra.mrb[0].mxu0 %v5109
    %v5291 = vpop.f32.mrb[0].mxu0
    %v5292 = vadd.f32 0.0, %v5291
    %v5293 = vpop.f32.mrb[0].mxu0
    %v5294 = vpop.f32.mrb[0].mxu0
    %v5295 = vadd.f32 0.0, %v5294
    %v5296 = vpop.f32.mrb[0].mxu0
    %5297 = vmatprep.mubr.bf16.mxu0 0
    %5298 = vmatmul.mubr.bf16.gmra.mrb[0].mxu0 %v5112
    %v5299 = vpop.f32.mrb[0].mxu0
    %v5300 = vadd.f32 0.0, %v5299
    %v5301 = vpop.f32.mrb[0].mxu0
    %v5302 = vpop.f32.mrb[0].mxu0
    %v5303 = vadd.f32 0.0, %v5302
    %v5304 = vpop.f32.mrb[0].mxu0
    %5305 = vmatprep.mubr.bf16.mxu0 0
    %5306 = vmatmul.mubr.bf16.gmra.mrb[0].mxu0 %v5115
    %v5307 = vpop.f32.mrb[0].mxu0
    %v5308 = vadd.f32 0.0, %v5307
    %v5309 = vpop.f32.mrb[0].mxu0
    %v5310 = vpop.f32.mrb[0].mxu0
    %v5311 = vadd.f32 0.0, %v5310
    %v5312 = vpop.f32.mrb[0].mxu0
    %5313 = vmatprep.mubr.bf16.mxu0 0
    %5314 = vmatmul.mubr.bf16.gmra.mrb[0].mxu0 %v5118
    %v5315 = vpop.f32.mrb[0].mxu0
    %v5316 = vadd.f32 0.0, %v5315
    %v5317 = vpop.f32.mrb[0].mxu0
    %v5318 = vpop.f32.mrb[0].mxu0
    %v5319 = vadd.f32 0.0, %v5318
    %v5320 = vpop.f32.mrb[0].mxu0
    %5321 = vmatprep.mubr.bf16.mxu0 0
    %5322 = vmatmul.mubr.bf16.gmra.mrb[0].mxu0 %v5121
    %v5323 = vpop.f32.mrb[0].mxu0
    %v5324 = vadd.f32 0.0, %v5323
    %v5325 = vpop.f32.mrb[0].mxu0
    %v5326 = vpop.f32.mrb[0].mxu0
    %v5327 = vadd.f32 0.0, %v5326
    %v5328 = vpop.f32.mrb[0].mxu0
    %5329 = vmatprep.mubr.bf16.mxu0 0
    %5330 = vmatmul.mubr.bf16.gmra.mrb[0].mxu0 %v5124
    %v5331 = vpop.f32.mrb[0].mxu0
    %v5332 = vadd.f32 0.0, %v5331
    %v5333 = vpop.f32.mrb[0].mxu0
    %v5334 = vpop.f32.mrb[0].mxu0
    %v5335 = vadd.f32 0.0, %v5334
    %v5336 = vpop.f32.mrb[0].mxu0
    %5337 = vmatprep.mubr.bf16.mxu0 0
    %5338 = vmatmul.mubr.bf16.gmra.mrb[0].mxu0 %v5127
    %v5339 = vpop.f32.mrb[0].mxu0
    %v5340 = vadd.f32 0.0, %v5339
    %v5341 = vpop.f32.mrb[0].mxu0
    %v5342 = vpop.f32.mrb[0].mxu0
    %v5343 = vadd.f32 0.0, %v5342
    %v5344 = vpop.f32.mrb[0].mxu0
    %5345 = vmatprep.mubr.bf16.mxu0 0
    %5346 = vmatmul.mubr.bf16.gmra.mrb[0].mxu0 %v5130
    %v5347 = vpop.f32.mrb[0].mxu0
    %v5348 = vadd.f32 0.0, %v5347
    %v5349 = vpop.f32.mrb[0].mxu0
    %v5350 = vpop.f32.mrb[0].mxu0
    %v5351 = vadd.f32 0.0, %v5350
    %v5352 = vpop.f32.mrb[0].mxu0
    %5353 = vmatprep.mubr.bf16.mxu0 0
    %5354 = vmatmul.mubr.bf16.gmra.mrb[0].mxu0 %v5133
    %v5355 = vpop.f32.mrb[0].mxu0
    %v5356 = vadd.f32 0.0, %v5355
    %v5357 = vpop.f32.mrb[0].mxu0
    %v5358 = vpop.f32.mrb[0].mxu0
    %v5359 = vadd.f32 0.0, %v5358
    %v5360 = vpop.f32.mrb[0].mxu0
    %5361 = vmatprep.mubr.bf16.mxu0 0
    %5362 = vmatmul.mubr.bf16.gmra.mrb[0].mxu0 %v5136
    %v5363 = vpop.f32.mrb[0].mxu0
    %v5364 = vadd.f32 0.0, %v5363
    %v5365 = vpop.f32.mrb[0].mxu0
    %v5366 = vpop.f32.mrb[0].mxu0
    %v5367 = vadd.f32 0.0, %v5366
    %v5368 = vpop.f32.mrb[0].mxu0
    %5369 = vmatprep.mubr.bf16.mxu0 0
    %5370 = vmatmul.mubr.bf16.gmra.mrb[0].mxu0 %v5139
    %v5371 = vpop.f32.mrb[0].mxu0
    %v5372 = vadd.f32 0.0, %v5371
    %v5373 = vpop.f32.mrb[0].mxu0
    %v5374 = vpop.f32.mrb[0].mxu0
    %v5375 = vadd.f32 0.0, %v5374
    %v5376 = vpop.f32.mrb[0].mxu0
    %5377 = vmatprep.mubr.bf16.mxu0 0
    %5378 = vmatmul.mubr.bf16.gmra.mrb[0].mxu0 %v5142
    %v5379 = vpop.f32.mrb[0].mxu0
    %v5380 = vadd.f32 0.0, %v5379
    %v5381 = vpop.f32.mrb[0].mxu0
    %v5382 = vpop.f32.mrb[0].mxu0
    %v5383 = vadd.f32 0.0, %v5382
    %v5384 = vpop.f32.mrb[0].mxu0
    %5385 = vmatprep.mubr.bf16.mxu0 0
    %5386 = vmatmul.mubr.bf16.gmra.mrb[0].mxu0 %v5145
    %v5387 = vpop.f32.mrb[0].mxu0
    %v5388 = vadd.f32 0.0, %v5387
    %v5389 = vpop.f32.mrb[0].mxu0
    %v5390 = vpop.f32.mrb[0].mxu0
    %v5391 = vadd.f32 0.0, %v5390
    %v5392 = vpop.f32.mrb[0].mxu0
    %5393 = vmatprep.mubr.bf16.mxu0 0
    %5394 = vmatmul.mubr.bf16.gmra.mrb[0].mxu0 %v5148
    %v5395 = vpop.f32.mrb[0].mxu0
    %v5396 = vadd.f32 0.0, %v5395
    %v5397 = vpop.f32.mrb[0].mxu0
    %v5398 = vpop.f32.mrb[0].mxu0
    %v5399 = vadd.f32 0.0, %v5398
    %v5400 = vpop.f32.mrb[0].mxu0
    %5401 = vmatprep.mubr.bf16.mxu0 0
    %5402 = vmatmul.mubr.bf16.gmra.mrb[0].mxu0 %v5151
    %v5403 = vpop.f32.mrb[0].mxu0
    %v5404 = vadd.f32 0.0, %v5403
    %v5405 = vpop.f32.mrb[0].mxu0
    %v5406 = vpop.f32.mrb[0].mxu0
    %v5407 = vadd.f32 0.0, %v5406
    %v5408 = vpop.f32.mrb[0].mxu0
    %5409 = vmatprep.mubr.bf16.mxu0 0
    %5410 = vmatmul.mubr.bf16.gmra.mrb[0].mxu0 %v5154
    %v5411 = vpop.f32.mrb[0].mxu0
    %v5412 = vadd.f32 0.0, %v5411
    %v5413 = vpop.f32.mrb[0].mxu0
    %v5414 = vpop.f32.mrb[0].mxu0
    %v5415 = vadd.f32 0.0, %v5414
    %v5416 = vpop.f32.mrb[0].mxu0
    %5417 = vmatprep.mubr.bf16.mxu0 0
    %5418 = vmatmul.mubr.bf16.gmra.mrb[0].mxu0 %v5157
    %v5419 = vpop.f32.mrb[0].mxu0
    %v5420 = vadd.f32 0.0, %v5419
    %v5421 = vpop.f32.mrb[0].mxu0
    %v5422 = vpop.f32.mrb[0].mxu0
    %v5423 = vadd.f32 0.0, %v5422
    %v5424 = vpop.f32.mrb[0].mxu0
    %5425 = vmatprep.mubr.bf16.mxu0 0
    %5426 = vmatmul.mubr.bf16.gmra.mrb[0].mxu0 %v5160
    %v5427 = vpop.f32.mrb[0].mxu0
    %v5428 = vadd.f32 0.0, %v5427
    %v5429 = vpop.f32.mrb[0].mxu0
    %v5430 = vpop.f32.mrb[0].mxu0
    %v5431 = vadd.f32 0.0, %v5430
    %v5432 = vpop.f32.mrb[0].mxu0
    %5433 = vmatprep.mubr.bf16.mxu0 0
    %5434 = vmatmul.mubr.bf16.gmra.mrb[0].mxu0 %v5163
    %v5435 = vpop.f32.mrb[0].mxu0
    %v5436 = vadd.f32 0.0, %v5435
    %v5437 = vpop.f32.mrb[0].mxu0
    %v5438 = vpop.f32.mrb[0].mxu0
    %v5439 = vadd.f32 0.0, %v5438
    %v5440 = vpop.f32.mrb[0].mxu0
    %5441 = vmatprep.mubr.bf16.mxu0 0
    %5442 = vmatmul.mubr.bf16.gmra.mrb[0].mxu0 %v5166
    %v5443 = vpop.f32.mrb[0].mxu0
    %v5444 = vadd.f32 0.0, %v5443
    %v5445 = vpop.f32.mrb[0].mxu0
    %v5446 = vpop.f32.mrb[0].mxu0
    %v5447 = vadd.f32 0.0, %v5446
    %v5448 = vpop.f32.mrb[0].mxu0
    %5449 = vmatprep.mubr.bf16.mxu0 0
    %5450 = vmatmul.mubr.bf16.gmra.mrb[0].mxu0 %v5169
    %v5451 = vpop.f32.mrb[0].mxu0
    %v5452 = vadd.f32 0.0, %v5451
    %v5453 = vpop.f32.mrb[0].mxu0
    %v5454 = vpop.f32.mrb[0].mxu0
    %v5455 = vadd.f32 0.0, %v5454
    %v5456 = vpop.f32.mrb[0].mxu0
    %5457 = vmatprep.mubr.bf16.mxu0 0
    %5458 = vmatmul.mubr.bf16.gmra.mrb[0].mxu0 %v5172
    %v5459 = vpop.f32.mrb[0].mxu0
    %v5460 = vadd.f32 0.0, %v5459
    %v5461 = vpop.f32.mrb[0].mxu0
    %v5462 = vpop.f32.mrb[0].mxu0
    %v5463 = vadd.f32 0.0, %v5462
    %v5464 = vpop.f32.mrb[0].mxu0
    %5465 = vdwg.mxu0
    %v5466 = vadd.f32 %v4916, %v5212
    %v5467 = vadd.f32 %v4917, %v5215
    %v5468 = vadd.f32 %v4918, %v5220
    %v5469 = vadd.f32 %v4919, %v5223
    %v5470 = vadd.f32 %v4920, %v5228
    %v5471 = vadd.f32 %v4921, %v5231
    %v5472 = vadd.f32 %v4922, %v5236
    %v5473 = vadd.f32 %v4923, %v5239
    %v5474 = vadd.f32 %v4924, %v5244
    %v5475 = vadd.f32 %v4925, %v5247
    %v5476 = vadd.f32 %v4926, %v5252
    %v5477 = vadd.f32 %v4927, %v5255
    %v5478 = vadd.f32 %v4928, %v5260
    %v5479 = vadd.f32 %v4929, %v5263
    %v5480 = vadd.f32 %v4930, %v5268
    %v5481 = vadd.f32 %v4931, %v5271
    %v5482 = vadd.f32 %v4932, %v5276
    %v5483 = vadd.f32 %v4933, %v5279
    %v5484 = vadd.f32 %v4934, %v5284
    %v5485 = vadd.f32 %v4935, %v5287
    %v5486 = vadd.f32 %v4936, %v5292
    %v5487 = vadd.f32 %v4937, %v5295
    %v5488 = vadd.f32 %v4938, %v5300
    %v5489 = vadd.f32 %v4939, %v5303
    %v5490 = vadd.f32 %v4940, %v5308
    %v5491 = vadd.f32 %v4941, %v5311
    %v5492 = vadd.f32 %v4942, %v5316
    %v5493 = vadd.f32 %v4943, %v5319
    %v5494 = vadd.f32 %v4944, %v5324
    %v5495 = vadd.f32 %v4945, %v5327
    %v5496 = vadd.f32 %v4946, %v5332
    %v5497 = vadd.f32 %v4947, %v5335
    %v5498 = vadd.f32 %v4948, %v5340
    %v5499 = vadd.f32 %v4949, %v5343
    %v5500 = vadd.f32 %v4950, %v5348
    %v5501 = vadd.f32 %v4951, %v5351
    %v5502 = vadd.f32 %v4952, %v5356
    %v5503 = vadd.f32 %v4953, %v5359
    %v5504 = vadd.f32 %v4954, %v5364
    %v5505 = vadd.f32 %v4955, %v5367
    %v5506 = vadd.f32 %v4956, %v5372
    %v5507 = vadd.f32 %v4957, %v5375
    %v5508 = vadd.f32 %v4958, %v5380
    %v5509 = vadd.f32 %v4959, %v5383
    %v5510 = vadd.f32 %v4960, %v5388
    %v5511 = vadd.f32 %v4961, %v5391
    %v5512 = vadd.f32 %v4962, %v5396
    %v5513 = vadd.f32 %v4963, %v5399
    %v5514 = vadd.f32 %v4964, %v5404
    %v5515 = vadd.f32 %v4965, %v5407
    %v5516 = vadd.f32 %v4966, %v5412
    %v5517 = vadd.f32 %v4967, %v5415
    %v5518 = vadd.f32 %v4968, %v5420
    %v5519 = vadd.f32 %v4969, %v5423
    %v5520 = vadd.f32 %v4970, %v5428
    %v5521 = vadd.f32 %v4971, %v5431
    %v5522 = vadd.f32 %v4972, %v5436
    %v5523 = vadd.f32 %v4973, %v5439
    %v5524 = vadd.f32 %v4974, %v5444
    %v5525 = vadd.f32 %v4975, %v5447
    %v5526 = vadd.f32 %v4976, %v5452
    %v5527 = vadd.f32 %v4977, %v5455
    %v5528 = vadd.f32 %v4978, %v5460
    %v5529 = vadd.f32 %v4979, %v5463
    %v5530 = vld [vmem:[%s4] sm:$0x1]
    %v5532 = vlaneseq
    %v5533 = vshrl.u32 %v5532, 7
    %v5534 = vsub.s32 0, %v5533
    %v5535 = vrot.slane %v5530, %v5534
    %v5537 = vadd.f32 %v5466, %v5535
    %v5538 = vadd.f32 %v5467, %v5535
    %v5539 = vadd.f32 %v5468, %v5535
    %v5540 = vadd.f32 %v5469, %v5535
    %v5541 = vadd.f32 %v5470, %v5535
    %v5542 = vadd.f32 %v5471, %v5535
    %v5543 = vadd.f32 %v5472, %v5535
    %v5544 = vadd.f32 %v5473, %v5535
    %v5545 = vadd.f32 %v5474, %v5535
    %v5546 = vadd.f32 %v5475, %v5535
    %v5547 = vadd.f32 %v5476, %v5535
    %v5548 = vadd.f32 %v5477, %v5535
    %v5549 = vadd.f32 %v5478, %v5535
    %v5550 = vadd.f32 %v5479, %v5535
    %v5551 = vadd.f32 %v5480, %v5535
    %v5552 = vadd.f32 %v5481, %v5535
    %v5553 = vadd.f32 %v5482, %v5535
    %v5554 = vadd.f32 %v5483, %v5535
    %v5555 = vadd.f32 %v5484, %v5535
    %v5556 = vadd.f32 %v5485, %v5535
    %v5557 = vadd.f32 %v5486, %v5535
    %v5558 = vadd.f32 %v5487, %v5535
    %v5559 = vadd.f32 %v5488, %v5535
    %v5560 = vadd.f32 %v5489, %v5535
    %v5561 = vadd.f32 %v5490, %v5535
    %v5562 = vadd.f32 %v5491, %v5535
    %v5563 = vadd.f32 %v5492, %v5535
    %v5564 = vadd.f32 %v5493, %v5535
    %v5565 = vadd.f32 %v5494, %v5535
    %v5566 = vadd.f32 %v5495, %v5535
    %v5567 = vadd.f32 %v5496, %v5535
    %v5568 = vadd.f32 %v5497, %v5535
    %v5569 = vadd.f32 %v5498, %v5535
    %v5570 = vadd.f32 %v5499, %v5535
    %v5571 = vadd.f32 %v5500, %v5535
    %v5572 = vadd.f32 %v5501, %v5535
    %v5573 = vadd.f32 %v5502, %v5535
    %v5574 = vadd.f32 %v5503, %v5535
    %v5575 = vadd.f32 %v5504, %v5535
    %v5576 = vadd.f32 %v5505, %v5535
    %v5577 = vadd.f32 %v5506, %v5535
    %v5578 = vadd.f32 %v5507, %v5535
    %v5579 = vadd.f32 %v5508, %v5535
    %v5580 = vadd.f32 %v5509, %v5535
    %v5581 = vadd.f32 %v5510, %v5535
    %v5582 = vadd.f32 %v5511, %v5535
    %v5583 = vadd.f32 %v5512, %v5535
    %v5584 = vadd.f32 %v5513, %v5535
    %v5585 = vadd.f32 %v5514, %v5535
    %v5586 = vadd.f32 %v5515, %v5535
    %v5587 = vadd.f32 %v5516, %v5535
    %v5588 = vadd.f32 %v5517, %v5535
    %v5589 = vadd.f32 %v5518, %v5535
    %v5590 = vadd.f32 %v5519, %v5535
    %v5591 = vadd.f32 %v5520, %v5535
    %v5592 = vadd.f32 %v5521, %v5535
    %v5593 = vadd.f32 %v5522, %v5535
    %v5594 = vadd.f32 %v5523, %v5535
    %v5595 = vadd.f32 %v5524, %v5535
    %v5596 = vadd.f32 %v5525, %v5535
    %v5597 = vadd.f32 %v5526, %v5535
    %v5598 = vadd.f32 %v5527, %v5535
    %v5599 = vadd.f32 %v5528, %v5535
    %v5600 = vadd.f32 %v5529, %v5535
    %v5601 = vmax.f32 %v5537, 0.0
    %v5602 = vmax.f32 %v5538, 0.0
    %v5603 = vmax.f32 %v5539, 0.0
    %v5604 = vmax.f32 %v5540, 0.0
    %v5605 = vmax.f32 %v5541, 0.0
    %v5606 = vmax.f32 %v5542, 0.0
    %v5607 = vmax.f32 %v5543, 0.0
    %v5608 = vmax.f32 %v5544, 0.0
    %v5609 = vmax.f32 %v5545, 0.0
    %v5610 = vmax.f32 %v5546, 0.0
    %v5611 = vmax.f32 %v5547, 0.0
    %v5612 = vmax.f32 %v5548, 0.0
    %v5613 = vmax.f32 %v5549, 0.0
    %v5614 = vmax.f32 %v5550, 0.0
    %v5615 = vmax.f32 %v5551, 0.0
    %v5616 = vmax.f32 %v5552, 0.0
    %v5617 = vmax.f32 %v5553, 0.0
    %v5618 = vmax.f32 %v5554, 0.0
    %v5619 = vmax.f32 %v5555, 0.0
    %v5620 = vmax.f32 %v5556, 0.0
    %v5621 = vmax.f32 %v5557, 0.0
    %v5622 = vmax.f32 %v5558, 0.0
    %v5623 = vmax.f32 %v5559, 0.0
    %v5624 = vmax.f32 %v5560, 0.0
    %v5625 = vmax.f32 %v5561, 0.0
    %v5626 = vmax.f32 %v5562, 0.0
    %v5627 = vmax.f32 %v5563, 0.0
    %v5628 = vmax.f32 %v5564, 0.0
    %v5629 = vmax.f32 %v5565, 0.0
    %v5630 = vmax.f32 %v5566, 0.0
    %v5631 = vmax.f32 %v5567, 0.0
    %v5632 = vmax.f32 %v5568, 0.0
    %v5633 = vmax.f32 %v5569, 0.0
    %v5634 = vmax.f32 %v5570, 0.0
    %v5635 = vmax.f32 %v5571, 0.0
    %v5636 = vmax.f32 %v5572, 0.0
    %v5637 = vmax.f32 %v5573, 0.0
    %v5638 = vmax.f32 %v5574, 0.0
    %v5639 = vmax.f32 %v5575, 0.0
    %v5640 = vmax.f32 %v5576, 0.0
    %v5641 = vmax.f32 %v5577, 0.0
    %v5642 = vmax.f32 %v5578, 0.0
    %v5643 = vmax.f32 %v5579, 0.0
    %v5644 = vmax.f32 %v5580, 0.0
    %v5645 = vmax.f32 %v5581, 0.0
    %v5646 = vmax.f32 %v5582, 0.0
    %v5647 = vmax.f32 %v5583, 0.0
    %v5648 = vmax.f32 %v5584, 0.0
    %v5649 = vmax.f32 %v5585, 0.0
    %v5650 = vmax.f32 %v5586, 0.0
    %v5651 = vmax.f32 %v5587, 0.0
    %v5652 = vmax.f32 %v5588, 0.0
    %v5653 = vmax.f32 %v5589, 0.0
    %v5654 = vmax.f32 %v5590, 0.0
    %v5655 = vmax.f32 %v5591, 0.0
    %v5656 = vmax.f32 %v5592, 0.0
    %v5657 = vmax.f32 %v5593, 0.0
    %v5658 = vmax.f32 %v5594, 0.0
    %v5659 = vmax.f32 %v5595, 0.0
    %v5660 = vmax.f32 %v5596, 0.0
    %v5661 = vmax.f32 %v5597, 0.0
    %v5662 = vmax.f32 %v5598, 0.0
    %v5663 = vmax.f32 %v5599, 0.0
    %v5664 = vmax.f32 %v5600, 0.0
    %v5665 = vpack.c.bf16 %v5602, %v5601
    %v5666 = vpack.c.bf16 %v5604, %v5603
    %v5667 = vpack.c.bf16 %v5606, %v5605
    %v5668 = vpack.c.bf16 %v5608, %v5607
    %v5669 = vpack.c.bf16 %v5610, %v5609
    %v5670 = vpack.c.bf16 %v5612, %v5611
    %v5671 = vpack.c.bf16 %v5614, %v5613
    %v5672 = vpack.c.bf16 %v5616, %v5615
    %v5673 = vpack.c.bf16 %v5618, %v5617
    %v5674 = vpack.c.bf16 %v5620, %v5619
    %v5675 = vpack.c.bf16 %v5622, %v5621
    %v5676 = vpack.c.bf16 %v5624, %v5623
    %v5677 = vpack.c.bf16 %v5626, %v5625
    %v5678 = vpack.c.bf16 %v5628, %v5627
    %v5679 = vpack.c.bf16 %v5630, %v5629
    %v5680 = vpack.c.bf16 %v5632, %v5631
    %v5681 = vpack.c.bf16 %v5634, %v5633
    %v5682 = vpack.c.bf16 %v5636, %v5635
    %v5683 = vpack.c.bf16 %v5638, %v5637
    %v5684 = vpack.c.bf16 %v5640, %v5639
    %v5685 = vpack.c.bf16 %v5642, %v5641
    %v5686 = vpack.c.bf16 %v5644, %v5643
    %v5687 = vpack.c.bf16 %v5646, %v5645
    %v5688 = vpack.c.bf16 %v5648, %v5647
    %v5689 = vpack.c.bf16 %v5650, %v5649
    %v5690 = vpack.c.bf16 %v5652, %v5651
    %v5691 = vpack.c.bf16 %v5654, %v5653
    %v5692 = vpack.c.bf16 %v5656, %v5655
    %v5693 = vpack.c.bf16 %v5658, %v5657
    %v5694 = vpack.c.bf16 %v5660, %v5659
    %v5695 = vpack.c.bf16 %v5662, %v5661
    %v5696 = vpack.c.bf16 %v5664, %v5663
    %v5697 = vld [vmem:[%s5] sm:$0x3]
    %v5698 = vld [vmem:[%s6] sm:$0x1]
    %v5700 = vlaneseq
    %v5701 = vshrl.u32 %v5700, 7
    %v5702 = vsub.s32 0, %v5701
    %v5703 = vrot.slane %v5698, %v5702
    %v5706 = vsel %vm562, %v5665, 0
    %v5709 = vsel %vm562, %v5666, 0
    %v5712 = vsel %vm562, %v5667, 0
    %v5715 = vsel %vm562, %v5668, 0
    %v5718 = vsel %vm562, %v5669, 0
    %v5721 = vsel %vm562, %v5670, 0
    %v5724 = vsel %vm562, %v5671, 0
    %v5727 = vsel %vm562, %v5672, 0
    %v5730 = vsel %vm562, %v5673, 0
    %v5733 = vsel %vm562, %v5674, 0
    %v5736 = vsel %vm562, %v5675, 0
    %v5739 = vsel %vm562, %v5676, 0
    %v5742 = vsel %vm562, %v5677, 0
    %v5745 = vsel %vm562, %v5678, 0
    %v5748 = vsel %vm562, %v5679, 0
    %v5751 = vsel %vm562, %v5680, 0
    %v5754 = vsel %vm562, %v5681, 0
    %v5757 = vsel %vm562, %v5682, 0
    %v5760 = vsel %vm562, %v5683, 0
    %v5763 = vsel %vm562, %v5684, 0
    %v5766 = vsel %vm562, %v5685, 0
    %v5769 = vsel %vm562, %v5686, 0
    %v5772 = vsel %vm562, %v5687, 0
    %v5775 = vsel %vm562, %v5688, 0
    %v5778 = vsel %vm562, %v5689, 0
    %v5781 = vsel %vm562, %v5690, 0
    %v5784 = vsel %vm562, %v5691, 0
    %v5787 = vsel %vm562, %v5692, 0
    %v5790 = vsel %vm562, %v5693, 0
    %v5793 = vsel %vm562, %v5694, 0
    %v5796 = vsel %vm562, %v5695, 0
    %v5799 = vsel %vm562, %v5696, 0
    %v5802 = vsel %vm998, %v5697, 0
    %5804 = vmatprep.subr.bf16.mxu0 0
    %5805 = vmatpush1.bf16.msra.mxu0 %v5802
    %5806 = vmatprep.subr.bf16.mxu0 0
    %5807 = vmatpush1.bf16.msra.mxu0 0
    %5808 = vmatprep.subr.bf16.mxu0 0
    %5809 = vmatpush1.bf16.msra.mxu0 0
    %5810 = vmatprep.subr.bf16.mxu0 0
    %5811 = vmatpush1.bf16.msra.mxu0 0
    %5812 = vmatprep.subr.bf16.mxu0 0
    %5813 = vmatpush1.bf16.msra.mxu0 0
    %5814 = vmatprep.subr.bf16.mxu0 0
    %5815 = vmatpush1.bf16.msra.mxu0 0
    %5816 = vmatprep.subr.bf16.mxu0 0
    %5817 = vmatpush1.bf16.msra.mxu0 0
    %5818 = vmatprep.subr.bf16.mxu0 0
    %5819 = vmatpush1.bf16.msra.mxu0 0
    %5820 = vmatprep.subr.bf16.mxu0 0
    %5821 = vmatpush1.bf16.msra.mxu0 0
    %5822 = vmatprep.subr.bf16.mxu0 0
    %5823 = vmatpush1.bf16.msra.mxu0 0
    %5824 = vmatprep.subr.bf16.mxu0 0
    %5825 = vmatpush1.bf16.msra.mxu0 0
    %5826 = vmatprep.subr.bf16.mxu0 0
    %5827 = vmatpush1.bf16.msra.mxu0 0
    %5828 = vmatprep.subr.bf16.mxu0 0
    %5829 = vmatpush1.bf16.msra.mxu0 0
    %5830 = vmatprep.subr.bf16.mxu0 0
    %5831 = vmatpush1.bf16.msra.mxu0 0
    %5832 = vmatprep.subr.bf16.mxu0 0
    %5833 = vmatpush1.bf16.msra.mxu0 0
    %5834 = vmatprep.subr.bf16.mxu0 0
    %5835 = vmatpush1.bf16.msra.mxu0 0
    %5836 = vmatprep.mubr.bf16.mxu0 0
    %5837 = vmatmul.mubr.bf16.gmra.mrb[0].mxu0 %v5706
    %v5838 = vpop.f32.mrb[0].mxu0
    %v5839 = vadd.f32 %v5703, %v5838
    %v5840 = vpop.f32.mrb[0].mxu0
    %v5841 = vpop.f32.mrb[0].mxu0
    %v5842 = vadd.f32 %v5703, %v5841
    %v5843 = vpop.f32.mrb[0].mxu0
    %5844 = vmatprep.mubr.bf16.mxu0 0
    %5845 = vmatmul.mubr.bf16.gmra.mrb[0].mxu0 %v5709
    %v5846 = vpop.f32.mrb[0].mxu0
    %v5847 = vadd.f32 %v5703, %v5846
    %v5848 = vpop.f32.mrb[0].mxu0
    %v5849 = vpop.f32.mrb[0].mxu0
    %v5850 = vadd.f32 %v5703, %v5849
    %v5851 = vpop.f32.mrb[0].mxu0
    %5852 = vmatprep.mubr.bf16.mxu0 0
    %5853 = vmatmul.mubr.bf16.gmra.mrb[0].mxu0 %v5712
    %v5854 = vpop.f32.mrb[0].mxu0
    %v5855 = vadd.f32 %v5703, %v5854
    %v5856 = vpop.f32.mrb[0].mxu0
    %v5857 = vpop.f32.mrb[0].mxu0
    %v5858 = vadd.f32 %v5703, %v5857
    %v5859 = vpop.f32.mrb[0].mxu0
    %5860 = vmatprep.mubr.bf16.mxu0 0
    %5861 = vmatmul.mubr.bf16.gmra.mrb[0].mxu0 %v5715
    %v5862 = vpop.f32.mrb[0].mxu0
    %v5863 = vadd.f32 %v5703, %v5862
    %v5864 = vpop.f32.mrb[0].mxu0
    %v5865 = vpop.f32.mrb[0].mxu0
    %v5866 = vadd.f32 %v5703, %v5865
    %v5867 = vpop.f32.mrb[0].mxu0
    %5868 = vmatprep.mubr.bf16.mxu0 0
    %5869 = vmatmul.mubr.bf16.gmra.mrb[0].mxu0 %v5718
    %v5870 = vpop.f32.mrb[0].mxu0
    %v5871 = vadd.f32 %v5703, %v5870
    %v5872 = vpop.f32.mrb[0].mxu0
    %v5873 = vpop.f32.mrb[0].mxu0
    %v5874 = vadd.f32 %v5703, %v5873
    %v5875 = vpop.f32.mrb[0].mxu0
    %5876 = vmatprep.mubr.bf16.mxu0 0
    %5877 = vmatmul.mubr.bf16.gmra.mrb[0].mxu0 %v5721
    %v5878 = vpop.f32.mrb[0].mxu0
    %v5879 = vadd.f32 %v5703, %v5878
    %v5880 = vpop.f32.mrb[0].mxu0
    %v5881 = vpop.f32.mrb[0].mxu0
    %v5882 = vadd.f32 %v5703, %v5881
    %v5883 = vpop.f32.mrb[0].mxu0
    %5884 = vmatprep.mubr.bf16.mxu0 0
    %5885 = vmatmul.mubr.bf16.gmra.mrb[0].mxu0 %v5724
    %v5886 = vpop.f32.mrb[0].mxu0
    %v5887 = vadd.f32 %v5703, %v5886
    %v5888 = vpop.f32.mrb[0].mxu0
    %v5889 = vpop.f32.mrb[0].mxu0
    %v5890 = vadd.f32 %v5703, %v5889
    %v5891 = vpop.f32.mrb[0].mxu0
    %5892 = vmatprep.mubr.bf16.mxu0 0
    %5893 = vmatmul.mubr.bf16.gmra.mrb[0].mxu0 %v5727
    %v5894 = vpop.f32.mrb[0].mxu0
    %v5895 = vadd.f32 %v5703, %v5894
    %v5896 = vpop.f32.mrb[0].mxu0
    %v5897 = vpop.f32.mrb[0].mxu0
    %v5898 = vadd.f32 %v5703, %v5897
    %v5899 = vpop.f32.mrb[0].mxu0
    %5900 = vmatprep.mubr.bf16.mxu0 0
    %5901 = vmatmul.mubr.bf16.gmra.mrb[0].mxu0 %v5730
    %v5902 = vpop.f32.mrb[0].mxu0
    %v5903 = vadd.f32 %v5703, %v5902
    %v5904 = vpop.f32.mrb[0].mxu0
    %v5905 = vpop.f32.mrb[0].mxu0
    %v5906 = vadd.f32 %v5703, %v5905
    %v5907 = vpop.f32.mrb[0].mxu0
    %5908 = vmatprep.mubr.bf16.mxu0 0
    %5909 = vmatmul.mubr.bf16.gmra.mrb[0].mxu0 %v5733
    %v5910 = vpop.f32.mrb[0].mxu0
    %v5911 = vadd.f32 %v5703, %v5910
    %v5912 = vpop.f32.mrb[0].mxu0
    %v5913 = vpop.f32.mrb[0].mxu0
    %v5914 = vadd.f32 %v5703, %v5913
    %v5915 = vpop.f32.mrb[0].mxu0
    %5916 = vmatprep.mubr.bf16.mxu0 0
    %5917 = vmatmul.mubr.bf16.gmra.mrb[0].mxu0 %v5736
    %v5918 = vpop.f32.mrb[0].mxu0
    %v5919 = vadd.f32 %v5703, %v5918
    %v5920 = vpop.f32.mrb[0].mxu0
    %v5921 = vpop.f32.mrb[0].mxu0
    %v5922 = vadd.f32 %v5703, %v5921
    %v5923 = vpop.f32.mrb[0].mxu0
    %5924 = vmatprep.mubr.bf16.mxu0 0
    %5925 = vmatmul.mubr.bf16.gmra.mrb[0].mxu0 %v5739
    %v5926 = vpop.f32.mrb[0].mxu0
    %v5927 = vadd.f32 %v5703, %v5926
    %v5928 = vpop.f32.mrb[0].mxu0
    %v5929 = vpop.f32.mrb[0].mxu0
    %v5930 = vadd.f32 %v5703, %v5929
    %v5931 = vpop.f32.mrb[0].mxu0
    %5932 = vmatprep.mubr.bf16.mxu0 0
    %5933 = vmatmul.mubr.bf16.gmra.mrb[0].mxu0 %v5742
    %v5934 = vpop.f32.mrb[0].mxu0
    %v5935 = vadd.f32 %v5703, %v5934
    %v5936 = vpop.f32.mrb[0].mxu0
    %v5937 = vpop.f32.mrb[0].mxu0
    %v5938 = vadd.f32 %v5703, %v5937
    %v5939 = vpop.f32.mrb[0].mxu0
    %5940 = vmatprep.mubr.bf16.mxu0 0
    %5941 = vmatmul.mubr.bf16.gmra.mrb[0].mxu0 %v5745
    %v5942 = vpop.f32.mrb[0].mxu0
    %v5943 = vadd.f32 %v5703, %v5942
    %v5944 = vpop.f32.mrb[0].mxu0
    %v5945 = vpop.f32.mrb[0].mxu0
    %v5946 = vadd.f32 %v5703, %v5945
    %v5947 = vpop.f32.mrb[0].mxu0
    %5948 = vmatprep.mubr.bf16.mxu0 0
    %5949 = vmatmul.mubr.bf16.gmra.mrb[0].mxu0 %v5748
    %v5950 = vpop.f32.mrb[0].mxu0
    %v5951 = vadd.f32 %v5703, %v5950
    %v5952 = vpop.f32.mrb[0].mxu0
    %v5953 = vpop.f32.mrb[0].mxu0
    %v5954 = vadd.f32 %v5703, %v5953
    %v5955 = vpop.f32.mrb[0].mxu0
    %5956 = vmatprep.mubr.bf16.mxu0 0
    %5957 = vmatmul.mubr.bf16.gmra.mrb[0].mxu0 %v5751
    %v5958 = vpop.f32.mrb[0].mxu0
    %v5959 = vadd.f32 %v5703, %v5958
    %v5960 = vpop.f32.mrb[0].mxu0
    %v5961 = vpop.f32.mrb[0].mxu0
    %v5962 = vadd.f32 %v5703, %v5961
    %v5963 = vpop.f32.mrb[0].mxu0
    %5964 = vmatprep.mubr.bf16.mxu0 0
    %5965 = vmatmul.mubr.bf16.gmra.mrb[0].mxu0 %v5754
    %v5966 = vpop.f32.mrb[0].mxu0
    %v5967 = vadd.f32 %v5703, %v5966
    %v5968 = vpop.f32.mrb[0].mxu0
    %v5969 = vpop.f32.mrb[0].mxu0
    %v5970 = vadd.f32 %v5703, %v5969
    %v5971 = vpop.f32.mrb[0].mxu0
    %5972 = vmatprep.mubr.bf16.mxu0 0
    %5973 = vmatmul.mubr.bf16.gmra.mrb[0].mxu0 %v5757
    %v5974 = vpop.f32.mrb[0].mxu0
    %v5975 = vadd.f32 %v5703, %v5974
    %v5976 = vpop.f32.mrb[0].mxu0
    %v5977 = vpop.f32.mrb[0].mxu0
    %v5978 = vadd.f32 %v5703, %v5977
    %v5979 = vpop.f32.mrb[0].mxu0
    %5980 = vmatprep.mubr.bf16.mxu0 0
    %5981 = vmatmul.mubr.bf16.gmra.mrb[0].mxu0 %v5760
    %v5982 = vpop.f32.mrb[0].mxu0
    %v5983 = vadd.f32 %v5703, %v5982
    %v5984 = vpop.f32.mrb[0].mxu0
    %v5985 = vpop.f32.mrb[0].mxu0
    %v5986 = vadd.f32 %v5703, %v5985
    %v5987 = vpop.f32.mrb[0].mxu0
    %5988 = vmatprep.mubr.bf16.mxu0 0
    %5989 = vmatmul.mubr.bf16.gmra.mrb[0].mxu0 %v5763
    %v5990 = vpop.f32.mrb[0].mxu0
    %v5991 = vadd.f32 %v5703, %v5990
    %v5992 = vpop.f32.mrb[0].mxu0
    %v5993 = vpop.f32.mrb[0].mxu0
    %v5994 = vadd.f32 %v5703, %v5993
    %v5995 = vpop.f32.mrb[0].mxu0
    %5996 = vmatprep.mubr.bf16.mxu0 0
    %5997 = vmatmul.mubr.bf16.gmra.mrb[0].mxu0 %v5766
    %v5998 = vpop.f32.mrb[0].mxu0
    %v5999 = vadd.f32 %v5703, %v5998
    %v6000 = vpop.f32.mrb[0].mxu0
    %v6001 = vpop.f32.mrb[0].mxu0
    %v6002 = vadd.f32 %v5703, %v6001
    %v6003 = vpop.f32.mrb[0].mxu0
    %6004 = vmatprep.mubr.bf16.mxu0 0
    %6005 = vmatmul.mubr.bf16.gmra.mrb[0].mxu0 %v5769
    %v6006 = vpop.f32.mrb[0].mxu0
    %v6007 = vadd.f32 %v5703, %v6006
    %v6008 = vpop.f32.mrb[0].mxu0
    %v6009 = vpop.f32.mrb[0].mxu0
    %v6010 = vadd.f32 %v5703, %v6009
    %v6011 = vpop.f32.mrb[0].mxu0
    %6012 = vmatprep.mubr.bf16.mxu0 0
    %6013 = vmatmul.mubr.bf16.gmra.mrb[0].mxu0 %v5772
    %v6014 = vpop.f32.mrb[0].mxu0
    %v6015 = vadd.f32 %v5703, %v6014
    %v6016 = vpop.f32.mrb[0].mxu0
    %v6017 = vpop.f32.mrb[0].mxu0
    %v6018 = vadd.f32 %v5703, %v6017
    %v6019 = vpop.f32.mrb[0].mxu0
    %6020 = vmatprep.mubr.bf16.mxu0 0
    %6021 = vmatmul.mubr.bf16.gmra.mrb[0].mxu0 %v5775
    %v6022 = vpop.f32.mrb[0].mxu0
    %v6023 = vadd.f32 %v5703, %v6022
    %v6024 = vpop.f32.mrb[0].mxu0
    %v6025 = vpop.f32.mrb[0].mxu0
    %v6026 = vadd.f32 %v5703, %v6025
    %v6027 = vpop.f32.mrb[0].mxu0
    %6028 = vmatprep.mubr.bf16.mxu0 0
    %6029 = vmatmul.mubr.bf16.gmra.mrb[0].mxu0 %v5778
    %v6030 = vpop.f32.mrb[0].mxu0
    %v6031 = vadd.f32 %v5703, %v6030
    %v6032 = vpop.f32.mrb[0].mxu0
    %v6033 = vpop.f32.mrb[0].mxu0
    %v6034 = vadd.f32 %v5703, %v6033
    %v6035 = vpop.f32.mrb[0].mxu0
    %6036 = vmatprep.mubr.bf16.mxu0 0
    %6037 = vmatmul.mubr.bf16.gmra.mrb[0].mxu0 %v5781
    %v6038 = vpop.f32.mrb[0].mxu0
    %v6039 = vadd.f32 %v5703, %v6038
    %v6040 = vpop.f32.mrb[0].mxu0
    %v6041 = vpop.f32.mrb[0].mxu0
    %v6042 = vadd.f32 %v5703, %v6041
    %v6043 = vpop.f32.mrb[0].mxu0
    %6044 = vmatprep.mubr.bf16.mxu0 0
    %6045 = vmatmul.mubr.bf16.gmra.mrb[0].mxu0 %v5784
    %v6046 = vpop.f32.mrb[0].mxu0
    %v6047 = vadd.f32 %v5703, %v6046
    %v6048 = vpop.f32.mrb[0].mxu0
    %v6049 = vpop.f32.mrb[0].mxu0
    %v6050 = vadd.f32 %v5703, %v6049
    %v6051 = vpop.f32.mrb[0].mxu0
    %6052 = vmatprep.mubr.bf16.mxu0 0
    %6053 = vmatmul.mubr.bf16.gmra.mrb[0].mxu0 %v5787
    %v6054 = vpop.f32.mrb[0].mxu0
    %v6055 = vadd.f32 %v5703, %v6054
    %v6056 = vpop.f32.mrb[0].mxu0
    %v6057 = vpop.f32.mrb[0].mxu0
    %v6058 = vadd.f32 %v5703, %v6057
    %v6059 = vpop.f32.mrb[0].mxu0
    %6060 = vmatprep.mubr.bf16.mxu0 0
    %6061 = vmatmul.mubr.bf16.gmra.mrb[0].mxu0 %v5790
    %v6062 = vpop.f32.mrb[0].mxu0
    %v6063 = vadd.f32 %v5703, %v6062
    %v6064 = vpop.f32.mrb[0].mxu0
    %v6065 = vpop.f32.mrb[0].mxu0
    %v6066 = vadd.f32 %v5703, %v6065
    %v6067 = vpop.f32.mrb[0].mxu0
    %6068 = vmatprep.mubr.bf16.mxu0 0
    %6069 = vmatmul.mubr.bf16.gmra.mrb[0].mxu0 %v5793
    %v6070 = vpop.f32.mrb[0].mxu0
    %v6071 = vadd.f32 %v5703, %v6070
    %v6072 = vpop.f32.mrb[0].mxu0
    %v6073 = vpop.f32.mrb[0].mxu0
    %v6074 = vadd.f32 %v5703, %v6073
    %v6075 = vpop.f32.mrb[0].mxu0
    %6076 = vmatprep.mubr.bf16.mxu0 0
    %6077 = vmatmul.mubr.bf16.gmra.mrb[0].mxu0 %v5796
    %v6078 = vpop.f32.mrb[0].mxu0
    %v6079 = vadd.f32 %v5703, %v6078
    %v6080 = vpop.f32.mrb[0].mxu0
    %v6081 = vpop.f32.mrb[0].mxu0
    %v6082 = vadd.f32 %v5703, %v6081
    %v6083 = vpop.f32.mrb[0].mxu0
    %6084 = vmatprep.mubr.bf16.mxu0 0
    %6085 = vmatmul.mubr.bf16.gmra.mrb[0].mxu0 %v5799
    %v6086 = vpop.f32.mrb[0].mxu0
    %v6087 = vadd.f32 %v5703, %v6086
    %v6088 = vpop.f32.mrb[0].mxu0
    %v6089 = vpop.f32.mrb[0].mxu0
    %v6090 = vadd.f32 %v5703, %v6089
    %v6091 = vpop.f32.mrb[0].mxu0
    %6092 = vdwg.mxu0
    %v6093 = vadd.f32 %v5839, %v42
    %v6094 = vadd.f32 %v5842, %v43
    %v6095 = vadd.f32 %v5847, %v44
    %v6096 = vadd.f32 %v5850, %v45
    %v6097 = vadd.f32 %v5855, %v46
    %v6098 = vadd.f32 %v5858, %v47
    %v6099 = vadd.f32 %v5863, %v48
    %v6100 = vadd.f32 %v5866, %v49
    %v6101 = vadd.f32 %v5871, %v50
    %v6102 = vadd.f32 %v5874, %v51
    %v6103 = vadd.f32 %v5879, %v52
    %v6104 = vadd.f32 %v5882, %v53
    %v6105 = vadd.f32 %v5887, %v54
    %v6106 = vadd.f32 %v5890, %v55
    %v6107 = vadd.f32 %v5895, %v56
    %v6108 = vadd.f32 %v5898, %v57
    %v6109 = vadd.f32 %v5903, %v58
    %v6110 = vadd.f32 %v5906, %v59
    %v6111 = vadd.f32 %v5911, %v60
    %v6112 = vadd.f32 %v5914, %v61
    %v6113 = vadd.f32 %v5919, %v62
    %v6114 = vadd.f32 %v5922, %v63
    %v6115 = vadd.f32 %v5927, %v64
    %v6116 = vadd.f32 %v5930, %v65
    %v6117 = vadd.f32 %v5935, %v66
    %v6118 = vadd.f32 %v5938, %v67
    %v6119 = vadd.f32 %v5943, %v68
    %v6120 = vadd.f32 %v5946, %v69
    %v6121 = vadd.f32 %v5951, %v70
    %v6122 = vadd.f32 %v5954, %v71
    %v6123 = vadd.f32 %v5959, %v72
    %v6124 = vadd.f32 %v5962, %v73
    %v6125 = vadd.f32 %v5967, %v74
    %v6126 = vadd.f32 %v5970, %v75
    %v6127 = vadd.f32 %v5975, %v76
    %v6128 = vadd.f32 %v5978, %v77
    %v6129 = vadd.f32 %v5983, %v78
    %v6130 = vadd.f32 %v5986, %v79
    %v6131 = vadd.f32 %v5991, %v80
    %v6132 = vadd.f32 %v5994, %v81
    %v6133 = vadd.f32 %v5999, %v82
    %v6134 = vadd.f32 %v6002, %v83
    %v6135 = vadd.f32 %v6007, %v84
    %v6136 = vadd.f32 %v6010, %v85
    %v6137 = vadd.f32 %v6015, %v86
    %v6138 = vadd.f32 %v6018, %v87
    %v6139 = vadd.f32 %v6023, %v88
    %v6140 = vadd.f32 %v6026, %v89
    %v6141 = vadd.f32 %v6031, %v90
    %v6142 = vadd.f32 %v6034, %v91
    %v6143 = vadd.f32 %v6039, %v92
    %v6144 = vadd.f32 %v6042, %v93
    %v6145 = vadd.f32 %v6047, %v94
    %v6146 = vadd.f32 %v6050, %v95
    %v6147 = vadd.f32 %v6055, %v96
    %v6148 = vadd.f32 %v6058, %v97
    %v6149 = vadd.f32 %v6063, %v98
    %v6150 = vadd.f32 %v6066, %v99
    %v6151 = vadd.f32 %v6071, %v100
    %v6152 = vadd.f32 %v6074, %v101
    %v6153 = vadd.f32 %v6079, %v102
    %v6154 = vadd.f32 %v6082, %v103
    %v6155 = vadd.f32 %v6087, %v104
    %v6156 = vadd.f32 %v6090, %v105
    %v6157 = vmax.f32 %v6093, 0.0
    %v6158 = vmax.f32 %v6094, 0.0
    %v6159 = vmax.f32 %v6095, 0.0
    %v6160 = vmax.f32 %v6096, 0.0
    %v6161 = vmax.f32 %v6097, 0.0
    %v6162 = vmax.f32 %v6098, 0.0
    %v6163 = vmax.f32 %v6099, 0.0
    %v6164 = vmax.f32 %v6100, 0.0
    %v6165 = vmax.f32 %v6101, 0.0
    %v6166 = vmax.f32 %v6102, 0.0
    %v6167 = vmax.f32 %v6103, 0.0
    %v6168 = vmax.f32 %v6104, 0.0
    %v6169 = vmax.f32 %v6105, 0.0
    %v6170 = vmax.f32 %v6106, 0.0
    %v6171 = vmax.f32 %v6107, 0.0
    %v6172 = vmax.f32 %v6108, 0.0
    %v6173 = vmax.f32 %v6109, 0.0
    %v6174 = vmax.f32 %v6110, 0.0
    %v6175 = vmax.f32 %v6111, 0.0
    %v6176 = vmax.f32 %v6112, 0.0
    %v6177 = vmax.f32 %v6113, 0.0
    %v6178 = vmax.f32 %v6114, 0.0
    %v6179 = vmax.f32 %v6115, 0.0
    %v6180 = vmax.f32 %v6116, 0.0
    %v6181 = vmax.f32 %v6117, 0.0
    %v6182 = vmax.f32 %v6118, 0.0
    %v6183 = vmax.f32 %v6119, 0.0
    %v6184 = vmax.f32 %v6120, 0.0
    %v6185 = vmax.f32 %v6121, 0.0
    %v6186 = vmax.f32 %v6122, 0.0
    %v6187 = vmax.f32 %v6123, 0.0
    %v6188 = vmax.f32 %v6124, 0.0
    %v6189 = vmax.f32 %v6125, 0.0
    %v6190 = vmax.f32 %v6126, 0.0
    %v6191 = vmax.f32 %v6127, 0.0
    %v6192 = vmax.f32 %v6128, 0.0
    %v6193 = vmax.f32 %v6129, 0.0
    %v6194 = vmax.f32 %v6130, 0.0
    %v6195 = vmax.f32 %v6131, 0.0
    %v6196 = vmax.f32 %v6132, 0.0
    %v6197 = vmax.f32 %v6133, 0.0
    %v6198 = vmax.f32 %v6134, 0.0
    %v6199 = vmax.f32 %v6135, 0.0
    %v6200 = vmax.f32 %v6136, 0.0
    %v6201 = vmax.f32 %v6137, 0.0
    %v6202 = vmax.f32 %v6138, 0.0
    %v6203 = vmax.f32 %v6139, 0.0
    %v6204 = vmax.f32 %v6140, 0.0
    %v6205 = vmax.f32 %v6141, 0.0
    %v6206 = vmax.f32 %v6142, 0.0
    %v6207 = vmax.f32 %v6143, 0.0
    %v6208 = vmax.f32 %v6144, 0.0
    %v6209 = vmax.f32 %v6145, 0.0
    %v6210 = vmax.f32 %v6146, 0.0
    %v6211 = vmax.f32 %v6147, 0.0
    %v6212 = vmax.f32 %v6148, 0.0
    %v6213 = vmax.f32 %v6149, 0.0
    %v6214 = vmax.f32 %v6150, 0.0
    %v6215 = vmax.f32 %v6151, 0.0
    %v6216 = vmax.f32 %v6152, 0.0
    %v6217 = vmax.f32 %v6153, 0.0
    %v6218 = vmax.f32 %v6154, 0.0
    %v6219 = vmax.f32 %v6155, 0.0
    %v6220 = vmax.f32 %v6156, 0.0
    %6221 = vst [vmem:[#allocation6] sm:$0xff] %v6157
    %6222 = vst [vmem:[#allocation6 + $0x8] sm:$0xff] %v6158
    %6223 = vst [vmem:[#allocation6 + $0x10] sm:$0xff] %v6159
    %6224 = vst [vmem:[#allocation6 + $0x18] sm:$0xff] %v6160
    %6225 = vst [vmem:[#allocation6 + $0x20] sm:$0xff] %v6161
    %6226 = vst [vmem:[#allocation6 + $0x28] sm:$0xff] %v6162
    %6227 = vst [vmem:[#allocation6 + $0x30] sm:$0xff] %v6163
    %6228 = vst [vmem:[#allocation6 + $0x38] sm:$0xff] %v6164
    %6229 = vst [vmem:[#allocation6 + $0x40] sm:$0xff] %v6165
    %6230 = vst [vmem:[#allocation6 + $0x48] sm:$0xff] %v6166
    %6231 = vst [vmem:[#allocation6 + $0x50] sm:$0xff] %v6167
    %6232 = vst [vmem:[#allocation6 + $0x58] sm:$0xff] %v6168
    %6233 = vst [vmem:[#allocation6 + $0x60] sm:$0xff] %v6169
    %6234 = vst [vmem:[#allocation6 + $0x68] sm:$0xff] %v6170
    %6235 = vst [vmem:[#allocation6 + $0x70] sm:$0xff] %v6171
    %6236 = vst [vmem:[#allocation6 + $0x78] sm:$0xff] %v6172
    %6237 = vst [vmem:[#allocation6 + $0x80] sm:$0xff] %v6173
    %6238 = vst [vmem:[#allocation6 + $0x88] sm:$0xff] %v6174
    %6239 = vst [vmem:[#allocation6 + $0x90] sm:$0xff] %v6175
    %6240 = vst [vmem:[#allocation6 + $0x98] sm:$0xff] %v6176
    %6241 = vst [vmem:[#allocation6 + $0xa0] sm:$0xff] %v6177
    %6242 = vst [vmem:[#allocation6 + $0xa8] sm:$0xff] %v6178
    %6243 = vst [vmem:[#allocation6 + $0xb0] sm:$0xff] %v6179
    %6244 = vst [vmem:[#allocation6 + $0xb8] sm:$0xff] %v6180
    %6245 = vst [vmem:[#allocation6 + $0xc0] sm:$0xff] %v6181
    %6246 = vst [vmem:[#allocation6 + $0xc8] sm:$0xff] %v6182
    %6247 = vst [vmem:[#allocation6 + $0xd0] sm:$0xff] %v6183
    %6248 = vst [vmem:[#allocation6 + $0xd8] sm:$0xff] %v6184
    %6249 = vst [vmem:[#allocation6 + $0xe0] sm:$0xff] %v6185
    %6250 = vst [vmem:[#allocation6 + $0xe8] sm:$0xff] %v6186
    %6251 = vst [vmem:[#allocation6 + $0xf0] sm:$0xff] %v6187
    %6252 = vst [vmem:[#allocation6 + $0xf8] sm:$0xff] %v6188
    %6253 = vst [vmem:[#allocation6 + $0x100] sm:$0xff] %v6189
    %6254 = vst [vmem:[#allocation6 + $0x108] sm:$0xff] %v6190
    %6255 = vst [vmem:[#allocation6 + $0x110] sm:$0xff] %v6191
    %6256 = vst [vmem:[#allocation6 + $0x118] sm:$0xff] %v6192
    %6257 = vst [vmem:[#allocation6 + $0x120] sm:$0xff] %v6193
    %6258 = vst [vmem:[#allocation6 + $0x128] sm:$0xff] %v6194
    %6259 = vst [vmem:[#allocation6 + $0x130] sm:$0xff] %v6195
    %6260 = vst [vmem:[#allocation6 + $0x138] sm:$0xff] %v6196
    %6261 = vst [vmem:[#allocation6 + $0x140] sm:$0xff] %v6197
    %6262 = vst [vmem:[#allocation6 + $0x148] sm:$0xff] %v6198
    %6263 = vst [vmem:[#allocation6 + $0x150] sm:$0xff] %v6199
    %6264 = vst [vmem:[#allocation6 + $0x158] sm:$0xff] %v6200
    %6265 = vst [vmem:[#allocation6 + $0x160] sm:$0xff] %v6201
    %6266 = vst [vmem:[#allocation6 + $0x168] sm:$0xff] %v6202
    %6267 = vst [vmem:[#allocation6 + $0x170] sm:$0xff] %v6203
    %6268 = vst [vmem:[#allocation6 + $0x178] sm:$0xff] %v6204
    %6269 = vst [vmem:[#allocation6 + $0x180] sm:$0xff] %v6205
    %6270 = vst [vmem:[#allocation6 + $0x188] sm:$0xff] %v6206
    %6271 = vst [vmem:[#allocation6 + $0x190] sm:$0xff] %v6207
    %6272 = vst [vmem:[#allocation6 + $0x198] sm:$0xff] %v6208
    %6273 = vst [vmem:[#allocation6 + $0x1a0] sm:$0xff] %v6209
    %6274 = vst [vmem:[#allocation6 + $0x1a8] sm:$0xff] %v6210
    %6275 = vst [vmem:[#allocation6 + $0x1b0] sm:$0xff] %v6211
    %6276 = vst [vmem:[#allocation6 + $0x1b8] sm:$0xff] %v6212
    %6277 = vst [vmem:[#allocation6 + $0x1c0] sm:$0xff] %v6213
    %6278 = vst [vmem:[#allocation6 + $0x1c8] sm:$0xff] %v6214
    %6279 = vst [vmem:[#allocation6 + $0x1d0] sm:$0xff] %v6215
    %6280 = vst [vmem:[#allocation6 + $0x1d8] sm:$0xff] %v6216
    %6281 = vst [vmem:[#allocation6 + $0x1e0] sm:$0xff] %v6217
    %6282 = vst [vmem:[#allocation6 + $0x1e8] sm:$0xff] %v6218
    %6283 = vst [vmem:[#allocation6 + $0x1f0] sm:$0xff] %v6219
    %6284 = vst [vmem:[#allocation6 + $0x1f8] sm:$0xff] %v6220
    // Predicated region
    $region34: #{tpu_custom_call.1} parent=1 // pred_check
      _
    $region35: #{tpu_custom_call.1} parent=1 // pred_check_branch
      %6286 = sbr.rel (0) target = $region37
    $region36: #{tpu_custom_call.1} parent=1 // pred_region
      %s6288 = ssub.s32 8192, 8192
      %6289 = vsyncadd [#allocation5], %s6288
      %s6290 = sshll.u32 [#allocation6], 4
      %s6291 = int_to_ptr.vmem [resolvable:$true] %s6290
      %6296 = dma.vmem_to_hbm [thread:$0]  %s6291, 8192, %s7, [#allocation5], 128, 128, 8
    $region37: #{tpu_custom_call.1} parent=1 // pred_fallthru
      _
    // Predicated region
    $region38: #{tpu_custom_call.1} parent=1 // pred_check
      _
    $region39: #{tpu_custom_call.1} parent=1 // pred_check_branch
      %6298 = sbr.rel (0) target = $region41
    $region40: #{tpu_custom_call.1} parent=1 // pred_region
      %6299 = dma.done [#allocation5], 8192
    $region41: #{tpu_custom_call.1} parent=1 // pred_fallthru
      _
    %6300 = vsyncpa [#allocation4], 1
    %6301 = vsyncpa [#allocation5], 1

</llo_original>
